<compile_context>
chip_gen: v7x
topology: tpu7x:2x2x1
jax: 0.10.0
libtpu: 0.0.40
codegen_flags: <defaults>
</compile_context>

<pallas_src>
import functools

import jax
import jax.numpy as jnp
import numpy as np
from jax.experimental import pallas as pl
from jax.experimental.pallas import tpu as pltpu


# ---------------------------------------------------------------------------
# Banded ("im2col folded into the weight") conv construction.
#
# An image is stored as packed rows     xp[p, r*W*Cin + w*Cin + c] = x[pool*p + r, w, c]
# (for pool == 1 this is simply the NHWC row-major layout).  For (pooled) output
# row hp the kernel computes
#     z[hp, ((dh*pool+dw)*Wp + wp)*Cout + co]
#         = sum_b  xp[hp + b, :] @ wband[b]              (b = 0..B-1 row bands)
#         = conv[pool*hp + dh, pool*wp + dw, co]
# i.e. the full pre-pool conv output with each 2x2 pooling quadrant occupying a
# contiguous lane range.  BN scale/bias + ReLU are applied to z, then the pool is
# a max over 4 static lane slices, and the store is the lane-dense NHWC row.
# ---------------------------------------------------------------------------
def build_conv_band_weights(w_oihw, H, W, pool):
    """w_oihw: [Cout, Cin, kh, kw] (PyTorch layout). Returns [B, pool*W*Cin, pool^2*Wp*Cout]."""
    w = np.transpose(np.asarray(w_oihw, np.float32), (2, 3, 1, 0))   # HWIO
    kh, kw, cin, cout = w.shape
    ho, wo = H - kh + 1, W - kw + 1
    assert H % pool == 0 and ho % pool == 0 and wo % pool == 0
    hp, wp = ho // pool, wo // pool
    nbands = -(-(kh + pool - 1) // pool)
    # band slices x[b : b + Hp, :] tile the packed rows exactly:
    assert H // pool == hp + nbands - 1
    lin = pool * W * cin
    lfull = pool * pool * wp * cout
    wb = np.zeros((nbands, lin, lfull), np.float32)
    for dh in range(pool):
        for di in range(kh):
            b, r = divmod(dh + di, pool)
            for dw in range(pool):
                for dj in range(kw):
                    for wpi in range(wp):
                        wi = pool * wpi + dw + dj
                        row0 = r * W * cin + wi * cin
                        col0 = ((dh * pool + dw) * wp + wpi) * cout
                        wb[b, row0:row0 + cin, col0:col0 + cout] = w[di, dj]
    return wb


def fold_bn_np(conv_bias, bn, eps=1e-5):
    gamma, beta, mean, var = (np.asarray(a, np.float32) for a in bn)
    scale = gamma / np.sqrt(var + eps)
    bias = (np.asarray(conv_bias, np.float32) - mean) * scale + beta
    return scale, bias


# ---------------------------------------------------------------------------
# Pallas kernels
# ---------------------------------------------------------------------------
def _conv_band_kernel(x_ref, w_ref, s_ref, b_ref, o_ref, *, pool):
    """Fused conv + BN + ReLU (+ 2x2 maxpool) for one batch tile.

    x_ref: [TB, Hpack, Lin]   bf16  packed input rows (Lin = pool*W*Cin)
    w_ref: [B, Lin, Lfull]    bf16  banded conv weights (Lfull = pool^2*Wp*Cout)
    s_ref, b_ref: [1, Lfull]  f32   folded BN scale / bias (tiled per column)
    o_ref: [TB, Hout, Q]      bf16  pooled NHWC output rows (Q = Wp*Cout)
    """
    tb, hpack, _ = x_ref.shape
    nb, _, lfull = w_ref.shape
    hout = hpack - nb + 1
    q = lfull // (pool * pool)
    s = s_ref[...]
    bias = b_ref[...]
    for t in range(tb):                          # static unroll over batch tile
        z = None
        for b in range(nb):                      # row bands -> MXU matmuls
            zb = jnp.dot(x_ref[t, b:b + hout, :], w_ref[b],
                         preferred_element_type=jnp.float32)
            z = zb if z is None else z + zb
        z = jnp.maximum(z * s + bias, 0.0)       # folded BN + ReLU (f32)
        if pool == 2:                            # 2x2 pool: max of 4 static lane slices
            z = jnp.maximum(jnp.maximum(z[:, 0:q], z[:, q:2 * q]),
                            jnp.maximum(z[:, 2 * q:3 * q], z[:, 3 * q:4 * q]))
        o_ref[t] = z.astype(o_ref.dtype)


def _conv_band_fc_kernel(x_ref, w_ref, s_ref, b_ref, fcw_ref, fcb_ref, o_ref, *, pool):
    """Like _conv_band_kernel (with pool=2) but additionally fuses the final fc:
    fcw_ref: [Q, Hout*128] bf16 (per-output-row fc blocks, columns padded to 128),
    fcb_ref: [1, 128] f32, o_ref: [TB, 1, 128] f32 logits."""
    tb, hpack, _ = x_ref.shape
    nb, _, lfull = w_ref.shape
    hout = hpack - nb + 1
    q = lfull // (pool * pool)
    ncp = fcb_ref.shape[1]
    s = s_ref[...]
    bias = b_ref[...]
    fcw = fcw_ref[...]
    fcb = fcb_ref[...]
    for t in range(tb):
        z = None
        for b in range(nb):
            zb = jnp.dot(x_ref[t, b:b + hout, :], w_ref[b],
                         preferred_element_type=jnp.float32)
            z = zb if z is None else z + zb
        z = jnp.maximum(z * s + bias, 0.0)
        z = jnp.maximum(jnp.maximum(z[:, 0:q], z[:, q:2 * q]),
                        jnp.maximum(z[:, 2 * q:3 * q], z[:, 3 * q:4 * q]))  # [Hout, Q]
        # Fused fc: one [Hout, Q] @ [Q, Hout*128] matmul; the logits are the sum of
        # the diagonal 128-lane blocks (fc block h only applies to output row h).
        res = jnp.dot(z.astype(jnp.bfloat16), fcw,
                      preferred_element_type=jnp.float32)                   # [Hout, Hout*128]
        logits = fcb
        for h in range(hout):
            logits = logits + res[h:h + 1, h * ncp:(h + 1) * ncp]
        o_ref[t] = logits


# ---------------------------------------------------------------------------
# pallas_call wrappers
# ---------------------------------------------------------------------------
def _mosaic_params():
    return pltpu.CompilerParams(dimension_semantics=("parallel",),
                                vmem_limit_bytes=32 * 1024 * 1024)


def conv_band_call(x, wband, scale, bias, *, pool, tb):
    npad, hpack, lin = x.shape
    nb, lin_w, lfull = wband.shape
    assert lin == lin_w and lfull % (pool * pool) == 0
    hout = hpack - nb + 1
    q = lfull // (pool * pool)
    flops = 2 * npad * nb * hout * lin * lfull
    bytes_accessed = (npad * hpack * lin * 2 + wband.size * 2 + 2 * lfull * 4
                      + npad * hout * q * 2)
    return pl.pallas_call(
        functools.partial(_conv_band_kernel, pool=pool),
        out_shape=jax.ShapeDtypeStruct((npad, hout, q), jnp.bfloat16),
        grid=(npad // tb,),
        in_specs=[
            pl.BlockSpec((tb, hpack, lin), lambda i: (i, 0, 0)),   # activation tile
            pl.BlockSpec((nb, lin, lfull), lambda i: (0, 0, 0)),   # banded weights (resident)
            pl.BlockSpec((1, lfull), lambda i: (0, 0)),            # BN scale
            pl.BlockSpec((1, lfull), lambda i: (0, 0)),            # BN bias
        ],
        out_specs=pl.BlockSpec((tb, hout, q), lambda i: (i, 0, 0)),
        compiler_params=_mosaic_params(),
        cost_estimate=pl.CostEstimate(flops=flops, transcendentals=0,
                                      bytes_accessed=bytes_accessed),
    )(x, wband, scale, bias)


def conv_band_fc_call(x, wband, scale, bias, fcw, fcb, *, pool, tb):
    npad, hpack, lin = x.shape
    nb, lin_w, lfull = wband.shape
    assert lin == lin_w
    hout = hpack - nb + 1
    q = lfull // (pool * pool)
    ncp = fcb.shape[1]
    assert fcw.shape == (q, hout * ncp), (fcw.shape, q, hout, ncp)
    flops = 2 * npad * (nb * hout * lin * lfull + hout * q * hout * ncp)
    bytes_accessed = (npad * hpack * lin * 2 + wband.size * 2 + fcw.size * 2
                      + 2 * lfull * 4 + ncp * 4 + npad * ncp * 4)
    return pl.pallas_call(
        functools.partial(_conv_band_fc_kernel, pool=pool),
        out_shape=jax.ShapeDtypeStruct((npad, 1, ncp), jnp.float32),
        grid=(npad // tb,),
        in_specs=[
            pl.BlockSpec((tb, hpack, lin), lambda i: (i, 0, 0)),
            pl.BlockSpec((nb, lin, lfull), lambda i: (0, 0, 0)),
            pl.BlockSpec((1, lfull), lambda i: (0, 0)),
            pl.BlockSpec((1, lfull), lambda i: (0, 0)),
            pl.BlockSpec((q, hout * ncp), lambda i: (0, 0)),       # fc weights (resident)
            pl.BlockSpec((1, ncp), lambda i: (0, 0)),              # fc bias (padded)
        ],
        out_specs=pl.BlockSpec((tb, 1, ncp), lambda i: (i, 0, 0)),
        compiler_params=_mosaic_params(),
        cost_estimate=pl.CostEstimate(flops=flops, transcendentals=0,
                                      bytes_accessed=bytes_accessed),
    )(x, wband, scale, bias, fcw, fcb)


# ---------------------------------------------------------------------------
# Parameter init / preparation (done once, outside jit)
# ---------------------------------------------------------------------------
def init_raw_params(key, in_channels=1, num_classes=10):
    ks = jax.random.split(key, 12)

    def conv_w(k, cout, cin, kh, kw):
        return jax.random.normal(k, (cout, cin, kh, kw), jnp.float32) * 0.1

    def bn_params(k, c):
        k1, k2, k3, k4 = jax.random.split(k, 4)
        return (jax.random.uniform(k1, (c,), jnp.float32, 0.5, 1.5),   # gamma
                jax.random.normal(k2, (c,), jnp.float32) * 0.1,        # beta
                jax.random.normal(k3, (c,), jnp.float32) * 0.1,        # running mean
                jax.random.uniform(k4, (c,), jnp.float32, 0.5, 1.5))   # running var

    return dict(
        w1=conv_w(ks[0], 16, in_channels, 5, 5),
        b1=jax.random.normal(ks[1], (16,), jnp.float32) * 0.1,
        bn1=bn_params(ks[2], 16),
        w2=conv_w(ks[3], 32, 16, 3, 3),
        b2=jax.random.normal(ks[4], (32,), jnp.float32) * 0.1,
        bn2=bn_params(ks[5], 32),
        w3=conv_w(ks[6], 64, 32, 3, 3),
        b3=jax.random.normal(ks[7], (64,), jnp.float32) * 0.1,
        bn3=bn_params(ks[8], 64),
        wfc=jax.random.normal(ks[9], (num_classes, 5 * 5 * 64), jnp.float32) * 0.02,
        bfc=jax.random.normal(ks[10], (num_classes,), jnp.float32) * 0.02,
    )


def prepare_kernel_params(raw, num_classes=10):
    assert num_classes <= 128

    def conv_layer(w, cb, bn, H, W, pool):
        wb = build_conv_band_weights(w, H, W, pool)
        scale, bias = fold_bn_np(cb, bn)
        reps = wb.shape[2] // scale.shape[0]
        return (jnp.asarray(wb, jnp.bfloat16),
                jnp.asarray(np.tile(scale, reps)[None, :], jnp.float32),
                jnp.asarray(np.tile(bias, reps)[None, :], jnp.float32))

    kp = {}
    kp["wband1"], kp["scale1"], kp["bias1"] = conv_layer(raw["w1"], raw["b1"], raw["bn1"], 32, 32, 2)
    kp["wband2"], kp["scale2"], kp["bias2"] = conv_layer(raw["w2"], raw["b2"], raw["bn2"], 14, 14, 1)
    kp["wband3"], kp["scale3"], kp["bias3"] = conv_layer(raw["w3"], raw["b3"], raw["bn3"], 12, 12, 2)

    # fc: rows permuted from PyTorch NCHW-flatten order into the kernel's NHWC-row
    # layout, columns zero-padded to 128 lanes, and the 5 per-row blocks concatenated
    # so the fused kernel needs a single [5,320] @ [320,640] matmul.
    cf, hf, wf = 64, 5, 5
    wfc = np.asarray(raw["wfc"], np.float32).reshape(num_classes, cf, hf, wf)
    ncp = 128
    fcw = np.zeros((wf * cf, hf * ncp), np.float32)
    for h in range(hf):
        blk = np.transpose(wfc[:, :, h, :], (2, 1, 0)).reshape(wf * cf, num_classes)
        fcw[:, h * ncp:h * ncp + num_classes] = blk
    fcb = np.zeros((1, ncp), np.float32)
    fcb[0, :num_classes] = np.asarray(raw["bfc"], np.float32)
    kp["fcw"] = jnp.asarray(fcw, jnp.bfloat16)
    kp["fcb"] = jnp.asarray(fcb, jnp.float32)
    return kp


# ---------------------------------------------------------------------------
# Forward pass (mirrors CNN_fmnist.forward, eval-mode BN)
# ---------------------------------------------------------------------------
def cnn_fmnist_forward(x_nchw, kp, *, num_classes=10):
    N, C, H, W = x_nchw.shape
    assert H == 28 and W == 28, "CNN_fmnist expects 28x28 inputs (fc is 5*5*64)"
    tb = 8 if N >= 16 else 1                      # >=2 parallel grid steps for N>=2
    npad = ((N + tb - 1) // tb) * tb

    # NCHW -> NHWC (free for C==1), conv1's padding=2, batch padded to the tile,
    # then viewed as row-pair-packed [N, 16, 2*32*C] for the fused conv+pool kernel.
    x = jnp.transpose(x_nchw, (0, 2, 3, 1))
    x = jnp.pad(x, ((0, npad - N), (2, 2), (2, 2), (0, 0)))
    x = x.astype(jnp.bfloat16).reshape(npad, 16, 2 * 32 * C)

    # layer1 + BN + ReLU + pool1  -> [npad, 14, 14*16]  (== NHWC [.,14,14,16] bytes)
    y = conv_band_call(x, kp["wband1"], kp["scale1"], kp["bias1"], pool=2, tb=tb)
    # layer2 + BN + ReLU          -> [npad, 12, 12*32]
    y = conv_band_call(y, kp["wband2"], kp["scale2"], kp["bias2"], pool=1, tb=tb)
    # row-pair pack for the pooled layer3 (free reshape of the same bytes)
    y = y.reshape(npad, 6, 2 * 12 * 32)
    # layer3 + BN + ReLU + pool2 + fc -> [npad, 1, 128] f32 logits (padded lanes)
    logits = conv_band_fc_call(y, kp["wband3"], kp["scale3"], kp["bias3"],
                               kp["fcw"], kp["fcb"], pool=2, tb=tb)
    return logits.reshape(npad, -1)[:N, :num_classes]


# ---------------------------------------------------------------------------
# Pure-JAX reference (same bf16-operand / f32-accumulate precision contract)
# ---------------------------------------------------------------------------
def reference_forward(x_nchw, raw):
    def conv_bn_relu(x, w_oihw, cb, bn, pad):
        w = jnp.transpose(w_oihw, (2, 3, 1, 0)).astype(jnp.bfloat16)   # HWIO
        if pad:
            x = jnp.pad(x, ((0, 0), (pad, pad), (pad, pad), (0, 0)))
        y = jax.lax.conv_general_dilated(
            x.astype(jnp.bfloat16), w, (1, 1), "VALID",
            dimension_numbers=("NHWC", "HWIO", "NHWC"),
            preferred_element_type=jnp.float32)
        gamma, beta, mean, var = bn
        scale = gamma / jnp.sqrt(var + 1e-5)
        bias = (cb - mean) * scale + beta
        return jnp.maximum(y * scale + bias, 0.0)

    def pool2x2(y):
        n, h, w, c = y.shape
        return y.reshape(n, h // 2, 2, w // 2, 2, c).max(axis=(2, 4))

    x = jnp.transpose(x_nchw, (0, 2, 3, 1))
    y = pool2x2(conv_bn_relu(x, raw["w1"], raw["b1"], raw["bn1"], pad=2)).astype(jnp.bfloat16)
    y = conv_bn_relu(y, raw["w2"], raw["b2"], raw["bn2"], pad=0).astype(jnp.bfloat16)
    y = pool2x2(conv_bn_relu(y, raw["w3"], raw["b3"], raw["bn3"], pad=0)).astype(jnp.bfloat16)
    y = jnp.transpose(y, (0, 3, 1, 2)).reshape(y.shape[0], -1)          # NCHW flatten
    return jnp.dot(y, raw["wfc"].T.astype(jnp.bfloat16),
                   preferred_element_type=jnp.float32) + raw["bfc"]


if __name__ == "__main__":
    key = jax.random.PRNGKey(0)
    kx, kw = jax.random.split(key)
    # FMNIST-shaped input (NCHW): batch=2, 1 channel, 28x28 (required by fc = 5*5*64)
    x = jax.random.normal(kx, (2, 1, 28, 28), jnp.float32)
    raw = init_raw_params(kw, in_channels=1, num_classes=10)
    kparams = prepare_kernel_params(raw, num_classes=10)

    fwd = jax.jit(functools.partial(cnn_fmnist_forward, num_classes=10))
    out = jax.block_until_ready(fwd(x, kparams))
    assert out.shape == (2, 10), out.shape
    assert bool(jnp.all(jnp.isfinite(out)))

    # Validate against a pure-JAX reference with the same precision contract
    # (bf16 operands, f32 accumulation); differences are summation-order only.
    ref = jax.block_until_ready(jax.jit(reference_forward)(x, raw))
    max_err = float(jnp.max(jnp.abs(out - ref)))
    ref_scale = float(jnp.max(jnp.abs(ref)))
    assert max_err <= 2e-2 * max(1.0, ref_scale), (max_err, ref_scale)

    print("KERNEL_OK")
</pallas_src>

<mosaic_0001>
module attributes {stable_mosaic.version = 11 : i64} {
  func.func @_conv_band_kernel(%arg0: i32, %arg1: memref<1x14x224xbf16, #tpu.memory_space<vmem>>, %arg2: memref<3x224x384xbf16, #tpu.memory_space<vmem>>, %arg3: memref<1x384xf32, #tpu.memory_space<vmem>>, %arg4: memref<1x384xf32, #tpu.memory_space<vmem>>, %arg5: memref<1x12x384xbf16, #tpu.memory_space<vmem>>) attributes {dimension_semantics = [#tpu.dimension_semantics<parallel>], iteration_bounds = array<i64: 2>, scalar_prefetch = 0 : i64, scratch_operands = 0 : i64, tpu.core_type = #tpu.core_type<tc>, window_params = [{transform_indices = @transform_0, window_bounds = array<i64: 1, 14, 224>}, {pipeline_mode = #tpu.pipeline_mode<synchronous>, transform_indices = @transform_1, window_bounds = array<i64: 3, 224, 384>}, {pipeline_mode = #tpu.pipeline_mode<synchronous>, transform_indices = @transform_2, window_bounds = array<i64: 1, 384>}, {pipeline_mode = #tpu.pipeline_mode<synchronous>, transform_indices = @transform_3, window_bounds = array<i64: 1, 384>}, {transform_indices = @transform_4, window_bounds = array<i64: 1, 12, 384>}]} {
    %c0 = arith.constant 0 : index
    %c0_0 = arith.constant 0 : index
    %0 = vector.load %arg3[%c0, %c0_0] : memref<1x384xf32, #tpu.memory_space<vmem>>, vector<1x384xf32>
    %c0_1 = arith.constant 0 : index
    %c0_2 = arith.constant 0 : index
    %1 = vector.load %arg4[%c0_1, %c0_2] : memref<1x384xf32, #tpu.memory_space<vmem>>, vector<1x384xf32>
    %c0_3 = arith.constant 0 : index
    %c0_4 = arith.constant 0 : index
    %c0_5 = arith.constant 0 : index
    %2 = vector.load %arg1[%c0_3, %c0_4, %c0_5] : memref<1x14x224xbf16, #tpu.memory_space<vmem>>, vector<1x12x224xbf16>
    %3 = vector.shape_cast %2 : vector<1x12x224xbf16> to vector<12x224xbf16>
    %c0_6 = arith.constant 0 : index
    %c0_7 = arith.constant 0 : index
    %c0_8 = arith.constant 0 : index
    %4 = vector.load %arg2[%c0_6, %c0_7, %c0_8] : memref<3x224x384xbf16, #tpu.memory_space<vmem>>, vector<1x224x384xbf16>
    %5 = vector.shape_cast %4 : vector<1x224x384xbf16> to vector<224x384xbf16>
    %cst = arith.constant dense<0.000000e+00> : vector<12x384xf32>
    %6 = tpu.matmul %3, %5, %cst {dimension_numbers = #tpu.dot_dimension_numbers<[1], [0], [0], [1], [0, 0, 1, 1], [], []>} : vector<12x224xbf16>, vector<224x384xbf16>, vector<12x384xf32> -> vector<12x384xf32>
    %c0_9 = arith.constant 0 : index
    %c1 = arith.constant 1 : index
    %c0_10 = arith.constant 0 : index
    %7 = vector.load %arg1[%c0_9, %c1, %c0_10] : memref<1x14x224xbf16, #tpu.memory_space<vmem>>, vector<1x12x224xbf16>
    %8 = vector.shape_cast %7 : vector<1x12x224xbf16> to vector<12x224xbf16>
    %c1_11 = arith.constant 1 : index
    %c0_12 = arith.constant 0 : index
    %c0_13 = arith.constant 0 : index
    %9 = vector.load %arg2[%c1_11, %c0_12, %c0_13] : memref<3x224x384xbf16, #tpu.memory_space<vmem>>, vector<1x224x384xbf16>
    %10 = vector.shape_cast %9 : vector<1x224x384xbf16> to vector<224x384xbf16>
    %cst_14 = arith.constant dense<0.000000e+00> : vector<12x384xf32>
    %11 = tpu.matmul %8, %10, %cst_14 {dimension_numbers = #tpu.dot_dimension_numbers<[1], [0], [0], [1], [0, 0, 1, 1], [], []>} : vector<12x224xbf16>, vector<224x384xbf16>, vector<12x384xf32> -> vector<12x384xf32>
    %12 = arith.addf %6, %11 : vector<12x384xf32>
    %c0_15 = arith.constant 0 : index
    %c2 = arith.constant 2 : index
    %c0_16 = arith.constant 0 : index
    %13 = vector.load %arg1[%c0_15, %c2, %c0_16] : memref<1x14x224xbf16, #tpu.memory_space<vmem>>, vector<1x12x224xbf16>
    %14 = vector.shape_cast %13 : vector<1x12x224xbf16> to vector<12x224xbf16>
    %c2_17 = arith.constant 2 : index
    %c0_18 = arith.constant 0 : index
    %c0_19 = arith.constant 0 : index
    %15 = vector.load %arg2[%c2_17, %c0_18, %c0_19] : memref<3x224x384xbf16, #tpu.memory_space<vmem>>, vector<1x224x384xbf16>
    %16 = vector.shape_cast %15 : vector<1x224x384xbf16> to vector<224x384xbf16>
    %cst_20 = arith.constant dense<0.000000e+00> : vector<12x384xf32>
    %17 = tpu.matmul %14, %16, %cst_20 {dimension_numbers = #tpu.dot_dimension_numbers<[1], [0], [0], [1], [0, 0, 1, 1], [], []>} : vector<12x224xbf16>, vector<224x384xbf16>, vector<12x384xf32> -> vector<12x384xf32>
    %18 = arith.addf %12, %17 : vector<12x384xf32>
    %19 = vector.broadcast %0 : vector<1x384xf32> to vector<12x384xf32>
    %20 = arith.mulf %18, %19 : vector<12x384xf32>
    %21 = vector.broadcast %1 : vector<1x384xf32> to vector<12x384xf32>
    %22 = arith.addf %20, %21 : vector<12x384xf32>
    %cst_21 = arith.constant 0.000000e+00 : f32
    %23 = vector.broadcast %cst_21 : f32 to vector<12x384xf32>
    %24 = arith.maximumf %22, %23 : vector<12x384xf32>
    %25 = arith.truncf %24 : vector<12x384xf32> to vector<12x384xbf16>
    %c0_22 = arith.constant 0 : index
    %c0_23 = arith.constant 0 : index
    %c0_24 = arith.constant 0 : index
    %26 = vector.load %arg5[%c0_22, %c0_23, %c0_24] : memref<1x12x384xbf16, #tpu.memory_space<vmem>>, vector<1x12x384xbf16>
    %27 = vector.shape_cast %26 : vector<1x12x384xbf16> to vector<12x384xbf16>
    %28 = vector.shape_cast %25 : vector<12x384xbf16> to vector<1x12x384xbf16>
    tpu.vector_store %arg5[%c0_22, %c0_23, %c0_24], %28 {strides = array<i32>} : memref<1x12x384xbf16, #tpu.memory_space<vmem>>, vector<1x12x384xbf16>,
    return
  }
  func.func @transform_0(%arg0: i32) -> (i32, i32, i32) {
    %c0_i32 = arith.constant 0 : i32
    %c0_i32_0 = arith.constant 0 : i32
    %c0_i32_1 = arith.constant 0 : i32
    return %arg0, %c0_i32, %c0_i32_0 : i32, i32, i32
  }
  func.func @transform_1(%arg0: i32) -> (i32, i32, i32) {
    %c0_i32 = arith.constant 0 : i32
    %c0_i32_0 = arith.constant 0 : i32
    %c0_i32_1 = arith.constant 0 : i32
    %c0_i32_2 = arith.constant 0 : i32
    return %c0_i32, %c0_i32_0, %c0_i32_1 : i32, i32, i32
  }
  func.func @transform_2(%arg0: i32) -> (i32, i32) {
    %c0_i32 = arith.constant 0 : i32
    %c0_i32_0 = arith.constant 0 : i32
    %c0_i32_1 = arith.constant 0 : i32
    return %c0_i32, %c0_i32_0 : i32, i32
  }
  func.func @transform_3(%arg0: i32) -> (i32, i32) {
    %c0_i32 = arith.constant 0 : i32
    %c0_i32_0 = arith.constant 0 : i32
    %c0_i32_1 = arith.constant 0 : i32
    return %c0_i32, %c0_i32_0 : i32, i32
  }
  func.func @transform_4(%arg0: i32) -> (i32, i32, i32) {
    %c0_i32 = arith.constant 0 : i32
    %c0_i32_0 = arith.constant 0 : i32
    %c0_i32_1 = arith.constant 0 : i32
    return %arg0, %c0_i32, %c0_i32_0 : i32, i32, i32
  }
}

module attributes {stable_mosaic.version = 11 : i64} {
  func.func @_conv_band_kernel(%arg0: i32, %arg1: memref<1x16x64xbf16, #tpu.memory_space<vmem>>, %arg2: memref<3x64x896xbf16, #tpu.memory_space<vmem>>, %arg3: memref<1x896xf32, #tpu.memory_space<vmem>>, %arg4: memref<1x896xf32, #tpu.memory_space<vmem>>, %arg5: memref<1x14x224xbf16, #tpu.memory_space<vmem>>) attributes {dimension_semantics = [#tpu.dimension_semantics<parallel>], iteration_bounds = array<i64: 2>, scalar_prefetch = 0 : i64, scratch_operands = 0 : i64, tpu.core_type = #tpu.core_type<tc>, window_params = [{transform_indices = @transform_0, window_bounds = array<i64: 1, 16, 64>}, {pipeline_mode = #tpu.pipeline_mode<synchronous>, transform_indices = @transform_1, window_bounds = array<i64: 3, 64, 896>}, {pipeline_mode = #tpu.pipeline_mode<synchronous>, transform_indices = @transform_2, window_bounds = array<i64: 1, 896>}, {pipeline_mode = #tpu.pipeline_mode<synchronous>, transform_indices = @transform_3, window_bounds = array<i64: 1, 896>}, {transform_indices = @transform_4, window_bounds = array<i64: 1, 14, 224>}]} {
    %c0 = arith.constant 0 : index
    %c0_0 = arith.constant 0 : index
    %0 = vector.load %arg3[%c0, %c0_0] : memref<1x896xf32, #tpu.memory_space<vmem>>, vector<1x896xf32>
    %c0_1 = arith.constant 0 : index
    %c0_2 = arith.constant 0 : index
    %1 = vector.load %arg4[%c0_1, %c0_2] : memref<1x896xf32, #tpu.memory_space<vmem>>, vector<1x896xf32>
    %c0_3 = arith.constant 0 : index
    %c0_4 = arith.constant 0 : index
    %c0_5 = arith.constant 0 : index
    %2 = vector.load %arg1[%c0_3, %c0_4, %c0_5] : memref<1x16x64xbf16, #tpu.memory_space<vmem>>, vector<1x14x64xbf16>
    %3 = vector.shape_cast %2 : vector<1x14x64xbf16> to vector<14x64xbf16>
    %c0_6 = arith.constant 0 : index
    %c0_7 = arith.constant 0 : index
    %c0_8 = arith.constant 0 : index
    %4 = vector.load %arg2[%c0_6, %c0_7, %c0_8] : memref<3x64x896xbf16, #tpu.memory_space<vmem>>, vector<1x64x896xbf16>
    %5 = vector.shape_cast %4 : vector<1x64x896xbf16> to vector<64x896xbf16>
    %cst = arith.constant dense<0.000000e+00> : vector<14x896xf32>
    %6 = tpu.matmul %3, %5, %cst {dimension_numbers = #tpu.dot_dimension_numbers<[1], [0], [0], [1], [0, 0, 1, 1], [], []>} : vector<14x64xbf16>, vector<64x896xbf16>, vector<14x896xf32> -> vector<14x896xf32>
    %c0_9 = arith.constant 0 : index
    %c1 = arith.constant 1 : index
    %c0_10 = arith.constant 0 : index
    %7 = vector.load %arg1[%c0_9, %c1, %c0_10] : memref<1x16x64xbf16, #tpu.memory_space<vmem>>, vector<1x14x64xbf16>
    %8 = vector.shape_cast %7 : vector<1x14x64xbf16> to vector<14x64xbf16>
    %c1_11 = arith.constant 1 : index
    %c0_12 = arith.constant 0 : index
    %c0_13 = arith.constant 0 : index
    %9 = vector.load %arg2[%c1_11, %c0_12, %c0_13] : memref<3x64x896xbf16, #tpu.memory_space<vmem>>, vector<1x64x896xbf16>
    %10 = vector.shape_cast %9 : vector<1x64x896xbf16> to vector<64x896xbf16>
    %cst_14 = arith.constant dense<0.000000e+00> : vector<14x896xf32>
    %11 = tpu.matmul %8, %10, %cst_14 {dimension_numbers = #tpu.dot_dimension_numbers<[1], [0], [0], [1], [0, 0, 1, 1], [], []>} : vector<14x64xbf16>, vector<64x896xbf16>, vector<14x896xf32> -> vector<14x896xf32>
    %12 = arith.addf %6, %11 : vector<14x896xf32>
    %c0_15 = arith.constant 0 : index
    %c2 = arith.constant 2 : index
    %c0_16 = arith.constant 0 : index
    %13 = vector.load %arg1[%c0_15, %c2, %c0_16] : memref<1x16x64xbf16, #tpu.memory_space<vmem>>, vector<1x14x64xbf16>
    %14 = vector.shape_cast %13 : vector<1x14x64xbf16> to vector<14x64xbf16>
    %c2_17 = arith.constant 2 : index
    %c0_18 = arith.constant 0 : index
    %c0_19 = arith.constant 0 : index
    %15 = vector.load %arg2[%c2_17, %c0_18, %c0_19] : memref<3x64x896xbf16, #tpu.memory_space<vmem>>, vector<1x64x896xbf16>
    %16 = vector.shape_cast %15 : vector<1x64x896xbf16> to vector<64x896xbf16>
    %cst_20 = arith.constant dense<0.000000e+00> : vector<14x896xf32>
    %17 = tpu.matmul %14, %16, %cst_20 {dimension_numbers = #tpu.dot_dimension_numbers<[1], [0], [0], [1], [0, 0, 1, 1], [], []>} : vector<14x64xbf16>, vector<64x896xbf16>, vector<14x896xf32> -> vector<14x896xf32>
    %18 = arith.addf %12, %17 : vector<14x896xf32>
    %19 = vector.broadcast %0 : vector<1x896xf32> to vector<14x896xf32>
    %20 = arith.mulf %18, %19 : vector<14x896xf32>
    %21 = vector.broadcast %1 : vector<1x896xf32> to vector<14x896xf32>
    %22 = arith.addf %20, %21 : vector<14x896xf32>
    %cst_21 = arith.constant 0.000000e+00 : f32
    %23 = vector.broadcast %cst_21 : f32 to vector<14x896xf32>
    %24 = arith.maximumf %22, %23 : vector<14x896xf32>
    %25 = vector.extract_strided_slice %24 {offsets = [0, 0], sizes = [14, 224], strides = [1, 1]} : vector<14x896xf32> to vector<14x224xf32>
    %26 = vector.extract_strided_slice %24 {offsets = [0, 224], sizes = [14, 224], strides = [1, 1]} : vector<14x896xf32> to vector<14x224xf32>
    %27 = arith.maximumf %25, %26 : vector<14x224xf32>
    %28 = vector.extract_strided_slice %24 {offsets = [0, 448], sizes = [14, 224], strides = [1, 1]} : vector<14x896xf32> to vector<14x224xf32>
    %29 = vector.extract_strided_slice %24 {offsets = [0, 672], sizes = [14, 224], strides = [1, 1]} : vector<14x896xf32> to vector<14x224xf32>
    %30 = arith.maximumf %28, %29 : vector<14x224xf32>
    %31 = arith.maximumf %27, %30 : vector<14x224xf32>
    %32 = arith.truncf %31 : vector<14x224xf32> to vector<14x224xbf16>
    %c0_22 = arith.constant 0 : index
    %c0_23 = arith.constant 0 : index
    %c0_24 = arith.constant 0 : index
    %33 = vector.load %arg5[%c0_22, %c0_23, %c0_24] : memref<1x14x224xbf16, #tpu.memory_space<vmem>>, vector<1x14x224xbf16>
    %34 = vector.shape_cast %33 : vector<1x14x224xbf16> to vector<14x224xbf16>
    %35 = vector.shape_cast %32 : vector<14x224xbf16> to vector<1x14x224xbf16>
    tpu.vector_store %arg5[%c0_22, %c0_23, %c0_24], %35 {strides = array<i32>} : memref<1x14x224xbf16, #tpu.memory_space<vmem>>, vector<1x14x224xbf16>,
    return
  }
  func.func @transform_0(%arg0: i32) -> (i32, i32, i32) {
    %c0_i32 = arith.constant 0 : i32
    %c0_i32_0 = arith.constant 0 : i32
    %c0_i32_1 = arith.constant 0 : i32
    return %arg0, %c0_i32, %c0_i32_0 : i32, i32, i32
  }
  func.func @transform_1(%arg0: i32) -> (i32, i32, i32) {
    %c0_i32 = arith.constant 0 : i32
    %c0_i32_0 = arith.constant 0 : i32
    %c0_i32_1 = arith.constant 0 : i32
    %c0_i32_2 = arith.constant 0 : i32
    return %c0_i32, %c0_i32_0, %c0_i32_1 : i32, i32, i32
  }
  func.func @transform_2(%arg0: i32) -> (i32, i32) {
    %c0_i32 = arith.constant 0 : i32
    %c0_i32_0 = arith.constant 0 : i32
    %c0_i32_1 = arith.constant 0 : i32
    return %c0_i32, %c0_i32_0 : i32, i32
  }
  func.func @transform_3(%arg0: i32) -> (i32, i32) {
    %c0_i32 = arith.constant 0 : i32
    %c0_i32_0 = arith.constant 0 : i32
    %c0_i32_1 = arith.constant 0 : i32
    return %c0_i32, %c0_i32_0 : i32, i32
  }
  func.func @transform_4(%arg0: i32) -> (i32, i32, i32) {
    %c0_i32 = arith.constant 0 : i32
    %c0_i32_0 = arith.constant 0 : i32
    %c0_i32_1 = arith.constant 0 : i32
    return %arg0, %c0_i32, %c0_i32_0 : i32, i32, i32
  }
}

module attributes {stable_mosaic.version = 11 : i64} {
  func.func @_conv_band_fc_kernel(%arg0: i32, %arg1: memref<1x6x768xbf16, #tpu.memory_space<vmem>>, %arg2: memref<2x768x1280xbf16, #tpu.memory_space<vmem>>, %arg3: memref<1x1280xf32, #tpu.memory_space<vmem>>, %arg4: memref<1x1280xf32, #tpu.memory_space<vmem>>, %arg5: memref<320x640xbf16, #tpu.memory_space<vmem>>, %arg6: memref<1x128xf32, #tpu.memory_space<vmem>>, %arg7: memref<1x1x128xf32, #tpu.memory_space<vmem>>) attributes {dimension_semantics = [#tpu.dimension_semantics<parallel>], iteration_bounds = array<i64: 2>, scalar_prefetch = 0 : i64, scratch_operands = 0 : i64, tpu.core_type = #tpu.core_type<tc>, window_params = [{transform_indices = @transform_0, window_bounds = array<i64: 1, 6, 768>}, {pipeline_mode = #tpu.pipeline_mode<synchronous>, transform_indices = @transform_1, window_bounds = array<i64: 2, 768, 1280>}, {pipeline_mode = #tpu.pipeline_mode<synchronous>, transform_indices = @transform_2, window_bounds = array<i64: 1, 1280>}, {pipeline_mode = #tpu.pipeline_mode<synchronous>, transform_indices = @transform_3, window_bounds = array<i64: 1, 1280>}, {pipeline_mode = #tpu.pipeline_mode<synchronous>, transform_indices = @transform_4, window_bounds = array<i64: 320, 640>}, {pipeline_mode = #tpu.pipeline_mode<synchronous>, transform_indices = @transform_5, window_bounds = array<i64: 1, 128>}, {transform_indices = @transform_6, window_bounds = array<i64: 1, 1, 128>}]} {
    %c0 = arith.constant 0 : index
    %c0_0 = arith.constant 0 : index
    %0 = vector.load %arg3[%c0, %c0_0] : memref<1x1280xf32, #tpu.memory_space<vmem>>, vector<1x1280xf32>
    %c0_1 = arith.constant 0 : index
    %c0_2 = arith.constant 0 : index
    %1 = vector.load %arg4[%c0_1, %c0_2] : memref<1x1280xf32, #tpu.memory_space<vmem>>, vector<1x1280xf32>
    %c0_3 = arith.constant 0 : index
    %c0_4 = arith.constant 0 : index
    %2 = vector.load %arg5[%c0_3, %c0_4] : memref<320x640xbf16, #tpu.memory_space<vmem>>, vector<320x640xbf16>
    %c0_5 = arith.constant 0 : index
    %c0_6 = arith.constant 0 : index
    %3 = vector.load %arg6[%c0_5, %c0_6] : memref<1x128xf32, #tpu.memory_space<vmem>>, vector<1x128xf32>
    %c0_7 = arith.constant 0 : index
    %c0_8 = arith.constant 0 : index
    %c0_9 = arith.constant 0 : index
    %4 = vector.load %arg1[%c0_7, %c0_8, %c0_9] : memref<1x6x768xbf16, #tpu.memory_space<vmem>>, vector<1x5x768xbf16>
    %5 = vector.shape_cast %4 : vector<1x5x768xbf16> to vector<5x768xbf16>
    %c0_10 = arith.constant 0 : index
    %c0_11 = arith.constant 0 : index
    %c0_12 = arith.constant 0 : index
    %6 = vector.load %arg2[%c0_10, %c0_11, %c0_12] : memref<2x768x1280xbf16, #tpu.memory_space<vmem>>, vector<1x768x1280xbf16>
    %7 = vector.shape_cast %6 : vector<1x768x1280xbf16> to vector<768x1280xbf16>
    %cst = arith.constant dense<0.000000e+00> : vector<5x1280xf32>
    %8 = tpu.matmul %5, %7, %cst {dimension_numbers = #tpu.dot_dimension_numbers<[1], [0], [0], [1], [0, 0, 1, 1], [], []>} : vector<5x768xbf16>, vector<768x1280xbf16>, vector<5x1280xf32> -> vector<5x1280xf32>
    %c0_13 = arith.constant 0 : index
    %c1 = arith.constant 1 : index
    %c0_14 = arith.constant 0 : index
    %9 = vector.load %arg1[%c0_13, %c1, %c0_14] : memref<1x6x768xbf16, #tpu.memory_space<vmem>>, vector<1x5x768xbf16>
    %10 = vector.shape_cast %9 : vector<1x5x768xbf16> to vector<5x768xbf16>
    %c1_15 = arith.constant 1 : index
    %c0_16 = arith.constant 0 : index
    %c0_17 = arith.constant 0 : index
    %11 = vector.load %arg2[%c1_15, %c0_16, %c0_17] : memref<2x768x1280xbf16, #tpu.memory_space<vmem>>, vector<1x768x1280xbf16>
    %12 = vector.shape_cast %11 : vector<1x768x1280xbf16> to vector<768x1280xbf16>
    %cst_18 = arith.constant dense<0.000000e+00> : vector<5x1280xf32>
    %13 = tpu.matmul %10, %12, %cst_18 {dimension_numbers = #tpu.dot_dimension_numbers<[1], [0], [0], [1], [0, 0, 1, 1], [], []>} : vector<5x768xbf16>, vector<768x1280xbf16>, vector<5x1280xf32> -> vector<5x1280xf32>
    %14 = arith.addf %8, %13 : vector<5x1280xf32>
    %15 = vector.broadcast %0 : vector<1x1280xf32> to vector<5x1280xf32>
    %16 = arith.mulf %14, %15 : vector<5x1280xf32>
    %17 = vector.broadcast %1 : vector<1x1280xf32> to vector<5x1280xf32>
    %18 = arith.addf %16, %17 : vector<5x1280xf32>
    %cst_19 = arith.constant 0.000000e+00 : f32
    %19 = vector.broadcast %cst_19 : f32 to vector<5x1280xf32>
    %20 = arith.maximumf %18, %19 : vector<5x1280xf32>
    %21 = vector.extract_strided_slice %20 {offsets = [0, 0], sizes = [5, 320], strides = [1, 1]} : vector<5x1280xf32> to vector<5x320xf32>
    %22 = vector.extract_strided_slice %20 {offsets = [0, 320], sizes = [5, 320], strides = [1, 1]} : vector<5x1280xf32> to vector<5x320xf32>
    %23 = arith.maximumf %21, %22 : vector<5x320xf32>
    %24 = vector.extract_strided_slice %20 {offsets = [0, 640], sizes = [5, 320], strides = [1, 1]} : vector<5x1280xf32> to vector<5x320xf32>
    %25 = vector.extract_strided_slice %20 {offsets = [0, 960], sizes = [5, 320], strides = [1, 1]} : vector<5x1280xf32> to vector<5x320xf32>
    %26 = arith.maximumf %24, %25 : vector<5x320xf32>
    %27 = arith.maximumf %23, %26 : vector<5x320xf32>
    %28 = arith.truncf %27 : vector<5x320xf32> to vector<5x320xbf16>
    %cst_20 = arith.constant dense<0.000000e+00> : vector<5x640xf32>
    %29 = tpu.matmul %28, %2, %cst_20 {dimension_numbers = #tpu.dot_dimension_numbers<[1], [0], [0], [1], [0, 0, 1, 1], [], []>} : vector<5x320xbf16>, vector<320x640xbf16>, vector<5x640xf32> -> vector<5x640xf32>
    %30 = vector.extract_strided_slice %29 {offsets = [0, 0], sizes = [1, 128], strides = [1, 1]} : vector<5x640xf32> to vector<1x128xf32>
    %31 = arith.addf %3, %30 : vector<1x128xf32>
    %32 = vector.extract_strided_slice %29 {offsets = [1, 128], sizes = [1, 128], strides = [1, 1]} : vector<5x640xf32> to vector<1x128xf32>
    %33 = arith.addf %31, %32 : vector<1x128xf32>
    %34 = vector.extract_strided_slice %29 {offsets = [2, 256], sizes = [1, 128], strides = [1, 1]} : vector<5x640xf32> to vector<1x128xf32>
    %35 = arith.addf %33, %34 : vector<1x128xf32>
    %36 = vector.extract_strided_slice %29 {offsets = [3, 384], sizes = [1, 128], strides = [1, 1]} : vector<5x640xf32> to vector<1x128xf32>
    %37 = arith.addf %35, %36 : vector<1x128xf32>
    %38 = vector.extract_strided_slice %29 {offsets = [4, 512], sizes = [1, 128], strides = [1, 1]} : vector<5x640xf32> to vector<1x128xf32>
    %39 = arith.addf %37, %38 : vector<1x128xf32>
    %c0_21 = arith.constant 0 : index
    %c0_22 = arith.constant 0 : index
    %c0_23 = arith.constant 0 : index
    %40 = vector.load %arg7[%c0_21, %c0_22, %c0_23] : memref<1x1x128xf32, #tpu.memory_space<vmem>>, vector<1x1x128xf32>
    %41 = vector.shape_cast %40 : vector<1x1x128xf32> to vector<1x128xf32>
    %42 = vector.shape_cast %39 : vector<1x128xf32> to vector<1x1x128xf32>
    tpu.vector_store %arg7[%c0_21, %c0_22, %c0_23], %42 {strides = array<i32>} : memref<1x1x128xf32, #tpu.memory_space<vmem>>, vector<1x1x128xf32>,
    return
  }
  func.func @transform_0(%arg0: i32) -> (i32, i32, i32) {
    %c0_i32 = arith.constant 0 : i32
    %c0_i32_0 = arith.constant 0 : i32
    %c0_i32_1 = arith.constant 0 : i32
    return %arg0, %c0_i32, %c0_i32_0 : i32, i32, i32
  }
  func.func @transform_1(%arg0: i32) -> (i32, i32, i32) {
    %c0_i32 = arith.constant 0 : i32
    %c0_i32_0 = arith.constant 0 : i32
    %c0_i32_1 = arith.constant 0 : i32
    %c0_i32_2 = arith.constant 0 : i32
    return %c0_i32, %c0_i32_0, %c0_i32_1 : i32, i32, i32
  }
  func.func @transform_2(%arg0: i32) -> (i32, i32) {
    %c0_i32 = arith.constant 0 : i32
    %c0_i32_0 = arith.constant 0 : i32
    %c0_i32_1 = arith.constant 0 : i32
    return %c0_i32, %c0_i32_0 : i32, i32
  }
  func.func @transform_3(%arg0: i32) -> (i32, i32) {
    %c0_i32 = arith.constant 0 : i32
    %c0_i32_0 = arith.constant 0 : i32
    %c0_i32_1 = arith.constant 0 : i32
    return %c0_i32, %c0_i32_0 : i32, i32
  }
  func.func @transform_4(%arg0: i32) -> (i32, i32) {
    %c0_i32 = arith.constant 0 : i32
    %c0_i32_0 = arith.constant 0 : i32
    %c0_i32_1 = arith.constant 0 : i32
    return %c0_i32, %c0_i32_0 : i32, i32
  }
  func.func @transform_5(%arg0: i32) -> (i32, i32) {
    %c0_i32 = arith.constant 0 : i32
    %c0_i32_0 = arith.constant 0 : i32
    %c0_i32_1 = arith.constant 0 : i32
    return %c0_i32, %c0_i32_0 : i32, i32
  }
  func.func @transform_6(%arg0: i32) -> (i32, i32, i32) {
    %c0_i32 = arith.constant 0 : i32
    %c0_i32_0 = arith.constant 0 : i32
    %c0_i32_1 = arith.constant 0 : i32
    return %arg0, %c0_i32, %c0_i32_0 : i32, i32, i32
  }
}

</mosaic_0001>

<llo_original>
// kernel: cnn_fmnist_forward.3
$region0: #{cnn_fmnist_forward.3}
  #allocation0 [shape = 'u32[]', space=smem, size = 0x4, offset = 0x4, fixed_abs, tag = 'smem constant byte address 0x4 - core index']
  #allocation1 [shape = 'u32[144,128]{1,0:T(1,128)}', space=vmem, size = 0x12000, scoped, tag = 'internal scratch']
  %s0 = inlined_call_operand.vmem [shape: bf16[2,16,64], index: 0, kind: input, shape index: {}]
  %s1 = inlined_call_operand.hbm [shape: bf16[3,64,896], index: 1, kind: input, shape index: {}]
  %s2 = inlined_call_operand.hbm [shape: f32[1,896], index: 2, kind: input, shape index: {}]
  %s3 = inlined_call_operand.hbm [shape: f32[1,896], index: 3, kind: input, shape index: {}]
  %s4 = inlined_call_operand.vmem [shape: bf16[2,14,224], index: 4, kind: output, shape index: {}]
  %s5 = sld [smem:[#allocation0]]
  $region61: #{cnn_fmnist_forward.3} parent=0
    _
  %s7 = ssub.s32 1, %s5
  %s8 = scalar_select 0, %s7, %s5
  $region1: #{cnn_fmnist_forward.3} parent=0
    #allocation2 [shape = 'u8[344064]{0}', space=vmem, size = 0x54000, scoped, tag = 'input window, operand 1, single buffered']
    #allocation3 [shape = 's32[2]{0}', space=sflag, size = 0x8, scoped, tag = 'scoped memory for cnn_fmnist_forward.3']
    #allocation4 [shape = 'u8[3584]{0}', space=vmem, size = 0x1000, scoped, tag = 'input window, operand 2, single buffered']
    #allocation5 [shape = 's32[1]{0}', space=sflag, size = 0x4, scoped, tag = 'scoped memory for cnn_fmnist_forward.3']
    #allocation6 [shape = 'u8[3584]{0}', space=vmem, size = 0x1000, scoped, tag = 'input window, operand 3, single buffered']
    %9 = vsyncpa [#allocation3], 0
    %10 = vsyncpa [#allocation5], 0
    loop: start=0, step=1, limit=4
    $region2: #{cnn_fmnist_forward.3} parent=1 // loop_pre_header
      _
    $region3: #{cnn_fmnist_forward.3} parent=1 // loop_header
      %s12 = sphi 0, %s16
      %p13 = scmp.ge.s32.totalorder %s12, 4
      %s22 = sphi 0, %s24
      %s25 = sphi 0, %s22
      %s26 = sphi 0, %s25
      %s42 = sphi 0, %s26
      %s46 = sphi 0, %s46
      %s48 = sphi 0, %s46
      %s49 = sphi 0, %s48
      %s63 = sphi 0, %s49
      %s67 = sphi 0, %s67
      %s69 = sphi 0, %s67
      %s70 = sphi 0, %s69
      %s84 = sphi 0, %s70
      %s88 = sphi 0, %s88
      %s90 = sphi 0, %s88
      %s91 = sphi 0, %s90
      %s105 = sphi 0, %s91
      %s111 = sphi 0, %s113
      %s114 = sphi 0, %s111
      %s115 = sphi 0, %s114
      %s131 = sphi 0, %s115
    $region4: #{cnn_fmnist_forward.3} parent=1 // loop_header_branch
      %15 = sbr.rel (%p13) target = $region8
    $region5: #{cnn_fmnist_forward.3} parent=1 // loop_body
      %s17 = ssub.s32 %s12, 1
      %s18 = ssub.s32 %s12, 2
      %s19 = sadd.s32 %s12, 1
      %s20 = ssub.s32 %s12, %s19
      %p21 = scmp.eq.s32.totalorder %s20, 0
      %s23 = sadd.s32 %s22, 1
      %s24 = scalar_select %p21, %s22, %s23
      %p27 = pneg %p21
      %p28 = scmp.eq.s32.totalorder %s12, 1
      %p29 = por %p27, %p28
      %p30 = scmp.ne.s32.totalorder %s22, %s25
      %p31 = scmp.eq.s32.totalorder %s12, 0
      %p32 = por %p30, %p31
      %p33 = scmp.ne.s32.totalorder %s22, %s25
      %p34 = scmp.eq.s32.totalorder %s17, 1
      %p35 = por %p33, %p34
      %p36 = scmp.ne.s32.totalorder %s25, %s26
      %p37 = scmp.eq.s32.totalorder %s17, 0
      %p38 = por %p36, %p37
      %p39 = scmp.ne.s32.totalorder %s25, %s26
      %p40 = scmp.eq.s32.totalorder %s18, 1
      %p41 = por %p39, %p40
      %p43 = scmp.ne.s32.totalorder %s26, %s42
      %p44 = scmp.eq.s32.totalorder %s18, 0
      %p45 = por %p43, %p44
      %s47 = sadd.s32 %s46, 1
      %p50 = scmp.eq.s32.totalorder %s12, 1
      %p51 = scmp.ne.s32.totalorder %s46, %s48
      %p52 = scmp.eq.s32.totalorder %s12, 0
      %p53 = por %p51, %p52
      %p54 = scmp.ne.s32.totalorder %s46, %s48
      %p55 = scmp.eq.s32.totalorder %s17, 1
      %p56 = por %p54, %p55
      %p57 = scmp.ne.s32.totalorder %s48, %s49
      %p58 = scmp.eq.s32.totalorder %s17, 0
      %p59 = por %p57, %p58
      %p60 = scmp.ne.s32.totalorder %s48, %s49
      %p61 = scmp.eq.s32.totalorder %s18, 1
      %p62 = por %p60, %p61
      %p64 = scmp.ne.s32.totalorder %s49, %s63
      %p65 = scmp.eq.s32.totalorder %s18, 0
      %p66 = por %p64, %p65
      %s68 = sadd.s32 %s67, 1
      %p71 = scmp.eq.s32.totalorder %s12, 1
      %p72 = scmp.ne.s32.totalorder %s67, %s69
      %p73 = scmp.eq.s32.totalorder %s12, 0
      %p74 = por %p72, %p73
      %p75 = scmp.ne.s32.totalorder %s67, %s69
      %p76 = scmp.eq.s32.totalorder %s17, 1
      %p77 = por %p75, %p76
      %p78 = scmp.ne.s32.totalorder %s69, %s70
      %p79 = scmp.eq.s32.totalorder %s17, 0
      %p80 = por %p78, %p79
      %p81 = scmp.ne.s32.totalorder %s69, %s70
      %p82 = scmp.eq.s32.totalorder %s18, 1
      %p83 = por %p81, %p82
      %p85 = scmp.ne.s32.totalorder %s70, %s84
      %p86 = scmp.eq.s32.totalorder %s18, 0
      %p87 = por %p85, %p86
      %s89 = sadd.s32 %s88, 1
      %p92 = scmp.eq.s32.totalorder %s12, 1
      %p93 = scmp.ne.s32.totalorder %s88, %s90
      %p94 = scmp.eq.s32.totalorder %s12, 0
      %p95 = por %p93, %p94
      %p96 = scmp.ne.s32.totalorder %s88, %s90
      %p97 = scmp.eq.s32.totalorder %s17, 1
      %p98 = por %p96, %p97
      %p99 = scmp.ne.s32.totalorder %s90, %s91
      %p100 = scmp.eq.s32.totalorder %s17, 0
      %p101 = por %p99, %p100
      %p102 = scmp.ne.s32.totalorder %s90, %s91
      %p103 = scmp.eq.s32.totalorder %s18, 1
      %p104 = por %p102, %p103
      %p106 = scmp.ne.s32.totalorder %s91, %s105
      %p107 = scmp.eq.s32.totalorder %s18, 0
      %p108 = por %p106, %p107
      %s109 = ssub.s32 %s12, %s19
      %p110 = scmp.eq.s32.totalorder %s109, 0
      %s112 = sadd.s32 %s111, 1
      %s113 = scalar_select %p110, %s111, %s112
      %p116 = pneg %p110
      %p117 = scmp.eq.s32.totalorder %s12, 1
      %p118 = por %p116, %p117
      %p119 = scmp.ne.s32.totalorder %s111, %s114
      %p120 = scmp.eq.s32.totalorder %s12, 0
      %p121 = por %p119, %p120
      %p122 = scmp.ne.s32.totalorder %s111, %s114
      %p123 = scmp.eq.s32.totalorder %s17, 1
      %p124 = por %p122, %p123
      %p125 = scmp.ne.s32.totalorder %s114, %s115
      %p126 = scmp.eq.s32.totalorder %s17, 0
      %p127 = por %p125, %p126
      %p128 = scmp.ne.s32.totalorder %s114, %s115
      %p129 = scmp.eq.s32.totalorder %s18, 1
      %p130 = por %p128, %p129
      %p132 = scmp.ne.s32.totalorder %s115, %s131
      %p133 = scmp.eq.s32.totalorder %s18, 0
      %p134 = por %p132, %p133
      %p135 = scmp.le.s32.totalorder 1, %s12
      %p136 = scmp.lt.s32.totalorder %s12, 3
      %p137 = pnand %p135, %p136
      %p138 = pneg %p137
      // Predicated region
      $region9: #{cnn_fmnist_forward.3} parent=5 // pred_check
        _
      $region10: #{cnn_fmnist_forward.3} parent=5 // pred_check_branch
        %140 = sbr.rel (%p137) target = $region12
      $region11: #{cnn_fmnist_forward.3} parent=5 // pred_region
        %s141 = ssub.s32 %s12, 1
        // Predicated region
        $region13: #{cnn_fmnist_forward.3} parent=11 // pred_check
          %p142 = pneg %p59
        $region14: #{cnn_fmnist_forward.3} parent=11 // pred_check_branch
          %144 = sbr.rel (%p142) target = $region16
        $region15: #{cnn_fmnist_forward.3} parent=11 // pred_region
          %s146 = ssub.s32 10752, 10752
          %147 = vsyncadd [#allocation3], %s146
          %s148 = sshll.u32 [#allocation2], 4
          %s149 = int_to_ptr.vmem [resolvable:$true] %s148
          %154 = dma.hbm_to_vmem [thread:$0]  %s1, 10752, %s149, [#allocation3], 448, 448, 28
        $region16: #{cnn_fmnist_forward.3} parent=11 // pred_fallthru
          _
        // Predicated region
        $region17: #{cnn_fmnist_forward.3} parent=11 // pred_check
          %p155 = pneg %p80
        $region18: #{cnn_fmnist_forward.3} parent=11 // pred_check_branch
          %157 = sbr.rel (%p155) target = $region20
        $region19: #{cnn_fmnist_forward.3} parent=11 // pred_region
          %s159 = ssub.s32 112, 112
          %160 = vsyncadd [#allocation5], %s159
          %s162 = sshll.u32 [#allocation4], 4
          %s163 = int_to_ptr.vmem [resolvable:$true] %s162
          %165 = dma.hbm_to_vmem [thread:$0]  %s2, 112, %s163, [#allocation5]
        $region20: #{cnn_fmnist_forward.3} parent=11 // pred_fallthru
          _
        // Predicated region
        $region21: #{cnn_fmnist_forward.3} parent=11 // pred_check
          %p166 = pneg %p101
        $region22: #{cnn_fmnist_forward.3} parent=11 // pred_check_branch
          %168 = sbr.rel (%p166) target = $region24
        $region23: #{cnn_fmnist_forward.3} parent=11 // pred_region
          %s170 = ssub.s32 112, 112
          %171 = vsyncadd [#allocation5], %s170
          %s173 = sshll.u32 [#allocation6], 4
          %s174 = int_to_ptr.vmem [resolvable:$true] %s173
          %176 = dma.hbm_to_vmem [thread:$0]  %s3, 112, %s174, [#allocation5]
        $region24: #{cnn_fmnist_forward.3} parent=11 // pred_fallthru
          _
      $region12: #{cnn_fmnist_forward.3} parent=5 // pred_fallthru
        _
      %p177 = scmp.lt.s32.totalorder %s12, 2
      // Predicated region
      $region25: #{cnn_fmnist_forward.3} parent=5 // pred_check
        %p178 = pneg %p177
      $region26: #{cnn_fmnist_forward.3} parent=5 // pred_check_branch
        %180 = sbr.rel (%p178) target = $region28
      $region27: #{cnn_fmnist_forward.3} parent=5 // pred_region
        // Predicated region
        $region29: #{cnn_fmnist_forward.3} parent=27 // pred_check
          %p181 = pneg %p32
        $region30: #{cnn_fmnist_forward.3} parent=27 // pred_check_branch
          %183 = sbr.rel (%p181) target = $region32
        $region31: #{cnn_fmnist_forward.3} parent=27 // pred_region
          %p184 = scmp.lt.s32.totalorder %s12, 1
          %s185 = scalar_select %p184, %s12, 1
          %s186 = smul.addr %s185, 2
          %s187 = smul.addr %s186, 4
          %s188 = scalar_lea.vmem %s0, %s187
        $region32: #{cnn_fmnist_forward.3} parent=27 // pred_fallthru
          _
      $region28: #{cnn_fmnist_forward.3} parent=5 // pred_fallthru
        _
      %p189 = scmp.le.s32.totalorder 1, %s12
      %p190 = scmp.lt.s32.totalorder %s12, 3
      %p191 = pnand %p189, %p190
      %p192 = pneg %p191
      // Predicated region
      $region33: #{cnn_fmnist_forward.3} parent=5 // pred_check
        _
      $region34: #{cnn_fmnist_forward.3} parent=5 // pred_check_branch
        %194 = sbr.rel (%p191) target = $region36
      $region35: #{cnn_fmnist_forward.3} parent=5 // pred_region
        %s195 = ssub.s32 %s12, 1
        // Predicated region
        $region37: #{cnn_fmnist_forward.3} parent=35 // pred_check
          %p196 = pneg %p59
        $region38: #{cnn_fmnist_forward.3} parent=35 // pred_check_branch
          %198 = sbr.rel (%p196) target = $region40
        $region39: #{cnn_fmnist_forward.3} parent=35 // pred_region
          %199 = dma.done [#allocation3], 10752
        $region40: #{cnn_fmnist_forward.3} parent=35 // pred_fallthru
          _
        // Predicated region
        $region41: #{cnn_fmnist_forward.3} parent=35 // pred_check
          %p200 = pneg %p80
        $region42: #{cnn_fmnist_forward.3} parent=35 // pred_check_branch
          %202 = sbr.rel (%p200) target = $region44
        $region43: #{cnn_fmnist_forward.3} parent=35 // pred_region
          %203 = dma.done [#allocation5], 112
        $region44: #{cnn_fmnist_forward.3} parent=35 // pred_fallthru
          _
        // Predicated region
        $region45: #{cnn_fmnist_forward.3} parent=35 // pred_check
          %p204 = pneg %p101
        $region46: #{cnn_fmnist_forward.3} parent=35 // pred_check_branch
          %206 = sbr.rel (%p204) target = $region48
        $region47: #{cnn_fmnist_forward.3} parent=35 // pred_region
          %207 = dma.done [#allocation5], 112
        $region48: #{cnn_fmnist_forward.3} parent=35 // pred_fallthru
          _
        %p208 = scmp.lt.s32.totalorder %s17, 1
        %s209 = scalar_select %p208, %s17, 1
        %s210 = smul.addr %s209, 2
        %s211 = smul.addr %s210, 4
        %s212 = scalar_lea.vmem %s0, %s211
        %p213 = pneg %p38
        %p214 = pneg %p35
        %p215 = pneg %p59
        %p216 = pneg %p56
        %p217 = pneg %p80
        %p218 = pneg %p77
        %p219 = pneg %p101
        %p220 = pneg %p98
        %p221 = pneg %p127
        %p222 = pneg %p124
        %p223 = scmp.lt.s32.totalorder %s17, 1
        %s224 = scalar_select %p223, %s17, 1
        %s225 = smul.addr %s224, 4
        %s226 = smul.addr %s225, 4
        %s227 = scalar_lea.vmem %s4, %s226
        %p228 = scmp.lt.s32.totalorder %s17, 1
        %s229 = scalar_select %p228, %s17, 1
        %s230 = smul.addr %s229, 2
        %s231 = smul.addr %s230, 4
        %s232 = scalar_lea.vmem %s0, %s231
        %p233 = scmp.lt.s32.totalorder %s17, 1
        %s234 = scalar_select %p233, %s17, 1
        %s235 = smul.addr %s234, 4
        %s236 = smul.addr %s235, 4
        %s237 = scalar_lea.vmem %s4, %s236
        %v239 = vld [vmem:[#allocation4] sm:$0xff]
        %v240 = vld [vmem:[#allocation6] sm:$0xff]
        %v241 = vld [vmem:[%s232] sm:$0xf]
        %v242 = vld [vmem:[%s232 + $0x4] sm:$0x7]
        %v243 = vld [vmem:[#allocation2] sm:$0xff]
        %v244 = vld [vmem:[#allocation2 + $0x8] sm:$0xff]
        %v245 = vld [vmem:[#allocation2 + $0x10] sm:$0xff]
        %v246 = vld [vmem:[#allocation2 + $0x18] sm:$0xf]
        %v247 = vld [vmem:[#allocation2 + $0x1c] sm:$0xff]
        %v248 = vld [vmem:[#allocation2 + $0x24] sm:$0xff]
        %v249 = vld [vmem:[#allocation2 + $0x2c] sm:$0xff]
        %v250 = vld [vmem:[#allocation2 + $0x34] sm:$0xf]
        %v251 = vld [vmem:[#allocation2 + $0x38] sm:$0xff]
        %v252 = vld [vmem:[#allocation2 + $0x40] sm:$0xff]
        %v253 = vld [vmem:[#allocation2 + $0x48] sm:$0xff]
        %v254 = vld [vmem:[#allocation2 + $0x50] sm:$0xf]
        %v255 = vld [vmem:[#allocation2 + $0x54] sm:$0xff]
        %v256 = vld [vmem:[#allocation2 + $0x5c] sm:$0xff]
        %v257 = vld [vmem:[#allocation2 + $0x64] sm:$0xff]
        %v258 = vld [vmem:[#allocation2 + $0x6c] sm:$0xf]
        %v259 = vld [vmem:[#allocation2 + $0x70] sm:$0xff]
        %v260 = vld [vmem:[#allocation2 + $0x78] sm:$0xff]
        %v261 = vld [vmem:[#allocation2 + $0x80] sm:$0xff]
        %v262 = vld [vmem:[#allocation2 + $0x88] sm:$0xf]
        %v263 = vld [vmem:[#allocation2 + $0x8c] sm:$0xff]
        %v264 = vld [vmem:[#allocation2 + $0x94] sm:$0xff]
        %v265 = vld [vmem:[#allocation2 + $0x9c] sm:$0xff]
        %v266 = vld [vmem:[#allocation2 + $0xa4] sm:$0xf]
        %v267 = vld [vmem:[#allocation2 + $0xa8] sm:$0xff]
        %v268 = vld [vmem:[#allocation2 + $0xb0] sm:$0xff]
        %v269 = vld [vmem:[#allocation2 + $0xb8] sm:$0xff]
        %v270 = vld [vmem:[#allocation2 + $0xc0] sm:$0xf]
        %v271 = vld [vmem:[#allocation2 + $0xc4] sm:$0xff]
        %v272 = vld [vmem:[#allocation2 + $0xcc] sm:$0xff]
        %v273 = vld [vmem:[#allocation2 + $0xd4] sm:$0xff]
        %v274 = vld [vmem:[#allocation2 + $0xdc] sm:$0xf]
        %v275 = vld [vmem:[%s232 + $0x4] sm:$0xf]
        %s276 = scalar_lea.vmem [#allocation2], 224
        %v277 = vld [vmem:[%s276] sm:$0xff]
        %v278 = vld [vmem:[%s276 + $0x8] sm:$0xff]
        %v279 = vld [vmem:[%s276 + $0x10] sm:$0xff]
        %v280 = vld [vmem:[%s276 + $0x18] sm:$0xf]
        %v281 = vld [vmem:[%s276 + $0x1c] sm:$0xff]
        %v282 = vld [vmem:[%s276 + $0x24] sm:$0xff]
        %v283 = vld [vmem:[%s276 + $0x2c] sm:$0xff]
        %v284 = vld [vmem:[%s276 + $0x34] sm:$0xf]
        %v285 = vld [vmem:[%s276 + $0x38] sm:$0xff]
        %v286 = vld [vmem:[%s276 + $0x40] sm:$0xff]
        %v287 = vld [vmem:[%s276 + $0x48] sm:$0xff]
        %v288 = vld [vmem:[%s276 + $0x50] sm:$0xf]
        %v289 = vld [vmem:[%s276 + $0x54] sm:$0xff]
        %v290 = vld [vmem:[%s276 + $0x5c] sm:$0xff]
        %v291 = vld [vmem:[%s276 + $0x64] sm:$0xff]
        %v292 = vld [vmem:[%s276 + $0x6c] sm:$0xf]
        %v293 = vld [vmem:[%s276 + $0x70] sm:$0xff]
        %v294 = vld [vmem:[%s276 + $0x78] sm:$0xff]
        %v295 = vld [vmem:[%s276 + $0x80] sm:$0xff]
        %v296 = vld [vmem:[%s276 + $0x88] sm:$0xf]
        %v297 = vld [vmem:[%s276 + $0x8c] sm:$0xff]
        %v298 = vld [vmem:[%s276 + $0x94] sm:$0xff]
        %v299 = vld [vmem:[%s276 + $0x9c] sm:$0xff]
        %v300 = vld [vmem:[%s276 + $0xa4] sm:$0xf]
        %v301 = vld [vmem:[%s276 + $0xa8] sm:$0xff]
        %v302 = vld [vmem:[%s276 + $0xb0] sm:$0xff]
        %v303 = vld [vmem:[%s276 + $0xb8] sm:$0xff]
        %v304 = vld [vmem:[%s276 + $0xc0] sm:$0xf]
        %v305 = vld [vmem:[%s276 + $0xc4] sm:$0xff]
        %v306 = vld [vmem:[%s276 + $0xcc] sm:$0xff]
        %v307 = vld [vmem:[%s276 + $0xd4] sm:$0xff]
        %v308 = vld [vmem:[%s276 + $0xdc] sm:$0xf]
        %v311 = vunpack.c.l.b16 %v241
        %v312 = vunpack.c.l.b16 %v275
        %v313 = vpack.c.b16 %v312, %v311
        %v315 = vshrl.u32 %v313, 16
        %v317 = vshll.u32 %v313, 16
        %v319 = vrot.slane %v317, 1
        %v320 = vor.u32 %v315, %v319
        %v353 = vunpack.c.l.b16 %v277
        %v354 = vunpack.c.h.b16 %v277
        %v355 = vunpack.c.l.b16 %v278
        %v356 = vunpack.c.h.b16 %v278
        %v357 = vunpack.c.l.b16 %v279
        %v358 = vunpack.c.h.b16 %v279
        %v359 = vunpack.c.l.b16 %v280
        %v360 = vunpack.c.l.b16 %v281
        %v361 = vunpack.c.h.b16 %v281
        %v362 = vunpack.c.l.b16 %v282
        %v363 = vunpack.c.h.b16 %v282
        %v364 = vunpack.c.l.b16 %v283
        %v365 = vunpack.c.h.b16 %v283
        %v366 = vunpack.c.l.b16 %v284
        %v367 = vunpack.c.l.b16 %v285
        %v368 = vunpack.c.h.b16 %v285
        %v369 = vunpack.c.l.b16 %v286
        %v370 = vunpack.c.h.b16 %v286
        %v371 = vunpack.c.l.b16 %v287
        %v372 = vunpack.c.h.b16 %v287
        %v373 = vunpack.c.l.b16 %v288
        %v374 = vunpack.c.l.b16 %v289
        %v375 = vunpack.c.h.b16 %v289
        %v376 = vunpack.c.l.b16 %v290
        %v377 = vunpack.c.h.b16 %v290
        %v378 = vunpack.c.l.b16 %v291
        %v379 = vunpack.c.h.b16 %v291
        %v380 = vunpack.c.l.b16 %v292
        %v381 = vunpack.c.l.b16 %v293
        %v382 = vunpack.c.h.b16 %v293
        %v383 = vunpack.c.l.b16 %v294
        %v384 = vunpack.c.h.b16 %v294
        %v385 = vunpack.c.l.b16 %v295
        %v386 = vunpack.c.h.b16 %v295
        %v387 = vunpack.c.l.b16 %v296
        %v388 = vunpack.c.l.b16 %v297
        %v389 = vunpack.c.h.b16 %v297
        %v390 = vunpack.c.l.b16 %v298
        %v391 = vunpack.c.h.b16 %v298
        %v392 = vunpack.c.l.b16 %v299
        %v393 = vunpack.c.h.b16 %v299
        %v394 = vunpack.c.l.b16 %v300
        %v395 = vunpack.c.l.b16 %v301
        %v396 = vunpack.c.h.b16 %v301
        %v397 = vunpack.c.l.b16 %v302
        %v398 = vunpack.c.h.b16 %v302
        %v399 = vunpack.c.l.b16 %v303
        %v400 = vunpack.c.h.b16 %v303
        %v401 = vunpack.c.l.b16 %v304
        %v402 = vunpack.c.l.b16 %v305
        %v403 = vunpack.c.h.b16 %v305
        %v404 = vunpack.c.l.b16 %v306
        %v405 = vunpack.c.h.b16 %v306
        %v406 = vunpack.c.l.b16 %v307
        %v407 = vunpack.c.h.b16 %v307
        %v408 = vunpack.c.l.b16 %v308
        %v409 = vpack.c.b16 %v360, %v353
        %v410 = vpack.c.b16 %v361, %v354
        %v411 = vpack.c.b16 %v362, %v355
        %v412 = vpack.c.b16 %v363, %v356
        %v413 = vpack.c.b16 %v364, %v357
        %v414 = vpack.c.b16 %v365, %v358
        %v415 = vpack.c.b16 %v366, %v359
        %v416 = vpack.c.b16 %v374, %v367
        %v417 = vpack.c.b16 %v375, %v368
        %v418 = vpack.c.b16 %v376, %v369
        %v419 = vpack.c.b16 %v377, %v370
        %v420 = vpack.c.b16 %v378, %v371
        %v421 = vpack.c.b16 %v379, %v372
        %v422 = vpack.c.b16 %v380, %v373
        %v423 = vpack.c.b16 %v388, %v381
        %v424 = vpack.c.b16 %v389, %v382
        %v425 = vpack.c.b16 %v390, %v383
        %v426 = vpack.c.b16 %v391, %v384
        %v427 = vpack.c.b16 %v392, %v385
        %v428 = vpack.c.b16 %v393, %v386
        %v429 = vpack.c.b16 %v394, %v387
        %v430 = vpack.c.b16 %v402, %v395
        %v431 = vpack.c.b16 %v403, %v396
        %v432 = vpack.c.b16 %v404, %v397
        %v433 = vpack.c.b16 %v405, %v398
        %v434 = vpack.c.b16 %v406, %v399
        %v435 = vpack.c.b16 %v407, %v400
        %v436 = vpack.c.b16 %v408, %v401
        %vm465 = vcmask 523264
        %v467 = vsel %vm465, %v320, 0
        %469 = vmatprep.subr.bf16.mxu0 %v410
        %470 = vmatpush1.bf16.msra.mxu0 %v409
        %471 = vmatprep.subr.bf16.mxu0 %v417
        %472 = vmatpush1.bf16.msra.mxu0 %v416
        %473 = vmatprep.subr.bf16.mxu0 %v424
        %474 = vmatpush1.bf16.msra.mxu0 %v423
        %475 = vmatprep.subr.bf16.mxu0 %v431
        %476 = vmatpush1.bf16.msra.mxu0 %v430
        %477 = vmatprep.subr.bf16.mxu0 0
        %478 = vmatpush1.bf16.msra.mxu0 0
        %479 = vmatprep.subr.bf16.mxu0 0
        %480 = vmatpush1.bf16.msra.mxu0 0
        %481 = vmatprep.subr.bf16.mxu0 0
        %482 = vmatpush1.bf16.msra.mxu0 0
        %483 = vmatprep.subr.bf16.mxu0 0
        %484 = vmatpush1.bf16.msra.mxu0 0
        %485 = vmatprep.subr.bf16.mxu0 0
        %486 = vmatpush1.bf16.msra.mxu0 0
        %487 = vmatprep.subr.bf16.mxu0 0
        %488 = vmatpush1.bf16.msra.mxu0 0
        %489 = vmatprep.subr.bf16.mxu0 0
        %490 = vmatpush1.bf16.msra.mxu0 0
        %491 = vmatprep.subr.bf16.mxu0 0
        %492 = vmatpush1.bf16.msra.mxu0 0
        %493 = vmatprep.subr.bf16.mxu0 0
        %494 = vmatpush1.bf16.msra.mxu0 0
        %495 = vmatprep.subr.bf16.mxu0 0
        %496 = vmatpush1.bf16.msra.mxu0 0
        %497 = vmatprep.subr.bf16.mxu0 0
        %498 = vmatpush1.bf16.msra.mxu0 0
        %499 = vmatprep.subr.bf16.mxu0 0
        %500 = vmatpush1.bf16.msra.mxu0 0
        %501 = vmatprep.mubr.bf16.mxu0 0
        %502 = vmatmul.mubr.bf16.gmra.mrb[0].mxu0 %v467
        %v503 = vpop.f32.mrb[0].mxu0
        %v504 = vadd.f32 0.0, %v503
        %v505 = vpop.f32.mrb[0].mxu0
        %v506 = vadd.f32 0.0, %v505
        %v507 = vpop.f32.mrb[0].mxu0
        %v508 = vadd.f32 0.0, %v507
        %v509 = vpop.f32.mrb[0].mxu0
        %v510 = vadd.f32 0.0, %v509
        %511 = vdwg.mxu0
        %512 = vmatprep.subr.bf16.mxu0 %v412
        %513 = vmatpush1.bf16.msra.mxu0 %v411
        %514 = vmatprep.subr.bf16.mxu0 %v419
        %515 = vmatpush1.bf16.msra.mxu0 %v418
        %516 = vmatprep.subr.bf16.mxu0 %v426
        %517 = vmatpush1.bf16.msra.mxu0 %v425
        %518 = vmatprep.subr.bf16.mxu0 %v433
        %519 = vmatpush1.bf16.msra.mxu0 %v432
        %520 = vmatprep.subr.bf16.mxu0 0
        %521 = vmatpush1.bf16.msra.mxu0 0
        %522 = vmatprep.subr.bf16.mxu0 0
        %523 = vmatpush1.bf16.msra.mxu0 0
        %524 = vmatprep.subr.bf16.mxu0 0
        %525 = vmatpush1.bf16.msra.mxu0 0
        %526 = vmatprep.subr.bf16.mxu0 0
        %527 = vmatpush1.bf16.msra.mxu0 0
        %528 = vmatprep.subr.bf16.mxu0 0
        %529 = vmatpush1.bf16.msra.mxu0 0
        %530 = vmatprep.subr.bf16.mxu0 0
        %531 = vmatpush1.bf16.msra.mxu0 0
        %532 = vmatprep.subr.bf16.mxu0 0
        %533 = vmatpush1.bf16.msra.mxu0 0
        %534 = vmatprep.subr.bf16.mxu0 0
        %535 = vmatpush1.bf16.msra.mxu0 0
        %536 = vmatprep.subr.bf16.mxu0 0
        %537 = vmatpush1.bf16.msra.mxu0 0
        %538 = vmatprep.subr.bf16.mxu0 0
        %539 = vmatpush1.bf16.msra.mxu0 0
        %540 = vmatprep.subr.bf16.mxu0 0
        %541 = vmatpush1.bf16.msra.mxu0 0
        %542 = vmatprep.subr.bf16.mxu0 0
        %543 = vmatpush1.bf16.msra.mxu0 0
        %544 = vmatprep.mubr.bf16.mxu0 0
        %545 = vmatmul.mubr.bf16.gmra.mrb[0].mxu0 %v467
        %v546 = vpop.f32.mrb[0].mxu0
        %v547 = vadd.f32 0.0, %v546
        %v548 = vpop.f32.mrb[0].mxu0
        %v549 = vadd.f32 0.0, %v548
        %v550 = vpop.f32.mrb[0].mxu0
        %v551 = vadd.f32 0.0, %v550
        %v552 = vpop.f32.mrb[0].mxu0
        %v553 = vadd.f32 0.0, %v552
        %554 = vdwg.mxu0
        %555 = vmatprep.subr.bf16.mxu0 %v414
        %556 = vmatpush1.bf16.msra.mxu0 %v413
        %557 = vmatprep.subr.bf16.mxu0 %v421
        %558 = vmatpush1.bf16.msra.mxu0 %v420
        %559 = vmatprep.subr.bf16.mxu0 %v428
        %560 = vmatpush1.bf16.msra.mxu0 %v427
        %561 = vmatprep.subr.bf16.mxu0 %v435
        %562 = vmatpush1.bf16.msra.mxu0 %v434
        %563 = vmatprep.subr.bf16.mxu0 0
        %564 = vmatpush1.bf16.msra.mxu0 0
        %565 = vmatprep.subr.bf16.mxu0 0
        %566 = vmatpush1.bf16.msra.mxu0 0
        %567 = vmatprep.subr.bf16.mxu0 0
        %568 = vmatpush1.bf16.msra.mxu0 0
        %569 = vmatprep.subr.bf16.mxu0 0
        %570 = vmatpush1.bf16.msra.mxu0 0
        %571 = vmatprep.subr.bf16.mxu0 0
        %572 = vmatpush1.bf16.msra.mxu0 0
        %573 = vmatprep.subr.bf16.mxu0 0
        %574 = vmatpush1.bf16.msra.mxu0 0
        %575 = vmatprep.subr.bf16.mxu0 0
        %576 = vmatpush1.bf16.msra.mxu0 0
        %577 = vmatprep.subr.bf16.mxu0 0
        %578 = vmatpush1.bf16.msra.mxu0 0
        %579 = vmatprep.subr.bf16.mxu0 0
        %580 = vmatpush1.bf16.msra.mxu0 0
        %581 = vmatprep.subr.bf16.mxu0 0
        %582 = vmatpush1.bf16.msra.mxu0 0
        %583 = vmatprep.subr.bf16.mxu0 0
        %584 = vmatpush1.bf16.msra.mxu0 0
        %585 = vmatprep.subr.bf16.mxu0 0
        %586 = vmatpush1.bf16.msra.mxu0 0
        %587 = vmatprep.mubr.bf16.mxu0 0
        %588 = vmatmul.mubr.bf16.gmra.mrb[0].mxu0 %v467
        %v589 = vpop.f32.mrb[0].mxu0
        %v590 = vadd.f32 0.0, %v589
        %v591 = vpop.f32.mrb[0].mxu0
        %v592 = vadd.f32 0.0, %v591
        %v593 = vpop.f32.mrb[0].mxu0
        %v594 = vadd.f32 0.0, %v593
        %v595 = vpop.f32.mrb[0].mxu0
        %v596 = vadd.f32 0.0, %v595
        %597 = vdwg.mxu0
        %598 = vmatprep.subr.bf16.mxu0 0
        %599 = vmatpush1.bf16.msra.mxu0 %v415
        %600 = vmatprep.subr.bf16.mxu0 0
        %601 = vmatpush1.bf16.msra.mxu0 %v422
        %602 = vmatprep.subr.bf16.mxu0 0
        %603 = vmatpush1.bf16.msra.mxu0 %v429
        %604 = vmatprep.subr.bf16.mxu0 0
        %605 = vmatpush1.bf16.msra.mxu0 %v436
        %606 = vmatprep.subr.bf16.mxu0 0
        %607 = vmatpush1.bf16.msra.mxu0 0
        %608 = vmatprep.subr.bf16.mxu0 0
        %609 = vmatpush1.bf16.msra.mxu0 0
        %610 = vmatprep.subr.bf16.mxu0 0
        %611 = vmatpush1.bf16.msra.mxu0 0
        %612 = vmatprep.subr.bf16.mxu0 0
        %613 = vmatpush1.bf16.msra.mxu0 0
        %614 = vmatprep.subr.bf16.mxu0 0
        %615 = vmatpush1.bf16.msra.mxu0 0
        %616 = vmatprep.subr.bf16.mxu0 0
        %617 = vmatpush1.bf16.msra.mxu0 0
        %618 = vmatprep.subr.bf16.mxu0 0
        %619 = vmatpush1.bf16.msra.mxu0 0
        %620 = vmatprep.subr.bf16.mxu0 0
        %621 = vmatpush1.bf16.msra.mxu0 0
        %622 = vmatprep.subr.bf16.mxu0 0
        %623 = vmatpush1.bf16.msra.mxu0 0
        %624 = vmatprep.subr.bf16.mxu0 0
        %625 = vmatpush1.bf16.msra.mxu0 0
        %626 = vmatprep.subr.bf16.mxu0 0
        %627 = vmatpush1.bf16.msra.mxu0 0
        %628 = vmatprep.subr.bf16.mxu0 0
        %629 = vmatpush1.bf16.msra.mxu0 0
        %630 = vmatprep.mubr.bf16.mxu0 0
        %631 = vmatmul.mubr.bf16.gmra.mrb[0].mxu0 %v467
        %v632 = vpop.f32.mrb[0].mxu0
        %v633 = vadd.f32 0.0, %v632
        %v634 = vpop.f32.mrb[0].mxu0
        %v635 = vpop.f32.mrb[0].mxu0
        %v636 = vadd.f32 0.0, %v635
        %v637 = vpop.f32.mrb[0].mxu0
        %638 = vdwg.mxu0
        %v640 = vunpack.c.l.b16 %v242
        %v641 = vpack.c.b16 %v640, %v311
        %v674 = vunpack.c.l.b16 %v243
        %v675 = vunpack.c.h.b16 %v243
        %v676 = vunpack.c.l.b16 %v244
        %v677 = vunpack.c.h.b16 %v244
        %v678 = vunpack.c.l.b16 %v245
        %v679 = vunpack.c.h.b16 %v245
        %v680 = vunpack.c.l.b16 %v246
        %v681 = vunpack.c.l.b16 %v247
        %v682 = vunpack.c.h.b16 %v247
        %v683 = vunpack.c.l.b16 %v248
        %v684 = vunpack.c.h.b16 %v248
        %v685 = vunpack.c.l.b16 %v249
        %v686 = vunpack.c.h.b16 %v249
        %v687 = vunpack.c.l.b16 %v250
        %v688 = vunpack.c.l.b16 %v251
        %v689 = vunpack.c.h.b16 %v251
        %v690 = vunpack.c.l.b16 %v252
        %v691 = vunpack.c.h.b16 %v252
        %v692 = vunpack.c.l.b16 %v253
        %v693 = vunpack.c.h.b16 %v253
        %v694 = vunpack.c.l.b16 %v254
        %v695 = vunpack.c.l.b16 %v255
        %v696 = vunpack.c.h.b16 %v255
        %v697 = vunpack.c.l.b16 %v256
        %v698 = vunpack.c.h.b16 %v256
        %v699 = vunpack.c.l.b16 %v257
        %v700 = vunpack.c.h.b16 %v257
        %v701 = vunpack.c.l.b16 %v258
        %v702 = vunpack.c.l.b16 %v259
        %v703 = vunpack.c.h.b16 %v259
        %v704 = vunpack.c.l.b16 %v260
        %v705 = vunpack.c.h.b16 %v260
        %v706 = vunpack.c.l.b16 %v261
        %v707 = vunpack.c.h.b16 %v261
        %v708 = vunpack.c.l.b16 %v262
        %v709 = vunpack.c.l.b16 %v263
        %v710 = vunpack.c.h.b16 %v263
        %v711 = vunpack.c.l.b16 %v264
        %v712 = vunpack.c.h.b16 %v264
        %v713 = vunpack.c.l.b16 %v265
        %v714 = vunpack.c.h.b16 %v265
        %v715 = vunpack.c.l.b16 %v266
        %v716 = vunpack.c.l.b16 %v267
        %v717 = vunpack.c.h.b16 %v267
        %v718 = vunpack.c.l.b16 %v268
        %v719 = vunpack.c.h.b16 %v268
        %v720 = vunpack.c.l.b16 %v269
        %v721 = vunpack.c.h.b16 %v269
        %v722 = vunpack.c.l.b16 %v270
        %v723 = vunpack.c.l.b16 %v271
        %v724 = vunpack.c.h.b16 %v271
        %v725 = vunpack.c.l.b16 %v272
        %v726 = vunpack.c.h.b16 %v272
        %v727 = vunpack.c.l.b16 %v273
        %v728 = vunpack.c.h.b16 %v273
        %v729 = vunpack.c.l.b16 %v274
        %v730 = vpack.c.b16 %v681, %v674
        %v731 = vpack.c.b16 %v682, %v675
        %v732 = vpack.c.b16 %v683, %v676
        %v733 = vpack.c.b16 %v684, %v677
        %v734 = vpack.c.b16 %v685, %v678
        %v735 = vpack.c.b16 %v686, %v679
        %v736 = vpack.c.b16 %v687, %v680
        %v737 = vpack.c.b16 %v695, %v688
        %v738 = vpack.c.b16 %v696, %v689
        %v739 = vpack.c.b16 %v697, %v690
        %v740 = vpack.c.b16 %v698, %v691
        %v741 = vpack.c.b16 %v699, %v692
        %v742 = vpack.c.b16 %v700, %v693
        %v743 = vpack.c.b16 %v701, %v694
        %v744 = vpack.c.b16 %v709, %v702
        %v745 = vpack.c.b16 %v710, %v703
        %v746 = vpack.c.b16 %v711, %v704
        %v747 = vpack.c.b16 %v712, %v705
        %v748 = vpack.c.b16 %v713, %v706
        %v749 = vpack.c.b16 %v714, %v707
        %v750 = vpack.c.b16 %v715, %v708
        %v751 = vpack.c.b16 %v723, %v716
        %v752 = vpack.c.b16 %v724, %v717
        %v753 = vpack.c.b16 %v725, %v718
        %v754 = vpack.c.b16 %v726, %v719
        %v755 = vpack.c.b16 %v727, %v720
        %v756 = vpack.c.b16 %v728, %v721
        %v757 = vpack.c.b16 %v729, %v722
        %v787 = vsel %vm465, %v641, 0
        %789 = vmatprep.subr.bf16.mxu0 %v731
        %790 = vmatpush1.bf16.msra.mxu0 %v730
        %791 = vmatprep.subr.bf16.mxu0 %v738
        %792 = vmatpush1.bf16.msra.mxu0 %v737
        %793 = vmatprep.subr.bf16.mxu0 %v745
        %794 = vmatpush1.bf16.msra.mxu0 %v744
        %795 = vmatprep.subr.bf16.mxu0 %v752
        %796 = vmatpush1.bf16.msra.mxu0 %v751
        %797 = vmatprep.subr.bf16.mxu0 0
        %798 = vmatpush1.bf16.msra.mxu0 0
        %799 = vmatprep.subr.bf16.mxu0 0
        %800 = vmatpush1.bf16.msra.mxu0 0
        %801 = vmatprep.subr.bf16.mxu0 0
        %802 = vmatpush1.bf16.msra.mxu0 0
        %803 = vmatprep.subr.bf16.mxu0 0
        %804 = vmatpush1.bf16.msra.mxu0 0
        %805 = vmatprep.subr.bf16.mxu0 0
        %806 = vmatpush1.bf16.msra.mxu0 0
        %807 = vmatprep.subr.bf16.mxu0 0
        %808 = vmatpush1.bf16.msra.mxu0 0
        %809 = vmatprep.subr.bf16.mxu0 0
        %810 = vmatpush1.bf16.msra.mxu0 0
        %811 = vmatprep.subr.bf16.mxu0 0
        %812 = vmatpush1.bf16.msra.mxu0 0
        %813 = vmatprep.subr.bf16.mxu0 0
        %814 = vmatpush1.bf16.msra.mxu0 0
        %815 = vmatprep.subr.bf16.mxu0 0
        %816 = vmatpush1.bf16.msra.mxu0 0
        %817 = vmatprep.subr.bf16.mxu0 0
        %818 = vmatpush1.bf16.msra.mxu0 0
        %819 = vmatprep.subr.bf16.mxu0 0
        %820 = vmatpush1.bf16.msra.mxu0 0
        %821 = vmatprep.mubr.bf16.mxu0 0
        %822 = vmatmul.mubr.bf16.gmra.mrb[0].mxu0 %v787
        %v823 = vpop.f32.mrb[0].mxu0
        %v824 = vadd.f32 %v504, %v823
        %v825 = vpop.f32.mrb[0].mxu0
        %v826 = vadd.f32 %v506, %v825
        %v827 = vpop.f32.mrb[0].mxu0
        %v828 = vadd.f32 %v508, %v827
        %v829 = vpop.f32.mrb[0].mxu0
        %v830 = vadd.f32 %v510, %v829
        %831 = vdwg.mxu0
        %832 = vmatprep.subr.bf16.mxu0 %v733
        %833 = vmatpush1.bf16.msra.mxu0 %v732
        %834 = vmatprep.subr.bf16.mxu0 %v740
        %835 = vmatpush1.bf16.msra.mxu0 %v739
        %836 = vmatprep.subr.bf16.mxu0 %v747
        %837 = vmatpush1.bf16.msra.mxu0 %v746
        %838 = vmatprep.subr.bf16.mxu0 %v754
        %839 = vmatpush1.bf16.msra.mxu0 %v753
        %840 = vmatprep.subr.bf16.mxu0 0
        %841 = vmatpush1.bf16.msra.mxu0 0
        %842 = vmatprep.subr.bf16.mxu0 0
        %843 = vmatpush1.bf16.msra.mxu0 0
        %844 = vmatprep.subr.bf16.mxu0 0
        %845 = vmatpush1.bf16.msra.mxu0 0
        %846 = vmatprep.subr.bf16.mxu0 0
        %847 = vmatpush1.bf16.msra.mxu0 0
        %848 = vmatprep.subr.bf16.mxu0 0
        %849 = vmatpush1.bf16.msra.mxu0 0
        %850 = vmatprep.subr.bf16.mxu0 0
        %851 = vmatpush1.bf16.msra.mxu0 0
        %852 = vmatprep.subr.bf16.mxu0 0
        %853 = vmatpush1.bf16.msra.mxu0 0
        %854 = vmatprep.subr.bf16.mxu0 0
        %855 = vmatpush1.bf16.msra.mxu0 0
        %856 = vmatprep.subr.bf16.mxu0 0
        %857 = vmatpush1.bf16.msra.mxu0 0
        %858 = vmatprep.subr.bf16.mxu0 0
        %859 = vmatpush1.bf16.msra.mxu0 0
        %860 = vmatprep.subr.bf16.mxu0 0
        %861 = vmatpush1.bf16.msra.mxu0 0
        %862 = vmatprep.subr.bf16.mxu0 0
        %863 = vmatpush1.bf16.msra.mxu0 0
        %864 = vmatprep.mubr.bf16.mxu0 0
        %865 = vmatmul.mubr.bf16.gmra.mrb[0].mxu0 %v787
        %v866 = vpop.f32.mrb[0].mxu0
        %v867 = vadd.f32 %v547, %v866
        %v868 = vpop.f32.mrb[0].mxu0
        %v869 = vadd.f32 %v549, %v868
        %v870 = vpop.f32.mrb[0].mxu0
        %v871 = vadd.f32 %v551, %v870
        %v872 = vpop.f32.mrb[0].mxu0
        %v873 = vadd.f32 %v553, %v872
        %874 = vdwg.mxu0
        %875 = vmatprep.subr.bf16.mxu0 %v735
        %876 = vmatpush1.bf16.msra.mxu0 %v734
        %877 = vmatprep.subr.bf16.mxu0 %v742
        %878 = vmatpush1.bf16.msra.mxu0 %v741
        %879 = vmatprep.subr.bf16.mxu0 %v749
        %880 = vmatpush1.bf16.msra.mxu0 %v748
        %881 = vmatprep.subr.bf16.mxu0 %v756
        %882 = vmatpush1.bf16.msra.mxu0 %v755
        %883 = vmatprep.subr.bf16.mxu0 0
        %884 = vmatpush1.bf16.msra.mxu0 0
        %885 = vmatprep.subr.bf16.mxu0 0
        %886 = vmatpush1.bf16.msra.mxu0 0
        %887 = vmatprep.subr.bf16.mxu0 0
        %888 = vmatpush1.bf16.msra.mxu0 0
        %889 = vmatprep.subr.bf16.mxu0 0
        %890 = vmatpush1.bf16.msra.mxu0 0
        %891 = vmatprep.subr.bf16.mxu0 0
        %892 = vmatpush1.bf16.msra.mxu0 0
        %893 = vmatprep.subr.bf16.mxu0 0
        %894 = vmatpush1.bf16.msra.mxu0 0
        %895 = vmatprep.subr.bf16.mxu0 0
        %896 = vmatpush1.bf16.msra.mxu0 0
        %897 = vmatprep.subr.bf16.mxu0 0
        %898 = vmatpush1.bf16.msra.mxu0 0
        %899 = vmatprep.subr.bf16.mxu0 0
        %900 = vmatpush1.bf16.msra.mxu0 0
        %901 = vmatprep.subr.bf16.mxu0 0
        %902 = vmatpush1.bf16.msra.mxu0 0
        %903 = vmatprep.subr.bf16.mxu0 0
        %904 = vmatpush1.bf16.msra.mxu0 0
        %905 = vmatprep.subr.bf16.mxu0 0
        %906 = vmatpush1.bf16.msra.mxu0 0
        %907 = vmatprep.mubr.bf16.mxu0 0
        %908 = vmatmul.mubr.bf16.gmra.mrb[0].mxu0 %v787
        %v909 = vpop.f32.mrb[0].mxu0
        %v910 = vadd.f32 %v590, %v909
        %v911 = vpop.f32.mrb[0].mxu0
        %v912 = vadd.f32 %v592, %v911
        %v913 = vpop.f32.mrb[0].mxu0
        %v914 = vadd.f32 %v594, %v913
        %v915 = vpop.f32.mrb[0].mxu0
        %v916 = vadd.f32 %v596, %v915
        %917 = vdwg.mxu0
        %918 = vmatprep.subr.bf16.mxu0 0
        %919 = vmatpush1.bf16.msra.mxu0 %v736
        %920 = vmatprep.subr.bf16.mxu0 0
        %921 = vmatpush1.bf16.msra.mxu0 %v743
        %922 = vmatprep.subr.bf16.mxu0 0
        %923 = vmatpush1.bf16.msra.mxu0 %v750
        %924 = vmatprep.subr.bf16.mxu0 0
        %925 = vmatpush1.bf16.msra.mxu0 %v757
        %926 = vmatprep.subr.bf16.mxu0 0
        %927 = vmatpush1.bf16.msra.mxu0 0
        %928 = vmatprep.subr.bf16.mxu0 0
        %929 = vmatpush1.bf16.msra.mxu0 0
        %930 = vmatprep.subr.bf16.mxu0 0
        %931 = vmatpush1.bf16.msra.mxu0 0
        %932 = vmatprep.subr.bf16.mxu0 0
        %933 = vmatpush1.bf16.msra.mxu0 0
        %934 = vmatprep.subr.bf16.mxu0 0
        %935 = vmatpush1.bf16.msra.mxu0 0
        %936 = vmatprep.subr.bf16.mxu0 0
        %937 = vmatpush1.bf16.msra.mxu0 0
        %938 = vmatprep.subr.bf16.mxu0 0
        %939 = vmatpush1.bf16.msra.mxu0 0
        %940 = vmatprep.subr.bf16.mxu0 0
        %941 = vmatpush1.bf16.msra.mxu0 0
        %942 = vmatprep.subr.bf16.mxu0 0
        %943 = vmatpush1.bf16.msra.mxu0 0
        %944 = vmatprep.subr.bf16.mxu0 0
        %945 = vmatpush1.bf16.msra.mxu0 0
        %946 = vmatprep.subr.bf16.mxu0 0
        %947 = vmatpush1.bf16.msra.mxu0 0
        %948 = vmatprep.subr.bf16.mxu0 0
        %949 = vmatpush1.bf16.msra.mxu0 0
        %950 = vmatprep.mubr.bf16.mxu0 0
        %951 = vmatmul.mubr.bf16.gmra.mrb[0].mxu0 %v787
        %v952 = vpop.f32.mrb[0].mxu0
        %v953 = vadd.f32 %v633, %v952
        %v954 = vpop.f32.mrb[0].mxu0
        %v955 = vpop.f32.mrb[0].mxu0
        %v956 = vadd.f32 %v636, %v955
        %v957 = vpop.f32.mrb[0].mxu0
        %958 = vdwg.mxu0
        %v959 = vld [vmem:[%s232] sm:$0xe]
        %s960 = scalar_lea.vmem [#allocation2], 448
        %v961 = vld [vmem:[%s960] sm:$0xff]
        %v962 = vld [vmem:[%s960 + $0x8] sm:$0xff]
        %v963 = vld [vmem:[%s960 + $0x10] sm:$0xff]
        %v964 = vld [vmem:[%s960 + $0x18] sm:$0xf]
        %v965 = vld [vmem:[%s960 + $0x1c] sm:$0xff]
        %v966 = vld [vmem:[%s960 + $0x24] sm:$0xff]
        %v967 = vld [vmem:[%s960 + $0x2c] sm:$0xff]
        %v968 = vld [vmem:[%s960 + $0x34] sm:$0xf]
        %v969 = vld [vmem:[%s960 + $0x38] sm:$0xff]
        %v970 = vld [vmem:[%s960 + $0x40] sm:$0xff]
        %v971 = vld [vmem:[%s960 + $0x48] sm:$0xff]
        %v972 = vld [vmem:[%s960 + $0x50] sm:$0xf]
        %v973 = vld [vmem:[%s960 + $0x54] sm:$0xff]
        %v974 = vld [vmem:[%s960 + $0x5c] sm:$0xff]
        %v975 = vld [vmem:[%s960 + $0x64] sm:$0xff]
        %v976 = vld [vmem:[%s960 + $0x6c] sm:$0xf]
        %v977 = vld [vmem:[%s960 + $0x70] sm:$0xff]
        %v978 = vld [vmem:[%s960 + $0x78] sm:$0xff]
        %v979 = vld [vmem:[%s960 + $0x80] sm:$0xff]
        %v980 = vld [vmem:[%s960 + $0x88] sm:$0xf]
        %v981 = vld [vmem:[%s960 + $0x8c] sm:$0xff]
        %v982 = vld [vmem:[%s960 + $0x94] sm:$0xff]
        %v983 = vld [vmem:[%s960 + $0x9c] sm:$0xff]
        %v984 = vld [vmem:[%s960 + $0xa4] sm:$0xf]
        %v985 = vld [vmem:[%s960 + $0xa8] sm:$0xff]
        %v986 = vld [vmem:[%s960 + $0xb0] sm:$0xff]
        %v987 = vld [vmem:[%s960 + $0xb8] sm:$0xff]
        %v988 = vld [vmem:[%s960 + $0xc0] sm:$0xf]
        %v989 = vld [vmem:[%s960 + $0xc4] sm:$0xff]
        %v990 = vld [vmem:[%s960 + $0xcc] sm:$0xff]
        %v991 = vld [vmem:[%s960 + $0xd4] sm:$0xff]
        %v992 = vld [vmem:[%s960 + $0xdc] sm:$0xf]
        %v994 = vunpack.c.l.b16 %v959
        %v995 = vpack.c.b16 %v312, %v994
        %v996 = vrot.slane %v995, 1
        %v1029 = vunpack.c.l.b16 %v961
        %v1030 = vunpack.c.h.b16 %v961
        %v1031 = vunpack.c.l.b16 %v962
        %v1032 = vunpack.c.h.b16 %v962
        %v1033 = vunpack.c.l.b16 %v963
        %v1034 = vunpack.c.h.b16 %v963
        %v1035 = vunpack.c.l.b16 %v964
        %v1036 = vunpack.c.l.b16 %v965
        %v1037 = vunpack.c.h.b16 %v965
        %v1038 = vunpack.c.l.b16 %v966
        %v1039 = vunpack.c.h.b16 %v966
        %v1040 = vunpack.c.l.b16 %v967
        %v1041 = vunpack.c.h.b16 %v967
        %v1042 = vunpack.c.l.b16 %v968
        %v1043 = vunpack.c.l.b16 %v969
        %v1044 = vunpack.c.h.b16 %v969
        %v1045 = vunpack.c.l.b16 %v970
        %v1046 = vunpack.c.h.b16 %v970
        %v1047 = vunpack.c.l.b16 %v971
        %v1048 = vunpack.c.h.b16 %v971
        %v1049 = vunpack.c.l.b16 %v972
        %v1050 = vunpack.c.l.b16 %v973
        %v1051 = vunpack.c.h.b16 %v973
        %v1052 = vunpack.c.l.b16 %v974
        %v1053 = vunpack.c.h.b16 %v974
        %v1054 = vunpack.c.l.b16 %v975
        %v1055 = vunpack.c.h.b16 %v975
        %v1056 = vunpack.c.l.b16 %v976
        %v1057 = vunpack.c.l.b16 %v977
        %v1058 = vunpack.c.h.b16 %v977
        %v1059 = vunpack.c.l.b16 %v978
        %v1060 = vunpack.c.h.b16 %v978
        %v1061 = vunpack.c.l.b16 %v979
        %v1062 = vunpack.c.h.b16 %v979
        %v1063 = vunpack.c.l.b16 %v980
        %v1064 = vunpack.c.l.b16 %v981
        %v1065 = vunpack.c.h.b16 %v981
        %v1066 = vunpack.c.l.b16 %v982
        %v1067 = vunpack.c.h.b16 %v982
        %v1068 = vunpack.c.l.b16 %v983
        %v1069 = vunpack.c.h.b16 %v983
        %v1070 = vunpack.c.l.b16 %v984
        %v1071 = vunpack.c.l.b16 %v985
        %v1072 = vunpack.c.h.b16 %v985
        %v1073 = vunpack.c.l.b16 %v986
        %v1074 = vunpack.c.h.b16 %v986
        %v1075 = vunpack.c.l.b16 %v987
        %v1076 = vunpack.c.h.b16 %v987
        %v1077 = vunpack.c.l.b16 %v988
        %v1078 = vunpack.c.l.b16 %v989
        %v1079 = vunpack.c.h.b16 %v989
        %v1080 = vunpack.c.l.b16 %v990
        %v1081 = vunpack.c.h.b16 %v990
        %v1082 = vunpack.c.l.b16 %v991
        %v1083 = vunpack.c.h.b16 %v991
        %v1084 = vunpack.c.l.b16 %v992
        %v1085 = vpack.c.b16 %v1036, %v1029
        %v1086 = vpack.c.b16 %v1037, %v1030
        %v1087 = vpack.c.b16 %v1038, %v1031
        %v1088 = vpack.c.b16 %v1039, %v1032
        %v1089 = vpack.c.b16 %v1040, %v1033
        %v1090 = vpack.c.b16 %v1041, %v1034
        %v1091 = vpack.c.b16 %v1042, %v1035
        %v1092 = vpack.c.b16 %v1050, %v1043
        %v1093 = vpack.c.b16 %v1051, %v1044
        %v1094 = vpack.c.b16 %v1052, %v1045
        %v1095 = vpack.c.b16 %v1053, %v1046
        %v1096 = vpack.c.b16 %v1054, %v1047
        %v1097 = vpack.c.b16 %v1055, %v1048
        %v1098 = vpack.c.b16 %v1056, %v1049
        %v1099 = vpack.c.b16 %v1064, %v1057
        %v1100 = vpack.c.b16 %v1065, %v1058
        %v1101 = vpack.c.b16 %v1066, %v1059
        %v1102 = vpack.c.b16 %v1067, %v1060
        %v1103 = vpack.c.b16 %v1068, %v1061
        %v1104 = vpack.c.b16 %v1069, %v1062
        %v1105 = vpack.c.b16 %v1070, %v1063
        %v1106 = vpack.c.b16 %v1078, %v1071
        %v1107 = vpack.c.b16 %v1079, %v1072
        %v1108 = vpack.c.b16 %v1080, %v1073
        %v1109 = vpack.c.b16 %v1081, %v1074
        %v1110 = vpack.c.b16 %v1082, %v1075
        %v1111 = vpack.c.b16 %v1083, %v1076
        %v1112 = vpack.c.b16 %v1084, %v1077
        %v1142 = vsel %vm465, %v996, 0
        %1144 = vmatprep.subr.bf16.mxu0 %v1086
        %1145 = vmatpush1.bf16.msra.mxu0 %v1085
        %1146 = vmatprep.subr.bf16.mxu0 %v1093
        %1147 = vmatpush1.bf16.msra.mxu0 %v1092
        %1148 = vmatprep.subr.bf16.mxu0 %v1100
        %1149 = vmatpush1.bf16.msra.mxu0 %v1099
        %1150 = vmatprep.subr.bf16.mxu0 %v1107
        %1151 = vmatpush1.bf16.msra.mxu0 %v1106
        %1152 = vmatprep.subr.bf16.mxu0 0
        %1153 = vmatpush1.bf16.msra.mxu0 0
        %1154 = vmatprep.subr.bf16.mxu0 0
        %1155 = vmatpush1.bf16.msra.mxu0 0
        %1156 = vmatprep.subr.bf16.mxu0 0
        %1157 = vmatpush1.bf16.msra.mxu0 0
        %1158 = vmatprep.subr.bf16.mxu0 0
        %1159 = vmatpush1.bf16.msra.mxu0 0
        %1160 = vmatprep.subr.bf16.mxu0 0
        %1161 = vmatpush1.bf16.msra.mxu0 0
        %1162 = vmatprep.subr.bf16.mxu0 0
        %1163 = vmatpush1.bf16.msra.mxu0 0
        %1164 = vmatprep.subr.bf16.mxu0 0
        %1165 = vmatpush1.bf16.msra.mxu0 0
        %1166 = vmatprep.subr.bf16.mxu0 0
        %1167 = vmatpush1.bf16.msra.mxu0 0
        %1168 = vmatprep.subr.bf16.mxu0 0
        %1169 = vmatpush1.bf16.msra.mxu0 0
        %1170 = vmatprep.subr.bf16.mxu0 0
        %1171 = vmatpush1.bf16.msra.mxu0 0
        %1172 = vmatprep.subr.bf16.mxu0 0
        %1173 = vmatpush1.bf16.msra.mxu0 0
        %1174 = vmatprep.subr.bf16.mxu0 0
        %1175 = vmatpush1.bf16.msra.mxu0 0
        %1176 = vmatprep.mubr.bf16.mxu0 0
        %1177 = vmatmul.mubr.bf16.gmra.mrb[0].mxu0 %v1142
        %v1178 = vpop.f32.mrb[0].mxu0
        %v1179 = vadd.f32 0.0, %v1178
        %v1180 = vpop.f32.mrb[0].mxu0
        %v1181 = vadd.f32 0.0, %v1180
        %v1182 = vpop.f32.mrb[0].mxu0
        %v1183 = vadd.f32 0.0, %v1182
        %v1184 = vpop.f32.mrb[0].mxu0
        %v1185 = vadd.f32 0.0, %v1184
        %1186 = vdwg.mxu0
        %1187 = vmatprep.subr.bf16.mxu0 %v1088
        %1188 = vmatpush1.bf16.msra.mxu0 %v1087
        %1189 = vmatprep.subr.bf16.mxu0 %v1095
        %1190 = vmatpush1.bf16.msra.mxu0 %v1094
        %1191 = vmatprep.subr.bf16.mxu0 %v1102
        %1192 = vmatpush1.bf16.msra.mxu0 %v1101
        %1193 = vmatprep.subr.bf16.mxu0 %v1109
        %1194 = vmatpush1.bf16.msra.mxu0 %v1108
        %1195 = vmatprep.subr.bf16.mxu0 0
        %1196 = vmatpush1.bf16.msra.mxu0 0
        %1197 = vmatprep.subr.bf16.mxu0 0
        %1198 = vmatpush1.bf16.msra.mxu0 0
        %1199 = vmatprep.subr.bf16.mxu0 0
        %1200 = vmatpush1.bf16.msra.mxu0 0
        %1201 = vmatprep.subr.bf16.mxu0 0
        %1202 = vmatpush1.bf16.msra.mxu0 0
        %1203 = vmatprep.subr.bf16.mxu0 0
        %1204 = vmatpush1.bf16.msra.mxu0 0
        %1205 = vmatprep.subr.bf16.mxu0 0
        %1206 = vmatpush1.bf16.msra.mxu0 0
        %1207 = vmatprep.subr.bf16.mxu0 0
        %1208 = vmatpush1.bf16.msra.mxu0 0
        %1209 = vmatprep.subr.bf16.mxu0 0
        %1210 = vmatpush1.bf16.msra.mxu0 0
        %1211 = vmatprep.subr.bf16.mxu0 0
        %1212 = vmatpush1.bf16.msra.mxu0 0
        %1213 = vmatprep.subr.bf16.mxu0 0
        %1214 = vmatpush1.bf16.msra.mxu0 0
        %1215 = vmatprep.subr.bf16.mxu0 0
        %1216 = vmatpush1.bf16.msra.mxu0 0
        %1217 = vmatprep.subr.bf16.mxu0 0
        %1218 = vmatpush1.bf16.msra.mxu0 0
        %1219 = vmatprep.mubr.bf16.mxu0 0
        %1220 = vmatmul.mubr.bf16.gmra.mrb[0].mxu0 %v1142
        %v1221 = vpop.f32.mrb[0].mxu0
        %v1222 = vadd.f32 0.0, %v1221
        %v1223 = vpop.f32.mrb[0].mxu0
        %v1224 = vadd.f32 0.0, %v1223
        %v1225 = vpop.f32.mrb[0].mxu0
        %v1226 = vadd.f32 0.0, %v1225
        %v1227 = vpop.f32.mrb[0].mxu0
        %v1228 = vadd.f32 0.0, %v1227
        %1229 = vdwg.mxu0
        %1230 = vmatprep.subr.bf16.mxu0 %v1090
        %1231 = vmatpush1.bf16.msra.mxu0 %v1089
        %1232 = vmatprep.subr.bf16.mxu0 %v1097
        %1233 = vmatpush1.bf16.msra.mxu0 %v1096
        %1234 = vmatprep.subr.bf16.mxu0 %v1104
        %1235 = vmatpush1.bf16.msra.mxu0 %v1103
        %1236 = vmatprep.subr.bf16.mxu0 %v1111
        %1237 = vmatpush1.bf16.msra.mxu0 %v1110
        %1238 = vmatprep.subr.bf16.mxu0 0
        %1239 = vmatpush1.bf16.msra.mxu0 0
        %1240 = vmatprep.subr.bf16.mxu0 0
        %1241 = vmatpush1.bf16.msra.mxu0 0
        %1242 = vmatprep.subr.bf16.mxu0 0
        %1243 = vmatpush1.bf16.msra.mxu0 0
        %1244 = vmatprep.subr.bf16.mxu0 0
        %1245 = vmatpush1.bf16.msra.mxu0 0
        %1246 = vmatprep.subr.bf16.mxu0 0
        %1247 = vmatpush1.bf16.msra.mxu0 0
        %1248 = vmatprep.subr.bf16.mxu0 0
        %1249 = vmatpush1.bf16.msra.mxu0 0
        %1250 = vmatprep.subr.bf16.mxu0 0
        %1251 = vmatpush1.bf16.msra.mxu0 0
        %1252 = vmatprep.subr.bf16.mxu0 0
        %1253 = vmatpush1.bf16.msra.mxu0 0
        %1254 = vmatprep.subr.bf16.mxu0 0
        %1255 = vmatpush1.bf16.msra.mxu0 0
        %1256 = vmatprep.subr.bf16.mxu0 0
        %1257 = vmatpush1.bf16.msra.mxu0 0
        %1258 = vmatprep.subr.bf16.mxu0 0
        %1259 = vmatpush1.bf16.msra.mxu0 0
        %1260 = vmatprep.subr.bf16.mxu0 0
        %1261 = vmatpush1.bf16.msra.mxu0 0
        %1262 = vmatprep.mubr.bf16.mxu0 0
        %1263 = vmatmul.mubr.bf16.gmra.mrb[0].mxu0 %v1142
        %v1264 = vpop.f32.mrb[0].mxu0
        %v1265 = vadd.f32 0.0, %v1264
        %v1266 = vpop.f32.mrb[0].mxu0
        %v1267 = vadd.f32 0.0, %v1266
        %v1268 = vpop.f32.mrb[0].mxu0
        %v1269 = vadd.f32 0.0, %v1268
        %v1270 = vpop.f32.mrb[0].mxu0
        %v1271 = vadd.f32 0.0, %v1270
        %1272 = vdwg.mxu0
        %1273 = vmatprep.subr.bf16.mxu0 0
        %1274 = vmatpush1.bf16.msra.mxu0 %v1091
        %1275 = vmatprep.subr.bf16.mxu0 0
        %1276 = vmatpush1.bf16.msra.mxu0 %v1098
        %1277 = vmatprep.subr.bf16.mxu0 0
        %1278 = vmatpush1.bf16.msra.mxu0 %v1105
        %1279 = vmatprep.subr.bf16.mxu0 0
        %1280 = vmatpush1.bf16.msra.mxu0 %v1112
        %1281 = vmatprep.subr.bf16.mxu0 0
        %1282 = vmatpush1.bf16.msra.mxu0 0
        %1283 = vmatprep.subr.bf16.mxu0 0
        %1284 = vmatpush1.bf16.msra.mxu0 0
        %1285 = vmatprep.subr.bf16.mxu0 0
        %1286 = vmatpush1.bf16.msra.mxu0 0
        %1287 = vmatprep.subr.bf16.mxu0 0
        %1288 = vmatpush1.bf16.msra.mxu0 0
        %1289 = vmatprep.subr.bf16.mxu0 0
        %1290 = vmatpush1.bf16.msra.mxu0 0
        %1291 = vmatprep.subr.bf16.mxu0 0
        %1292 = vmatpush1.bf16.msra.mxu0 0
        %1293 = vmatprep.subr.bf16.mxu0 0
        %1294 = vmatpush1.bf16.msra.mxu0 0
        %1295 = vmatprep.subr.bf16.mxu0 0
        %1296 = vmatpush1.bf16.msra.mxu0 0
        %1297 = vmatprep.subr.bf16.mxu0 0
        %1298 = vmatpush1.bf16.msra.mxu0 0
        %1299 = vmatprep.subr.bf16.mxu0 0
        %1300 = vmatpush1.bf16.msra.mxu0 0
        %1301 = vmatprep.subr.bf16.mxu0 0
        %1302 = vmatpush1.bf16.msra.mxu0 0
        %1303 = vmatprep.subr.bf16.mxu0 0
        %1304 = vmatpush1.bf16.msra.mxu0 0
        %1305 = vmatprep.mubr.bf16.mxu0 0
        %1306 = vmatmul.mubr.bf16.gmra.mrb[0].mxu0 %v1142
        %v1307 = vpop.f32.mrb[0].mxu0
        %v1308 = vadd.f32 0.0, %v1307
        %v1309 = vpop.f32.mrb[0].mxu0
        %v1310 = vpop.f32.mrb[0].mxu0
        %v1311 = vadd.f32 0.0, %v1310
        %v1312 = vpop.f32.mrb[0].mxu0
        %1313 = vdwg.mxu0
        %v1314 = vadd.f32 %v824, %v1179
        %v1315 = vadd.f32 %v826, %v1181
        %v1316 = vadd.f32 %v867, %v1222
        %v1317 = vadd.f32 %v869, %v1224
        %v1318 = vadd.f32 %v910, %v1265
        %v1319 = vadd.f32 %v912, %v1267
        %v1320 = vadd.f32 %v953, %v1308
        %v1321 = vadd.f32 %v828, %v1183
        %v1322 = vadd.f32 %v830, %v1185
        %v1323 = vadd.f32 %v871, %v1226
        %v1324 = vadd.f32 %v873, %v1228
        %v1325 = vadd.f32 %v914, %v1269
        %v1326 = vadd.f32 %v916, %v1271
        %v1327 = vadd.f32 %v956, %v1311
        %v1329 = vlaneseq
        %v1330 = vshrl.u32 %v1329, 7
        %v1331 = vsub.s32 0, %v1330
        %v1332 = vrot.slane %v239, %v1331
        %v1333 = vlaneseq
        %v1334 = vshrl.u32 %v1333, 7
        %v1335 = vsub.s32 1, %v1334
        %v1336 = vrot.slane %v239, %v1335
        %v1337 = vlaneseq
        %v1338 = vshrl.u32 %v1337, 7
        %v1339 = vsub.s32 2, %v1338
        %v1340 = vrot.slane %v239, %v1339
        %v1341 = vlaneseq
        %v1342 = vshrl.u32 %v1341, 7
        %v1343 = vsub.s32 3, %v1342
        %v1344 = vrot.slane %v239, %v1343
        %v1345 = vlaneseq
        %v1346 = vshrl.u32 %v1345, 7
        %v1347 = vsub.s32 4, %v1346
        %v1348 = vrot.slane %v239, %v1347
        %v1349 = vlaneseq
        %v1350 = vshrl.u32 %v1349, 7
        %v1351 = vsub.s32 5, %v1350
        %v1352 = vrot.slane %v239, %v1351
        %v1353 = vlaneseq
        %v1354 = vshrl.u32 %v1353, 7
        %v1355 = vsub.s32 6, %v1354
        %v1356 = vrot.slane %v239, %v1355
        %v1364 = vmul.f32 %v1314, %v1332
        %v1365 = vmul.f32 %v1315, %v1336
        %v1366 = vmul.f32 %v1316, %v1340
        %v1367 = vmul.f32 %v1317, %v1344
        %v1368 = vmul.f32 %v1318, %v1348
        %v1369 = vmul.f32 %v1319, %v1352
        %v1370 = vmul.f32 %v1320, %v1356
        %v1371 = vmul.f32 %v1321, %v1332
        %v1372 = vmul.f32 %v1322, %v1336
        %v1373 = vmul.f32 %v1323, %v1340
        %v1374 = vmul.f32 %v1324, %v1344
        %v1375 = vmul.f32 %v1325, %v1348
        %v1376 = vmul.f32 %v1326, %v1352
        %v1377 = vmul.f32 %v1327, %v1356
        %v1379 = vlaneseq
        %v1380 = vshrl.u32 %v1379, 7
        %v1381 = vsub.s32 0, %v1380
        %v1382 = vrot.slane %v240, %v1381
        %v1383 = vlaneseq
        %v1384 = vshrl.u32 %v1383, 7
        %v1385 = vsub.s32 1, %v1384
        %v1386 = vrot.slane %v240, %v1385
        %v1387 = vlaneseq
        %v1388 = vshrl.u32 %v1387, 7
        %v1389 = vsub.s32 2, %v1388
        %v1390 = vrot.slane %v240, %v1389
        %v1391 = vlaneseq
        %v1392 = vshrl.u32 %v1391, 7
        %v1393 = vsub.s32 3, %v1392
        %v1394 = vrot.slane %v240, %v1393
        %v1395 = vlaneseq
        %v1396 = vshrl.u32 %v1395, 7
        %v1397 = vsub.s32 4, %v1396
        %v1398 = vrot.slane %v240, %v1397
        %v1399 = vlaneseq
        %v1400 = vshrl.u32 %v1399, 7
        %v1401 = vsub.s32 5, %v1400
        %v1402 = vrot.slane %v240, %v1401
        %v1403 = vlaneseq
        %v1404 = vshrl.u32 %v1403, 7
        %v1405 = vsub.s32 6, %v1404
        %v1406 = vrot.slane %v240, %v1405
        %v1414 = vadd.f32 %v1364, %v1382
        %v1415 = vadd.f32 %v1365, %v1386
        %v1416 = vadd.f32 %v1366, %v1390
        %v1417 = vadd.f32 %v1367, %v1394
        %v1418 = vadd.f32 %v1368, %v1398
        %v1419 = vadd.f32 %v1369, %v1402
        %v1420 = vadd.f32 %v1370, %v1406
        %v1421 = vadd.f32 %v1371, %v1382
        %v1422 = vadd.f32 %v1372, %v1386
        %v1423 = vadd.f32 %v1373, %v1390
        %v1424 = vadd.f32 %v1374, %v1394
        %v1425 = vadd.f32 %v1375, %v1398
        %v1426 = vadd.f32 %v1376, %v1402
        %v1427 = vadd.f32 %v1377, %v1406
        %v1428 = vmax.f32 %v1414, 0.0
        %v1429 = vmax.f32 %v1415, 0.0
        %v1430 = vmax.f32 %v1416, 0.0
        %v1431 = vmax.f32 %v1417, 0.0
        %v1432 = vmax.f32 %v1418, 0.0
        %v1433 = vmax.f32 %v1419, 0.0
        %v1434 = vmax.f32 %v1420, 0.0
        %v1435 = vmax.f32 %v1421, 0.0
        %v1436 = vmax.f32 %v1422, 0.0
        %v1437 = vmax.f32 %v1423, 0.0
        %v1438 = vmax.f32 %v1424, 0.0
        %v1439 = vmax.f32 %v1425, 0.0
        %v1440 = vmax.f32 %v1426, 0.0
        %v1441 = vmax.f32 %v1427, 0.0
        %1448 = vrot.lane.b32.xlu0 %v1429, 32
        %v1449 = vpop.permute.xlu0 %1448
        %1450 = vrot.lane.b32.xlu0 %v1430, 32
        %v1451 = vpop.permute.xlu0 %1450
        %1452 = vrot.lane.b32.xlu0 %v1431, 32
        %v1453 = vpop.permute.xlu0 %1452
        %1454 = vrot.lane.b32.xlu0 %v1436, 32
        %v1455 = vpop.permute.xlu0 %1454
        %1456 = vrot.lane.b32.xlu0 %v1437, 32
        %v1457 = vpop.permute.xlu0 %1456
        %1458 = vrot.lane.b32.xlu0 %v1438, 32
        %v1459 = vpop.permute.xlu0 %1458
        %vm1460 = vcmask 261120
        %v1461 = vsel %vm1460, %v1449, %v1451
        %v1462 = vsel %vm1460, %v1451, %v1453
        %v1463 = vsel %vm1460, %v1455, %v1457
        %v1464 = vsel %vm1460, %v1457, %v1459
        %v1469 = vmax.f32 %v1428, %v1461
        %v1470 = vmax.f32 %v1429, %v1462
        %v1471 = vmax.f32 %v1435, %v1463
        %v1472 = vmax.f32 %v1436, %v1464
        %1477 = vrot.lane.b32.xlu0 %v1433, 32
        %v1478 = vpop.permute.xlu0 %1477
        %1479 = vrot.lane.b32.xlu0 %v1434, 32
        %v1480 = vpop.permute.xlu0 %1479
        %1481 = vrot.lane.b32.xlu0 %v1440, 32
        %v1482 = vpop.permute.xlu0 %1481
        %1483 = vrot.lane.b32.xlu0 %v1441, 32
        %v1484 = vpop.permute.xlu0 %1483
        %v1485 = vsel %vm1460, %v1478, %v1480
        %v1486 = vsel %vm1460, %v1482, %v1484
        %v1493 = vmax.f32 %v1431, %v1478
        %v1494 = vmax.f32 %v1432, %v1485
        %v1495 = vmax.f32 %v1433, %v1480
        %v1496 = vmax.f32 %v1438, %v1482
        %v1497 = vmax.f32 %v1439, %v1486
        %v1498 = vmax.f32 %v1440, %v1484
        %1505 = vrot.lane.b32.xlu0 %v1493, 64
        %v1506 = vpop.permute.xlu0 %1505
        %1507 = vrot.lane.b32.xlu0 %v1494, 64
        %v1508 = vpop.permute.xlu0 %1507
        %1509 = vrot.lane.b32.xlu0 %v1495, 64
        %v1510 = vpop.permute.xlu0 %1509
        %1511 = vrot.lane.b32.xlu0 %v1496, 64
        %v1512 = vpop.permute.xlu0 %1511
        %1513 = vrot.lane.b32.xlu0 %v1497, 64
        %v1514 = vpop.permute.xlu0 %1513
        %1515 = vrot.lane.b32.xlu0 %v1498, 64
        %v1516 = vpop.permute.xlu0 %1515
        %v1517 = vsel %vm465, %v1506, %v1508
        %v1518 = vsel %vm465, %v1508, %v1510
        %v1519 = vsel %vm465, %v1512, %v1514
        %v1520 = vsel %vm465, %v1514, %v1516
        %v1525 = vmax.f32 %v1469, %v1517
        %v1526 = vmax.f32 %v1470, %v1518
        %v1527 = vmax.f32 %v1471, %v1519
        %v1528 = vmax.f32 %v1472, %v1520
        %v1529 = vpack.c.bf16 %v1527, %v1525
        %v1530 = vpack.c.bf16 %v1528, %v1526
        %v1533 = vunpack.c.l.b16 %v1529
        %v1534 = vunpack.c.l.b16 %v1530
        %v1535 = vunpack.c.h.b16 %v1529
        %v1536 = vunpack.c.h.b16 %v1530
        %v1537 = vpack.c.b16 %v1534, %v1533
        %v1538 = vpack.c.b16 %v1536, %v1535
        %vm1541 = vcmask 1043456
        %vm1542 = vcmask 785412
        %vm1543 = vmor %vm1542, %vm1541
        %1544 = vst.msk [vmem:[%s237] sm:$0xff] %vm1543, %v1537
        %vm1545 = vcmask 1042432
        %vm1546 = vcmask 784388
        %vm1547 = vmor %vm1546, %vm1545
        %1548 = vst.msk [vmem:[%s237 + $0x8] sm:$0x77] %vm1547, %v1538
        %p1549 = scmp.lt.s32.totalorder %s17, 1
        %s1550 = scalar_select %p1549, %s17, 1
        %s1551 = smul.addr %s1550, 4
        %s1552 = smul.addr %s1551, 4
        %s1553 = scalar_lea.vmem %s4, %s1552
        // Predicated region
        $region49: #{cnn_fmnist_forward.3} parent=35 // pred_check
          %p1554 = pneg %p124
        $region50: #{cnn_fmnist_forward.3} parent=35 // pred_check_branch
          %1556 = sbr.rel (%p1554) target = $region52
        $region51: #{cnn_fmnist_forward.3} parent=35 // pred_region
          _
        $region52: #{cnn_fmnist_forward.3} parent=35 // pred_fallthru
          _
      $region36: #{cnn_fmnist_forward.3} parent=5 // pred_fallthru
        _
      %p1557 = scmp.le.s32.totalorder 2, %s12
      // Predicated region
      $region53: #{cnn_fmnist_forward.3} parent=5 // pred_check
        %p1558 = pneg %p1557
      $region54: #{cnn_fmnist_forward.3} parent=5 // pred_check_branch
        %1560 = sbr.rel (%p1558) target = $region56
      $region55: #{cnn_fmnist_forward.3} parent=5 // pred_region
        %s1561 = ssub.s32 %s12, 2
        // Predicated region
        $region57: #{cnn_fmnist_forward.3} parent=55 // pred_check
          %p1562 = pneg %p130
        $region58: #{cnn_fmnist_forward.3} parent=55 // pred_check_branch
          %1564 = sbr.rel (%p1562) target = $region60
        $region59: #{cnn_fmnist_forward.3} parent=55 // pred_region
          %p1565 = scmp.lt.s32.totalorder %s18, 1
          %s1566 = scalar_select %p1565, %s18, 1
          %s1567 = smul.addr %s1566, 4
          %s1568 = smul.addr %s1567, 4
          %s1569 = scalar_lea.vmem %s4, %s1568
        $region60: #{cnn_fmnist_forward.3} parent=55 // pred_fallthru
          _
      $region56: #{cnn_fmnist_forward.3} parent=5 // pred_fallthru
        _
    $region6: #{cnn_fmnist_forward.3} parent=1 // loop_footer
      %s16 = sadd.s32 1, %s12
    $region7: #{cnn_fmnist_forward.3} parent=1 // loop_footer_branch
      %11 = sbr.rel target = $region3
    $region8: #{cnn_fmnist_forward.3} parent=1 // loop_exit
      _
    %1570 = vsyncpa [#allocation3], 1
    %s1571 = scalar_lea.sflag [#allocation3], 1
    %1572 = vsyncpa %s1571, 1
    %1573 = vsyncpa [#allocation5], 1

// kernel: cnn_fmnist_forward.4
$region0: #{cnn_fmnist_forward.4}
  #allocation0 [shape = 'u32[]', space=smem, size = 0x4, offset = 0x4, fixed_abs, tag = 'smem constant byte address 0x4 - core index']
  #allocation1 [shape = 'u32[144,128]{1,0:T(1,128)}', space=vmem, size = 0x12000, scoped, tag = 'internal scratch']
  %s0 = inlined_call_operand.vmem [shape: bf16[2,14,224], index: 0, kind: input, shape index: {}]
  %s1 = inlined_call_operand.hbm [shape: bf16[3,224,384], index: 1, kind: input, shape index: {}]
  %s2 = inlined_call_operand.hbm [shape: f32[1,384], index: 2, kind: input, shape index: {}]
  %s3 = inlined_call_operand.hbm [shape: f32[1,384], index: 3, kind: input, shape index: {}]
  %s4 = inlined_call_operand.vmem [shape: bf16[2,12,384], index: 4, kind: output, shape index: {}]
  %s5 = sld [smem:[#allocation0]]
  $region61: #{cnn_fmnist_forward.4} parent=0
    _
  %s7 = ssub.s32 1, %s5
  %s8 = scalar_select 0, %s7, %s5
  $region1: #{cnn_fmnist_forward.4} parent=0
    #allocation2 [shape = 'u8[516096]{0}', space=vmem, size = 0x7e000, scoped, tag = 'input window, operand 1, single buffered']
    #allocation3 [shape = 's32[2]{0}', space=sflag, size = 0x8, scoped, tag = 'scoped memory for cnn_fmnist_forward.4']
    #allocation4 [shape = 'u8[1536]{0}', space=vmem, size = 0x800, scoped, tag = 'input window, operand 2, single buffered']
    #allocation5 [shape = 's32[1]{0}', space=sflag, size = 0x4, scoped, tag = 'scoped memory for cnn_fmnist_forward.4']
    #allocation6 [shape = 'u8[1536]{0}', space=vmem, size = 0x800, scoped, tag = 'input window, operand 3, single buffered']
    %9 = vsyncpa [#allocation3], 0
    %10 = vsyncpa [#allocation5], 0
    loop: start=0, step=1, limit=4
    $region2: #{cnn_fmnist_forward.4} parent=1 // loop_pre_header
      _
    $region3: #{cnn_fmnist_forward.4} parent=1 // loop_header
      %s12 = sphi 0, %s16
      %p13 = scmp.ge.s32.totalorder %s12, 4
      %s22 = sphi 0, %s24
      %s25 = sphi 0, %s22
      %s26 = sphi 0, %s25
      %s42 = sphi 0, %s26
      %s46 = sphi 0, %s46
      %s48 = sphi 0, %s46
      %s49 = sphi 0, %s48
      %s63 = sphi 0, %s49
      %s67 = sphi 0, %s67
      %s69 = sphi 0, %s67
      %s70 = sphi 0, %s69
      %s84 = sphi 0, %s70
      %s88 = sphi 0, %s88
      %s90 = sphi 0, %s88
      %s91 = sphi 0, %s90
      %s105 = sphi 0, %s91
      %s111 = sphi 0, %s113
      %s114 = sphi 0, %s111
      %s115 = sphi 0, %s114
      %s131 = sphi 0, %s115
    $region4: #{cnn_fmnist_forward.4} parent=1 // loop_header_branch
      %15 = sbr.rel (%p13) target = $region8
    $region5: #{cnn_fmnist_forward.4} parent=1 // loop_body
      %s17 = ssub.s32 %s12, 1
      %s18 = ssub.s32 %s12, 2
      %s19 = sadd.s32 %s12, 1
      %s20 = ssub.s32 %s12, %s19
      %p21 = scmp.eq.s32.totalorder %s20, 0
      %s23 = sadd.s32 %s22, 1
      %s24 = scalar_select %p21, %s22, %s23
      %p27 = pneg %p21
      %p28 = scmp.eq.s32.totalorder %s12, 1
      %p29 = por %p27, %p28
      %p30 = scmp.ne.s32.totalorder %s22, %s25
      %p31 = scmp.eq.s32.totalorder %s12, 0
      %p32 = por %p30, %p31
      %p33 = scmp.ne.s32.totalorder %s22, %s25
      %p34 = scmp.eq.s32.totalorder %s17, 1
      %p35 = por %p33, %p34
      %p36 = scmp.ne.s32.totalorder %s25, %s26
      %p37 = scmp.eq.s32.totalorder %s17, 0
      %p38 = por %p36, %p37
      %p39 = scmp.ne.s32.totalorder %s25, %s26
      %p40 = scmp.eq.s32.totalorder %s18, 1
      %p41 = por %p39, %p40
      %p43 = scmp.ne.s32.totalorder %s26, %s42
      %p44 = scmp.eq.s32.totalorder %s18, 0
      %p45 = por %p43, %p44
      %s47 = sadd.s32 %s46, 1
      %p50 = scmp.eq.s32.totalorder %s12, 1
      %p51 = scmp.ne.s32.totalorder %s46, %s48
      %p52 = scmp.eq.s32.totalorder %s12, 0
      %p53 = por %p51, %p52
      %p54 = scmp.ne.s32.totalorder %s46, %s48
      %p55 = scmp.eq.s32.totalorder %s17, 1
      %p56 = por %p54, %p55
      %p57 = scmp.ne.s32.totalorder %s48, %s49
      %p58 = scmp.eq.s32.totalorder %s17, 0
      %p59 = por %p57, %p58
      %p60 = scmp.ne.s32.totalorder %s48, %s49
      %p61 = scmp.eq.s32.totalorder %s18, 1
      %p62 = por %p60, %p61
      %p64 = scmp.ne.s32.totalorder %s49, %s63
      %p65 = scmp.eq.s32.totalorder %s18, 0
      %p66 = por %p64, %p65
      %s68 = sadd.s32 %s67, 1
      %p71 = scmp.eq.s32.totalorder %s12, 1
      %p72 = scmp.ne.s32.totalorder %s67, %s69
      %p73 = scmp.eq.s32.totalorder %s12, 0
      %p74 = por %p72, %p73
      %p75 = scmp.ne.s32.totalorder %s67, %s69
      %p76 = scmp.eq.s32.totalorder %s17, 1
      %p77 = por %p75, %p76
      %p78 = scmp.ne.s32.totalorder %s69, %s70
      %p79 = scmp.eq.s32.totalorder %s17, 0
      %p80 = por %p78, %p79
      %p81 = scmp.ne.s32.totalorder %s69, %s70
      %p82 = scmp.eq.s32.totalorder %s18, 1
      %p83 = por %p81, %p82
      %p85 = scmp.ne.s32.totalorder %s70, %s84
      %p86 = scmp.eq.s32.totalorder %s18, 0
      %p87 = por %p85, %p86
      %s89 = sadd.s32 %s88, 1
      %p92 = scmp.eq.s32.totalorder %s12, 1
      %p93 = scmp.ne.s32.totalorder %s88, %s90
      %p94 = scmp.eq.s32.totalorder %s12, 0
      %p95 = por %p93, %p94
      %p96 = scmp.ne.s32.totalorder %s88, %s90
      %p97 = scmp.eq.s32.totalorder %s17, 1
      %p98 = por %p96, %p97
      %p99 = scmp.ne.s32.totalorder %s90, %s91
      %p100 = scmp.eq.s32.totalorder %s17, 0
      %p101 = por %p99, %p100
      %p102 = scmp.ne.s32.totalorder %s90, %s91
      %p103 = scmp.eq.s32.totalorder %s18, 1
      %p104 = por %p102, %p103
      %p106 = scmp.ne.s32.totalorder %s91, %s105
      %p107 = scmp.eq.s32.totalorder %s18, 0
      %p108 = por %p106, %p107
      %s109 = ssub.s32 %s12, %s19
      %p110 = scmp.eq.s32.totalorder %s109, 0
      %s112 = sadd.s32 %s111, 1
      %s113 = scalar_select %p110, %s111, %s112
      %p116 = pneg %p110
      %p117 = scmp.eq.s32.totalorder %s12, 1
      %p118 = por %p116, %p117
      %p119 = scmp.ne.s32.totalorder %s111, %s114
      %p120 = scmp.eq.s32.totalorder %s12, 0
      %p121 = por %p119, %p120
      %p122 = scmp.ne.s32.totalorder %s111, %s114
      %p123 = scmp.eq.s32.totalorder %s17, 1
      %p124 = por %p122, %p123
      %p125 = scmp.ne.s32.totalorder %s114, %s115
      %p126 = scmp.eq.s32.totalorder %s17, 0
      %p127 = por %p125, %p126
      %p128 = scmp.ne.s32.totalorder %s114, %s115
      %p129 = scmp.eq.s32.totalorder %s18, 1
      %p130 = por %p128, %p129
      %p132 = scmp.ne.s32.totalorder %s115, %s131
      %p133 = scmp.eq.s32.totalorder %s18, 0
      %p134 = por %p132, %p133
      %p135 = scmp.le.s32.totalorder 1, %s12
      %p136 = scmp.lt.s32.totalorder %s12, 3
      %p137 = pnand %p135, %p136
      %p138 = pneg %p137
      // Predicated region
      $region9: #{cnn_fmnist_forward.4} parent=5 // pred_check
        _
      $region10: #{cnn_fmnist_forward.4} parent=5 // pred_check_branch
        %140 = sbr.rel (%p137) target = $region12
      $region11: #{cnn_fmnist_forward.4} parent=5 // pred_region
        %s141 = ssub.s32 %s12, 1
        // Predicated region
        $region13: #{cnn_fmnist_forward.4} parent=11 // pred_check
          %p142 = pneg %p59
        $region14: #{cnn_fmnist_forward.4} parent=11 // pred_check_branch
          %144 = sbr.rel (%p142) target = $region16
        $region15: #{cnn_fmnist_forward.4} parent=11 // pred_region
          %s146 = ssub.s32 16128, 16128
          %147 = vsyncadd [#allocation3], %s146
          %s148 = sshll.u32 [#allocation2], 4
          %s149 = int_to_ptr.vmem [resolvable:$true] %s148
          %154 = dma.hbm_to_vmem [thread:$0]  %s1, 16128, %s149, [#allocation3], 192, 192, 12
        $region16: #{cnn_fmnist_forward.4} parent=11 // pred_fallthru
          _
        // Predicated region
        $region17: #{cnn_fmnist_forward.4} parent=11 // pred_check
          %p155 = pneg %p80
        $region18: #{cnn_fmnist_forward.4} parent=11 // pred_check_branch
          %157 = sbr.rel (%p155) target = $region20
        $region19: #{cnn_fmnist_forward.4} parent=11 // pred_region
          %s159 = ssub.s32 48, 48
          %160 = vsyncadd [#allocation5], %s159
          %s162 = sshll.u32 [#allocation4], 4
          %s163 = int_to_ptr.vmem [resolvable:$true] %s162
          %165 = dma.hbm_to_vmem [thread:$0]  %s2, 48, %s163, [#allocation5]
        $region20: #{cnn_fmnist_forward.4} parent=11 // pred_fallthru
          _
        // Predicated region
        $region21: #{cnn_fmnist_forward.4} parent=11 // pred_check
          %p166 = pneg %p101
        $region22: #{cnn_fmnist_forward.4} parent=11 // pred_check_branch
          %168 = sbr.rel (%p166) target = $region24
        $region23: #{cnn_fmnist_forward.4} parent=11 // pred_region
          %s170 = ssub.s32 48, 48
          %171 = vsyncadd [#allocation5], %s170
          %s173 = sshll.u32 [#allocation6], 4
          %s174 = int_to_ptr.vmem [resolvable:$true] %s173
          %176 = dma.hbm_to_vmem [thread:$0]  %s3, 48, %s174, [#allocation5]
        $region24: #{cnn_fmnist_forward.4} parent=11 // pred_fallthru
          _
      $region12: #{cnn_fmnist_forward.4} parent=5 // pred_fallthru
        _
      %p177 = scmp.lt.s32.totalorder %s12, 2
      // Predicated region
      $region25: #{cnn_fmnist_forward.4} parent=5 // pred_check
        %p178 = pneg %p177
      $region26: #{cnn_fmnist_forward.4} parent=5 // pred_check_branch
        %180 = sbr.rel (%p178) target = $region28
      $region27: #{cnn_fmnist_forward.4} parent=5 // pred_region
        // Predicated region
        $region29: #{cnn_fmnist_forward.4} parent=27 // pred_check
          %p181 = pneg %p32
        $region30: #{cnn_fmnist_forward.4} parent=27 // pred_check_branch
          %183 = sbr.rel (%p181) target = $region32
        $region31: #{cnn_fmnist_forward.4} parent=27 // pred_region
          %p184 = scmp.lt.s32.totalorder %s12, 1
          %s185 = scalar_select %p184, %s12, 1
          %s186 = smul.addr %s185, 4
          %s187 = smul.addr %s186, 4
          %s188 = scalar_lea.vmem %s0, %s187
        $region32: #{cnn_fmnist_forward.4} parent=27 // pred_fallthru
          _
      $region28: #{cnn_fmnist_forward.4} parent=5 // pred_fallthru
        _
      %p189 = scmp.le.s32.totalorder 1, %s12
      %p190 = scmp.lt.s32.totalorder %s12, 3
      %p191 = pnand %p189, %p190
      %p192 = pneg %p191
      // Predicated region
      $region33: #{cnn_fmnist_forward.4} parent=5 // pred_check
        _
      $region34: #{cnn_fmnist_forward.4} parent=5 // pred_check_branch
        %194 = sbr.rel (%p191) target = $region36
      $region35: #{cnn_fmnist_forward.4} parent=5 // pred_region
        %s195 = ssub.s32 %s12, 1
        // Predicated region
        $region37: #{cnn_fmnist_forward.4} parent=35 // pred_check
          %p196 = pneg %p59
        $region38: #{cnn_fmnist_forward.4} parent=35 // pred_check_branch
          %198 = sbr.rel (%p196) target = $region40
        $region39: #{cnn_fmnist_forward.4} parent=35 // pred_region
          %199 = dma.done [#allocation3], 16128
        $region40: #{cnn_fmnist_forward.4} parent=35 // pred_fallthru
          _
        // Predicated region
        $region41: #{cnn_fmnist_forward.4} parent=35 // pred_check
          %p200 = pneg %p80
        $region42: #{cnn_fmnist_forward.4} parent=35 // pred_check_branch
          %202 = sbr.rel (%p200) target = $region44
        $region43: #{cnn_fmnist_forward.4} parent=35 // pred_region
          %203 = dma.done [#allocation5], 48
        $region44: #{cnn_fmnist_forward.4} parent=35 // pred_fallthru
          _
        // Predicated region
        $region45: #{cnn_fmnist_forward.4} parent=35 // pred_check
          %p204 = pneg %p101
        $region46: #{cnn_fmnist_forward.4} parent=35 // pred_check_branch
          %206 = sbr.rel (%p204) target = $region48
        $region47: #{cnn_fmnist_forward.4} parent=35 // pred_region
          %207 = dma.done [#allocation5], 48
        $region48: #{cnn_fmnist_forward.4} parent=35 // pred_fallthru
          _
        %p208 = scmp.lt.s32.totalorder %s17, 1
        %s209 = scalar_select %p208, %s17, 1
        %s210 = smul.addr %s209, 4
        %s211 = smul.addr %s210, 4
        %s212 = scalar_lea.vmem %s0, %s211
        %p213 = pneg %p38
        %p214 = pneg %p35
        %p215 = pneg %p59
        %p216 = pneg %p56
        %p217 = pneg %p80
        %p218 = pneg %p77
        %p219 = pneg %p101
        %p220 = pneg %p98
        %p221 = pneg %p127
        %p222 = pneg %p124
        %p223 = scmp.lt.s32.totalorder %s17, 1
        %s224 = scalar_select %p223, %s17, 1
        %s225 = smul.addr %s224, 6
        %s226 = smul.addr %s225, 4
        %s227 = scalar_lea.vmem %s4, %s226
        %p228 = scmp.lt.s32.totalorder %s17, 1
        %s229 = scalar_select %p228, %s17, 1
        %s230 = smul.addr %s229, 4
        %s231 = smul.addr %s230, 4
        %s232 = scalar_lea.vmem %s0, %s231
        %p233 = scmp.lt.s32.totalorder %s17, 1
        %s234 = scalar_select %p233, %s17, 1
        %s235 = smul.addr %s234, 6
        %s236 = smul.addr %s235, 4
        %s237 = scalar_lea.vmem %s4, %s236
        %v239 = vld [vmem:[#allocation4] sm:$0x7]
        %v240 = vld [vmem:[#allocation6] sm:$0x7]
        %v241 = vld [vmem:[%s232] sm:$0xff]
        %v242 = vld [vmem:[%s232 + $0x8] sm:$0x33]
        %v243 = vld [vmem:[#allocation2] sm:$0xff]
        %v244 = vld [vmem:[#allocation2 + $0x8] sm:$0xf]
        %v245 = vld [vmem:[#allocation2 + $0xc] sm:$0xff]
        %v246 = vld [vmem:[#allocation2 + $0x14] sm:$0xf]
        %v247 = vld [vmem:[#allocation2 + $0x18] sm:$0xff]
        %v248 = vld [vmem:[#allocation2 + $0x20] sm:$0xf]
        %v249 = vld [vmem:[#allocation2 + $0x24] sm:$0xff]
        %v250 = vld [vmem:[#allocation2 + $0x2c] sm:$0xf]
        %v251 = vld [vmem:[#allocation2 + $0x30] sm:$0xff]
        %v252 = vld [vmem:[#allocation2 + $0x38] sm:$0xf]
        %v253 = vld [vmem:[#allocation2 + $0x3c] sm:$0xff]
        %v254 = vld [vmem:[#allocation2 + $0x44] sm:$0xf]
        %v255 = vld [vmem:[#allocation2 + $0x48] sm:$0xff]
        %v256 = vld [vmem:[#allocation2 + $0x50] sm:$0xf]
        %v257 = vld [vmem:[#allocation2 + $0x54] sm:$0xff]
        %v258 = vld [vmem:[#allocation2 + $0x5c] sm:$0xf]
        %v259 = vld [vmem:[#allocation2 + $0x60] sm:$0xff]
        %v260 = vld [vmem:[#allocation2 + $0x68] sm:$0xf]
        %v261 = vld [vmem:[#allocation2 + $0x6c] sm:$0xff]
        %v262 = vld [vmem:[#allocation2 + $0x74] sm:$0xf]
        %v263 = vld [vmem:[#allocation2 + $0x78] sm:$0xff]
        %v264 = vld [vmem:[#allocation2 + $0x80] sm:$0xf]
        %v265 = vld [vmem:[#allocation2 + $0x84] sm:$0xff]
        %v266 = vld [vmem:[#allocation2 + $0x8c] sm:$0xf]
        %v267 = vld [vmem:[#allocation2 + $0x90] sm:$0xff]
        %v268 = vld [vmem:[#allocation2 + $0x98] sm:$0xf]
        %v269 = vld [vmem:[#allocation2 + $0x9c] sm:$0xff]
        %v270 = vld [vmem:[#allocation2 + $0xa4] sm:$0xf]
        %v271 = vld [vmem:[#allocation2 + $0xa8] sm:$0xff]
        %v272 = vld [vmem:[#allocation2 + $0xb0] sm:$0xf]
        %v273 = vld [vmem:[#allocation2 + $0xb4] sm:$0xff]
        %v274 = vld [vmem:[#allocation2 + $0xbc] sm:$0xf]
        %v275 = vld [vmem:[#allocation2 + $0xc0] sm:$0xff]
        %v276 = vld [vmem:[#allocation2 + $0xc8] sm:$0xf]
        %v277 = vld [vmem:[#allocation2 + $0xcc] sm:$0xff]
        %v278 = vld [vmem:[#allocation2 + $0xd4] sm:$0xf]
        %v279 = vld [vmem:[#allocation2 + $0xd8] sm:$0xff]
        %v280 = vld [vmem:[#allocation2 + $0xe0] sm:$0xf]
        %v281 = vld [vmem:[#allocation2 + $0xe4] sm:$0xff]
        %v282 = vld [vmem:[#allocation2 + $0xec] sm:$0xf]
        %v283 = vld [vmem:[#allocation2 + $0xf0] sm:$0xff]
        %v284 = vld [vmem:[#allocation2 + $0xf8] sm:$0xf]
        %v285 = vld [vmem:[#allocation2 + $0xfc] sm:$0xff]
        %v286 = vld [vmem:[#allocation2 + $0x104] sm:$0xf]
        %v287 = vld [vmem:[#allocation2 + $0x108] sm:$0xff]
        %v288 = vld [vmem:[#allocation2 + $0x110] sm:$0xf]
        %v289 = vld [vmem:[#allocation2 + $0x114] sm:$0xff]
        %v290 = vld [vmem:[#allocation2 + $0x11c] sm:$0xf]
        %v291 = vld [vmem:[#allocation2 + $0x120] sm:$0xff]
        %v292 = vld [vmem:[#allocation2 + $0x128] sm:$0xf]
        %v293 = vld [vmem:[#allocation2 + $0x12c] sm:$0xff]
        %v294 = vld [vmem:[#allocation2 + $0x134] sm:$0xf]
        %v295 = vld [vmem:[#allocation2 + $0x138] sm:$0xff]
        %v296 = vld [vmem:[#allocation2 + $0x140] sm:$0xf]
        %v297 = vld [vmem:[#allocation2 + $0x144] sm:$0xff]
        %v298 = vld [vmem:[#allocation2 + $0x14c] sm:$0xf]
        %v299 = vld [vmem:[%s232 + $0x8] sm:$0x77]
        %s300 = scalar_lea.vmem [#allocation2], 336
        %v301 = vld [vmem:[%s300] sm:$0xff]
        %v302 = vld [vmem:[%s300 + $0x8] sm:$0xf]
        %v303 = vld [vmem:[%s300 + $0xc] sm:$0xff]
        %v304 = vld [vmem:[%s300 + $0x14] sm:$0xf]
        %v305 = vld [vmem:[%s300 + $0x18] sm:$0xff]
        %v306 = vld [vmem:[%s300 + $0x20] sm:$0xf]
        %v307 = vld [vmem:[%s300 + $0x24] sm:$0xff]
        %v308 = vld [vmem:[%s300 + $0x2c] sm:$0xf]
        %v309 = vld [vmem:[%s300 + $0x30] sm:$0xff]
        %v310 = vld [vmem:[%s300 + $0x38] sm:$0xf]
        %v311 = vld [vmem:[%s300 + $0x3c] sm:$0xff]
        %v312 = vld [vmem:[%s300 + $0x44] sm:$0xf]
        %v313 = vld [vmem:[%s300 + $0x48] sm:$0xff]
        %v314 = vld [vmem:[%s300 + $0x50] sm:$0xf]
        %v315 = vld [vmem:[%s300 + $0x54] sm:$0xff]
        %v316 = vld [vmem:[%s300 + $0x5c] sm:$0xf]
        %v317 = vld [vmem:[%s300 + $0x60] sm:$0xff]
        %v318 = vld [vmem:[%s300 + $0x68] sm:$0xf]
        %v319 = vld [vmem:[%s300 + $0x6c] sm:$0xff]
        %v320 = vld [vmem:[%s300 + $0x74] sm:$0xf]
        %v321 = vld [vmem:[%s300 + $0x78] sm:$0xff]
        %v322 = vld [vmem:[%s300 + $0x80] sm:$0xf]
        %v323 = vld [vmem:[%s300 + $0x84] sm:$0xff]
        %v324 = vld [vmem:[%s300 + $0x8c] sm:$0xf]
        %v325 = vld [vmem:[%s300 + $0x90] sm:$0xff]
        %v326 = vld [vmem:[%s300 + $0x98] sm:$0xf]
        %v327 = vld [vmem:[%s300 + $0x9c] sm:$0xff]
        %v328 = vld [vmem:[%s300 + $0xa4] sm:$0xf]
        %v329 = vld [vmem:[%s300 + $0xa8] sm:$0xff]
        %v330 = vld [vmem:[%s300 + $0xb0] sm:$0xf]
        %v331 = vld [vmem:[%s300 + $0xb4] sm:$0xff]
        %v332 = vld [vmem:[%s300 + $0xbc] sm:$0xf]
        %v333 = vld [vmem:[%s300 + $0xc0] sm:$0xff]
        %v334 = vld [vmem:[%s300 + $0xc8] sm:$0xf]
        %v335 = vld [vmem:[%s300 + $0xcc] sm:$0xff]
        %v336 = vld [vmem:[%s300 + $0xd4] sm:$0xf]
        %v337 = vld [vmem:[%s300 + $0xd8] sm:$0xff]
        %v338 = vld [vmem:[%s300 + $0xe0] sm:$0xf]
        %v339 = vld [vmem:[%s300 + $0xe4] sm:$0xff]
        %v340 = vld [vmem:[%s300 + $0xec] sm:$0xf]
        %v341 = vld [vmem:[%s300 + $0xf0] sm:$0xff]
        %v342 = vld [vmem:[%s300 + $0xf8] sm:$0xf]
        %v343 = vld [vmem:[%s300 + $0xfc] sm:$0xff]
        %v344 = vld [vmem:[%s300 + $0x104] sm:$0xf]
        %v345 = vld [vmem:[%s300 + $0x108] sm:$0xff]
        %v346 = vld [vmem:[%s300 + $0x110] sm:$0xf]
        %v347 = vld [vmem:[%s300 + $0x114] sm:$0xff]
        %v348 = vld [vmem:[%s300 + $0x11c] sm:$0xf]
        %v349 = vld [vmem:[%s300 + $0x120] sm:$0xff]
        %v350 = vld [vmem:[%s300 + $0x128] sm:$0xf]
        %v351 = vld [vmem:[%s300 + $0x12c] sm:$0xff]
        %v352 = vld [vmem:[%s300 + $0x134] sm:$0xf]
        %v353 = vld [vmem:[%s300 + $0x138] sm:$0xff]
        %v354 = vld [vmem:[%s300 + $0x140] sm:$0xf]
        %v355 = vld [vmem:[%s300 + $0x144] sm:$0xff]
        %v356 = vld [vmem:[%s300 + $0x14c] sm:$0xf]
        %v359 = vunpack.c.l.b16 %v241
        %v360 = vunpack.c.h.b16 %v241
        %v361 = vunpack.c.l.b16 %v299
        %v362 = vunpack.c.h.b16 %v299
        %v363 = vpack.c.b16 %v361, %v359
        %v364 = vpack.c.b16 %v362, %v360
        %v366 = vshrl.u32 %v363, 16
        %v368 = vshll.u32 %v363, 16
        %v370 = vrot.slane %v368, 1
        %v371 = vor.u32 %v366, %v370
        %v373 = vshrl.u32 %v364, 16
        %v375 = vshll.u32 %v364, 16
        %v377 = vrot.slane %v375, 1
        %v378 = vor.u32 %v373, %v377
        %v436 = vunpack.c.l.b16 %v301
        %v437 = vunpack.c.h.b16 %v301
        %v438 = vunpack.c.l.b16 %v302
        %v439 = vunpack.c.l.b16 %v303
        %v440 = vunpack.c.h.b16 %v303
        %v441 = vunpack.c.l.b16 %v304
        %v442 = vunpack.c.l.b16 %v305
        %v443 = vunpack.c.h.b16 %v305
        %v444 = vunpack.c.l.b16 %v306
        %v445 = vunpack.c.l.b16 %v307
        %v446 = vunpack.c.h.b16 %v307
        %v447 = vunpack.c.l.b16 %v308
        %v448 = vunpack.c.l.b16 %v309
        %v449 = vunpack.c.h.b16 %v309
        %v450 = vunpack.c.l.b16 %v310
        %v451 = vunpack.c.l.b16 %v311
        %v452 = vunpack.c.h.b16 %v311
        %v453 = vunpack.c.l.b16 %v312
        %v454 = vunpack.c.l.b16 %v313
        %v455 = vunpack.c.h.b16 %v313
        %v456 = vunpack.c.l.b16 %v314
        %v457 = vunpack.c.l.b16 %v315
        %v458 = vunpack.c.h.b16 %v315
        %v459 = vunpack.c.l.b16 %v316
        %v460 = vunpack.c.l.b16 %v317
        %v461 = vunpack.c.h.b16 %v317
        %v462 = vunpack.c.l.b16 %v318
        %v463 = vunpack.c.l.b16 %v319
        %v464 = vunpack.c.h.b16 %v319
        %v465 = vunpack.c.l.b16 %v320
        %v466 = vunpack.c.l.b16 %v321
        %v467 = vunpack.c.h.b16 %v321
        %v468 = vunpack.c.l.b16 %v322
        %v469 = vunpack.c.l.b16 %v323
        %v470 = vunpack.c.h.b16 %v323
        %v471 = vunpack.c.l.b16 %v324
        %v472 = vunpack.c.l.b16 %v325
        %v473 = vunpack.c.h.b16 %v325
        %v474 = vunpack.c.l.b16 %v326
        %v475 = vunpack.c.l.b16 %v327
        %v476 = vunpack.c.h.b16 %v327
        %v477 = vunpack.c.l.b16 %v328
        %v478 = vunpack.c.l.b16 %v329
        %v479 = vunpack.c.h.b16 %v329
        %v480 = vunpack.c.l.b16 %v330
        %v481 = vunpack.c.l.b16 %v331
        %v482 = vunpack.c.h.b16 %v331
        %v483 = vunpack.c.l.b16 %v332
        %v484 = vunpack.c.l.b16 %v333
        %v485 = vunpack.c.h.b16 %v333
        %v486 = vunpack.c.l.b16 %v334
        %v487 = vunpack.c.l.b16 %v335
        %v488 = vunpack.c.h.b16 %v335
        %v489 = vunpack.c.l.b16 %v336
        %v490 = vunpack.c.l.b16 %v337
        %v491 = vunpack.c.h.b16 %v337
        %v492 = vunpack.c.l.b16 %v338
        %v493 = vunpack.c.l.b16 %v339
        %v494 = vunpack.c.h.b16 %v339
        %v495 = vunpack.c.l.b16 %v340
        %v496 = vunpack.c.l.b16 %v341
        %v497 = vunpack.c.h.b16 %v341
        %v498 = vunpack.c.l.b16 %v342
        %v499 = vunpack.c.l.b16 %v343
        %v500 = vunpack.c.h.b16 %v343
        %v501 = vunpack.c.l.b16 %v344
        %v502 = vunpack.c.l.b16 %v345
        %v503 = vunpack.c.h.b16 %v345
        %v504 = vunpack.c.l.b16 %v346
        %v505 = vunpack.c.l.b16 %v347
        %v506 = vunpack.c.h.b16 %v347
        %v507 = vunpack.c.l.b16 %v348
        %v508 = vunpack.c.l.b16 %v349
        %v509 = vunpack.c.h.b16 %v349
        %v510 = vunpack.c.l.b16 %v350
        %v511 = vunpack.c.l.b16 %v351
        %v512 = vunpack.c.h.b16 %v351
        %v513 = vunpack.c.l.b16 %v352
        %v514 = vunpack.c.l.b16 %v353
        %v515 = vunpack.c.h.b16 %v353
        %v516 = vunpack.c.l.b16 %v354
        %v517 = vunpack.c.l.b16 %v355
        %v518 = vunpack.c.h.b16 %v355
        %v519 = vunpack.c.l.b16 %v356
        %v520 = vpack.c.b16 %v439, %v436
        %v521 = vpack.c.b16 %v440, %v437
        %v522 = vpack.c.b16 %v441, %v438
        %v523 = vpack.c.b16 %v445, %v442
        %v524 = vpack.c.b16 %v446, %v443
        %v525 = vpack.c.b16 %v447, %v444
        %v526 = vpack.c.b16 %v451, %v448
        %v527 = vpack.c.b16 %v452, %v449
        %v528 = vpack.c.b16 %v453, %v450
        %v529 = vpack.c.b16 %v457, %v454
        %v530 = vpack.c.b16 %v458, %v455
        %v531 = vpack.c.b16 %v459, %v456
        %v532 = vpack.c.b16 %v463, %v460
        %v533 = vpack.c.b16 %v464, %v461
        %v534 = vpack.c.b16 %v465, %v462
        %v535 = vpack.c.b16 %v469, %v466
        %v536 = vpack.c.b16 %v470, %v467
        %v537 = vpack.c.b16 %v471, %v468
        %v538 = vpack.c.b16 %v475, %v472
        %v539 = vpack.c.b16 %v476, %v473
        %v540 = vpack.c.b16 %v477, %v474
        %v541 = vpack.c.b16 %v481, %v478
        %v542 = vpack.c.b16 %v482, %v479
        %v543 = vpack.c.b16 %v483, %v480
        %v544 = vpack.c.b16 %v487, %v484
        %v545 = vpack.c.b16 %v488, %v485
        %v546 = vpack.c.b16 %v489, %v486
        %v547 = vpack.c.b16 %v493, %v490
        %v548 = vpack.c.b16 %v494, %v491
        %v549 = vpack.c.b16 %v495, %v492
        %v550 = vpack.c.b16 %v499, %v496
        %v551 = vpack.c.b16 %v500, %v497
        %v552 = vpack.c.b16 %v501, %v498
        %v553 = vpack.c.b16 %v505, %v502
        %v554 = vpack.c.b16 %v506, %v503
        %v555 = vpack.c.b16 %v507, %v504
        %v556 = vpack.c.b16 %v511, %v508
        %v557 = vpack.c.b16 %v512, %v509
        %v558 = vpack.c.b16 %v513, %v510
        %v559 = vpack.c.b16 %v517, %v514
        %v560 = vpack.c.b16 %v518, %v515
        %v561 = vpack.c.b16 %v519, %v516
        %vm604 = vcmask 785408
        %v606 = vsel %vm604, %v378, 0
        %608 = vmatprep.subr.bf16.mxu0 %v521
        %609 = vmatpush1.bf16.msra.mxu0 %v520
        %610 = vmatprep.subr.bf16.mxu0 %v524
        %611 = vmatpush1.bf16.msra.mxu0 %v523
        %612 = vmatprep.subr.bf16.mxu0 %v527
        %613 = vmatpush1.bf16.msra.mxu0 %v526
        %614 = vmatprep.subr.bf16.mxu0 %v530
        %615 = vmatpush1.bf16.msra.mxu0 %v529
        %616 = vmatprep.subr.bf16.mxu0 %v533
        %617 = vmatpush1.bf16.msra.mxu0 %v532
        %618 = vmatprep.subr.bf16.mxu0 %v536
        %619 = vmatpush1.bf16.msra.mxu0 %v535
        %620 = vmatprep.subr.bf16.mxu0 %v539
        %621 = vmatpush1.bf16.msra.mxu0 %v538
        %622 = vmatprep.subr.bf16.mxu0 %v542
        %623 = vmatpush1.bf16.msra.mxu0 %v541
        %624 = vmatprep.subr.bf16.mxu0 %v545
        %625 = vmatpush1.bf16.msra.mxu0 %v544
        %626 = vmatprep.subr.bf16.mxu0 %v548
        %627 = vmatpush1.bf16.msra.mxu0 %v547
        %628 = vmatprep.subr.bf16.mxu0 %v551
        %629 = vmatpush1.bf16.msra.mxu0 %v550
        %630 = vmatprep.subr.bf16.mxu0 %v554
        %631 = vmatpush1.bf16.msra.mxu0 %v553
        %632 = vmatprep.subr.bf16.mxu0 %v557
        %633 = vmatpush1.bf16.msra.mxu0 %v556
        %634 = vmatprep.subr.bf16.mxu0 %v560
        %635 = vmatpush1.bf16.msra.mxu0 %v559
        %636 = vmatprep.subr.bf16.mxu0 0
        %637 = vmatpush1.bf16.msra.mxu0 0
        %638 = vmatprep.subr.bf16.mxu0 0
        %639 = vmatpush1.bf16.msra.mxu0 0
        %640 = vmatprep.mubr.bf16.mxu0 %v606
        %641 = vmatmul.mubr.bf16.gmra.mrb[0].mxu0 %v371
        %v642 = vpop.f32.mrb[0].mxu0
        %v643 = vadd.f32 0.0, %v642
        %v644 = vpop.f32.mrb[0].mxu0
        %v645 = vadd.f32 0.0, %v644
        %v646 = vpop.f32.mrb[0].mxu0
        %v647 = vadd.f32 0.0, %v646
        %v648 = vpop.f32.mrb[0].mxu0
        %v649 = vadd.f32 0.0, %v648
        %650 = vdwg.mxu0
        %651 = vmatprep.subr.bf16.mxu0 0
        %652 = vmatpush1.bf16.msra.mxu0 %v522
        %653 = vmatprep.subr.bf16.mxu0 0
        %654 = vmatpush1.bf16.msra.mxu0 %v525
        %655 = vmatprep.subr.bf16.mxu0 0
        %656 = vmatpush1.bf16.msra.mxu0 %v528
        %657 = vmatprep.subr.bf16.mxu0 0
        %658 = vmatpush1.bf16.msra.mxu0 %v531
        %659 = vmatprep.subr.bf16.mxu0 0
        %660 = vmatpush1.bf16.msra.mxu0 %v534
        %661 = vmatprep.subr.bf16.mxu0 0
        %662 = vmatpush1.bf16.msra.mxu0 %v537
        %663 = vmatprep.subr.bf16.mxu0 0
        %664 = vmatpush1.bf16.msra.mxu0 %v540
        %665 = vmatprep.subr.bf16.mxu0 0
        %666 = vmatpush1.bf16.msra.mxu0 %v543
        %667 = vmatprep.subr.bf16.mxu0 0
        %668 = vmatpush1.bf16.msra.mxu0 %v546
        %669 = vmatprep.subr.bf16.mxu0 0
        %670 = vmatpush1.bf16.msra.mxu0 %v549
        %671 = vmatprep.subr.bf16.mxu0 0
        %672 = vmatpush1.bf16.msra.mxu0 %v552
        %673 = vmatprep.subr.bf16.mxu0 0
        %674 = vmatpush1.bf16.msra.mxu0 %v555
        %675 = vmatprep.subr.bf16.mxu0 0
        %676 = vmatpush1.bf16.msra.mxu0 %v558
        %677 = vmatprep.subr.bf16.mxu0 0
        %678 = vmatpush1.bf16.msra.mxu0 %v561
        %679 = vmatprep.subr.bf16.mxu0 0
        %680 = vmatpush1.bf16.msra.mxu0 0
        %681 = vmatprep.subr.bf16.mxu0 0
        %682 = vmatpush1.bf16.msra.mxu0 0
        %683 = vmatprep.mubr.bf16.mxu0 %v606
        %684 = vmatmul.mubr.bf16.gmra.mrb[0].mxu0 %v371
        %v685 = vpop.f32.mrb[0].mxu0
        %v686 = vadd.f32 0.0, %v685
        %v687 = vpop.f32.mrb[0].mxu0
        %v688 = vpop.f32.mrb[0].mxu0
        %v689 = vadd.f32 0.0, %v688
        %v690 = vpop.f32.mrb[0].mxu0
        %691 = vdwg.mxu0
        %v693 = vunpack.c.l.b16 %v242
        %v694 = vunpack.c.h.b16 %v242
        %v695 = vpack.c.b16 %v693, %v359
        %v696 = vpack.c.b16 %v694, %v360
        %v754 = vunpack.c.l.b16 %v243
        %v755 = vunpack.c.h.b16 %v243
        %v756 = vunpack.c.l.b16 %v244
        %v757 = vunpack.c.l.b16 %v245
        %v758 = vunpack.c.h.b16 %v245
        %v759 = vunpack.c.l.b16 %v246
        %v760 = vunpack.c.l.b16 %v247
        %v761 = vunpack.c.h.b16 %v247
        %v762 = vunpack.c.l.b16 %v248
        %v763 = vunpack.c.l.b16 %v249
        %v764 = vunpack.c.h.b16 %v249
        %v765 = vunpack.c.l.b16 %v250
        %v766 = vunpack.c.l.b16 %v251
        %v767 = vunpack.c.h.b16 %v251
        %v768 = vunpack.c.l.b16 %v252
        %v769 = vunpack.c.l.b16 %v253
        %v770 = vunpack.c.h.b16 %v253
        %v771 = vunpack.c.l.b16 %v254
        %v772 = vunpack.c.l.b16 %v255
        %v773 = vunpack.c.h.b16 %v255
        %v774 = vunpack.c.l.b16 %v256
        %v775 = vunpack.c.l.b16 %v257
        %v776 = vunpack.c.h.b16 %v257
        %v777 = vunpack.c.l.b16 %v258
        %v778 = vunpack.c.l.b16 %v259
        %v779 = vunpack.c.h.b16 %v259
        %v780 = vunpack.c.l.b16 %v260
        %v781 = vunpack.c.l.b16 %v261
        %v782 = vunpack.c.h.b16 %v261
        %v783 = vunpack.c.l.b16 %v262
        %v784 = vunpack.c.l.b16 %v263
        %v785 = vunpack.c.h.b16 %v263
        %v786 = vunpack.c.l.b16 %v264
        %v787 = vunpack.c.l.b16 %v265
        %v788 = vunpack.c.h.b16 %v265
        %v789 = vunpack.c.l.b16 %v266
        %v790 = vunpack.c.l.b16 %v267
        %v791 = vunpack.c.h.b16 %v267
        %v792 = vunpack.c.l.b16 %v268
        %v793 = vunpack.c.l.b16 %v269
        %v794 = vunpack.c.h.b16 %v269
        %v795 = vunpack.c.l.b16 %v270
        %v796 = vunpack.c.l.b16 %v271
        %v797 = vunpack.c.h.b16 %v271
        %v798 = vunpack.c.l.b16 %v272
        %v799 = vunpack.c.l.b16 %v273
        %v800 = vunpack.c.h.b16 %v273
        %v801 = vunpack.c.l.b16 %v274
        %v802 = vunpack.c.l.b16 %v275
        %v803 = vunpack.c.h.b16 %v275
        %v804 = vunpack.c.l.b16 %v276
        %v805 = vunpack.c.l.b16 %v277
        %v806 = vunpack.c.h.b16 %v277
        %v807 = vunpack.c.l.b16 %v278
        %v808 = vunpack.c.l.b16 %v279
        %v809 = vunpack.c.h.b16 %v279
        %v810 = vunpack.c.l.b16 %v280
        %v811 = vunpack.c.l.b16 %v281
        %v812 = vunpack.c.h.b16 %v281
        %v813 = vunpack.c.l.b16 %v282
        %v814 = vunpack.c.l.b16 %v283
        %v815 = vunpack.c.h.b16 %v283
        %v816 = vunpack.c.l.b16 %v284
        %v817 = vunpack.c.l.b16 %v285
        %v818 = vunpack.c.h.b16 %v285
        %v819 = vunpack.c.l.b16 %v286
        %v820 = vunpack.c.l.b16 %v287
        %v821 = vunpack.c.h.b16 %v287
        %v822 = vunpack.c.l.b16 %v288
        %v823 = vunpack.c.l.b16 %v289
        %v824 = vunpack.c.h.b16 %v289
        %v825 = vunpack.c.l.b16 %v290
        %v826 = vunpack.c.l.b16 %v291
        %v827 = vunpack.c.h.b16 %v291
        %v828 = vunpack.c.l.b16 %v292
        %v829 = vunpack.c.l.b16 %v293
        %v830 = vunpack.c.h.b16 %v293
        %v831 = vunpack.c.l.b16 %v294
        %v832 = vunpack.c.l.b16 %v295
        %v833 = vunpack.c.h.b16 %v295
        %v834 = vunpack.c.l.b16 %v296
        %v835 = vunpack.c.l.b16 %v297
        %v836 = vunpack.c.h.b16 %v297
        %v837 = vunpack.c.l.b16 %v298
        %v838 = vpack.c.b16 %v757, %v754
        %v839 = vpack.c.b16 %v758, %v755
        %v840 = vpack.c.b16 %v759, %v756
        %v841 = vpack.c.b16 %v763, %v760
        %v842 = vpack.c.b16 %v764, %v761
        %v843 = vpack.c.b16 %v765, %v762
        %v844 = vpack.c.b16 %v769, %v766
        %v845 = vpack.c.b16 %v770, %v767
        %v846 = vpack.c.b16 %v771, %v768
        %v847 = vpack.c.b16 %v775, %v772
        %v848 = vpack.c.b16 %v776, %v773
        %v849 = vpack.c.b16 %v777, %v774
        %v850 = vpack.c.b16 %v781, %v778
        %v851 = vpack.c.b16 %v782, %v779
        %v852 = vpack.c.b16 %v783, %v780
        %v853 = vpack.c.b16 %v787, %v784
        %v854 = vpack.c.b16 %v788, %v785
        %v855 = vpack.c.b16 %v789, %v786
        %v856 = vpack.c.b16 %v793, %v790
        %v857 = vpack.c.b16 %v794, %v791
        %v858 = vpack.c.b16 %v795, %v792
        %v859 = vpack.c.b16 %v799, %v796
        %v860 = vpack.c.b16 %v800, %v797
        %v861 = vpack.c.b16 %v801, %v798
        %v862 = vpack.c.b16 %v805, %v802
        %v863 = vpack.c.b16 %v806, %v803
        %v864 = vpack.c.b16 %v807, %v804
        %v865 = vpack.c.b16 %v811, %v808
        %v866 = vpack.c.b16 %v812, %v809
        %v867 = vpack.c.b16 %v813, %v810
        %v868 = vpack.c.b16 %v817, %v814
        %v869 = vpack.c.b16 %v818, %v815
        %v870 = vpack.c.b16 %v819, %v816
        %v871 = vpack.c.b16 %v823, %v820
        %v872 = vpack.c.b16 %v824, %v821
        %v873 = vpack.c.b16 %v825, %v822
        %v874 = vpack.c.b16 %v829, %v826
        %v875 = vpack.c.b16 %v830, %v827
        %v876 = vpack.c.b16 %v831, %v828
        %v877 = vpack.c.b16 %v835, %v832
        %v878 = vpack.c.b16 %v836, %v833
        %v879 = vpack.c.b16 %v837, %v834
        %v923 = vsel %vm604, %v696, 0
        %925 = vmatprep.subr.bf16.mxu0 %v839
        %926 = vmatpush1.bf16.msra.mxu0 %v838
        %927 = vmatprep.subr.bf16.mxu0 %v842
        %928 = vmatpush1.bf16.msra.mxu0 %v841
        %929 = vmatprep.subr.bf16.mxu0 %v845
        %930 = vmatpush1.bf16.msra.mxu0 %v844
        %931 = vmatprep.subr.bf16.mxu0 %v848
        %932 = vmatpush1.bf16.msra.mxu0 %v847
        %933 = vmatprep.subr.bf16.mxu0 %v851
        %934 = vmatpush1.bf16.msra.mxu0 %v850
        %935 = vmatprep.subr.bf16.mxu0 %v854
        %936 = vmatpush1.bf16.msra.mxu0 %v853
        %937 = vmatprep.subr.bf16.mxu0 %v857
        %938 = vmatpush1.bf16.msra.mxu0 %v856
        %939 = vmatprep.subr.bf16.mxu0 %v860
        %940 = vmatpush1.bf16.msra.mxu0 %v859
        %941 = vmatprep.subr.bf16.mxu0 %v863
        %942 = vmatpush1.bf16.msra.mxu0 %v862
        %943 = vmatprep.subr.bf16.mxu0 %v866
        %944 = vmatpush1.bf16.msra.mxu0 %v865
        %945 = vmatprep.subr.bf16.mxu0 %v869
        %946 = vmatpush1.bf16.msra.mxu0 %v868
        %947 = vmatprep.subr.bf16.mxu0 %v872
        %948 = vmatpush1.bf16.msra.mxu0 %v871
        %949 = vmatprep.subr.bf16.mxu0 %v875
        %950 = vmatpush1.bf16.msra.mxu0 %v874
        %951 = vmatprep.subr.bf16.mxu0 %v878
        %952 = vmatpush1.bf16.msra.mxu0 %v877
        %953 = vmatprep.subr.bf16.mxu0 0
        %954 = vmatpush1.bf16.msra.mxu0 0
        %955 = vmatprep.subr.bf16.mxu0 0
        %956 = vmatpush1.bf16.msra.mxu0 0
        %957 = vmatprep.mubr.bf16.mxu0 %v923
        %958 = vmatmul.mubr.bf16.gmra.mrb[0].mxu0 %v695
        %v959 = vpop.f32.mrb[0].mxu0
        %v960 = vadd.f32 %v643, %v959
        %v961 = vpop.f32.mrb[0].mxu0
        %v962 = vadd.f32 %v645, %v961
        %v963 = vpop.f32.mrb[0].mxu0
        %v964 = vadd.f32 %v647, %v963
        %v965 = vpop.f32.mrb[0].mxu0
        %v966 = vadd.f32 %v649, %v965
        %967 = vdwg.mxu0
        %968 = vmatprep.subr.bf16.mxu0 0
        %969 = vmatpush1.bf16.msra.mxu0 %v840
        %970 = vmatprep.subr.bf16.mxu0 0
        %971 = vmatpush1.bf16.msra.mxu0 %v843
        %972 = vmatprep.subr.bf16.mxu0 0
        %973 = vmatpush1.bf16.msra.mxu0 %v846
        %974 = vmatprep.subr.bf16.mxu0 0
        %975 = vmatpush1.bf16.msra.mxu0 %v849
        %976 = vmatprep.subr.bf16.mxu0 0
        %977 = vmatpush1.bf16.msra.mxu0 %v852
        %978 = vmatprep.subr.bf16.mxu0 0
        %979 = vmatpush1.bf16.msra.mxu0 %v855
        %980 = vmatprep.subr.bf16.mxu0 0
        %981 = vmatpush1.bf16.msra.mxu0 %v858
        %982 = vmatprep.subr.bf16.mxu0 0
        %983 = vmatpush1.bf16.msra.mxu0 %v861
        %984 = vmatprep.subr.bf16.mxu0 0
        %985 = vmatpush1.bf16.msra.mxu0 %v864
        %986 = vmatprep.subr.bf16.mxu0 0
        %987 = vmatpush1.bf16.msra.mxu0 %v867
        %988 = vmatprep.subr.bf16.mxu0 0
        %989 = vmatpush1.bf16.msra.mxu0 %v870
        %990 = vmatprep.subr.bf16.mxu0 0
        %991 = vmatpush1.bf16.msra.mxu0 %v873
        %992 = vmatprep.subr.bf16.mxu0 0
        %993 = vmatpush1.bf16.msra.mxu0 %v876
        %994 = vmatprep.subr.bf16.mxu0 0
        %995 = vmatpush1.bf16.msra.mxu0 %v879
        %996 = vmatprep.subr.bf16.mxu0 0
        %997 = vmatpush1.bf16.msra.mxu0 0
        %998 = vmatprep.subr.bf16.mxu0 0
        %999 = vmatpush1.bf16.msra.mxu0 0
        %1000 = vmatprep.mubr.bf16.mxu0 %v923
        %1001 = vmatmul.mubr.bf16.gmra.mrb[0].mxu0 %v695
        %v1002 = vpop.f32.mrb[0].mxu0
        %v1003 = vadd.f32 %v686, %v1002
        %v1004 = vpop.f32.mrb[0].mxu0
        %v1005 = vpop.f32.mrb[0].mxu0
        %v1006 = vadd.f32 %v689, %v1005
        %v1007 = vpop.f32.mrb[0].mxu0
        %1008 = vdwg.mxu0
        %v1009 = vld [vmem:[%s232] sm:$0xee]
        %s1010 = scalar_lea.vmem [#allocation2], 672
        %v1011 = vld [vmem:[%s1010] sm:$0xff]
        %v1012 = vld [vmem:[%s1010 + $0x8] sm:$0xf]
        %v1013 = vld [vmem:[%s1010 + $0xc] sm:$0xff]
        %v1014 = vld [vmem:[%s1010 + $0x14] sm:$0xf]
        %v1015 = vld [vmem:[%s1010 + $0x18] sm:$0xff]
        %v1016 = vld [vmem:[%s1010 + $0x20] sm:$0xf]
        %v1017 = vld [vmem:[%s1010 + $0x24] sm:$0xff]
        %v1018 = vld [vmem:[%s1010 + $0x2c] sm:$0xf]
        %v1019 = vld [vmem:[%s1010 + $0x30] sm:$0xff]
        %v1020 = vld [vmem:[%s1010 + $0x38] sm:$0xf]
        %v1021 = vld [vmem:[%s1010 + $0x3c] sm:$0xff]
        %v1022 = vld [vmem:[%s1010 + $0x44] sm:$0xf]
        %v1023 = vld [vmem:[%s1010 + $0x48] sm:$0xff]
        %v1024 = vld [vmem:[%s1010 + $0x50] sm:$0xf]
        %v1025 = vld [vmem:[%s1010 + $0x54] sm:$0xff]
        %v1026 = vld [vmem:[%s1010 + $0x5c] sm:$0xf]
        %v1027 = vld [vmem:[%s1010 + $0x60] sm:$0xff]
        %v1028 = vld [vmem:[%s1010 + $0x68] sm:$0xf]
        %v1029 = vld [vmem:[%s1010 + $0x6c] sm:$0xff]
        %v1030 = vld [vmem:[%s1010 + $0x74] sm:$0xf]
        %v1031 = vld [vmem:[%s1010 + $0x78] sm:$0xff]
        %v1032 = vld [vmem:[%s1010 + $0x80] sm:$0xf]
        %v1033 = vld [vmem:[%s1010 + $0x84] sm:$0xff]
        %v1034 = vld [vmem:[%s1010 + $0x8c] sm:$0xf]
        %v1035 = vld [vmem:[%s1010 + $0x90] sm:$0xff]
        %v1036 = vld [vmem:[%s1010 + $0x98] sm:$0xf]
        %v1037 = vld [vmem:[%s1010 + $0x9c] sm:$0xff]
        %v1038 = vld [vmem:[%s1010 + $0xa4] sm:$0xf]
        %v1039 = vld [vmem:[%s1010 + $0xa8] sm:$0xff]
        %v1040 = vld [vmem:[%s1010 + $0xb0] sm:$0xf]
        %v1041 = vld [vmem:[%s1010 + $0xb4] sm:$0xff]
        %v1042 = vld [vmem:[%s1010 + $0xbc] sm:$0xf]
        %v1043 = vld [vmem:[%s1010 + $0xc0] sm:$0xff]
        %v1044 = vld [vmem:[%s1010 + $0xc8] sm:$0xf]
        %v1045 = vld [vmem:[%s1010 + $0xcc] sm:$0xff]
        %v1046 = vld [vmem:[%s1010 + $0xd4] sm:$0xf]
        %v1047 = vld [vmem:[%s1010 + $0xd8] sm:$0xff]
        %v1048 = vld [vmem:[%s1010 + $0xe0] sm:$0xf]
        %v1049 = vld [vmem:[%s1010 + $0xe4] sm:$0xff]
        %v1050 = vld [vmem:[%s1010 + $0xec] sm:$0xf]
        %v1051 = vld [vmem:[%s1010 + $0xf0] sm:$0xff]
        %v1052 = vld [vmem:[%s1010 + $0xf8] sm:$0xf]
        %v1053 = vld [vmem:[%s1010 + $0xfc] sm:$0xff]
        %v1054 = vld [vmem:[%s1010 + $0x104] sm:$0xf]
        %v1055 = vld [vmem:[%s1010 + $0x108] sm:$0xff]
        %v1056 = vld [vmem:[%s1010 + $0x110] sm:$0xf]
        %v1057 = vld [vmem:[%s1010 + $0x114] sm:$0xff]
        %v1058 = vld [vmem:[%s1010 + $0x11c] sm:$0xf]
        %v1059 = vld [vmem:[%s1010 + $0x120] sm:$0xff]
        %v1060 = vld [vmem:[%s1010 + $0x128] sm:$0xf]
        %v1061 = vld [vmem:[%s1010 + $0x12c] sm:$0xff]
        %v1062 = vld [vmem:[%s1010 + $0x134] sm:$0xf]
        %v1063 = vld [vmem:[%s1010 + $0x138] sm:$0xff]
        %v1064 = vld [vmem:[%s1010 + $0x140] sm:$0xf]
        %v1065 = vld [vmem:[%s1010 + $0x144] sm:$0xff]
        %v1066 = vld [vmem:[%s1010 + $0x14c] sm:$0xf]
        %v1068 = vunpack.c.l.b16 %v1009
        %v1069 = vunpack.c.h.b16 %v1009
        %v1070 = vpack.c.b16 %v361, %v1068
        %v1071 = vpack.c.b16 %v362, %v1069
        %v1072 = vrot.slane %v1070, 1
        %v1073 = vrot.slane %v1071, 1
        %v1131 = vunpack.c.l.b16 %v1011
        %v1132 = vunpack.c.h.b16 %v1011
        %v1133 = vunpack.c.l.b16 %v1012
        %v1134 = vunpack.c.l.b16 %v1013
        %v1135 = vunpack.c.h.b16 %v1013
        %v1136 = vunpack.c.l.b16 %v1014
        %v1137 = vunpack.c.l.b16 %v1015
        %v1138 = vunpack.c.h.b16 %v1015
        %v1139 = vunpack.c.l.b16 %v1016
        %v1140 = vunpack.c.l.b16 %v1017
        %v1141 = vunpack.c.h.b16 %v1017
        %v1142 = vunpack.c.l.b16 %v1018
        %v1143 = vunpack.c.l.b16 %v1019
        %v1144 = vunpack.c.h.b16 %v1019
        %v1145 = vunpack.c.l.b16 %v1020
        %v1146 = vunpack.c.l.b16 %v1021
        %v1147 = vunpack.c.h.b16 %v1021
        %v1148 = vunpack.c.l.b16 %v1022
        %v1149 = vunpack.c.l.b16 %v1023
        %v1150 = vunpack.c.h.b16 %v1023
        %v1151 = vunpack.c.l.b16 %v1024
        %v1152 = vunpack.c.l.b16 %v1025
        %v1153 = vunpack.c.h.b16 %v1025
        %v1154 = vunpack.c.l.b16 %v1026
        %v1155 = vunpack.c.l.b16 %v1027
        %v1156 = vunpack.c.h.b16 %v1027
        %v1157 = vunpack.c.l.b16 %v1028
        %v1158 = vunpack.c.l.b16 %v1029
        %v1159 = vunpack.c.h.b16 %v1029
        %v1160 = vunpack.c.l.b16 %v1030
        %v1161 = vunpack.c.l.b16 %v1031
        %v1162 = vunpack.c.h.b16 %v1031
        %v1163 = vunpack.c.l.b16 %v1032
        %v1164 = vunpack.c.l.b16 %v1033
        %v1165 = vunpack.c.h.b16 %v1033
        %v1166 = vunpack.c.l.b16 %v1034
        %v1167 = vunpack.c.l.b16 %v1035
        %v1168 = vunpack.c.h.b16 %v1035
        %v1169 = vunpack.c.l.b16 %v1036
        %v1170 = vunpack.c.l.b16 %v1037
        %v1171 = vunpack.c.h.b16 %v1037
        %v1172 = vunpack.c.l.b16 %v1038
        %v1173 = vunpack.c.l.b16 %v1039
        %v1174 = vunpack.c.h.b16 %v1039
        %v1175 = vunpack.c.l.b16 %v1040
        %v1176 = vunpack.c.l.b16 %v1041
        %v1177 = vunpack.c.h.b16 %v1041
        %v1178 = vunpack.c.l.b16 %v1042
        %v1179 = vunpack.c.l.b16 %v1043
        %v1180 = vunpack.c.h.b16 %v1043
        %v1181 = vunpack.c.l.b16 %v1044
        %v1182 = vunpack.c.l.b16 %v1045
        %v1183 = vunpack.c.h.b16 %v1045
        %v1184 = vunpack.c.l.b16 %v1046
        %v1185 = vunpack.c.l.b16 %v1047
        %v1186 = vunpack.c.h.b16 %v1047
        %v1187 = vunpack.c.l.b16 %v1048
        %v1188 = vunpack.c.l.b16 %v1049
        %v1189 = vunpack.c.h.b16 %v1049
        %v1190 = vunpack.c.l.b16 %v1050
        %v1191 = vunpack.c.l.b16 %v1051
        %v1192 = vunpack.c.h.b16 %v1051
        %v1193 = vunpack.c.l.b16 %v1052
        %v1194 = vunpack.c.l.b16 %v1053
        %v1195 = vunpack.c.h.b16 %v1053
        %v1196 = vunpack.c.l.b16 %v1054
        %v1197 = vunpack.c.l.b16 %v1055
        %v1198 = vunpack.c.h.b16 %v1055
        %v1199 = vunpack.c.l.b16 %v1056
        %v1200 = vunpack.c.l.b16 %v1057
        %v1201 = vunpack.c.h.b16 %v1057
        %v1202 = vunpack.c.l.b16 %v1058
        %v1203 = vunpack.c.l.b16 %v1059
        %v1204 = vunpack.c.h.b16 %v1059
        %v1205 = vunpack.c.l.b16 %v1060
        %v1206 = vunpack.c.l.b16 %v1061
        %v1207 = vunpack.c.h.b16 %v1061
        %v1208 = vunpack.c.l.b16 %v1062
        %v1209 = vunpack.c.l.b16 %v1063
        %v1210 = vunpack.c.h.b16 %v1063
        %v1211 = vunpack.c.l.b16 %v1064
        %v1212 = vunpack.c.l.b16 %v1065
        %v1213 = vunpack.c.h.b16 %v1065
        %v1214 = vunpack.c.l.b16 %v1066
        %v1215 = vpack.c.b16 %v1134, %v1131
        %v1216 = vpack.c.b16 %v1135, %v1132
        %v1217 = vpack.c.b16 %v1136, %v1133
        %v1218 = vpack.c.b16 %v1140, %v1137
        %v1219 = vpack.c.b16 %v1141, %v1138
        %v1220 = vpack.c.b16 %v1142, %v1139
        %v1221 = vpack.c.b16 %v1146, %v1143
        %v1222 = vpack.c.b16 %v1147, %v1144
        %v1223 = vpack.c.b16 %v1148, %v1145
        %v1224 = vpack.c.b16 %v1152, %v1149
        %v1225 = vpack.c.b16 %v1153, %v1150
        %v1226 = vpack.c.b16 %v1154, %v1151
        %v1227 = vpack.c.b16 %v1158, %v1155
        %v1228 = vpack.c.b16 %v1159, %v1156
        %v1229 = vpack.c.b16 %v1160, %v1157
        %v1230 = vpack.c.b16 %v1164, %v1161
        %v1231 = vpack.c.b16 %v1165, %v1162
        %v1232 = vpack.c.b16 %v1166, %v1163
        %v1233 = vpack.c.b16 %v1170, %v1167
        %v1234 = vpack.c.b16 %v1171, %v1168
        %v1235 = vpack.c.b16 %v1172, %v1169
        %v1236 = vpack.c.b16 %v1176, %v1173
        %v1237 = vpack.c.b16 %v1177, %v1174
        %v1238 = vpack.c.b16 %v1178, %v1175
        %v1239 = vpack.c.b16 %v1182, %v1179
        %v1240 = vpack.c.b16 %v1183, %v1180
        %v1241 = vpack.c.b16 %v1184, %v1181
        %v1242 = vpack.c.b16 %v1188, %v1185
        %v1243 = vpack.c.b16 %v1189, %v1186
        %v1244 = vpack.c.b16 %v1190, %v1187
        %v1245 = vpack.c.b16 %v1194, %v1191
        %v1246 = vpack.c.b16 %v1195, %v1192
        %v1247 = vpack.c.b16 %v1196, %v1193
        %v1248 = vpack.c.b16 %v1200, %v1197
        %v1249 = vpack.c.b16 %v1201, %v1198
        %v1250 = vpack.c.b16 %v1202, %v1199
        %v1251 = vpack.c.b16 %v1206, %v1203
        %v1252 = vpack.c.b16 %v1207, %v1204
        %v1253 = vpack.c.b16 %v1208, %v1205
        %v1254 = vpack.c.b16 %v1212, %v1209
        %v1255 = vpack.c.b16 %v1213, %v1210
        %v1256 = vpack.c.b16 %v1214, %v1211
        %v1300 = vsel %vm604, %v1073, 0
        %1302 = vmatprep.subr.bf16.mxu0 %v1216
        %1303 = vmatpush1.bf16.msra.mxu0 %v1215
        %1304 = vmatprep.subr.bf16.mxu0 %v1219
        %1305 = vmatpush1.bf16.msra.mxu0 %v1218
        %1306 = vmatprep.subr.bf16.mxu0 %v1222
        %1307 = vmatpush1.bf16.msra.mxu0 %v1221
        %1308 = vmatprep.subr.bf16.mxu0 %v1225
        %1309 = vmatpush1.bf16.msra.mxu0 %v1224
        %1310 = vmatprep.subr.bf16.mxu0 %v1228
        %1311 = vmatpush1.bf16.msra.mxu0 %v1227
        %1312 = vmatprep.subr.bf16.mxu0 %v1231
        %1313 = vmatpush1.bf16.msra.mxu0 %v1230
        %1314 = vmatprep.subr.bf16.mxu0 %v1234
        %1315 = vmatpush1.bf16.msra.mxu0 %v1233
        %1316 = vmatprep.subr.bf16.mxu0 %v1237
        %1317 = vmatpush1.bf16.msra.mxu0 %v1236
        %1318 = vmatprep.subr.bf16.mxu0 %v1240
        %1319 = vmatpush1.bf16.msra.mxu0 %v1239
        %1320 = vmatprep.subr.bf16.mxu0 %v1243
        %1321 = vmatpush1.bf16.msra.mxu0 %v1242
        %1322 = vmatprep.subr.bf16.mxu0 %v1246
        %1323 = vmatpush1.bf16.msra.mxu0 %v1245
        %1324 = vmatprep.subr.bf16.mxu0 %v1249
        %1325 = vmatpush1.bf16.msra.mxu0 %v1248
        %1326 = vmatprep.subr.bf16.mxu0 %v1252
        %1327 = vmatpush1.bf16.msra.mxu0 %v1251
        %1328 = vmatprep.subr.bf16.mxu0 %v1255
        %1329 = vmatpush1.bf16.msra.mxu0 %v1254
        %1330 = vmatprep.subr.bf16.mxu0 0
        %1331 = vmatpush1.bf16.msra.mxu0 0
        %1332 = vmatprep.subr.bf16.mxu0 0
        %1333 = vmatpush1.bf16.msra.mxu0 0
        %1334 = vmatprep.mubr.bf16.mxu0 %v1300
        %1335 = vmatmul.mubr.bf16.gmra.mrb[0].mxu0 %v1072
        %v1336 = vpop.f32.mrb[0].mxu0
        %v1337 = vadd.f32 0.0, %v1336
        %v1338 = vpop.f32.mrb[0].mxu0
        %v1339 = vadd.f32 0.0, %v1338
        %v1340 = vpop.f32.mrb[0].mxu0
        %v1341 = vadd.f32 0.0, %v1340
        %v1342 = vpop.f32.mrb[0].mxu0
        %v1343 = vadd.f32 0.0, %v1342
        %1344 = vdwg.mxu0
        %1345 = vmatprep.subr.bf16.mxu0 0
        %1346 = vmatpush1.bf16.msra.mxu0 %v1217
        %1347 = vmatprep.subr.bf16.mxu0 0
        %1348 = vmatpush1.bf16.msra.mxu0 %v1220
        %1349 = vmatprep.subr.bf16.mxu0 0
        %1350 = vmatpush1.bf16.msra.mxu0 %v1223
        %1351 = vmatprep.subr.bf16.mxu0 0
        %1352 = vmatpush1.bf16.msra.mxu0 %v1226
        %1353 = vmatprep.subr.bf16.mxu0 0
        %1354 = vmatpush1.bf16.msra.mxu0 %v1229
        %1355 = vmatprep.subr.bf16.mxu0 0
        %1356 = vmatpush1.bf16.msra.mxu0 %v1232
        %1357 = vmatprep.subr.bf16.mxu0 0
        %1358 = vmatpush1.bf16.msra.mxu0 %v1235
        %1359 = vmatprep.subr.bf16.mxu0 0
        %1360 = vmatpush1.bf16.msra.mxu0 %v1238
        %1361 = vmatprep.subr.bf16.mxu0 0
        %1362 = vmatpush1.bf16.msra.mxu0 %v1241
        %1363 = vmatprep.subr.bf16.mxu0 0
        %1364 = vmatpush1.bf16.msra.mxu0 %v1244
        %1365 = vmatprep.subr.bf16.mxu0 0
        %1366 = vmatpush1.bf16.msra.mxu0 %v1247
        %1367 = vmatprep.subr.bf16.mxu0 0
        %1368 = vmatpush1.bf16.msra.mxu0 %v1250
        %1369 = vmatprep.subr.bf16.mxu0 0
        %1370 = vmatpush1.bf16.msra.mxu0 %v1253
        %1371 = vmatprep.subr.bf16.mxu0 0
        %1372 = vmatpush1.bf16.msra.mxu0 %v1256
        %1373 = vmatprep.subr.bf16.mxu0 0
        %1374 = vmatpush1.bf16.msra.mxu0 0
        %1375 = vmatprep.subr.bf16.mxu0 0
        %1376 = vmatpush1.bf16.msra.mxu0 0
        %1377 = vmatprep.mubr.bf16.mxu0 %v1300
        %1378 = vmatmul.mubr.bf16.gmra.mrb[0].mxu0 %v1072
        %v1379 = vpop.f32.mrb[0].mxu0
        %v1380 = vadd.f32 0.0, %v1379
        %v1381 = vpop.f32.mrb[0].mxu0
        %v1382 = vpop.f32.mrb[0].mxu0
        %v1383 = vadd.f32 0.0, %v1382
        %v1384 = vpop.f32.mrb[0].mxu0
        %1385 = vdwg.mxu0
        %v1386 = vadd.f32 %v960, %v1337
        %v1387 = vadd.f32 %v962, %v1339
        %v1388 = vadd.f32 %v1003, %v1380
        %v1389 = vadd.f32 %v964, %v1341
        %v1390 = vadd.f32 %v966, %v1343
        %v1391 = vadd.f32 %v1006, %v1383
        %v1393 = vlaneseq
        %v1394 = vshrl.u32 %v1393, 7
        %v1395 = vsub.s32 0, %v1394
        %v1396 = vrot.slane %v239, %v1395
        %v1397 = vlaneseq
        %v1398 = vshrl.u32 %v1397, 7
        %v1399 = vsub.s32 1, %v1398
        %v1400 = vrot.slane %v239, %v1399
        %v1401 = vlaneseq
        %v1402 = vshrl.u32 %v1401, 7
        %v1403 = vsub.s32 2, %v1402
        %v1404 = vrot.slane %v239, %v1403
        %v1408 = vmul.f32 %v1386, %v1396
        %v1409 = vmul.f32 %v1387, %v1400
        %v1410 = vmul.f32 %v1388, %v1404
        %v1411 = vmul.f32 %v1389, %v1396
        %v1412 = vmul.f32 %v1390, %v1400
        %v1413 = vmul.f32 %v1391, %v1404
        %v1415 = vlaneseq
        %v1416 = vshrl.u32 %v1415, 7
        %v1417 = vsub.s32 0, %v1416
        %v1418 = vrot.slane %v240, %v1417
        %v1419 = vlaneseq
        %v1420 = vshrl.u32 %v1419, 7
        %v1421 = vsub.s32 1, %v1420
        %v1422 = vrot.slane %v240, %v1421
        %v1423 = vlaneseq
        %v1424 = vshrl.u32 %v1423, 7
        %v1425 = vsub.s32 2, %v1424
        %v1426 = vrot.slane %v240, %v1425
        %v1430 = vadd.f32 %v1408, %v1418
        %v1431 = vadd.f32 %v1409, %v1422
        %v1432 = vadd.f32 %v1410, %v1426
        %v1433 = vadd.f32 %v1411, %v1418
        %v1434 = vadd.f32 %v1412, %v1422
        %v1435 = vadd.f32 %v1413, %v1426
        %v1436 = vmax.f32 %v1430, 0.0
        %v1437 = vmax.f32 %v1431, 0.0
        %v1438 = vmax.f32 %v1432, 0.0
        %v1439 = vmax.f32 %v1433, 0.0
        %v1440 = vmax.f32 %v1434, 0.0
        %v1441 = vmax.f32 %v1435, 0.0
        %v1442 = vpack.c.bf16 %v1439, %v1436
        %v1443 = vpack.c.bf16 %v1440, %v1437
        %v1444 = vpack.c.bf16 %v1441, %v1438
        %v1448 = vunpack.c.l.b16 %v1442
        %v1449 = vunpack.c.l.b16 %v1443
        %v1450 = vunpack.c.l.b16 %v1444
        %v1451 = vunpack.c.h.b16 %v1442
        %v1452 = vunpack.c.h.b16 %v1443
        %v1453 = vunpack.c.h.b16 %v1444
        %v1454 = vpack.c.b16 %v1449, %v1448
        %v1455 = vpack.c.b16 %v1450, %v1450
        %v1456 = vpack.c.b16 %v1452, %v1451
        %v1457 = vpack.c.b16 %v1453, %v1453
        %1462 = vst [vmem:[%s237] sm:$0xff] %v1454
        %1463 = vst [vmem:[%s237 + $0x8] sm:$0xf] %v1455
        %1464 = vst [vmem:[%s237 + $0xc] sm:$0x33] %v1456
        %1465 = vst [vmem:[%s237 + $0x14] sm:$0x3] %v1457
        %p1466 = scmp.lt.s32.totalorder %s17, 1
        %s1467 = scalar_select %p1466, %s17, 1
        %s1468 = smul.addr %s1467, 6
        %s1469 = smul.addr %s1468, 4
        %s1470 = scalar_lea.vmem %s4, %s1469
        // Predicated region
        $region49: #{cnn_fmnist_forward.4} parent=35 // pred_check
          %p1471 = pneg %p124
        $region50: #{cnn_fmnist_forward.4} parent=35 // pred_check_branch
          %1473 = sbr.rel (%p1471) target = $region52
        $region51: #{cnn_fmnist_forward.4} parent=35 // pred_region
          _
        $region52: #{cnn_fmnist_forward.4} parent=35 // pred_fallthru
          _
      $region36: #{cnn_fmnist_forward.4} parent=5 // pred_fallthru
        _
      %p1474 = scmp.le.s32.totalorder 2, %s12
      // Predicated region
      $region53: #{cnn_fmnist_forward.4} parent=5 // pred_check
        %p1475 = pneg %p1474
      $region54: #{cnn_fmnist_forward.4} parent=5 // pred_check_branch
        %1477 = sbr.rel (%p1475) target = $region56
      $region55: #{cnn_fmnist_forward.4} parent=5 // pred_region
        %s1478 = ssub.s32 %s12, 2
        // Predicated region
        $region57: #{cnn_fmnist_forward.4} parent=55 // pred_check
          %p1479 = pneg %p130
        $region58: #{cnn_fmnist_forward.4} parent=55 // pred_check_branch
          %1481 = sbr.rel (%p1479) target = $region60
        $region59: #{cnn_fmnist_forward.4} parent=55 // pred_region
          %p1482 = scmp.lt.s32.totalorder %s18, 1
          %s1483 = scalar_select %p1482, %s18, 1
          %s1484 = smul.addr %s1483, 6
          %s1485 = smul.addr %s1484, 4
          %s1486 = scalar_lea.vmem %s4, %s1485
        $region60: #{cnn_fmnist_forward.4} parent=55 // pred_fallthru
          _
      $region56: #{cnn_fmnist_forward.4} parent=5 // pred_fallthru
        _
    $region6: #{cnn_fmnist_forward.4} parent=1 // loop_footer
      %s16 = sadd.s32 1, %s12
    $region7: #{cnn_fmnist_forward.4} parent=1 // loop_footer_branch
      %11 = sbr.rel target = $region3
    $region8: #{cnn_fmnist_forward.4} parent=1 // loop_exit
      _
    %1487 = vsyncpa [#allocation3], 1
    %s1488 = scalar_lea.sflag [#allocation3], 1
    %1489 = vsyncpa %s1488, 1
    %1490 = vsyncpa [#allocation5], 1

// kernel: cnn_fmnist_forward.5
$region0: #{cnn_fmnist_forward.5}
  #allocation0 [shape = 'u32[]', space=smem, size = 0x4, offset = 0x4, fixed_abs, tag = 'smem constant byte address 0x4 - core index']
  #allocation1 [shape = 'u32[144,128]{1,0:T(1,128)}', space=vmem, size = 0x12000, scoped, tag = 'internal scratch']
  %s0 = inlined_call_operand.vmem [shape: bf16[2,6,768], index: 0, kind: input, shape index: {}]
  %s1 = inlined_call_operand.hbm [shape: bf16[2,768,1280], index: 1, kind: input, shape index: {}]
  %s2 = inlined_call_operand.hbm [shape: f32[1,1280], index: 2, kind: input, shape index: {}]
  %s3 = inlined_call_operand.hbm [shape: f32[1,1280], index: 3, kind: input, shape index: {}]
  %s4 = inlined_call_operand.hbm [shape: bf16[320,640], index: 4, kind: input, shape index: {}]
  %s5 = inlined_call_operand.hbm [shape: f32[1,128], index: 5, kind: input, shape index: {}]
  %s6 = inlined_call_operand.hbm [shape: f32[2,1,128], index: 6, kind: output, shape index: {}]
  %s7 = sld [smem:[#allocation0]]
  $region77: #{cnn_fmnist_forward.5} parent=0
    _
  %s9 = ssub.s32 1, %s7
  %s10 = scalar_select 0, %s9, %s7
  $region1: #{cnn_fmnist_forward.5} parent=0
    #allocation2 [shape = 'u8[3932160]{0}', space=vmem, size = 0x3c0000, scoped, tag = 'input window, operand 1, single buffered']
    #allocation3 [shape = 's32[2]{0}', space=sflag, size = 0x8, scoped, tag = 'scoped memory for cnn_fmnist_forward.5']
    #allocation4 [shape = 's32[2]{0}', space=sflag, size = 0x8, scoped, tag = 'scoped memory for cnn_fmnist_forward.5']
    #allocation5 [shape = 'u8[5120]{0}', space=vmem, size = 0x1400, scoped, tag = 'input window, operand 2, single buffered']
    #allocation6 [shape = 's32[1]{0}', space=sflag, size = 0x4, scoped, tag = 'scoped memory for cnn_fmnist_forward.5']
    #allocation7 [shape = 'u8[5120]{0}', space=vmem, size = 0x1400, scoped, tag = 'input window, operand 3, single buffered']
    #allocation8 [shape = 'u8[409600]{0}', space=vmem, size = 0x64000, scoped, tag = 'input window, operand 4, single buffered']
    #allocation9 [shape = 's32[1]{0}', space=sflag, size = 0x4, scoped, tag = 'scoped memory for cnn_fmnist_forward.5']
    #allocation10 [shape = 'u8[512]{0}', space=vmem, size = 0x400, scoped, tag = 'input window, operand 5, single buffered']
    #allocation11 [shape = 'u8[1024]{0}', space=vmem, size = 0x400, scoped, tag = 'output window, operand 0']
    %11 = vsyncpa [#allocation3], 0
    %12 = vsyncpa [#allocation6], 0
    %13 = vsyncpa [#allocation9], 0
    %14 = vsyncpa [#allocation4], 0
    %s15 = scalar_lea.sflag [#allocation4], 1
    %16 = vsyncpa %s15, 0
    loop: start=0, step=1, limit=4
    $region2: #{cnn_fmnist_forward.5} parent=1 // loop_pre_header
      _
    $region3: #{cnn_fmnist_forward.5} parent=1 // loop_header
      %s18 = sphi 0, %s22
      %p19 = scmp.ge.s32.totalorder %s18, 4
      %s28 = sphi 0, %s30
      %s31 = sphi 0, %s28
      %s32 = sphi 0, %s31
      %s48 = sphi 0, %s32
      %s52 = sphi 0, %s52
      %s54 = sphi 0, %s52
      %s55 = sphi 0, %s54
      %s69 = sphi 0, %s55
      %s73 = sphi 0, %s73
      %s75 = sphi 0, %s73
      %s76 = sphi 0, %s75
      %s90 = sphi 0, %s76
      %s94 = sphi 0, %s94
      %s96 = sphi 0, %s94
      %s97 = sphi 0, %s96
      %s111 = sphi 0, %s97
      %s115 = sphi 0, %s115
      %s117 = sphi 0, %s115
      %s118 = sphi 0, %s117
      %s132 = sphi 0, %s118
      %s136 = sphi 0, %s136
      %s138 = sphi 0, %s136
      %s139 = sphi 0, %s138
      %s153 = sphi 0, %s139
      %s159 = sphi 0, %s161
      %s162 = sphi 0, %s159
      %s163 = sphi 0, %s162
      %s179 = sphi 0, %s163
    $region4: #{cnn_fmnist_forward.5} parent=1 // loop_header_branch
      %21 = sbr.rel (%p19) target = $region8
    $region5: #{cnn_fmnist_forward.5} parent=1 // loop_body
      %s23 = ssub.s32 %s18, 1
      %s24 = ssub.s32 %s18, 2
      %s25 = sadd.s32 %s18, 1
      %s26 = ssub.s32 %s18, %s25
      %p27 = scmp.eq.s32.totalorder %s26, 0
      %s29 = sadd.s32 %s28, 1
      %s30 = scalar_select %p27, %s28, %s29
      %p33 = pneg %p27
      %p34 = scmp.eq.s32.totalorder %s18, 1
      %p35 = por %p33, %p34
      %p36 = scmp.ne.s32.totalorder %s28, %s31
      %p37 = scmp.eq.s32.totalorder %s18, 0
      %p38 = por %p36, %p37
      %p39 = scmp.ne.s32.totalorder %s28, %s31
      %p40 = scmp.eq.s32.totalorder %s23, 1
      %p41 = por %p39, %p40
      %p42 = scmp.ne.s32.totalorder %s31, %s32
      %p43 = scmp.eq.s32.totalorder %s23, 0
      %p44 = por %p42, %p43
      %p45 = scmp.ne.s32.totalorder %s31, %s32
      %p46 = scmp.eq.s32.totalorder %s24, 1
      %p47 = por %p45, %p46
      %p49 = scmp.ne.s32.totalorder %s32, %s48
      %p50 = scmp.eq.s32.totalorder %s24, 0
      %p51 = por %p49, %p50
      %s53 = sadd.s32 %s52, 1
      %p56 = scmp.eq.s32.totalorder %s18, 1
      %p57 = scmp.ne.s32.totalorder %s52, %s54
      %p58 = scmp.eq.s32.totalorder %s18, 0
      %p59 = por %p57, %p58
      %p60 = scmp.ne.s32.totalorder %s52, %s54
      %p61 = scmp.eq.s32.totalorder %s23, 1
      %p62 = por %p60, %p61
      %p63 = scmp.ne.s32.totalorder %s54, %s55
      %p64 = scmp.eq.s32.totalorder %s23, 0
      %p65 = por %p63, %p64
      %p66 = scmp.ne.s32.totalorder %s54, %s55
      %p67 = scmp.eq.s32.totalorder %s24, 1
      %p68 = por %p66, %p67
      %p70 = scmp.ne.s32.totalorder %s55, %s69
      %p71 = scmp.eq.s32.totalorder %s24, 0
      %p72 = por %p70, %p71
      %s74 = sadd.s32 %s73, 1
      %p77 = scmp.eq.s32.totalorder %s18, 1
      %p78 = scmp.ne.s32.totalorder %s73, %s75
      %p79 = scmp.eq.s32.totalorder %s18, 0
      %p80 = por %p78, %p79
      %p81 = scmp.ne.s32.totalorder %s73, %s75
      %p82 = scmp.eq.s32.totalorder %s23, 1
      %p83 = por %p81, %p82
      %p84 = scmp.ne.s32.totalorder %s75, %s76
      %p85 = scmp.eq.s32.totalorder %s23, 0
      %p86 = por %p84, %p85
      %p87 = scmp.ne.s32.totalorder %s75, %s76
      %p88 = scmp.eq.s32.totalorder %s24, 1
      %p89 = por %p87, %p88
      %p91 = scmp.ne.s32.totalorder %s76, %s90
      %p92 = scmp.eq.s32.totalorder %s24, 0
      %p93 = por %p91, %p92
      %s95 = sadd.s32 %s94, 1
      %p98 = scmp.eq.s32.totalorder %s18, 1
      %p99 = scmp.ne.s32.totalorder %s94, %s96
      %p100 = scmp.eq.s32.totalorder %s18, 0
      %p101 = por %p99, %p100
      %p102 = scmp.ne.s32.totalorder %s94, %s96
      %p103 = scmp.eq.s32.totalorder %s23, 1
      %p104 = por %p102, %p103
      %p105 = scmp.ne.s32.totalorder %s96, %s97
      %p106 = scmp.eq.s32.totalorder %s23, 0
      %p107 = por %p105, %p106
      %p108 = scmp.ne.s32.totalorder %s96, %s97
      %p109 = scmp.eq.s32.totalorder %s24, 1
      %p110 = por %p108, %p109
      %p112 = scmp.ne.s32.totalorder %s97, %s111
      %p113 = scmp.eq.s32.totalorder %s24, 0
      %p114 = por %p112, %p113
      %s116 = sadd.s32 %s115, 1
      %p119 = scmp.eq.s32.totalorder %s18, 1
      %p120 = scmp.ne.s32.totalorder %s115, %s117
      %p121 = scmp.eq.s32.totalorder %s18, 0
      %p122 = por %p120, %p121
      %p123 = scmp.ne.s32.totalorder %s115, %s117
      %p124 = scmp.eq.s32.totalorder %s23, 1
      %p125 = por %p123, %p124
      %p126 = scmp.ne.s32.totalorder %s117, %s118
      %p127 = scmp.eq.s32.totalorder %s23, 0
      %p128 = por %p126, %p127
      %p129 = scmp.ne.s32.totalorder %s117, %s118
      %p130 = scmp.eq.s32.totalorder %s24, 1
      %p131 = por %p129, %p130
      %p133 = scmp.ne.s32.totalorder %s118, %s132
      %p134 = scmp.eq.s32.totalorder %s24, 0
      %p135 = por %p133, %p134
      %s137 = sadd.s32 %s136, 1
      %p140 = scmp.eq.s32.totalorder %s18, 1
      %p141 = scmp.ne.s32.totalorder %s136, %s138
      %p142 = scmp.eq.s32.totalorder %s18, 0
      %p143 = por %p141, %p142
      %p144 = scmp.ne.s32.totalorder %s136, %s138
      %p145 = scmp.eq.s32.totalorder %s23, 1
      %p146 = por %p144, %p145
      %p147 = scmp.ne.s32.totalorder %s138, %s139
      %p148 = scmp.eq.s32.totalorder %s23, 0
      %p149 = por %p147, %p148
      %p150 = scmp.ne.s32.totalorder %s138, %s139
      %p151 = scmp.eq.s32.totalorder %s24, 1
      %p152 = por %p150, %p151
      %p154 = scmp.ne.s32.totalorder %s139, %s153
      %p155 = scmp.eq.s32.totalorder %s24, 0
      %p156 = por %p154, %p155
      %s157 = ssub.s32 %s18, %s25
      %p158 = scmp.eq.s32.totalorder %s157, 0
      %s160 = sadd.s32 %s159, 1
      %s161 = scalar_select %p158, %s159, %s160
      %p164 = pneg %p158
      %p165 = scmp.eq.s32.totalorder %s18, 1
      %p166 = por %p164, %p165
      %p167 = scmp.ne.s32.totalorder %s159, %s162
      %p168 = scmp.eq.s32.totalorder %s18, 0
      %p169 = por %p167, %p168
      %p170 = scmp.ne.s32.totalorder %s159, %s162
      %p171 = scmp.eq.s32.totalorder %s23, 1
      %p172 = por %p170, %p171
      %p173 = scmp.ne.s32.totalorder %s162, %s163
      %p174 = scmp.eq.s32.totalorder %s23, 0
      %p175 = por %p173, %p174
      %p176 = scmp.ne.s32.totalorder %s162, %s163
      %p177 = scmp.eq.s32.totalorder %s24, 1
      %p178 = por %p176, %p177
      %p180 = scmp.ne.s32.totalorder %s163, %s179
      %p181 = scmp.eq.s32.totalorder %s24, 0
      %p182 = por %p180, %p181
      %p183 = scmp.le.s32.totalorder 1, %s18
      %p184 = scmp.lt.s32.totalorder %s18, 3
      %p185 = pnand %p183, %p184
      %p186 = pneg %p185
      // Predicated region
      $region9: #{cnn_fmnist_forward.5} parent=5 // pred_check
        _
      $region10: #{cnn_fmnist_forward.5} parent=5 // pred_check_branch
        %188 = sbr.rel (%p185) target = $region12
      $region11: #{cnn_fmnist_forward.5} parent=5 // pred_region
        %s189 = ssub.s32 %s18, 1
        // Predicated region
        $region13: #{cnn_fmnist_forward.5} parent=11 // pred_check
          %p190 = pneg %p65
        $region14: #{cnn_fmnist_forward.5} parent=11 // pred_check_branch
          %192 = sbr.rel (%p190) target = $region16
        $region15: #{cnn_fmnist_forward.5} parent=11 // pred_region
          %s194 = ssub.s32 122880, 122880
          %195 = vsyncadd [#allocation3], %s194
          %s196 = sshll.u32 [#allocation2], 4
          %s197 = int_to_ptr.vmem [resolvable:$true] %s196
          %202 = dma.hbm_to_vmem [thread:$0]  %s1, 122880, %s197, [#allocation3], 640, 640, 40
        $region16: #{cnn_fmnist_forward.5} parent=11 // pred_fallthru
          _
        // Predicated region
        $region17: #{cnn_fmnist_forward.5} parent=11 // pred_check
          %p203 = pneg %p86
        $region18: #{cnn_fmnist_forward.5} parent=11 // pred_check_branch
          %205 = sbr.rel (%p203) target = $region20
        $region19: #{cnn_fmnist_forward.5} parent=11 // pred_region
          %s207 = ssub.s32 160, 160
          %208 = vsyncadd [#allocation6], %s207
          %s210 = sshll.u32 [#allocation5], 4
          %s211 = int_to_ptr.vmem [resolvable:$true] %s210
          %213 = dma.hbm_to_vmem [thread:$0]  %s2, 160, %s211, [#allocation6]
        $region20: #{cnn_fmnist_forward.5} parent=11 // pred_fallthru
          _
        // Predicated region
        $region21: #{cnn_fmnist_forward.5} parent=11 // pred_check
          %p214 = pneg %p107
        $region22: #{cnn_fmnist_forward.5} parent=11 // pred_check_branch
          %216 = sbr.rel (%p214) target = $region24
        $region23: #{cnn_fmnist_forward.5} parent=11 // pred_region
          %s218 = ssub.s32 160, 160
          %219 = vsyncadd [#allocation6], %s218
          %s221 = sshll.u32 [#allocation7], 4
          %s222 = int_to_ptr.vmem [resolvable:$true] %s221
          %224 = dma.hbm_to_vmem [thread:$0]  %s3, 160, %s222, [#allocation6]
        $region24: #{cnn_fmnist_forward.5} parent=11 // pred_fallthru
          _
        // Predicated region
        $region25: #{cnn_fmnist_forward.5} parent=11 // pred_check
          %p225 = pneg %p128
        $region26: #{cnn_fmnist_forward.5} parent=11 // pred_check_branch
          %227 = sbr.rel (%p225) target = $region28
        $region27: #{cnn_fmnist_forward.5} parent=11 // pred_region
          %s229 = ssub.s32 12800, 12800
          %230 = vsyncadd [#allocation9], %s229
          %s231 = sshll.u32 [#allocation8], 4
          %s232 = int_to_ptr.vmem [resolvable:$true] %s231
          %237 = dma.hbm_to_vmem [thread:$0]  %s4, 12800, %s232, [#allocation9], 320, 320, 20
        $region28: #{cnn_fmnist_forward.5} parent=11 // pred_fallthru
          _
        // Predicated region
        $region29: #{cnn_fmnist_forward.5} parent=11 // pred_check
          %p238 = pneg %p149
        $region30: #{cnn_fmnist_forward.5} parent=11 // pred_check_branch
          %240 = sbr.rel (%p238) target = $region32
        $region31: #{cnn_fmnist_forward.5} parent=11 // pred_region
          %s242 = ssub.s32 16, 16
          %243 = vsyncadd [#allocation9], %s242
          %s245 = sshll.u32 [#allocation10], 4
          %s246 = int_to_ptr.vmem [resolvable:$true] %s245
          %248 = dma.hbm_to_vmem [thread:$0]  %s5, 16, %s246, [#allocation9]
        $region32: #{cnn_fmnist_forward.5} parent=11 // pred_fallthru
          _
      $region12: #{cnn_fmnist_forward.5} parent=5 // pred_fallthru
        _
      %p249 = scmp.lt.s32.totalorder %s18, 2
      // Predicated region
      $region33: #{cnn_fmnist_forward.5} parent=5 // pred_check
        %p250 = pneg %p249
      $region34: #{cnn_fmnist_forward.5} parent=5 // pred_check_branch
        %252 = sbr.rel (%p250) target = $region36
      $region35: #{cnn_fmnist_forward.5} parent=5 // pred_region
        // Predicated region
        $region37: #{cnn_fmnist_forward.5} parent=35 // pred_check
          %p253 = pneg %p38
        $region38: #{cnn_fmnist_forward.5} parent=35 // pred_check_branch
          %255 = sbr.rel (%p253) target = $region40
        $region39: #{cnn_fmnist_forward.5} parent=35 // pred_region
          %p256 = scmp.lt.s32.totalorder %s18, 1
          %s257 = scalar_select %p256, %s18, 1
          %s258 = smul.addr %s257, 6
          %s259 = smul.addr %s258, 4
          %s260 = scalar_lea.vmem %s0, %s259
        $region40: #{cnn_fmnist_forward.5} parent=35 // pred_fallthru
          _
      $region36: #{cnn_fmnist_forward.5} parent=5 // pred_fallthru
        _
      %p261 = scmp.le.s32.totalorder 1, %s18
      %p262 = scmp.lt.s32.totalorder %s18, 3
      %p263 = pnand %p261, %p262
      %p264 = pneg %p263
      // Predicated region
      $region41: #{cnn_fmnist_forward.5} parent=5 // pred_check
        _
      $region42: #{cnn_fmnist_forward.5} parent=5 // pred_check_branch
        %266 = sbr.rel (%p263) target = $region44
      $region43: #{cnn_fmnist_forward.5} parent=5 // pred_region
        %s267 = ssub.s32 %s18, 1
        // Predicated region
        $region45: #{cnn_fmnist_forward.5} parent=43 // pred_check
          %p268 = pneg %p65
        $region46: #{cnn_fmnist_forward.5} parent=43 // pred_check_branch
          %270 = sbr.rel (%p268) target = $region48
        $region47: #{cnn_fmnist_forward.5} parent=43 // pred_region
          %271 = dma.done [#allocation3], 122880
        $region48: #{cnn_fmnist_forward.5} parent=43 // pred_fallthru
          _
        // Predicated region
        $region49: #{cnn_fmnist_forward.5} parent=43 // pred_check
          %p272 = pneg %p86
        $region50: #{cnn_fmnist_forward.5} parent=43 // pred_check_branch
          %274 = sbr.rel (%p272) target = $region52
        $region51: #{cnn_fmnist_forward.5} parent=43 // pred_region
          %275 = dma.done [#allocation6], 160
        $region52: #{cnn_fmnist_forward.5} parent=43 // pred_fallthru
          _
        // Predicated region
        $region53: #{cnn_fmnist_forward.5} parent=43 // pred_check
          %p276 = pneg %p107
        $region54: #{cnn_fmnist_forward.5} parent=43 // pred_check_branch
          %278 = sbr.rel (%p276) target = $region56
        $region55: #{cnn_fmnist_forward.5} parent=43 // pred_region
          %279 = dma.done [#allocation6], 160
        $region56: #{cnn_fmnist_forward.5} parent=43 // pred_fallthru
          _
        // Predicated region
        $region57: #{cnn_fmnist_forward.5} parent=43 // pred_check
          %p280 = pneg %p128
        $region58: #{cnn_fmnist_forward.5} parent=43 // pred_check_branch
          %282 = sbr.rel (%p280) target = $region60
        $region59: #{cnn_fmnist_forward.5} parent=43 // pred_region
          %283 = dma.done [#allocation9], 12800
        $region60: #{cnn_fmnist_forward.5} parent=43 // pred_fallthru
          _
        // Predicated region
        $region61: #{cnn_fmnist_forward.5} parent=43 // pred_check
          %p284 = pneg %p149
        $region62: #{cnn_fmnist_forward.5} parent=43 // pred_check_branch
          %286 = sbr.rel (%p284) target = $region64
        $region63: #{cnn_fmnist_forward.5} parent=43 // pred_region
          %287 = dma.done [#allocation9], 16
        $region64: #{cnn_fmnist_forward.5} parent=43 // pred_fallthru
          _
        %p288 = scmp.lt.s32.totalorder %s23, 1
        %s289 = scalar_select %p288, %s23, 1
        %s290 = smul.addr %s289, 6
        %s291 = smul.addr %s290, 4
        %s292 = scalar_lea.vmem %s0, %s291
        %p293 = pneg %p44
        %p294 = pneg %p41
        %p295 = pneg %p65
        %p296 = pneg %p62
        %p297 = pneg %p86
        %p298 = pneg %p83
        %p299 = pneg %p107
        %p300 = pneg %p104
        %p301 = pneg %p128
        %p302 = pneg %p125
        %p303 = pneg %p149
        %p304 = pneg %p146
        %p305 = pneg %p175
        %p306 = pneg %p172
        %s307 = sand.u32 %s162, 1
        %s308 = scalar_lea.sflag [#allocation4], %s307
        %s309 = sand.u32 %s162, 1
        %s310 = scalar_lea.vmem [#allocation11], %s309
        %p311 = scmp.lt.s32.totalorder %s23, 1
        %s312 = scalar_select %p311, %s23, 1
        %s313 = smul.addr %s312, 6
        %s314 = smul.addr %s313, 4
        %s315 = scalar_lea.vmem %s0, %s314
        %v317 = vld [vmem:[#allocation5] sm:$0xff]
        %v318 = vld [vmem:[#allocation5 + $0x8] sm:$0x3]
        %v319 = vld [vmem:[#allocation7] sm:$0xff]
        %v320 = vld [vmem:[#allocation7 + $0x8] sm:$0x3]
        %v321 = vld [vmem:[#allocation8] sm:$0xff]
        %v322 = vld [vmem:[#allocation8 + $0x8] sm:$0xff]
        %v323 = vld [vmem:[#allocation8 + $0x10] sm:$0xf]
        %v324 = vld [vmem:[#allocation8 + $0x14] sm:$0xff]
        %v325 = vld [vmem:[#allocation8 + $0x1c] sm:$0xff]
        %v326 = vld [vmem:[#allocation8 + $0x24] sm:$0xf]
        %v327 = vld [vmem:[#allocation8 + $0x28] sm:$0xff]
        %v328 = vld [vmem:[#allocation8 + $0x30] sm:$0xff]
        %v329 = vld [vmem:[#allocation8 + $0x38] sm:$0xf]
        %v330 = vld [vmem:[#allocation8 + $0x3c] sm:$0xff]
        %v331 = vld [vmem:[#allocation8 + $0x44] sm:$0xff]
        %v332 = vld [vmem:[#allocation8 + $0x4c] sm:$0xf]
        %v333 = vld [vmem:[#allocation8 + $0x50] sm:$0xff]
        %v334 = vld [vmem:[#allocation8 + $0x58] sm:$0xff]
        %v335 = vld [vmem:[#allocation8 + $0x60] sm:$0xf]
        %v336 = vld [vmem:[#allocation8 + $0x64] sm:$0xff]
        %v337 = vld [vmem:[#allocation8 + $0x6c] sm:$0xff]
        %v338 = vld [vmem:[#allocation8 + $0x74] sm:$0xf]
        %v339 = vld [vmem:[#allocation8 + $0x78] sm:$0xff]
        %v340 = vld [vmem:[#allocation8 + $0x80] sm:$0xff]
        %v341 = vld [vmem:[#allocation8 + $0x88] sm:$0xf]
        %v342 = vld [vmem:[#allocation8 + $0x8c] sm:$0xff]
        %v343 = vld [vmem:[#allocation8 + $0x94] sm:$0xff]
        %v344 = vld [vmem:[#allocation8 + $0x9c] sm:$0xf]
        %v345 = vld [vmem:[#allocation8 + $0xa0] sm:$0xff]
        %v346 = vld [vmem:[#allocation8 + $0xa8] sm:$0xff]
        %v347 = vld [vmem:[#allocation8 + $0xb0] sm:$0xf]
        %v348 = vld [vmem:[#allocation8 + $0xb4] sm:$0xff]
        %v349 = vld [vmem:[#allocation8 + $0xbc] sm:$0xff]
        %v350 = vld [vmem:[#allocation8 + $0xc4] sm:$0xf]
        %v351 = vld [vmem:[#allocation8 + $0xc8] sm:$0xff]
        %v352 = vld [vmem:[#allocation8 + $0xd0] sm:$0xff]
        %v353 = vld [vmem:[#allocation8 + $0xd8] sm:$0xf]
        %v354 = vld [vmem:[#allocation8 + $0xdc] sm:$0xff]
        %v355 = vld [vmem:[#allocation8 + $0xe4] sm:$0xff]
        %v356 = vld [vmem:[#allocation8 + $0xec] sm:$0xf]
        %v357 = vld [vmem:[#allocation8 + $0xf0] sm:$0xff]
        %v358 = vld [vmem:[#allocation8 + $0xf8] sm:$0xff]
        %v359 = vld [vmem:[#allocation8 + $0x100] sm:$0xf]
        %v360 = vld [vmem:[#allocation8 + $0x104] sm:$0xff]
        %v361 = vld [vmem:[#allocation8 + $0x10c] sm:$0xff]
        %v362 = vld [vmem:[#allocation8 + $0x114] sm:$0xf]
        %v363 = vld [vmem:[#allocation8 + $0x118] sm:$0xff]
        %v364 = vld [vmem:[#allocation8 + $0x120] sm:$0xff]
        %v365 = vld [vmem:[#allocation8 + $0x128] sm:$0xf]
        %v366 = vld [vmem:[#allocation8 + $0x12c] sm:$0xff]
        %v367 = vld [vmem:[#allocation8 + $0x134] sm:$0xff]
        %v368 = vld [vmem:[#allocation8 + $0x13c] sm:$0xf]
        %v369 = vld [vmem:[#allocation8 + $0x140] sm:$0xff]
        %v370 = vld [vmem:[#allocation8 + $0x148] sm:$0xff]
        %v371 = vld [vmem:[#allocation8 + $0x150] sm:$0xf]
        %v372 = vld [vmem:[#allocation8 + $0x154] sm:$0xff]
        %v373 = vld [vmem:[#allocation8 + $0x15c] sm:$0xff]
        %v374 = vld [vmem:[#allocation8 + $0x164] sm:$0xf]
        %v375 = vld [vmem:[#allocation8 + $0x168] sm:$0xff]
        %v376 = vld [vmem:[#allocation8 + $0x170] sm:$0xff]
        %v377 = vld [vmem:[#allocation8 + $0x178] sm:$0xf]
        %v378 = vld [vmem:[#allocation8 + $0x17c] sm:$0xff]
        %v379 = vld [vmem:[#allocation8 + $0x184] sm:$0xff]
        %v380 = vld [vmem:[#allocation8 + $0x18c] sm:$0xf]
        %v381 = vld [vmem:[#allocation8 + $0x190] sm:$0xff]
        %v382 = vld [vmem:[#allocation8 + $0x198] sm:$0xff]
        %v383 = vld [vmem:[#allocation8 + $0x1a0] sm:$0xf]
        %v384 = vld [vmem:[#allocation8 + $0x1a4] sm:$0xff]
        %v385 = vld [vmem:[#allocation8 + $0x1ac] sm:$0xff]
        %v386 = vld [vmem:[#allocation8 + $0x1b4] sm:$0xf]
        %v387 = vld [vmem:[#allocation8 + $0x1b8] sm:$0xff]
        %v388 = vld [vmem:[#allocation8 + $0x1c0] sm:$0xff]
        %v389 = vld [vmem:[#allocation8 + $0x1c8] sm:$0xf]
        %v390 = vld [vmem:[#allocation8 + $0x1cc] sm:$0xff]
        %v391 = vld [vmem:[#allocation8 + $0x1d4] sm:$0xff]
        %v392 = vld [vmem:[#allocation8 + $0x1dc] sm:$0xf]
        %v393 = vld [vmem:[#allocation8 + $0x1e0] sm:$0xff]
        %v394 = vld [vmem:[#allocation8 + $0x1e8] sm:$0xff]
        %v395 = vld [vmem:[#allocation8 + $0x1f0] sm:$0xf]
        %v396 = vld [vmem:[#allocation8 + $0x1f4] sm:$0xff]
        %v397 = vld [vmem:[#allocation8 + $0x1fc] sm:$0xff]
        %v398 = vld [vmem:[#allocation8 + $0x204] sm:$0xf]
        %v399 = vld [vmem:[#allocation8 + $0x208] sm:$0xff]
        %v400 = vld [vmem:[#allocation8 + $0x210] sm:$0xff]
        %v401 = vld [vmem:[#allocation8 + $0x218] sm:$0xf]
        %v402 = vld [vmem:[#allocation8 + $0x21c] sm:$0xff]
        %v403 = vld [vmem:[#allocation8 + $0x224] sm:$0xff]
        %v404 = vld [vmem:[#allocation8 + $0x22c] sm:$0xf]
        %v405 = vld [vmem:[#allocation8 + $0x230] sm:$0xff]
        %v406 = vld [vmem:[#allocation8 + $0x238] sm:$0xff]
        %v407 = vld [vmem:[#allocation8 + $0x240] sm:$0xf]
        %v408 = vld [vmem:[#allocation8 + $0x244] sm:$0xff]
        %v409 = vld [vmem:[#allocation8 + $0x24c] sm:$0xff]
        %v410 = vld [vmem:[#allocation8 + $0x254] sm:$0xf]
        %v411 = vld [vmem:[#allocation8 + $0x258] sm:$0xff]
        %v412 = vld [vmem:[#allocation8 + $0x260] sm:$0xff]
        %v413 = vld [vmem:[#allocation8 + $0x268] sm:$0xf]
        %v414 = vld [vmem:[#allocation8 + $0x26c] sm:$0xff]
        %v415 = vld [vmem:[#allocation8 + $0x274] sm:$0xff]
        %v416 = vld [vmem:[#allocation8 + $0x27c] sm:$0xf]
        %v417 = vld [vmem:[#allocation8 + $0x280] sm:$0xff]
        %v418 = vld [vmem:[#allocation8 + $0x288] sm:$0xff]
        %v419 = vld [vmem:[#allocation8 + $0x290] sm:$0xf]
        %v420 = vld [vmem:[#allocation8 + $0x294] sm:$0xff]
        %v421 = vld [vmem:[#allocation8 + $0x29c] sm:$0xff]
        %v422 = vld [vmem:[#allocation8 + $0x2a4] sm:$0xf]
        %v423 = vld [vmem:[#allocation8 + $0x2a8] sm:$0xff]
        %v424 = vld [vmem:[#allocation8 + $0x2b0] sm:$0xff]
        %v425 = vld [vmem:[#allocation8 + $0x2b8] sm:$0xf]
        %v426 = vld [vmem:[#allocation8 + $0x2bc] sm:$0xff]
        %v427 = vld [vmem:[#allocation8 + $0x2c4] sm:$0xff]
        %v428 = vld [vmem:[#allocation8 + $0x2cc] sm:$0xf]
        %v429 = vld [vmem:[#allocation8 + $0x2d0] sm:$0xff]
        %v430 = vld [vmem:[#allocation8 + $0x2d8] sm:$0xff]
        %v431 = vld [vmem:[#allocation8 + $0x2e0] sm:$0xf]
        %v432 = vld [vmem:[#allocation8 + $0x2e4] sm:$0xff]
        %v433 = vld [vmem:[#allocation8 + $0x2ec] sm:$0xff]
        %v434 = vld [vmem:[#allocation8 + $0x2f4] sm:$0xf]
        %v435 = vld [vmem:[#allocation8 + $0x2f8] sm:$0xff]
        %v436 = vld [vmem:[#allocation8 + $0x300] sm:$0xff]
        %v437 = vld [vmem:[#allocation8 + $0x308] sm:$0xf]
        %v438 = vld [vmem:[#allocation8 + $0x30c] sm:$0xff]
        %v439 = vld [vmem:[#allocation8 + $0x314] sm:$0xff]
        %v440 = vld [vmem:[#allocation8 + $0x31c] sm:$0xf]
        %v441 = vld [vmem:[#allocation10] sm:$0x1]
        %v442 = vld [vmem:[%s315] sm:$0x77]
        %v443 = vld [vmem:[%s315 + $0x8] sm:$0x77]
        %v444 = vld [vmem:[%s315 + $0x10] sm:$0x77]
        %v445 = vld [vmem:[#allocation2] sm:$0xff]
        %v446 = vld [vmem:[#allocation2 + $0x8] sm:$0xff]
        %v447 = vld [vmem:[#allocation2 + $0x10] sm:$0xff]
        %v448 = vld [vmem:[#allocation2 + $0x18] sm:$0xff]
        %v449 = vld [vmem:[#allocation2 + $0x20] sm:$0xff]
        %v450 = vld [vmem:[#allocation2 + $0x28] sm:$0xff]
        %v451 = vld [vmem:[#allocation2 + $0x30] sm:$0xff]
        %v452 = vld [vmem:[#allocation2 + $0x38] sm:$0xff]
        %v453 = vld [vmem:[#allocation2 + $0x40] sm:$0xff]
        %v454 = vld [vmem:[#allocation2 + $0x48] sm:$0xff]
        %v455 = vld [vmem:[#allocation2 + $0x50] sm:$0xff]
        %v456 = vld [vmem:[#allocation2 + $0x58] sm:$0xff]
        %v457 = vld [vmem:[#allocation2 + $0x60] sm:$0xff]
        %v458 = vld [vmem:[#allocation2 + $0x68] sm:$0xff]
        %v459 = vld [vmem:[#allocation2 + $0x70] sm:$0xff]
        %v460 = vld [vmem:[#allocation2 + $0x78] sm:$0xff]
        %v461 = vld [vmem:[#allocation2 + $0x80] sm:$0xff]
        %v462 = vld [vmem:[#allocation2 + $0x88] sm:$0xff]
        %v463 = vld [vmem:[#allocation2 + $0x90] sm:$0xff]
        %v464 = vld [vmem:[#allocation2 + $0x98] sm:$0xff]
        %v465 = vld [vmem:[#allocation2 + $0xa0] sm:$0xff]
        %v466 = vld [vmem:[#allocation2 + $0xa8] sm:$0xff]
        %v467 = vld [vmem:[#allocation2 + $0xb0] sm:$0xff]
        %v468 = vld [vmem:[#allocation2 + $0xb8] sm:$0xff]
        %v469 = vld [vmem:[#allocation2 + $0xc0] sm:$0xff]
        %v470 = vld [vmem:[#allocation2 + $0xc8] sm:$0xff]
        %v471 = vld [vmem:[#allocation2 + $0xd0] sm:$0xff]
        %v472 = vld [vmem:[#allocation2 + $0xd8] sm:$0xff]
        %v473 = vld [vmem:[#allocation2 + $0xe0] sm:$0xff]
        %v474 = vld [vmem:[#allocation2 + $0xe8] sm:$0xff]
        %v475 = vld [vmem:[#allocation2 + $0xf0] sm:$0xff]
        %v476 = vld [vmem:[#allocation2 + $0xf8] sm:$0xff]
        %v477 = vld [vmem:[#allocation2 + $0x100] sm:$0xff]
        %v478 = vld [vmem:[#allocation2 + $0x108] sm:$0xff]
        %v479 = vld [vmem:[#allocation2 + $0x110] sm:$0xff]
        %v480 = vld [vmem:[#allocation2 + $0x118] sm:$0xff]
        %v481 = vld [vmem:[#allocation2 + $0x120] sm:$0xff]
        %v482 = vld [vmem:[#allocation2 + $0x128] sm:$0xff]
        %v483 = vld [vmem:[#allocation2 + $0x130] sm:$0xff]
        %v484 = vld [vmem:[#allocation2 + $0x138] sm:$0xff]
        %v485 = vld [vmem:[#allocation2 + $0x140] sm:$0xff]
        %v486 = vld [vmem:[#allocation2 + $0x148] sm:$0xff]
        %v487 = vld [vmem:[#allocation2 + $0x150] sm:$0xff]
        %v488 = vld [vmem:[#allocation2 + $0x158] sm:$0xff]
        %v489 = vld [vmem:[#allocation2 + $0x160] sm:$0xff]
        %v490 = vld [vmem:[#allocation2 + $0x168] sm:$0xff]
        %v491 = vld [vmem:[#allocation2 + $0x170] sm:$0xff]
        %v492 = vld [vmem:[#allocation2 + $0x178] sm:$0xff]
        %v493 = vld [vmem:[#allocation2 + $0x180] sm:$0xff]
        %v494 = vld [vmem:[#allocation2 + $0x188] sm:$0xff]
        %v495 = vld [vmem:[#allocation2 + $0x190] sm:$0xff]
        %v496 = vld [vmem:[#allocation2 + $0x198] sm:$0xff]
        %v497 = vld [vmem:[#allocation2 + $0x1a0] sm:$0xff]
        %v498 = vld [vmem:[#allocation2 + $0x1a8] sm:$0xff]
        %v499 = vld [vmem:[#allocation2 + $0x1b0] sm:$0xff]
        %v500 = vld [vmem:[#allocation2 + $0x1b8] sm:$0xff]
        %v501 = vld [vmem:[#allocation2 + $0x1c0] sm:$0xff]
        %v502 = vld [vmem:[#allocation2 + $0x1c8] sm:$0xff]
        %v503 = vld [vmem:[#allocation2 + $0x1d0] sm:$0xff]
        %v504 = vld [vmem:[#allocation2 + $0x1d8] sm:$0xff]
        %v505 = vld [vmem:[#allocation2 + $0x1e0] sm:$0xff]
        %v506 = vld [vmem:[#allocation2 + $0x1e8] sm:$0xff]
        %v507 = vld [vmem:[#allocation2 + $0x1f0] sm:$0xff]
        %v508 = vld [vmem:[#allocation2 + $0x1f8] sm:$0xff]
        %v509 = vld [vmem:[#allocation2 + $0x200] sm:$0xff]
        %v510 = vld [vmem:[#allocation2 + $0x208] sm:$0xff]
        %v511 = vld [vmem:[#allocation2 + $0x210] sm:$0xff]
        %v512 = vld [vmem:[#allocation2 + $0x218] sm:$0xff]
        %v513 = vld [vmem:[#allocation2 + $0x220] sm:$0xff]
        %v514 = vld [vmem:[#allocation2 + $0x228] sm:$0xff]
        %v515 = vld [vmem:[#allocation2 + $0x230] sm:$0xff]
        %v516 = vld [vmem:[#allocation2 + $0x238] sm:$0xff]
        %v517 = vld [vmem:[#allocation2 + $0x240] sm:$0xff]
        %v518 = vld [vmem:[#allocation2 + $0x248] sm:$0xff]
        %v519 = vld [vmem:[#allocation2 + $0x250] sm:$0xff]
        %v520 = vld [vmem:[#allocation2 + $0x258] sm:$0xff]
        %v521 = vld [vmem:[#allocation2 + $0x260] sm:$0xff]
        %v522 = vld [vmem:[#allocation2 + $0x268] sm:$0xff]
        %v523 = vld [vmem:[#allocation2 + $0x270] sm:$0xff]
        %v524 = vld [vmem:[#allocation2 + $0x278] sm:$0xff]
        %v525 = vld [vmem:[#allocation2 + $0x280] sm:$0xff]
        %v526 = vld [vmem:[#allocation2 + $0x288] sm:$0xff]
        %v527 = vld [vmem:[#allocation2 + $0x290] sm:$0xff]
        %v528 = vld [vmem:[#allocation2 + $0x298] sm:$0xff]
        %v529 = vld [vmem:[#allocation2 + $0x2a0] sm:$0xff]
        %v530 = vld [vmem:[#allocation2 + $0x2a8] sm:$0xff]
        %v531 = vld [vmem:[#allocation2 + $0x2b0] sm:$0xff]
        %v532 = vld [vmem:[#allocation2 + $0x2b8] sm:$0xff]
        %v533 = vld [vmem:[#allocation2 + $0x2c0] sm:$0xff]
        %v534 = vld [vmem:[#allocation2 + $0x2c8] sm:$0xff]
        %v535 = vld [vmem:[#allocation2 + $0x2d0] sm:$0xff]
        %v536 = vld [vmem:[#allocation2 + $0x2d8] sm:$0xff]
        %v537 = vld [vmem:[#allocation2 + $0x2e0] sm:$0xff]
        %v538 = vld [vmem:[#allocation2 + $0x2e8] sm:$0xff]
        %v539 = vld [vmem:[#allocation2 + $0x2f0] sm:$0xff]
        %v540 = vld [vmem:[#allocation2 + $0x2f8] sm:$0xff]
        %v541 = vld [vmem:[#allocation2 + $0x300] sm:$0xff]
        %v542 = vld [vmem:[#allocation2 + $0x308] sm:$0xff]
        %v543 = vld [vmem:[#allocation2 + $0x310] sm:$0xff]
        %v544 = vld [vmem:[#allocation2 + $0x318] sm:$0xff]
        %v545 = vld [vmem:[#allocation2 + $0x320] sm:$0xff]
        %v546 = vld [vmem:[#allocation2 + $0x328] sm:$0xff]
        %v547 = vld [vmem:[#allocation2 + $0x330] sm:$0xff]
        %v548 = vld [vmem:[#allocation2 + $0x338] sm:$0xff]
        %v549 = vld [vmem:[#allocation2 + $0x340] sm:$0xff]
        %v550 = vld [vmem:[#allocation2 + $0x348] sm:$0xff]
        %v551 = vld [vmem:[#allocation2 + $0x350] sm:$0xff]
        %v552 = vld [vmem:[#allocation2 + $0x358] sm:$0xff]
        %v553 = vld [vmem:[#allocation2 + $0x360] sm:$0xff]
        %v554 = vld [vmem:[#allocation2 + $0x368] sm:$0xff]
        %v555 = vld [vmem:[#allocation2 + $0x370] sm:$0xff]
        %v556 = vld [vmem:[#allocation2 + $0x378] sm:$0xff]
        %v557 = vld [vmem:[#allocation2 + $0x380] sm:$0xff]
        %v558 = vld [vmem:[#allocation2 + $0x388] sm:$0xff]
        %v559 = vld [vmem:[#allocation2 + $0x390] sm:$0xff]
        %v560 = vld [vmem:[#allocation2 + $0x398] sm:$0xff]
        %v561 = vld [vmem:[#allocation2 + $0x3a0] sm:$0xff]
        %v562 = vld [vmem:[#allocation2 + $0x3a8] sm:$0xff]
        %v563 = vld [vmem:[#allocation2 + $0x3b0] sm:$0xff]
        %v564 = vld [vmem:[#allocation2 + $0x3b8] sm:$0xff]
        %v565 = vld [vmem:[#allocation2 + $0x3c0] sm:$0xff]
        %v566 = vld [vmem:[#allocation2 + $0x3c8] sm:$0xff]
        %v567 = vld [vmem:[#allocation2 + $0x3d0] sm:$0xff]
        %v568 = vld [vmem:[#allocation2 + $0x3d8] sm:$0xff]
        %v569 = vld [vmem:[#allocation2 + $0x3e0] sm:$0xff]
        %v570 = vld [vmem:[#allocation2 + $0x3e8] sm:$0xff]
        %v571 = vld [vmem:[#allocation2 + $0x3f0] sm:$0xff]
        %v572 = vld [vmem:[#allocation2 + $0x3f8] sm:$0xff]
        %v573 = vld [vmem:[#allocation2 + $0x400] sm:$0xff]
        %v574 = vld [vmem:[#allocation2 + $0x408] sm:$0xff]
        %v575 = vld [vmem:[#allocation2 + $0x410] sm:$0xff]
        %v576 = vld [vmem:[#allocation2 + $0x418] sm:$0xff]
        %v577 = vld [vmem:[#allocation2 + $0x420] sm:$0xff]
        %v578 = vld [vmem:[#allocation2 + $0x428] sm:$0xff]
        %v579 = vld [vmem:[#allocation2 + $0x430] sm:$0xff]
        %v580 = vld [vmem:[#allocation2 + $0x438] sm:$0xff]
        %v581 = vld [vmem:[#allocation2 + $0x440] sm:$0xff]
        %v582 = vld [vmem:[#allocation2 + $0x448] sm:$0xff]
        %v583 = vld [vmem:[#allocation2 + $0x450] sm:$0xff]
        %v584 = vld [vmem:[#allocation2 + $0x458] sm:$0xff]
        %v585 = vld [vmem:[#allocation2 + $0x460] sm:$0xff]
        %v586 = vld [vmem:[#allocation2 + $0x468] sm:$0xff]
        %v587 = vld [vmem:[#allocation2 + $0x470] sm:$0xff]
        %v588 = vld [vmem:[#allocation2 + $0x478] sm:$0xff]
        %v589 = vld [vmem:[#allocation2 + $0x480] sm:$0xff]
        %v590 = vld [vmem:[#allocation2 + $0x488] sm:$0xff]
        %v591 = vld [vmem:[#allocation2 + $0x490] sm:$0xff]
        %v592 = vld [vmem:[#allocation2 + $0x498] sm:$0xff]
        %v593 = vld [vmem:[#allocation2 + $0x4a0] sm:$0xff]
        %v594 = vld [vmem:[#allocation2 + $0x4a8] sm:$0xff]
        %v595 = vld [vmem:[#allocation2 + $0x4b0] sm:$0xff]
        %v596 = vld [vmem:[#allocation2 + $0x4b8] sm:$0xff]
        %v597 = vld [vmem:[#allocation2 + $0x4c0] sm:$0xff]
        %v598 = vld [vmem:[#allocation2 + $0x4c8] sm:$0xff]
        %v599 = vld [vmem:[#allocation2 + $0x4d0] sm:$0xff]
        %v600 = vld [vmem:[#allocation2 + $0x4d8] sm:$0xff]
        %v601 = vld [vmem:[#allocation2 + $0x4e0] sm:$0xff]
        %v602 = vld [vmem:[#allocation2 + $0x4e8] sm:$0xff]
        %v603 = vld [vmem:[#allocation2 + $0x4f0] sm:$0xff]
        %v604 = vld [vmem:[#allocation2 + $0x4f8] sm:$0xff]
        %v605 = vld [vmem:[#allocation2 + $0x500] sm:$0xff]
        %v606 = vld [vmem:[#allocation2 + $0x508] sm:$0xff]
        %v607 = vld [vmem:[#allocation2 + $0x510] sm:$0xff]
        %v608 = vld [vmem:[#allocation2 + $0x518] sm:$0xff]
        %v609 = vld [vmem:[#allocation2 + $0x520] sm:$0xff]
        %v610 = vld [vmem:[#allocation2 + $0x528] sm:$0xff]
        %v611 = vld [vmem:[#allocation2 + $0x530] sm:$0xff]
        %v612 = vld [vmem:[#allocation2 + $0x538] sm:$0xff]
        %v613 = vld [vmem:[#allocation2 + $0x540] sm:$0xff]
        %v614 = vld [vmem:[#allocation2 + $0x548] sm:$0xff]
        %v615 = vld [vmem:[#allocation2 + $0x550] sm:$0xff]
        %v616 = vld [vmem:[#allocation2 + $0x558] sm:$0xff]
        %v617 = vld [vmem:[#allocation2 + $0x560] sm:$0xff]
        %v618 = vld [vmem:[#allocation2 + $0x568] sm:$0xff]
        %v619 = vld [vmem:[#allocation2 + $0x570] sm:$0xff]
        %v620 = vld [vmem:[#allocation2 + $0x578] sm:$0xff]
        %v621 = vld [vmem:[#allocation2 + $0x580] sm:$0xff]
        %v622 = vld [vmem:[#allocation2 + $0x588] sm:$0xff]
        %v623 = vld [vmem:[#allocation2 + $0x590] sm:$0xff]
        %v624 = vld [vmem:[#allocation2 + $0x598] sm:$0xff]
        %v625 = vld [vmem:[#allocation2 + $0x5a0] sm:$0xff]
        %v626 = vld [vmem:[#allocation2 + $0x5a8] sm:$0xff]
        %v627 = vld [vmem:[#allocation2 + $0x5b0] sm:$0xff]
        %v628 = vld [vmem:[#allocation2 + $0x5b8] sm:$0xff]
        %v629 = vld [vmem:[#allocation2 + $0x5c0] sm:$0xff]
        %v630 = vld [vmem:[#allocation2 + $0x5c8] sm:$0xff]
        %v631 = vld [vmem:[#allocation2 + $0x5d0] sm:$0xff]
        %v632 = vld [vmem:[#allocation2 + $0x5d8] sm:$0xff]
        %v633 = vld [vmem:[#allocation2 + $0x5e0] sm:$0xff]
        %v634 = vld [vmem:[#allocation2 + $0x5e8] sm:$0xff]
        %v635 = vld [vmem:[#allocation2 + $0x5f0] sm:$0xff]
        %v636 = vld [vmem:[#allocation2 + $0x5f8] sm:$0xff]
        %v637 = vld [vmem:[#allocation2 + $0x600] sm:$0xff]
        %v638 = vld [vmem:[#allocation2 + $0x608] sm:$0xff]
        %v639 = vld [vmem:[#allocation2 + $0x610] sm:$0xff]
        %v640 = vld [vmem:[#allocation2 + $0x618] sm:$0xff]
        %v641 = vld [vmem:[#allocation2 + $0x620] sm:$0xff]
        %v642 = vld [vmem:[#allocation2 + $0x628] sm:$0xff]
        %v643 = vld [vmem:[#allocation2 + $0x630] sm:$0xff]
        %v644 = vld [vmem:[#allocation2 + $0x638] sm:$0xff]
        %v645 = vld [vmem:[#allocation2 + $0x640] sm:$0xff]
        %v646 = vld [vmem:[#allocation2 + $0x648] sm:$0xff]
        %v647 = vld [vmem:[#allocation2 + $0x650] sm:$0xff]
        %v648 = vld [vmem:[#allocation2 + $0x658] sm:$0xff]
        %v649 = vld [vmem:[#allocation2 + $0x660] sm:$0xff]
        %v650 = vld [vmem:[#allocation2 + $0x668] sm:$0xff]
        %v651 = vld [vmem:[#allocation2 + $0x670] sm:$0xff]
        %v652 = vld [vmem:[#allocation2 + $0x678] sm:$0xff]
        %v653 = vld [vmem:[#allocation2 + $0x680] sm:$0xff]
        %v654 = vld [vmem:[#allocation2 + $0x688] sm:$0xff]
        %v655 = vld [vmem:[#allocation2 + $0x690] sm:$0xff]
        %v656 = vld [vmem:[#allocation2 + $0x698] sm:$0xff]
        %v657 = vld [vmem:[#allocation2 + $0x6a0] sm:$0xff]
        %v658 = vld [vmem:[#allocation2 + $0x6a8] sm:$0xff]
        %v659 = vld [vmem:[#allocation2 + $0x6b0] sm:$0xff]
        %v660 = vld [vmem:[#allocation2 + $0x6b8] sm:$0xff]
        %v661 = vld [vmem:[#allocation2 + $0x6c0] sm:$0xff]
        %v662 = vld [vmem:[#allocation2 + $0x6c8] sm:$0xff]
        %v663 = vld [vmem:[#allocation2 + $0x6d0] sm:$0xff]
        %v664 = vld [vmem:[#allocation2 + $0x6d8] sm:$0xff]
        %v665 = vld [vmem:[#allocation2 + $0x6e0] sm:$0xff]
        %v666 = vld [vmem:[#allocation2 + $0x6e8] sm:$0xff]
        %v667 = vld [vmem:[#allocation2 + $0x6f0] sm:$0xff]
        %v668 = vld [vmem:[#allocation2 + $0x6f8] sm:$0xff]
        %v669 = vld [vmem:[#allocation2 + $0x700] sm:$0xff]
        %v670 = vld [vmem:[#allocation2 + $0x708] sm:$0xff]
        %v671 = vld [vmem:[#allocation2 + $0x710] sm:$0xff]
        %v672 = vld [vmem:[#allocation2 + $0x718] sm:$0xff]
        %v673 = vld [vmem:[#allocation2 + $0x720] sm:$0xff]
        %v674 = vld [vmem:[#allocation2 + $0x728] sm:$0xff]
        %v675 = vld [vmem:[#allocation2 + $0x730] sm:$0xff]
        %v676 = vld [vmem:[#allocation2 + $0x738] sm:$0xff]
        %v677 = vld [vmem:[#allocation2 + $0x740] sm:$0xff]
        %v678 = vld [vmem:[#allocation2 + $0x748] sm:$0xff]
        %v679 = vld [vmem:[#allocation2 + $0x750] sm:$0xff]
        %v680 = vld [vmem:[#allocation2 + $0x758] sm:$0xff]
        %v681 = vld [vmem:[#allocation2 + $0x760] sm:$0xff]
        %v682 = vld [vmem:[#allocation2 + $0x768] sm:$0xff]
        %v683 = vld [vmem:[#allocation2 + $0x770] sm:$0xff]
        %v684 = vld [vmem:[#allocation2 + $0x778] sm:$0xff]
        %v685 = vld [vmem:[#allocation2 + $0x780] sm:$0xff]
        %v686 = vld [vmem:[#allocation2 + $0x788] sm:$0xff]
        %v687 = vld [vmem:[#allocation2 + $0x790] sm:$0xff]
        %v688 = vld [vmem:[#allocation2 + $0x798] sm:$0xff]
        %v689 = vld [vmem:[#allocation2 + $0x7a0] sm:$0xff]
        %v690 = vld [vmem:[#allocation2 + $0x7a8] sm:$0xff]
        %v691 = vld [vmem:[#allocation2 + $0x7b0] sm:$0xff]
        %v692 = vld [vmem:[#allocation2 + $0x7b8] sm:$0xff]
        %v693 = vld [vmem:[#allocation2 + $0x7c0] sm:$0xff]
        %v694 = vld [vmem:[#allocation2 + $0x7c8] sm:$0xff]
        %v695 = vld [vmem:[#allocation2 + $0x7d0] sm:$0xff]
        %v696 = vld [vmem:[#allocation2 + $0x7d8] sm:$0xff]
        %v697 = vld [vmem:[#allocation2 + $0x7e0] sm:$0xff]
        %v698 = vld [vmem:[#allocation2 + $0x7e8] sm:$0xff]
        %v699 = vld [vmem:[#allocation2 + $0x7f0] sm:$0xff]
        %v700 = vld [vmem:[#allocation2 + $0x7f8] sm:$0xff]
        %v701 = vld [vmem:[#allocation2 + $0x800] sm:$0xff]
        %v702 = vld [vmem:[#allocation2 + $0x808] sm:$0xff]
        %v703 = vld [vmem:[#allocation2 + $0x810] sm:$0xff]
        %v704 = vld [vmem:[#allocation2 + $0x818] sm:$0xff]
        %v705 = vld [vmem:[#allocation2 + $0x820] sm:$0xff]
        %v706 = vld [vmem:[#allocation2 + $0x828] sm:$0xff]
        %v707 = vld [vmem:[#allocation2 + $0x830] sm:$0xff]
        %v708 = vld [vmem:[#allocation2 + $0x838] sm:$0xff]
        %v709 = vld [vmem:[#allocation2 + $0x840] sm:$0xff]
        %v710 = vld [vmem:[#allocation2 + $0x848] sm:$0xff]
        %v711 = vld [vmem:[#allocation2 + $0x850] sm:$0xff]
        %v712 = vld [vmem:[#allocation2 + $0x858] sm:$0xff]
        %v713 = vld [vmem:[#allocation2 + $0x860] sm:$0xff]
        %v714 = vld [vmem:[#allocation2 + $0x868] sm:$0xff]
        %v715 = vld [vmem:[#allocation2 + $0x870] sm:$0xff]
        %v716 = vld [vmem:[#allocation2 + $0x878] sm:$0xff]
        %v717 = vld [vmem:[#allocation2 + $0x880] sm:$0xff]
        %v718 = vld [vmem:[#allocation2 + $0x888] sm:$0xff]
        %v719 = vld [vmem:[#allocation2 + $0x890] sm:$0xff]
        %v720 = vld [vmem:[#allocation2 + $0x898] sm:$0xff]
        %v721 = vld [vmem:[#allocation2 + $0x8a0] sm:$0xff]
        %v722 = vld [vmem:[#allocation2 + $0x8a8] sm:$0xff]
        %v723 = vld [vmem:[#allocation2 + $0x8b0] sm:$0xff]
        %v724 = vld [vmem:[#allocation2 + $0x8b8] sm:$0xff]
        %v725 = vld [vmem:[#allocation2 + $0x8c0] sm:$0xff]
        %v726 = vld [vmem:[#allocation2 + $0x8c8] sm:$0xff]
        %v727 = vld [vmem:[#allocation2 + $0x8d0] sm:$0xff]
        %v728 = vld [vmem:[#allocation2 + $0x8d8] sm:$0xff]
        %v729 = vld [vmem:[#allocation2 + $0x8e0] sm:$0xff]
        %v730 = vld [vmem:[#allocation2 + $0x8e8] sm:$0xff]
        %v731 = vld [vmem:[#allocation2 + $0x8f0] sm:$0xff]
        %v732 = vld [vmem:[#allocation2 + $0x8f8] sm:$0xff]
        %v733 = vld [vmem:[#allocation2 + $0x900] sm:$0xff]
        %v734 = vld [vmem:[#allocation2 + $0x908] sm:$0xff]
        %v735 = vld [vmem:[#allocation2 + $0x910] sm:$0xff]
        %v736 = vld [vmem:[#allocation2 + $0x918] sm:$0xff]
        %v737 = vld [vmem:[#allocation2 + $0x920] sm:$0xff]
        %v738 = vld [vmem:[#allocation2 + $0x928] sm:$0xff]
        %v739 = vld [vmem:[#allocation2 + $0x930] sm:$0xff]
        %v740 = vld [vmem:[#allocation2 + $0x938] sm:$0xff]
        %v741 = vld [vmem:[#allocation2 + $0x940] sm:$0xff]
        %v742 = vld [vmem:[#allocation2 + $0x948] sm:$0xff]
        %v743 = vld [vmem:[#allocation2 + $0x950] sm:$0xff]
        %v744 = vld [vmem:[#allocation2 + $0x958] sm:$0xff]
        %v745 = vld [vmem:[#allocation2 + $0x960] sm:$0xff]
        %v746 = vld [vmem:[#allocation2 + $0x968] sm:$0xff]
        %v747 = vld [vmem:[#allocation2 + $0x970] sm:$0xff]
        %v748 = vld [vmem:[#allocation2 + $0x978] sm:$0xff]
        %v749 = vld [vmem:[#allocation2 + $0x980] sm:$0xff]
        %v750 = vld [vmem:[#allocation2 + $0x988] sm:$0xff]
        %v751 = vld [vmem:[#allocation2 + $0x990] sm:$0xff]
        %v752 = vld [vmem:[#allocation2 + $0x998] sm:$0xff]
        %v753 = vld [vmem:[#allocation2 + $0x9a0] sm:$0xff]
        %v754 = vld [vmem:[#allocation2 + $0x9a8] sm:$0xff]
        %v755 = vld [vmem:[#allocation2 + $0x9b0] sm:$0xff]
        %v756 = vld [vmem:[#allocation2 + $0x9b8] sm:$0xff]
        %v757 = vld [vmem:[#allocation2 + $0x9c0] sm:$0xff]
        %v758 = vld [vmem:[#allocation2 + $0x9c8] sm:$0xff]
        %v759 = vld [vmem:[#allocation2 + $0x9d0] sm:$0xff]
        %v760 = vld [vmem:[#allocation2 + $0x9d8] sm:$0xff]
        %v761 = vld [vmem:[#allocation2 + $0x9e0] sm:$0xff]
        %v762 = vld [vmem:[#allocation2 + $0x9e8] sm:$0xff]
        %v763 = vld [vmem:[#allocation2 + $0x9f0] sm:$0xff]
        %v764 = vld [vmem:[#allocation2 + $0x9f8] sm:$0xff]
        %v765 = vld [vmem:[#allocation2 + $0xa00] sm:$0xff]
        %v766 = vld [vmem:[#allocation2 + $0xa08] sm:$0xff]
        %v767 = vld [vmem:[#allocation2 + $0xa10] sm:$0xff]
        %v768 = vld [vmem:[#allocation2 + $0xa18] sm:$0xff]
        %v769 = vld [vmem:[#allocation2 + $0xa20] sm:$0xff]
        %v770 = vld [vmem:[#allocation2 + $0xa28] sm:$0xff]
        %v771 = vld [vmem:[#allocation2 + $0xa30] sm:$0xff]
        %v772 = vld [vmem:[#allocation2 + $0xa38] sm:$0xff]
        %v773 = vld [vmem:[#allocation2 + $0xa40] sm:$0xff]
        %v774 = vld [vmem:[#allocation2 + $0xa48] sm:$0xff]
        %v775 = vld [vmem:[#allocation2 + $0xa50] sm:$0xff]
        %v776 = vld [vmem:[#allocation2 + $0xa58] sm:$0xff]
        %v777 = vld [vmem:[#allocation2 + $0xa60] sm:$0xff]
        %v778 = vld [vmem:[#allocation2 + $0xa68] sm:$0xff]
        %v779 = vld [vmem:[#allocation2 + $0xa70] sm:$0xff]
        %v780 = vld [vmem:[#allocation2 + $0xa78] sm:$0xff]
        %v781 = vld [vmem:[#allocation2 + $0xa80] sm:$0xff]
        %v782 = vld [vmem:[#allocation2 + $0xa88] sm:$0xff]
        %v783 = vld [vmem:[#allocation2 + $0xa90] sm:$0xff]
        %v784 = vld [vmem:[#allocation2 + $0xa98] sm:$0xff]
        %v785 = vld [vmem:[#allocation2 + $0xaa0] sm:$0xff]
        %v786 = vld [vmem:[#allocation2 + $0xaa8] sm:$0xff]
        %v787 = vld [vmem:[#allocation2 + $0xab0] sm:$0xff]
        %v788 = vld [vmem:[#allocation2 + $0xab8] sm:$0xff]
        %v789 = vld [vmem:[#allocation2 + $0xac0] sm:$0xff]
        %v790 = vld [vmem:[#allocation2 + $0xac8] sm:$0xff]
        %v791 = vld [vmem:[#allocation2 + $0xad0] sm:$0xff]
        %v792 = vld [vmem:[#allocation2 + $0xad8] sm:$0xff]
        %v793 = vld [vmem:[#allocation2 + $0xae0] sm:$0xff]
        %v794 = vld [vmem:[#allocation2 + $0xae8] sm:$0xff]
        %v795 = vld [vmem:[#allocation2 + $0xaf0] sm:$0xff]
        %v796 = vld [vmem:[#allocation2 + $0xaf8] sm:$0xff]
        %v797 = vld [vmem:[#allocation2 + $0xb00] sm:$0xff]
        %v798 = vld [vmem:[#allocation2 + $0xb08] sm:$0xff]
        %v799 = vld [vmem:[#allocation2 + $0xb10] sm:$0xff]
        %v800 = vld [vmem:[#allocation2 + $0xb18] sm:$0xff]
        %v801 = vld [vmem:[#allocation2 + $0xb20] sm:$0xff]
        %v802 = vld [vmem:[#allocation2 + $0xb28] sm:$0xff]
        %v803 = vld [vmem:[#allocation2 + $0xb30] sm:$0xff]
        %v804 = vld [vmem:[#allocation2 + $0xb38] sm:$0xff]
        %v805 = vld [vmem:[#allocation2 + $0xb40] sm:$0xff]
        %v806 = vld [vmem:[#allocation2 + $0xb48] sm:$0xff]
        %v807 = vld [vmem:[#allocation2 + $0xb50] sm:$0xff]
        %v808 = vld [vmem:[#allocation2 + $0xb58] sm:$0xff]
        %v809 = vld [vmem:[#allocation2 + $0xb60] sm:$0xff]
        %v810 = vld [vmem:[#allocation2 + $0xb68] sm:$0xff]
        %v811 = vld [vmem:[#allocation2 + $0xb70] sm:$0xff]
        %v812 = vld [vmem:[#allocation2 + $0xb78] sm:$0xff]
        %v813 = vld [vmem:[#allocation2 + $0xb80] sm:$0xff]
        %v814 = vld [vmem:[#allocation2 + $0xb88] sm:$0xff]
        %v815 = vld [vmem:[#allocation2 + $0xb90] sm:$0xff]
        %v816 = vld [vmem:[#allocation2 + $0xb98] sm:$0xff]
        %v817 = vld [vmem:[#allocation2 + $0xba0] sm:$0xff]
        %v818 = vld [vmem:[#allocation2 + $0xba8] sm:$0xff]
        %v819 = vld [vmem:[#allocation2 + $0xbb0] sm:$0xff]
        %v820 = vld [vmem:[#allocation2 + $0xbb8] sm:$0xff]
        %v821 = vld [vmem:[#allocation2 + $0xbc0] sm:$0xff]
        %v822 = vld [vmem:[#allocation2 + $0xbc8] sm:$0xff]
        %v823 = vld [vmem:[#allocation2 + $0xbd0] sm:$0xff]
        %v824 = vld [vmem:[#allocation2 + $0xbd8] sm:$0xff]
        %v825 = vld [vmem:[#allocation2 + $0xbe0] sm:$0xff]
        %v826 = vld [vmem:[#allocation2 + $0xbe8] sm:$0xff]
        %v827 = vld [vmem:[#allocation2 + $0xbf0] sm:$0xff]
        %v828 = vld [vmem:[#allocation2 + $0xbf8] sm:$0xff]
        %v829 = vld [vmem:[#allocation2 + $0xc00] sm:$0xff]
        %v830 = vld [vmem:[#allocation2 + $0xc08] sm:$0xff]
        %v831 = vld [vmem:[#allocation2 + $0xc10] sm:$0xff]
        %v832 = vld [vmem:[#allocation2 + $0xc18] sm:$0xff]
        %v833 = vld [vmem:[#allocation2 + $0xc20] sm:$0xff]
        %v834 = vld [vmem:[#allocation2 + $0xc28] sm:$0xff]
        %v835 = vld [vmem:[#allocation2 + $0xc30] sm:$0xff]
        %v836 = vld [vmem:[#allocation2 + $0xc38] sm:$0xff]
        %v837 = vld [vmem:[#allocation2 + $0xc40] sm:$0xff]
        %v838 = vld [vmem:[#allocation2 + $0xc48] sm:$0xff]
        %v839 = vld [vmem:[#allocation2 + $0xc50] sm:$0xff]
        %v840 = vld [vmem:[#allocation2 + $0xc58] sm:$0xff]
        %v841 = vld [vmem:[#allocation2 + $0xc60] sm:$0xff]
        %v842 = vld [vmem:[#allocation2 + $0xc68] sm:$0xff]
        %v843 = vld [vmem:[#allocation2 + $0xc70] sm:$0xff]
        %v844 = vld [vmem:[#allocation2 + $0xc78] sm:$0xff]
        %v845 = vld [vmem:[#allocation2 + $0xc80] sm:$0xff]
        %v846 = vld [vmem:[#allocation2 + $0xc88] sm:$0xff]
        %v847 = vld [vmem:[#allocation2 + $0xc90] sm:$0xff]
        %v848 = vld [vmem:[#allocation2 + $0xc98] sm:$0xff]
        %v849 = vld [vmem:[#allocation2 + $0xca0] sm:$0xff]
        %v850 = vld [vmem:[#allocation2 + $0xca8] sm:$0xff]
        %v851 = vld [vmem:[#allocation2 + $0xcb0] sm:$0xff]
        %v852 = vld [vmem:[#allocation2 + $0xcb8] sm:$0xff]
        %v853 = vld [vmem:[#allocation2 + $0xcc0] sm:$0xff]
        %v854 = vld [vmem:[#allocation2 + $0xcc8] sm:$0xff]
        %v855 = vld [vmem:[#allocation2 + $0xcd0] sm:$0xff]
        %v856 = vld [vmem:[#allocation2 + $0xcd8] sm:$0xff]
        %v857 = vld [vmem:[#allocation2 + $0xce0] sm:$0xff]
        %v858 = vld [vmem:[#allocation2 + $0xce8] sm:$0xff]
        %v859 = vld [vmem:[#allocation2 + $0xcf0] sm:$0xff]
        %v860 = vld [vmem:[#allocation2 + $0xcf8] sm:$0xff]
        %v861 = vld [vmem:[#allocation2 + $0xd00] sm:$0xff]
        %v862 = vld [vmem:[#allocation2 + $0xd08] sm:$0xff]
        %v863 = vld [vmem:[#allocation2 + $0xd10] sm:$0xff]
        %v864 = vld [vmem:[#allocation2 + $0xd18] sm:$0xff]
        %v865 = vld [vmem:[#allocation2 + $0xd20] sm:$0xff]
        %v866 = vld [vmem:[#allocation2 + $0xd28] sm:$0xff]
        %v867 = vld [vmem:[#allocation2 + $0xd30] sm:$0xff]
        %v868 = vld [vmem:[#allocation2 + $0xd38] sm:$0xff]
        %v869 = vld [vmem:[#allocation2 + $0xd40] sm:$0xff]
        %v870 = vld [vmem:[#allocation2 + $0xd48] sm:$0xff]
        %v871 = vld [vmem:[#allocation2 + $0xd50] sm:$0xff]
        %v872 = vld [vmem:[#allocation2 + $0xd58] sm:$0xff]
        %v873 = vld [vmem:[#allocation2 + $0xd60] sm:$0xff]
        %v874 = vld [vmem:[#allocation2 + $0xd68] sm:$0xff]
        %v875 = vld [vmem:[#allocation2 + $0xd70] sm:$0xff]
        %v876 = vld [vmem:[#allocation2 + $0xd78] sm:$0xff]
        %v877 = vld [vmem:[#allocation2 + $0xd80] sm:$0xff]
        %v878 = vld [vmem:[#allocation2 + $0xd88] sm:$0xff]
        %v879 = vld [vmem:[#allocation2 + $0xd90] sm:$0xff]
        %v880 = vld [vmem:[#allocation2 + $0xd98] sm:$0xff]
        %v881 = vld [vmem:[#allocation2 + $0xda0] sm:$0xff]
        %v882 = vld [vmem:[#allocation2 + $0xda8] sm:$0xff]
        %v883 = vld [vmem:[#allocation2 + $0xdb0] sm:$0xff]
        %v884 = vld [vmem:[#allocation2 + $0xdb8] sm:$0xff]
        %v885 = vld [vmem:[#allocation2 + $0xdc0] sm:$0xff]
        %v886 = vld [vmem:[#allocation2 + $0xdc8] sm:$0xff]
        %v887 = vld [vmem:[#allocation2 + $0xdd0] sm:$0xff]
        %v888 = vld [vmem:[#allocation2 + $0xdd8] sm:$0xff]
        %v889 = vld [vmem:[#allocation2 + $0xde0] sm:$0xff]
        %v890 = vld [vmem:[#allocation2 + $0xde8] sm:$0xff]
        %v891 = vld [vmem:[#allocation2 + $0xdf0] sm:$0xff]
        %v892 = vld [vmem:[#allocation2 + $0xdf8] sm:$0xff]
        %v893 = vld [vmem:[#allocation2 + $0xe00] sm:$0xff]
        %v894 = vld [vmem:[#allocation2 + $0xe08] sm:$0xff]
        %v895 = vld [vmem:[#allocation2 + $0xe10] sm:$0xff]
        %v896 = vld [vmem:[#allocation2 + $0xe18] sm:$0xff]
        %v897 = vld [vmem:[#allocation2 + $0xe20] sm:$0xff]
        %v898 = vld [vmem:[#allocation2 + $0xe28] sm:$0xff]
        %v899 = vld [vmem:[#allocation2 + $0xe30] sm:$0xff]
        %v900 = vld [vmem:[#allocation2 + $0xe38] sm:$0xff]
        %v901 = vld [vmem:[#allocation2 + $0xe40] sm:$0xff]
        %v902 = vld [vmem:[#allocation2 + $0xe48] sm:$0xff]
        %v903 = vld [vmem:[#allocation2 + $0xe50] sm:$0xff]
        %v904 = vld [vmem:[#allocation2 + $0xe58] sm:$0xff]
        %v905 = vld [vmem:[#allocation2 + $0xe60] sm:$0xff]
        %v906 = vld [vmem:[#allocation2 + $0xe68] sm:$0xff]
        %v907 = vld [vmem:[#allocation2 + $0xe70] sm:$0xff]
        %v908 = vld [vmem:[#allocation2 + $0xe78] sm:$0xff]
        %v909 = vld [vmem:[#allocation2 + $0xe80] sm:$0xff]
        %v910 = vld [vmem:[#allocation2 + $0xe88] sm:$0xff]
        %v911 = vld [vmem:[#allocation2 + $0xe90] sm:$0xff]
        %v912 = vld [vmem:[#allocation2 + $0xe98] sm:$0xff]
        %v913 = vld [vmem:[#allocation2 + $0xea0] sm:$0xff]
        %v914 = vld [vmem:[#allocation2 + $0xea8] sm:$0xff]
        %v915 = vld [vmem:[#allocation2 + $0xeb0] sm:$0xff]
        %v916 = vld [vmem:[#allocation2 + $0xeb8] sm:$0xff]
        %v917 = vld [vmem:[#allocation2 + $0xec0] sm:$0xff]
        %v918 = vld [vmem:[#allocation2 + $0xec8] sm:$0xff]
        %v919 = vld [vmem:[#allocation2 + $0xed0] sm:$0xff]
        %v920 = vld [vmem:[#allocation2 + $0xed8] sm:$0xff]
        %v921 = vld [vmem:[#allocation2 + $0xee0] sm:$0xff]
        %v922 = vld [vmem:[#allocation2 + $0xee8] sm:$0xff]
        %v923 = vld [vmem:[#allocation2 + $0xef0] sm:$0xff]
        %v924 = vld [vmem:[#allocation2 + $0xef8] sm:$0xff]
        %s925 = scalar_lea.vmem [#allocation2], 3840
        %v926 = vld [vmem:[%s925] sm:$0xff]
        %v927 = vld [vmem:[%s925 + $0x8] sm:$0xff]
        %v928 = vld [vmem:[%s925 + $0x10] sm:$0xff]
        %v929 = vld [vmem:[%s925 + $0x18] sm:$0xff]
        %v930 = vld [vmem:[%s925 + $0x20] sm:$0xff]
        %v931 = vld [vmem:[%s925 + $0x28] sm:$0xff]
        %v932 = vld [vmem:[%s925 + $0x30] sm:$0xff]
        %v933 = vld [vmem:[%s925 + $0x38] sm:$0xff]
        %v934 = vld [vmem:[%s925 + $0x40] sm:$0xff]
        %v935 = vld [vmem:[%s925 + $0x48] sm:$0xff]
        %v936 = vld [vmem:[%s925 + $0x50] sm:$0xff]
        %v937 = vld [vmem:[%s925 + $0x58] sm:$0xff]
        %v938 = vld [vmem:[%s925 + $0x60] sm:$0xff]
        %v939 = vld [vmem:[%s925 + $0x68] sm:$0xff]
        %v940 = vld [vmem:[%s925 + $0x70] sm:$0xff]
        %v941 = vld [vmem:[%s925 + $0x78] sm:$0xff]
        %v942 = vld [vmem:[%s925 + $0x80] sm:$0xff]
        %v943 = vld [vmem:[%s925 + $0x88] sm:$0xff]
        %v944 = vld [vmem:[%s925 + $0x90] sm:$0xff]
        %v945 = vld [vmem:[%s925 + $0x98] sm:$0xff]
        %v946 = vld [vmem:[%s925 + $0xa0] sm:$0xff]
        %v947 = vld [vmem:[%s925 + $0xa8] sm:$0xff]
        %v948 = vld [vmem:[%s925 + $0xb0] sm:$0xff]
        %v949 = vld [vmem:[%s925 + $0xb8] sm:$0xff]
        %v950 = vld [vmem:[%s925 + $0xc0] sm:$0xff]
        %v951 = vld [vmem:[%s925 + $0xc8] sm:$0xff]
        %v952 = vld [vmem:[%s925 + $0xd0] sm:$0xff]
        %v953 = vld [vmem:[%s925 + $0xd8] sm:$0xff]
        %v954 = vld [vmem:[%s925 + $0xe0] sm:$0xff]
        %v955 = vld [vmem:[%s925 + $0xe8] sm:$0xff]
        %v956 = vld [vmem:[%s925 + $0xf0] sm:$0xff]
        %v957 = vld [vmem:[%s925 + $0xf8] sm:$0xff]
        %v958 = vld [vmem:[%s925 + $0x100] sm:$0xff]
        %v959 = vld [vmem:[%s925 + $0x108] sm:$0xff]
        %v960 = vld [vmem:[%s925 + $0x110] sm:$0xff]
        %v961 = vld [vmem:[%s925 + $0x118] sm:$0xff]
        %v962 = vld [vmem:[%s925 + $0x120] sm:$0xff]
        %v963 = vld [vmem:[%s925 + $0x128] sm:$0xff]
        %v964 = vld [vmem:[%s925 + $0x130] sm:$0xff]
        %v965 = vld [vmem:[%s925 + $0x138] sm:$0xff]
        %v966 = vld [vmem:[%s925 + $0x140] sm:$0xff]
        %v967 = vld [vmem:[%s925 + $0x148] sm:$0xff]
        %v968 = vld [vmem:[%s925 + $0x150] sm:$0xff]
        %v969 = vld [vmem:[%s925 + $0x158] sm:$0xff]
        %v970 = vld [vmem:[%s925 + $0x160] sm:$0xff]
        %v971 = vld [vmem:[%s925 + $0x168] sm:$0xff]
        %v972 = vld [vmem:[%s925 + $0x170] sm:$0xff]
        %v973 = vld [vmem:[%s925 + $0x178] sm:$0xff]
        %v974 = vld [vmem:[%s925 + $0x180] sm:$0xff]
        %v975 = vld [vmem:[%s925 + $0x188] sm:$0xff]
        %v976 = vld [vmem:[%s925 + $0x190] sm:$0xff]
        %v977 = vld [vmem:[%s925 + $0x198] sm:$0xff]
        %v978 = vld [vmem:[%s925 + $0x1a0] sm:$0xff]
        %v979 = vld [vmem:[%s925 + $0x1a8] sm:$0xff]
        %v980 = vld [vmem:[%s925 + $0x1b0] sm:$0xff]
        %v981 = vld [vmem:[%s925 + $0x1b8] sm:$0xff]
        %v982 = vld [vmem:[%s925 + $0x1c0] sm:$0xff]
        %v983 = vld [vmem:[%s925 + $0x1c8] sm:$0xff]
        %v984 = vld [vmem:[%s925 + $0x1d0] sm:$0xff]
        %v985 = vld [vmem:[%s925 + $0x1d8] sm:$0xff]
        %v986 = vld [vmem:[%s925 + $0x1e0] sm:$0xff]
        %v987 = vld [vmem:[%s925 + $0x1e8] sm:$0xff]
        %v988 = vld [vmem:[%s925 + $0x1f0] sm:$0xff]
        %v989 = vld [vmem:[%s925 + $0x1f8] sm:$0xff]
        %v990 = vld [vmem:[%s925 + $0x200] sm:$0xff]
        %v991 = vld [vmem:[%s925 + $0x208] sm:$0xff]
        %v992 = vld [vmem:[%s925 + $0x210] sm:$0xff]
        %v993 = vld [vmem:[%s925 + $0x218] sm:$0xff]
        %v994 = vld [vmem:[%s925 + $0x220] sm:$0xff]
        %v995 = vld [vmem:[%s925 + $0x228] sm:$0xff]
        %v996 = vld [vmem:[%s925 + $0x230] sm:$0xff]
        %v997 = vld [vmem:[%s925 + $0x238] sm:$0xff]
        %v998 = vld [vmem:[%s925 + $0x240] sm:$0xff]
        %v999 = vld [vmem:[%s925 + $0x248] sm:$0xff]
        %v1000 = vld [vmem:[%s925 + $0x250] sm:$0xff]
        %v1001 = vld [vmem:[%s925 + $0x258] sm:$0xff]
        %v1002 = vld [vmem:[%s925 + $0x260] sm:$0xff]
        %v1003 = vld [vmem:[%s925 + $0x268] sm:$0xff]
        %v1004 = vld [vmem:[%s925 + $0x270] sm:$0xff]
        %v1005 = vld [vmem:[%s925 + $0x278] sm:$0xff]
        %v1006 = vld [vmem:[%s925 + $0x280] sm:$0xff]
        %v1007 = vld [vmem:[%s925 + $0x288] sm:$0xff]
        %v1008 = vld [vmem:[%s925 + $0x290] sm:$0xff]
        %v1009 = vld [vmem:[%s925 + $0x298] sm:$0xff]
        %v1010 = vld [vmem:[%s925 + $0x2a0] sm:$0xff]
        %v1011 = vld [vmem:[%s925 + $0x2a8] sm:$0xff]
        %v1012 = vld [vmem:[%s925 + $0x2b0] sm:$0xff]
        %v1013 = vld [vmem:[%s925 + $0x2b8] sm:$0xff]
        %v1014 = vld [vmem:[%s925 + $0x2c0] sm:$0xff]
        %v1015 = vld [vmem:[%s925 + $0x2c8] sm:$0xff]
        %v1016 = vld [vmem:[%s925 + $0x2d0] sm:$0xff]
        %v1017 = vld [vmem:[%s925 + $0x2d8] sm:$0xff]
        %v1018 = vld [vmem:[%s925 + $0x2e0] sm:$0xff]
        %v1019 = vld [vmem:[%s925 + $0x2e8] sm:$0xff]
        %v1020 = vld [vmem:[%s925 + $0x2f0] sm:$0xff]
        %v1021 = vld [vmem:[%s925 + $0x2f8] sm:$0xff]
        %v1022 = vld [vmem:[%s925 + $0x300] sm:$0xff]
        %v1023 = vld [vmem:[%s925 + $0x308] sm:$0xff]
        %v1024 = vld [vmem:[%s925 + $0x310] sm:$0xff]
        %v1025 = vld [vmem:[%s925 + $0x318] sm:$0xff]
        %v1026 = vld [vmem:[%s925 + $0x320] sm:$0xff]
        %v1027 = vld [vmem:[%s925 + $0x328] sm:$0xff]
        %v1028 = vld [vmem:[%s925 + $0x330] sm:$0xff]
        %v1029 = vld [vmem:[%s925 + $0x338] sm:$0xff]
        %v1030 = vld [vmem:[%s925 + $0x340] sm:$0xff]
        %v1031 = vld [vmem:[%s925 + $0x348] sm:$0xff]
        %v1032 = vld [vmem:[%s925 + $0x350] sm:$0xff]
        %v1033 = vld [vmem:[%s925 + $0x358] sm:$0xff]
        %v1034 = vld [vmem:[%s925 + $0x360] sm:$0xff]
        %v1035 = vld [vmem:[%s925 + $0x368] sm:$0xff]
        %v1036 = vld [vmem:[%s925 + $0x370] sm:$0xff]
        %v1037 = vld [vmem:[%s925 + $0x378] sm:$0xff]
        %v1038 = vld [vmem:[%s925 + $0x380] sm:$0xff]
        %v1039 = vld [vmem:[%s925 + $0x388] sm:$0xff]
        %v1040 = vld [vmem:[%s925 + $0x390] sm:$0xff]
        %v1041 = vld [vmem:[%s925 + $0x398] sm:$0xff]
        %v1042 = vld [vmem:[%s925 + $0x3a0] sm:$0xff]
        %v1043 = vld [vmem:[%s925 + $0x3a8] sm:$0xff]
        %v1044 = vld [vmem:[%s925 + $0x3b0] sm:$0xff]
        %v1045 = vld [vmem:[%s925 + $0x3b8] sm:$0xff]
        %v1046 = vld [vmem:[%s925 + $0x3c0] sm:$0xff]
        %v1047 = vld [vmem:[%s925 + $0x3c8] sm:$0xff]
        %v1048 = vld [vmem:[%s925 + $0x3d0] sm:$0xff]
        %v1049 = vld [vmem:[%s925 + $0x3d8] sm:$0xff]
        %v1050 = vld [vmem:[%s925 + $0x3e0] sm:$0xff]
        %v1051 = vld [vmem:[%s925 + $0x3e8] sm:$0xff]
        %v1052 = vld [vmem:[%s925 + $0x3f0] sm:$0xff]
        %v1053 = vld [vmem:[%s925 + $0x3f8] sm:$0xff]
        %v1054 = vld [vmem:[%s925 + $0x400] sm:$0xff]
        %v1055 = vld [vmem:[%s925 + $0x408] sm:$0xff]
        %v1056 = vld [vmem:[%s925 + $0x410] sm:$0xff]
        %v1057 = vld [vmem:[%s925 + $0x418] sm:$0xff]
        %v1058 = vld [vmem:[%s925 + $0x420] sm:$0xff]
        %v1059 = vld [vmem:[%s925 + $0x428] sm:$0xff]
        %v1060 = vld [vmem:[%s925 + $0x430] sm:$0xff]
        %v1061 = vld [vmem:[%s925 + $0x438] sm:$0xff]
        %v1062 = vld [vmem:[%s925 + $0x440] sm:$0xff]
        %v1063 = vld [vmem:[%s925 + $0x448] sm:$0xff]
        %v1064 = vld [vmem:[%s925 + $0x450] sm:$0xff]
        %v1065 = vld [vmem:[%s925 + $0x458] sm:$0xff]
        %v1066 = vld [vmem:[%s925 + $0x460] sm:$0xff]
        %v1067 = vld [vmem:[%s925 + $0x468] sm:$0xff]
        %v1068 = vld [vmem:[%s925 + $0x470] sm:$0xff]
        %v1069 = vld [vmem:[%s925 + $0x478] sm:$0xff]
        %v1070 = vld [vmem:[%s925 + $0x480] sm:$0xff]
        %v1071 = vld [vmem:[%s925 + $0x488] sm:$0xff]
        %v1072 = vld [vmem:[%s925 + $0x490] sm:$0xff]
        %v1073 = vld [vmem:[%s925 + $0x498] sm:$0xff]
        %v1074 = vld [vmem:[%s925 + $0x4a0] sm:$0xff]
        %v1075 = vld [vmem:[%s925 + $0x4a8] sm:$0xff]
        %v1076 = vld [vmem:[%s925 + $0x4b0] sm:$0xff]
        %v1077 = vld [vmem:[%s925 + $0x4b8] sm:$0xff]
        %v1078 = vld [vmem:[%s925 + $0x4c0] sm:$0xff]
        %v1079 = vld [vmem:[%s925 + $0x4c8] sm:$0xff]
        %v1080 = vld [vmem:[%s925 + $0x4d0] sm:$0xff]
        %v1081 = vld [vmem:[%s925 + $0x4d8] sm:$0xff]
        %v1082 = vld [vmem:[%s925 + $0x4e0] sm:$0xff]
        %v1083 = vld [vmem:[%s925 + $0x4e8] sm:$0xff]
        %v1084 = vld [vmem:[%s925 + $0x4f0] sm:$0xff]
        %v1085 = vld [vmem:[%s925 + $0x4f8] sm:$0xff]
        %v1086 = vld [vmem:[%s925 + $0x500] sm:$0xff]
        %v1087 = vld [vmem:[%s925 + $0x508] sm:$0xff]
        %v1088 = vld [vmem:[%s925 + $0x510] sm:$0xff]
        %v1089 = vld [vmem:[%s925 + $0x518] sm:$0xff]
        %v1090 = vld [vmem:[%s925 + $0x520] sm:$0xff]
        %v1091 = vld [vmem:[%s925 + $0x528] sm:$0xff]
        %v1092 = vld [vmem:[%s925 + $0x530] sm:$0xff]
        %v1093 = vld [vmem:[%s925 + $0x538] sm:$0xff]
        %v1094 = vld [vmem:[%s925 + $0x540] sm:$0xff]
        %v1095 = vld [vmem:[%s925 + $0x548] sm:$0xff]
        %v1096 = vld [vmem:[%s925 + $0x550] sm:$0xff]
        %v1097 = vld [vmem:[%s925 + $0x558] sm:$0xff]
        %v1098 = vld [vmem:[%s925 + $0x560] sm:$0xff]
        %v1099 = vld [vmem:[%s925 + $0x568] sm:$0xff]
        %v1100 = vld [vmem:[%s925 + $0x570] sm:$0xff]
        %v1101 = vld [vmem:[%s925 + $0x578] sm:$0xff]
        %v1102 = vld [vmem:[%s925 + $0x580] sm:$0xff]
        %v1103 = vld [vmem:[%s925 + $0x588] sm:$0xff]
        %v1104 = vld [vmem:[%s925 + $0x590] sm:$0xff]
        %v1105 = vld [vmem:[%s925 + $0x598] sm:$0xff]
        %v1106 = vld [vmem:[%s925 + $0x5a0] sm:$0xff]
        %v1107 = vld [vmem:[%s925 + $0x5a8] sm:$0xff]
        %v1108 = vld [vmem:[%s925 + $0x5b0] sm:$0xff]
        %v1109 = vld [vmem:[%s925 + $0x5b8] sm:$0xff]
        %v1110 = vld [vmem:[%s925 + $0x5c0] sm:$0xff]
        %v1111 = vld [vmem:[%s925 + $0x5c8] sm:$0xff]
        %v1112 = vld [vmem:[%s925 + $0x5d0] sm:$0xff]
        %v1113 = vld [vmem:[%s925 + $0x5d8] sm:$0xff]
        %v1114 = vld [vmem:[%s925 + $0x5e0] sm:$0xff]
        %v1115 = vld [vmem:[%s925 + $0x5e8] sm:$0xff]
        %v1116 = vld [vmem:[%s925 + $0x5f0] sm:$0xff]
        %v1117 = vld [vmem:[%s925 + $0x5f8] sm:$0xff]
        %v1118 = vld [vmem:[%s925 + $0x600] sm:$0xff]
        %v1119 = vld [vmem:[%s925 + $0x608] sm:$0xff]
        %v1120 = vld [vmem:[%s925 + $0x610] sm:$0xff]
        %v1121 = vld [vmem:[%s925 + $0x618] sm:$0xff]
        %v1122 = vld [vmem:[%s925 + $0x620] sm:$0xff]
        %v1123 = vld [vmem:[%s925 + $0x628] sm:$0xff]
        %v1124 = vld [vmem:[%s925 + $0x630] sm:$0xff]
        %v1125 = vld [vmem:[%s925 + $0x638] sm:$0xff]
        %v1126 = vld [vmem:[%s925 + $0x640] sm:$0xff]
        %v1127 = vld [vmem:[%s925 + $0x648] sm:$0xff]
        %v1128 = vld [vmem:[%s925 + $0x650] sm:$0xff]
        %v1129 = vld [vmem:[%s925 + $0x658] sm:$0xff]
        %v1130 = vld [vmem:[%s925 + $0x660] sm:$0xff]
        %v1131 = vld [vmem:[%s925 + $0x668] sm:$0xff]
        %v1132 = vld [vmem:[%s925 + $0x670] sm:$0xff]
        %v1133 = vld [vmem:[%s925 + $0x678] sm:$0xff]
        %v1134 = vld [vmem:[%s925 + $0x680] sm:$0xff]
        %v1135 = vld [vmem:[%s925 + $0x688] sm:$0xff]
        %v1136 = vld [vmem:[%s925 + $0x690] sm:$0xff]
        %v1137 = vld [vmem:[%s925 + $0x698] sm:$0xff]
        %v1138 = vld [vmem:[%s925 + $0x6a0] sm:$0xff]
        %v1139 = vld [vmem:[%s925 + $0x6a8] sm:$0xff]
        %v1140 = vld [vmem:[%s925 + $0x6b0] sm:$0xff]
        %v1141 = vld [vmem:[%s925 + $0x6b8] sm:$0xff]
        %v1142 = vld [vmem:[%s925 + $0x6c0] sm:$0xff]
        %v1143 = vld [vmem:[%s925 + $0x6c8] sm:$0xff]
        %v1144 = vld [vmem:[%s925 + $0x6d0] sm:$0xff]
        %v1145 = vld [vmem:[%s925 + $0x6d8] sm:$0xff]
        %v1146 = vld [vmem:[%s925 + $0x6e0] sm:$0xff]
        %v1147 = vld [vmem:[%s925 + $0x6e8] sm:$0xff]
        %v1148 = vld [vmem:[%s925 + $0x6f0] sm:$0xff]
        %v1149 = vld [vmem:[%s925 + $0x6f8] sm:$0xff]
        %v1150 = vld [vmem:[%s925 + $0x700] sm:$0xff]
        %v1151 = vld [vmem:[%s925 + $0x708] sm:$0xff]
        %v1152 = vld [vmem:[%s925 + $0x710] sm:$0xff]
        %v1153 = vld [vmem:[%s925 + $0x718] sm:$0xff]
        %v1154 = vld [vmem:[%s925 + $0x720] sm:$0xff]
        %v1155 = vld [vmem:[%s925 + $0x728] sm:$0xff]
        %v1156 = vld [vmem:[%s925 + $0x730] sm:$0xff]
        %v1157 = vld [vmem:[%s925 + $0x738] sm:$0xff]
        %v1158 = vld [vmem:[%s925 + $0x740] sm:$0xff]
        %v1159 = vld [vmem:[%s925 + $0x748] sm:$0xff]
        %v1160 = vld [vmem:[%s925 + $0x750] sm:$0xff]
        %v1161 = vld [vmem:[%s925 + $0x758] sm:$0xff]
        %v1162 = vld [vmem:[%s925 + $0x760] sm:$0xff]
        %v1163 = vld [vmem:[%s925 + $0x768] sm:$0xff]
        %v1164 = vld [vmem:[%s925 + $0x770] sm:$0xff]
        %v1165 = vld [vmem:[%s925 + $0x778] sm:$0xff]
        %v1166 = vld [vmem:[%s925 + $0x780] sm:$0xff]
        %v1167 = vld [vmem:[%s925 + $0x788] sm:$0xff]
        %v1168 = vld [vmem:[%s925 + $0x790] sm:$0xff]
        %v1169 = vld [vmem:[%s925 + $0x798] sm:$0xff]
        %v1170 = vld [vmem:[%s925 + $0x7a0] sm:$0xff]
        %v1171 = vld [vmem:[%s925 + $0x7a8] sm:$0xff]
        %v1172 = vld [vmem:[%s925 + $0x7b0] sm:$0xff]
        %v1173 = vld [vmem:[%s925 + $0x7b8] sm:$0xff]
        %v1174 = vld [vmem:[%s925 + $0x7c0] sm:$0xff]
        %v1175 = vld [vmem:[%s925 + $0x7c8] sm:$0xff]
        %v1176 = vld [vmem:[%s925 + $0x7d0] sm:$0xff]
        %v1177 = vld [vmem:[%s925 + $0x7d8] sm:$0xff]
        %v1178 = vld [vmem:[%s925 + $0x7e0] sm:$0xff]
        %v1179 = vld [vmem:[%s925 + $0x7e8] sm:$0xff]
        %v1180 = vld [vmem:[%s925 + $0x7f0] sm:$0xff]
        %v1181 = vld [vmem:[%s925 + $0x7f8] sm:$0xff]
        %v1182 = vld [vmem:[%s925 + $0x800] sm:$0xff]
        %v1183 = vld [vmem:[%s925 + $0x808] sm:$0xff]
        %v1184 = vld [vmem:[%s925 + $0x810] sm:$0xff]
        %v1185 = vld [vmem:[%s925 + $0x818] sm:$0xff]
        %v1186 = vld [vmem:[%s925 + $0x820] sm:$0xff]
        %v1187 = vld [vmem:[%s925 + $0x828] sm:$0xff]
        %v1188 = vld [vmem:[%s925 + $0x830] sm:$0xff]
        %v1189 = vld [vmem:[%s925 + $0x838] sm:$0xff]
        %v1190 = vld [vmem:[%s925 + $0x840] sm:$0xff]
        %v1191 = vld [vmem:[%s925 + $0x848] sm:$0xff]
        %v1192 = vld [vmem:[%s925 + $0x850] sm:$0xff]
        %v1193 = vld [vmem:[%s925 + $0x858] sm:$0xff]
        %v1194 = vld [vmem:[%s925 + $0x860] sm:$0xff]
        %v1195 = vld [vmem:[%s925 + $0x868] sm:$0xff]
        %v1196 = vld [vmem:[%s925 + $0x870] sm:$0xff]
        %v1197 = vld [vmem:[%s925 + $0x878] sm:$0xff]
        %v1198 = vld [vmem:[%s925 + $0x880] sm:$0xff]
        %v1199 = vld [vmem:[%s925 + $0x888] sm:$0xff]
        %v1200 = vld [vmem:[%s925 + $0x890] sm:$0xff]
        %v1201 = vld [vmem:[%s925 + $0x898] sm:$0xff]
        %v1202 = vld [vmem:[%s925 + $0x8a0] sm:$0xff]
        %v1203 = vld [vmem:[%s925 + $0x8a8] sm:$0xff]
        %v1204 = vld [vmem:[%s925 + $0x8b0] sm:$0xff]
        %v1205 = vld [vmem:[%s925 + $0x8b8] sm:$0xff]
        %v1206 = vld [vmem:[%s925 + $0x8c0] sm:$0xff]
        %v1207 = vld [vmem:[%s925 + $0x8c8] sm:$0xff]
        %v1208 = vld [vmem:[%s925 + $0x8d0] sm:$0xff]
        %v1209 = vld [vmem:[%s925 + $0x8d8] sm:$0xff]
        %v1210 = vld [vmem:[%s925 + $0x8e0] sm:$0xff]
        %v1211 = vld [vmem:[%s925 + $0x8e8] sm:$0xff]
        %v1212 = vld [vmem:[%s925 + $0x8f0] sm:$0xff]
        %v1213 = vld [vmem:[%s925 + $0x8f8] sm:$0xff]
        %v1214 = vld [vmem:[%s925 + $0x900] sm:$0xff]
        %v1215 = vld [vmem:[%s925 + $0x908] sm:$0xff]
        %v1216 = vld [vmem:[%s925 + $0x910] sm:$0xff]
        %v1217 = vld [vmem:[%s925 + $0x918] sm:$0xff]
        %v1218 = vld [vmem:[%s925 + $0x920] sm:$0xff]
        %v1219 = vld [vmem:[%s925 + $0x928] sm:$0xff]
        %v1220 = vld [vmem:[%s925 + $0x930] sm:$0xff]
        %v1221 = vld [vmem:[%s925 + $0x938] sm:$0xff]
        %v1222 = vld [vmem:[%s925 + $0x940] sm:$0xff]
        %v1223 = vld [vmem:[%s925 + $0x948] sm:$0xff]
        %v1224 = vld [vmem:[%s925 + $0x950] sm:$0xff]
        %v1225 = vld [vmem:[%s925 + $0x958] sm:$0xff]
        %v1226 = vld [vmem:[%s925 + $0x960] sm:$0xff]
        %v1227 = vld [vmem:[%s925 + $0x968] sm:$0xff]
        %v1228 = vld [vmem:[%s925 + $0x970] sm:$0xff]
        %v1229 = vld [vmem:[%s925 + $0x978] sm:$0xff]
        %v1230 = vld [vmem:[%s925 + $0x980] sm:$0xff]
        %v1231 = vld [vmem:[%s925 + $0x988] sm:$0xff]
        %v1232 = vld [vmem:[%s925 + $0x990] sm:$0xff]
        %v1233 = vld [vmem:[%s925 + $0x998] sm:$0xff]
        %v1234 = vld [vmem:[%s925 + $0x9a0] sm:$0xff]
        %v1235 = vld [vmem:[%s925 + $0x9a8] sm:$0xff]
        %v1236 = vld [vmem:[%s925 + $0x9b0] sm:$0xff]
        %v1237 = vld [vmem:[%s925 + $0x9b8] sm:$0xff]
        %v1238 = vld [vmem:[%s925 + $0x9c0] sm:$0xff]
        %v1239 = vld [vmem:[%s925 + $0x9c8] sm:$0xff]
        %v1240 = vld [vmem:[%s925 + $0x9d0] sm:$0xff]
        %v1241 = vld [vmem:[%s925 + $0x9d8] sm:$0xff]
        %v1242 = vld [vmem:[%s925 + $0x9e0] sm:$0xff]
        %v1243 = vld [vmem:[%s925 + $0x9e8] sm:$0xff]
        %v1244 = vld [vmem:[%s925 + $0x9f0] sm:$0xff]
        %v1245 = vld [vmem:[%s925 + $0x9f8] sm:$0xff]
        %v1246 = vld [vmem:[%s925 + $0xa00] sm:$0xff]
        %v1247 = vld [vmem:[%s925 + $0xa08] sm:$0xff]
        %v1248 = vld [vmem:[%s925 + $0xa10] sm:$0xff]
        %v1249 = vld [vmem:[%s925 + $0xa18] sm:$0xff]
        %v1250 = vld [vmem:[%s925 + $0xa20] sm:$0xff]
        %v1251 = vld [vmem:[%s925 + $0xa28] sm:$0xff]
        %v1252 = vld [vmem:[%s925 + $0xa30] sm:$0xff]
        %v1253 = vld [vmem:[%s925 + $0xa38] sm:$0xff]
        %v1254 = vld [vmem:[%s925 + $0xa40] sm:$0xff]
        %v1255 = vld [vmem:[%s925 + $0xa48] sm:$0xff]
        %v1256 = vld [vmem:[%s925 + $0xa50] sm:$0xff]
        %v1257 = vld [vmem:[%s925 + $0xa58] sm:$0xff]
        %v1258 = vld [vmem:[%s925 + $0xa60] sm:$0xff]
        %v1259 = vld [vmem:[%s925 + $0xa68] sm:$0xff]
        %v1260 = vld [vmem:[%s925 + $0xa70] sm:$0xff]
        %v1261 = vld [vmem:[%s925 + $0xa78] sm:$0xff]
        %v1262 = vld [vmem:[%s925 + $0xa80] sm:$0xff]
        %v1263 = vld [vmem:[%s925 + $0xa88] sm:$0xff]
        %v1264 = vld [vmem:[%s925 + $0xa90] sm:$0xff]
        %v1265 = vld [vmem:[%s925 + $0xa98] sm:$0xff]
        %v1266 = vld [vmem:[%s925 + $0xaa0] sm:$0xff]
        %v1267 = vld [vmem:[%s925 + $0xaa8] sm:$0xff]
        %v1268 = vld [vmem:[%s925 + $0xab0] sm:$0xff]
        %v1269 = vld [vmem:[%s925 + $0xab8] sm:$0xff]
        %v1270 = vld [vmem:[%s925 + $0xac0] sm:$0xff]
        %v1271 = vld [vmem:[%s925 + $0xac8] sm:$0xff]
        %v1272 = vld [vmem:[%s925 + $0xad0] sm:$0xff]
        %v1273 = vld [vmem:[%s925 + $0xad8] sm:$0xff]
        %v1274 = vld [vmem:[%s925 + $0xae0] sm:$0xff]
        %v1275 = vld [vmem:[%s925 + $0xae8] sm:$0xff]
        %v1276 = vld [vmem:[%s925 + $0xaf0] sm:$0xff]
        %v1277 = vld [vmem:[%s925 + $0xaf8] sm:$0xff]
        %v1278 = vld [vmem:[%s925 + $0xb00] sm:$0xff]
        %v1279 = vld [vmem:[%s925 + $0xb08] sm:$0xff]
        %v1280 = vld [vmem:[%s925 + $0xb10] sm:$0xff]
        %v1281 = vld [vmem:[%s925 + $0xb18] sm:$0xff]
        %v1282 = vld [vmem:[%s925 + $0xb20] sm:$0xff]
        %v1283 = vld [vmem:[%s925 + $0xb28] sm:$0xff]
        %v1284 = vld [vmem:[%s925 + $0xb30] sm:$0xff]
        %v1285 = vld [vmem:[%s925 + $0xb38] sm:$0xff]
        %v1286 = vld [vmem:[%s925 + $0xb40] sm:$0xff]
        %v1287 = vld [vmem:[%s925 + $0xb48] sm:$0xff]
        %v1288 = vld [vmem:[%s925 + $0xb50] sm:$0xff]
        %v1289 = vld [vmem:[%s925 + $0xb58] sm:$0xff]
        %v1290 = vld [vmem:[%s925 + $0xb60] sm:$0xff]
        %v1291 = vld [vmem:[%s925 + $0xb68] sm:$0xff]
        %v1292 = vld [vmem:[%s925 + $0xb70] sm:$0xff]
        %v1293 = vld [vmem:[%s925 + $0xb78] sm:$0xff]
        %v1294 = vld [vmem:[%s925 + $0xb80] sm:$0xff]
        %v1295 = vld [vmem:[%s925 + $0xb88] sm:$0xff]
        %v1296 = vld [vmem:[%s925 + $0xb90] sm:$0xff]
        %v1297 = vld [vmem:[%s925 + $0xb98] sm:$0xff]
        %v1298 = vld [vmem:[%s925 + $0xba0] sm:$0xff]
        %v1299 = vld [vmem:[%s925 + $0xba8] sm:$0xff]
        %v1300 = vld [vmem:[%s925 + $0xbb0] sm:$0xff]
        %v1301 = vld [vmem:[%s925 + $0xbb8] sm:$0xff]
        %v1302 = vld [vmem:[%s925 + $0xbc0] sm:$0xff]
        %v1303 = vld [vmem:[%s925 + $0xbc8] sm:$0xff]
        %v1304 = vld [vmem:[%s925 + $0xbd0] sm:$0xff]
        %v1305 = vld [vmem:[%s925 + $0xbd8] sm:$0xff]
        %v1306 = vld [vmem:[%s925 + $0xbe0] sm:$0xff]
        %v1307 = vld [vmem:[%s925 + $0xbe8] sm:$0xff]
        %v1308 = vld [vmem:[%s925 + $0xbf0] sm:$0xff]
        %v1309 = vld [vmem:[%s925 + $0xbf8] sm:$0xff]
        %v1310 = vld [vmem:[%s925 + $0xc00] sm:$0xff]
        %v1311 = vld [vmem:[%s925 + $0xc08] sm:$0xff]
        %v1312 = vld [vmem:[%s925 + $0xc10] sm:$0xff]
        %v1313 = vld [vmem:[%s925 + $0xc18] sm:$0xff]
        %v1314 = vld [vmem:[%s925 + $0xc20] sm:$0xff]
        %v1315 = vld [vmem:[%s925 + $0xc28] sm:$0xff]
        %v1316 = vld [vmem:[%s925 + $0xc30] sm:$0xff]
        %v1317 = vld [vmem:[%s925 + $0xc38] sm:$0xff]
        %v1318 = vld [vmem:[%s925 + $0xc40] sm:$0xff]
        %v1319 = vld [vmem:[%s925 + $0xc48] sm:$0xff]
        %v1320 = vld [vmem:[%s925 + $0xc50] sm:$0xff]
        %v1321 = vld [vmem:[%s925 + $0xc58] sm:$0xff]
        %v1322 = vld [vmem:[%s925 + $0xc60] sm:$0xff]
        %v1323 = vld [vmem:[%s925 + $0xc68] sm:$0xff]
        %v1324 = vld [vmem:[%s925 + $0xc70] sm:$0xff]
        %v1325 = vld [vmem:[%s925 + $0xc78] sm:$0xff]
        %v1326 = vld [vmem:[%s925 + $0xc80] sm:$0xff]
        %v1327 = vld [vmem:[%s925 + $0xc88] sm:$0xff]
        %v1328 = vld [vmem:[%s925 + $0xc90] sm:$0xff]
        %v1329 = vld [vmem:[%s925 + $0xc98] sm:$0xff]
        %v1330 = vld [vmem:[%s925 + $0xca0] sm:$0xff]
        %v1331 = vld [vmem:[%s925 + $0xca8] sm:$0xff]
        %v1332 = vld [vmem:[%s925 + $0xcb0] sm:$0xff]
        %v1333 = vld [vmem:[%s925 + $0xcb8] sm:$0xff]
        %v1334 = vld [vmem:[%s925 + $0xcc0] sm:$0xff]
        %v1335 = vld [vmem:[%s925 + $0xcc8] sm:$0xff]
        %v1336 = vld [vmem:[%s925 + $0xcd0] sm:$0xff]
        %v1337 = vld [vmem:[%s925 + $0xcd8] sm:$0xff]
        %v1338 = vld [vmem:[%s925 + $0xce0] sm:$0xff]
        %v1339 = vld [vmem:[%s925 + $0xce8] sm:$0xff]
        %v1340 = vld [vmem:[%s925 + $0xcf0] sm:$0xff]
        %v1341 = vld [vmem:[%s925 + $0xcf8] sm:$0xff]
        %v1342 = vld [vmem:[%s925 + $0xd00] sm:$0xff]
        %v1343 = vld [vmem:[%s925 + $0xd08] sm:$0xff]
        %v1344 = vld [vmem:[%s925 + $0xd10] sm:$0xff]
        %v1345 = vld [vmem:[%s925 + $0xd18] sm:$0xff]
        %v1346 = vld [vmem:[%s925 + $0xd20] sm:$0xff]
        %v1347 = vld [vmem:[%s925 + $0xd28] sm:$0xff]
        %v1348 = vld [vmem:[%s925 + $0xd30] sm:$0xff]
        %v1349 = vld [vmem:[%s925 + $0xd38] sm:$0xff]
        %v1350 = vld [vmem:[%s925 + $0xd40] sm:$0xff]
        %v1351 = vld [vmem:[%s925 + $0xd48] sm:$0xff]
        %v1352 = vld [vmem:[%s925 + $0xd50] sm:$0xff]
        %v1353 = vld [vmem:[%s925 + $0xd58] sm:$0xff]
        %v1354 = vld [vmem:[%s925 + $0xd60] sm:$0xff]
        %v1355 = vld [vmem:[%s925 + $0xd68] sm:$0xff]
        %v1356 = vld [vmem:[%s925 + $0xd70] sm:$0xff]
        %v1357 = vld [vmem:[%s925 + $0xd78] sm:$0xff]
        %v1358 = vld [vmem:[%s925 + $0xd80] sm:$0xff]
        %v1359 = vld [vmem:[%s925 + $0xd88] sm:$0xff]
        %v1360 = vld [vmem:[%s925 + $0xd90] sm:$0xff]
        %v1361 = vld [vmem:[%s925 + $0xd98] sm:$0xff]
        %v1362 = vld [vmem:[%s925 + $0xda0] sm:$0xff]
        %v1363 = vld [vmem:[%s925 + $0xda8] sm:$0xff]
        %v1364 = vld [vmem:[%s925 + $0xdb0] sm:$0xff]
        %v1365 = vld [vmem:[%s925 + $0xdb8] sm:$0xff]
        %v1366 = vld [vmem:[%s925 + $0xdc0] sm:$0xff]
        %v1367 = vld [vmem:[%s925 + $0xdc8] sm:$0xff]
        %v1368 = vld [vmem:[%s925 + $0xdd0] sm:$0xff]
        %v1369 = vld [vmem:[%s925 + $0xdd8] sm:$0xff]
        %v1370 = vld [vmem:[%s925 + $0xde0] sm:$0xff]
        %v1371 = vld [vmem:[%s925 + $0xde8] sm:$0xff]
        %v1372 = vld [vmem:[%s925 + $0xdf0] sm:$0xff]
        %v1373 = vld [vmem:[%s925 + $0xdf8] sm:$0xff]
        %v1374 = vld [vmem:[%s925 + $0xe00] sm:$0xff]
        %v1375 = vld [vmem:[%s925 + $0xe08] sm:$0xff]
        %v1376 = vld [vmem:[%s925 + $0xe10] sm:$0xff]
        %v1377 = vld [vmem:[%s925 + $0xe18] sm:$0xff]
        %v1378 = vld [vmem:[%s925 + $0xe20] sm:$0xff]
        %v1379 = vld [vmem:[%s925 + $0xe28] sm:$0xff]
        %v1380 = vld [vmem:[%s925 + $0xe30] sm:$0xff]
        %v1381 = vld [vmem:[%s925 + $0xe38] sm:$0xff]
        %v1382 = vld [vmem:[%s925 + $0xe40] sm:$0xff]
        %v1383 = vld [vmem:[%s925 + $0xe48] sm:$0xff]
        %v1384 = vld [vmem:[%s925 + $0xe50] sm:$0xff]
        %v1385 = vld [vmem:[%s925 + $0xe58] sm:$0xff]
        %v1386 = vld [vmem:[%s925 + $0xe60] sm:$0xff]
        %v1387 = vld [vmem:[%s925 + $0xe68] sm:$0xff]
        %v1388 = vld [vmem:[%s925 + $0xe70] sm:$0xff]
        %v1389 = vld [vmem:[%s925 + $0xe78] sm:$0xff]
        %v1390 = vld [vmem:[%s925 + $0xe80] sm:$0xff]
        %v1391 = vld [vmem:[%s925 + $0xe88] sm:$0xff]
        %v1392 = vld [vmem:[%s925 + $0xe90] sm:$0xff]
        %v1393 = vld [vmem:[%s925 + $0xe98] sm:$0xff]
        %v1394 = vld [vmem:[%s925 + $0xea0] sm:$0xff]
        %v1395 = vld [vmem:[%s925 + $0xea8] sm:$0xff]
        %v1396 = vld [vmem:[%s925 + $0xeb0] sm:$0xff]
        %v1397 = vld [vmem:[%s925 + $0xeb8] sm:$0xff]
        %v1398 = vld [vmem:[%s925 + $0xec0] sm:$0xff]
        %v1399 = vld [vmem:[%s925 + $0xec8] sm:$0xff]
        %v1400 = vld [vmem:[%s925 + $0xed0] sm:$0xff]
        %v1401 = vld [vmem:[%s925 + $0xed8] sm:$0xff]
        %v1402 = vld [vmem:[%s925 + $0xee0] sm:$0xff]
        %v1403 = vld [vmem:[%s925 + $0xee8] sm:$0xff]
        %v1404 = vld [vmem:[%s925 + $0xef0] sm:$0xff]
        %v1405 = vld [vmem:[%s925 + $0xef8] sm:$0xff]
        %v1409 = vunpack.c.l.b16 %v442
        %v1410 = vunpack.c.h.b16 %v442
        %v1411 = vunpack.c.l.b16 %v443
        %v1412 = vunpack.c.h.b16 %v443
        %v1413 = vunpack.c.l.b16 %v444
        %v1414 = vunpack.c.h.b16 %v444
        %v1415 = vpack.c.b16 %v1409, %v1409
        %v1416 = vpack.c.b16 %v1410, %v1410
        %v1417 = vpack.c.b16 %v1411, %v1411
        %v1418 = vpack.c.b16 %v1412, %v1412
        %v1419 = vpack.c.b16 %v1413, %v1413
        %v1420 = vpack.c.b16 %v1414, %v1414
        %v1422 = vshrl.u32 %v1415, 16
        %v1424 = vshll.u32 %v1415, 16
        %v1426 = vrot.slane %v1424, 1
        %v1427 = vor.u32 %v1422, %v1426
        %v1429 = vshrl.u32 %v1416, 16
        %v1431 = vshll.u32 %v1416, 16
        %v1433 = vrot.slane %v1431, 1
        %v1434 = vor.u32 %v1429, %v1433
        %v1436 = vshrl.u32 %v1417, 16
        %v1438 = vshll.u32 %v1417, 16
        %v1440 = vrot.slane %v1438, 1
        %v1441 = vor.u32 %v1436, %v1440
        %v1443 = vshrl.u32 %v1418, 16
        %v1445 = vshll.u32 %v1418, 16
        %v1447 = vrot.slane %v1445, 1
        %v1448 = vor.u32 %v1443, %v1447
        %v1450 = vshrl.u32 %v1419, 16
        %v1452 = vshll.u32 %v1419, 16
        %v1454 = vrot.slane %v1452, 1
        %v1455 = vor.u32 %v1450, %v1454
        %v1457 = vshrl.u32 %v1420, 16
        %v1459 = vshll.u32 %v1420, 16
        %v1461 = vrot.slane %v1459, 1
        %v1462 = vor.u32 %v1457, %v1461
        %v1949 = vunpack.c.l.b16 %v926
        %v1950 = vunpack.c.h.b16 %v926
        %v1951 = vunpack.c.l.b16 %v927
        %v1952 = vunpack.c.h.b16 %v927
        %v1953 = vunpack.c.l.b16 %v928
        %v1954 = vunpack.c.h.b16 %v928
        %v1955 = vunpack.c.l.b16 %v929
        %v1956 = vunpack.c.h.b16 %v929
        %v1957 = vunpack.c.l.b16 %v930
        %v1958 = vunpack.c.h.b16 %v930
        %v1959 = vunpack.c.l.b16 %v931
        %v1960 = vunpack.c.h.b16 %v931
        %v1961 = vunpack.c.l.b16 %v932
        %v1962 = vunpack.c.h.b16 %v932
        %v1963 = vunpack.c.l.b16 %v933
        %v1964 = vunpack.c.h.b16 %v933
        %v1965 = vunpack.c.l.b16 %v934
        %v1966 = vunpack.c.h.b16 %v934
        %v1967 = vunpack.c.l.b16 %v935
        %v1968 = vunpack.c.h.b16 %v935
        %v1969 = vunpack.c.l.b16 %v936
        %v1970 = vunpack.c.h.b16 %v936
        %v1971 = vunpack.c.l.b16 %v937
        %v1972 = vunpack.c.h.b16 %v937
        %v1973 = vunpack.c.l.b16 %v938
        %v1974 = vunpack.c.h.b16 %v938
        %v1975 = vunpack.c.l.b16 %v939
        %v1976 = vunpack.c.h.b16 %v939
        %v1977 = vunpack.c.l.b16 %v940
        %v1978 = vunpack.c.h.b16 %v940
        %v1979 = vunpack.c.l.b16 %v941
        %v1980 = vunpack.c.h.b16 %v941
        %v1981 = vunpack.c.l.b16 %v942
        %v1982 = vunpack.c.h.b16 %v942
        %v1983 = vunpack.c.l.b16 %v943
        %v1984 = vunpack.c.h.b16 %v943
        %v1985 = vunpack.c.l.b16 %v944
        %v1986 = vunpack.c.h.b16 %v944
        %v1987 = vunpack.c.l.b16 %v945
        %v1988 = vunpack.c.h.b16 %v945
        %v1989 = vunpack.c.l.b16 %v946
        %v1990 = vunpack.c.h.b16 %v946
        %v1991 = vunpack.c.l.b16 %v947
        %v1992 = vunpack.c.h.b16 %v947
        %v1993 = vunpack.c.l.b16 %v948
        %v1994 = vunpack.c.h.b16 %v948
        %v1995 = vunpack.c.l.b16 %v949
        %v1996 = vunpack.c.h.b16 %v949
        %v1997 = vunpack.c.l.b16 %v950
        %v1998 = vunpack.c.h.b16 %v950
        %v1999 = vunpack.c.l.b16 %v951
        %v2000 = vunpack.c.h.b16 %v951
        %v2001 = vunpack.c.l.b16 %v952
        %v2002 = vunpack.c.h.b16 %v952
        %v2003 = vunpack.c.l.b16 %v953
        %v2004 = vunpack.c.h.b16 %v953
        %v2005 = vunpack.c.l.b16 %v954
        %v2006 = vunpack.c.h.b16 %v954
        %v2007 = vunpack.c.l.b16 %v955
        %v2008 = vunpack.c.h.b16 %v955
        %v2009 = vunpack.c.l.b16 %v956
        %v2010 = vunpack.c.h.b16 %v956
        %v2011 = vunpack.c.l.b16 %v957
        %v2012 = vunpack.c.h.b16 %v957
        %v2013 = vunpack.c.l.b16 %v958
        %v2014 = vunpack.c.h.b16 %v958
        %v2015 = vunpack.c.l.b16 %v959
        %v2016 = vunpack.c.h.b16 %v959
        %v2017 = vunpack.c.l.b16 %v960
        %v2018 = vunpack.c.h.b16 %v960
        %v2019 = vunpack.c.l.b16 %v961
        %v2020 = vunpack.c.h.b16 %v961
        %v2021 = vunpack.c.l.b16 %v962
        %v2022 = vunpack.c.h.b16 %v962
        %v2023 = vunpack.c.l.b16 %v963
        %v2024 = vunpack.c.h.b16 %v963
        %v2025 = vunpack.c.l.b16 %v964
        %v2026 = vunpack.c.h.b16 %v964
        %v2027 = vunpack.c.l.b16 %v965
        %v2028 = vunpack.c.h.b16 %v965
        %v2029 = vunpack.c.l.b16 %v966
        %v2030 = vunpack.c.h.b16 %v966
        %v2031 = vunpack.c.l.b16 %v967
        %v2032 = vunpack.c.h.b16 %v967
        %v2033 = vunpack.c.l.b16 %v968
        %v2034 = vunpack.c.h.b16 %v968
        %v2035 = vunpack.c.l.b16 %v969
        %v2036 = vunpack.c.h.b16 %v969
        %v2037 = vunpack.c.l.b16 %v970
        %v2038 = vunpack.c.h.b16 %v970
        %v2039 = vunpack.c.l.b16 %v971
        %v2040 = vunpack.c.h.b16 %v971
        %v2041 = vunpack.c.l.b16 %v972
        %v2042 = vunpack.c.h.b16 %v972
        %v2043 = vunpack.c.l.b16 %v973
        %v2044 = vunpack.c.h.b16 %v973
        %v2045 = vunpack.c.l.b16 %v974
        %v2046 = vunpack.c.h.b16 %v974
        %v2047 = vunpack.c.l.b16 %v975
        %v2048 = vunpack.c.h.b16 %v975
        %v2049 = vunpack.c.l.b16 %v976
        %v2050 = vunpack.c.h.b16 %v976
        %v2051 = vunpack.c.l.b16 %v977
        %v2052 = vunpack.c.h.b16 %v977
        %v2053 = vunpack.c.l.b16 %v978
        %v2054 = vunpack.c.h.b16 %v978
        %v2055 = vunpack.c.l.b16 %v979
        %v2056 = vunpack.c.h.b16 %v979
        %v2057 = vunpack.c.l.b16 %v980
        %v2058 = vunpack.c.h.b16 %v980
        %v2059 = vunpack.c.l.b16 %v981
        %v2060 = vunpack.c.h.b16 %v981
        %v2061 = vunpack.c.l.b16 %v982
        %v2062 = vunpack.c.h.b16 %v982
        %v2063 = vunpack.c.l.b16 %v983
        %v2064 = vunpack.c.h.b16 %v983
        %v2065 = vunpack.c.l.b16 %v984
        %v2066 = vunpack.c.h.b16 %v984
        %v2067 = vunpack.c.l.b16 %v985
        %v2068 = vunpack.c.h.b16 %v985
        %v2069 = vunpack.c.l.b16 %v986
        %v2070 = vunpack.c.h.b16 %v986
        %v2071 = vunpack.c.l.b16 %v987
        %v2072 = vunpack.c.h.b16 %v987
        %v2073 = vunpack.c.l.b16 %v988
        %v2074 = vunpack.c.h.b16 %v988
        %v2075 = vunpack.c.l.b16 %v989
        %v2076 = vunpack.c.h.b16 %v989
        %v2077 = vunpack.c.l.b16 %v990
        %v2078 = vunpack.c.h.b16 %v990
        %v2079 = vunpack.c.l.b16 %v991
        %v2080 = vunpack.c.h.b16 %v991
        %v2081 = vunpack.c.l.b16 %v992
        %v2082 = vunpack.c.h.b16 %v992
        %v2083 = vunpack.c.l.b16 %v993
        %v2084 = vunpack.c.h.b16 %v993
        %v2085 = vunpack.c.l.b16 %v994
        %v2086 = vunpack.c.h.b16 %v994
        %v2087 = vunpack.c.l.b16 %v995
        %v2088 = vunpack.c.h.b16 %v995
        %v2089 = vunpack.c.l.b16 %v996
        %v2090 = vunpack.c.h.b16 %v996
        %v2091 = vunpack.c.l.b16 %v997
        %v2092 = vunpack.c.h.b16 %v997
        %v2093 = vunpack.c.l.b16 %v998
        %v2094 = vunpack.c.h.b16 %v998
        %v2095 = vunpack.c.l.b16 %v999
        %v2096 = vunpack.c.h.b16 %v999
        %v2097 = vunpack.c.l.b16 %v1000
        %v2098 = vunpack.c.h.b16 %v1000
        %v2099 = vunpack.c.l.b16 %v1001
        %v2100 = vunpack.c.h.b16 %v1001
        %v2101 = vunpack.c.l.b16 %v1002
        %v2102 = vunpack.c.h.b16 %v1002
        %v2103 = vunpack.c.l.b16 %v1003
        %v2104 = vunpack.c.h.b16 %v1003
        %v2105 = vunpack.c.l.b16 %v1004
        %v2106 = vunpack.c.h.b16 %v1004
        %v2107 = vunpack.c.l.b16 %v1005
        %v2108 = vunpack.c.h.b16 %v1005
        %v2109 = vunpack.c.l.b16 %v1006
        %v2110 = vunpack.c.h.b16 %v1006
        %v2111 = vunpack.c.l.b16 %v1007
        %v2112 = vunpack.c.h.b16 %v1007
        %v2113 = vunpack.c.l.b16 %v1008
        %v2114 = vunpack.c.h.b16 %v1008
        %v2115 = vunpack.c.l.b16 %v1009
        %v2116 = vunpack.c.h.b16 %v1009
        %v2117 = vunpack.c.l.b16 %v1010
        %v2118 = vunpack.c.h.b16 %v1010
        %v2119 = vunpack.c.l.b16 %v1011
        %v2120 = vunpack.c.h.b16 %v1011
        %v2121 = vunpack.c.l.b16 %v1012
        %v2122 = vunpack.c.h.b16 %v1012
        %v2123 = vunpack.c.l.b16 %v1013
        %v2124 = vunpack.c.h.b16 %v1013
        %v2125 = vunpack.c.l.b16 %v1014
        %v2126 = vunpack.c.h.b16 %v1014
        %v2127 = vunpack.c.l.b16 %v1015
        %v2128 = vunpack.c.h.b16 %v1015
        %v2129 = vunpack.c.l.b16 %v1016
        %v2130 = vunpack.c.h.b16 %v1016
        %v2131 = vunpack.c.l.b16 %v1017
        %v2132 = vunpack.c.h.b16 %v1017
        %v2133 = vunpack.c.l.b16 %v1018
        %v2134 = vunpack.c.h.b16 %v1018
        %v2135 = vunpack.c.l.b16 %v1019
        %v2136 = vunpack.c.h.b16 %v1019
        %v2137 = vunpack.c.l.b16 %v1020
        %v2138 = vunpack.c.h.b16 %v1020
        %v2139 = vunpack.c.l.b16 %v1021
        %v2140 = vunpack.c.h.b16 %v1021
        %v2141 = vunpack.c.l.b16 %v1022
        %v2142 = vunpack.c.h.b16 %v1022
        %v2143 = vunpack.c.l.b16 %v1023
        %v2144 = vunpack.c.h.b16 %v1023
        %v2145 = vunpack.c.l.b16 %v1024
        %v2146 = vunpack.c.h.b16 %v1024
        %v2147 = vunpack.c.l.b16 %v1025
        %v2148 = vunpack.c.h.b16 %v1025
        %v2149 = vunpack.c.l.b16 %v1026
        %v2150 = vunpack.c.h.b16 %v1026
        %v2151 = vunpack.c.l.b16 %v1027
        %v2152 = vunpack.c.h.b16 %v1027
        %v2153 = vunpack.c.l.b16 %v1028
        %v2154 = vunpack.c.h.b16 %v1028
        %v2155 = vunpack.c.l.b16 %v1029
        %v2156 = vunpack.c.h.b16 %v1029
        %v2157 = vunpack.c.l.b16 %v1030
        %v2158 = vunpack.c.h.b16 %v1030
        %v2159 = vunpack.c.l.b16 %v1031
        %v2160 = vunpack.c.h.b16 %v1031
        %v2161 = vunpack.c.l.b16 %v1032
        %v2162 = vunpack.c.h.b16 %v1032
        %v2163 = vunpack.c.l.b16 %v1033
        %v2164 = vunpack.c.h.b16 %v1033
        %v2165 = vunpack.c.l.b16 %v1034
        %v2166 = vunpack.c.h.b16 %v1034
        %v2167 = vunpack.c.l.b16 %v1035
        %v2168 = vunpack.c.h.b16 %v1035
        %v2169 = vunpack.c.l.b16 %v1036
        %v2170 = vunpack.c.h.b16 %v1036
        %v2171 = vunpack.c.l.b16 %v1037
        %v2172 = vunpack.c.h.b16 %v1037
        %v2173 = vunpack.c.l.b16 %v1038
        %v2174 = vunpack.c.h.b16 %v1038
        %v2175 = vunpack.c.l.b16 %v1039
        %v2176 = vunpack.c.h.b16 %v1039
        %v2177 = vunpack.c.l.b16 %v1040
        %v2178 = vunpack.c.h.b16 %v1040
        %v2179 = vunpack.c.l.b16 %v1041
        %v2180 = vunpack.c.h.b16 %v1041
        %v2181 = vunpack.c.l.b16 %v1042
        %v2182 = vunpack.c.h.b16 %v1042
        %v2183 = vunpack.c.l.b16 %v1043
        %v2184 = vunpack.c.h.b16 %v1043
        %v2185 = vunpack.c.l.b16 %v1044
        %v2186 = vunpack.c.h.b16 %v1044
        %v2187 = vunpack.c.l.b16 %v1045
        %v2188 = vunpack.c.h.b16 %v1045
        %v2189 = vunpack.c.l.b16 %v1046
        %v2190 = vunpack.c.h.b16 %v1046
        %v2191 = vunpack.c.l.b16 %v1047
        %v2192 = vunpack.c.h.b16 %v1047
        %v2193 = vunpack.c.l.b16 %v1048
        %v2194 = vunpack.c.h.b16 %v1048
        %v2195 = vunpack.c.l.b16 %v1049
        %v2196 = vunpack.c.h.b16 %v1049
        %v2197 = vunpack.c.l.b16 %v1050
        %v2198 = vunpack.c.h.b16 %v1050
        %v2199 = vunpack.c.l.b16 %v1051
        %v2200 = vunpack.c.h.b16 %v1051
        %v2201 = vunpack.c.l.b16 %v1052
        %v2202 = vunpack.c.h.b16 %v1052
        %v2203 = vunpack.c.l.b16 %v1053
        %v2204 = vunpack.c.h.b16 %v1053
        %v2205 = vunpack.c.l.b16 %v1054
        %v2206 = vunpack.c.h.b16 %v1054
        %v2207 = vunpack.c.l.b16 %v1055
        %v2208 = vunpack.c.h.b16 %v1055
        %v2209 = vunpack.c.l.b16 %v1056
        %v2210 = vunpack.c.h.b16 %v1056
        %v2211 = vunpack.c.l.b16 %v1057
        %v2212 = vunpack.c.h.b16 %v1057
        %v2213 = vunpack.c.l.b16 %v1058
        %v2214 = vunpack.c.h.b16 %v1058
        %v2215 = vunpack.c.l.b16 %v1059
        %v2216 = vunpack.c.h.b16 %v1059
        %v2217 = vunpack.c.l.b16 %v1060
        %v2218 = vunpack.c.h.b16 %v1060
        %v2219 = vunpack.c.l.b16 %v1061
        %v2220 = vunpack.c.h.b16 %v1061
        %v2221 = vunpack.c.l.b16 %v1062
        %v2222 = vunpack.c.h.b16 %v1062
        %v2223 = vunpack.c.l.b16 %v1063
        %v2224 = vunpack.c.h.b16 %v1063
        %v2225 = vunpack.c.l.b16 %v1064
        %v2226 = vunpack.c.h.b16 %v1064
        %v2227 = vunpack.c.l.b16 %v1065
        %v2228 = vunpack.c.h.b16 %v1065
        %v2229 = vunpack.c.l.b16 %v1066
        %v2230 = vunpack.c.h.b16 %v1066
        %v2231 = vunpack.c.l.b16 %v1067
        %v2232 = vunpack.c.h.b16 %v1067
        %v2233 = vunpack.c.l.b16 %v1068
        %v2234 = vunpack.c.h.b16 %v1068
        %v2235 = vunpack.c.l.b16 %v1069
        %v2236 = vunpack.c.h.b16 %v1069
        %v2237 = vunpack.c.l.b16 %v1070
        %v2238 = vunpack.c.h.b16 %v1070
        %v2239 = vunpack.c.l.b16 %v1071
        %v2240 = vunpack.c.h.b16 %v1071
        %v2241 = vunpack.c.l.b16 %v1072
        %v2242 = vunpack.c.h.b16 %v1072
        %v2243 = vunpack.c.l.b16 %v1073
        %v2244 = vunpack.c.h.b16 %v1073
        %v2245 = vunpack.c.l.b16 %v1074
        %v2246 = vunpack.c.h.b16 %v1074
        %v2247 = vunpack.c.l.b16 %v1075
        %v2248 = vunpack.c.h.b16 %v1075
        %v2249 = vunpack.c.l.b16 %v1076
        %v2250 = vunpack.c.h.b16 %v1076
        %v2251 = vunpack.c.l.b16 %v1077
        %v2252 = vunpack.c.h.b16 %v1077
        %v2253 = vunpack.c.l.b16 %v1078
        %v2254 = vunpack.c.h.b16 %v1078
        %v2255 = vunpack.c.l.b16 %v1079
        %v2256 = vunpack.c.h.b16 %v1079
        %v2257 = vunpack.c.l.b16 %v1080
        %v2258 = vunpack.c.h.b16 %v1080
        %v2259 = vunpack.c.l.b16 %v1081
        %v2260 = vunpack.c.h.b16 %v1081
        %v2261 = vunpack.c.l.b16 %v1082
        %v2262 = vunpack.c.h.b16 %v1082
        %v2263 = vunpack.c.l.b16 %v1083
        %v2264 = vunpack.c.h.b16 %v1083
        %v2265 = vunpack.c.l.b16 %v1084
        %v2266 = vunpack.c.h.b16 %v1084
        %v2267 = vunpack.c.l.b16 %v1085
        %v2268 = vunpack.c.h.b16 %v1085
        %v2269 = vunpack.c.l.b16 %v1086
        %v2270 = vunpack.c.h.b16 %v1086
        %v2271 = vunpack.c.l.b16 %v1087
        %v2272 = vunpack.c.h.b16 %v1087
        %v2273 = vunpack.c.l.b16 %v1088
        %v2274 = vunpack.c.h.b16 %v1088
        %v2275 = vunpack.c.l.b16 %v1089
        %v2276 = vunpack.c.h.b16 %v1089
        %v2277 = vunpack.c.l.b16 %v1090
        %v2278 = vunpack.c.h.b16 %v1090
        %v2279 = vunpack.c.l.b16 %v1091
        %v2280 = vunpack.c.h.b16 %v1091
        %v2281 = vunpack.c.l.b16 %v1092
        %v2282 = vunpack.c.h.b16 %v1092
        %v2283 = vunpack.c.l.b16 %v1093
        %v2284 = vunpack.c.h.b16 %v1093
        %v2285 = vunpack.c.l.b16 %v1094
        %v2286 = vunpack.c.h.b16 %v1094
        %v2287 = vunpack.c.l.b16 %v1095
        %v2288 = vunpack.c.h.b16 %v1095
        %v2289 = vunpack.c.l.b16 %v1096
        %v2290 = vunpack.c.h.b16 %v1096
        %v2291 = vunpack.c.l.b16 %v1097
        %v2292 = vunpack.c.h.b16 %v1097
        %v2293 = vunpack.c.l.b16 %v1098
        %v2294 = vunpack.c.h.b16 %v1098
        %v2295 = vunpack.c.l.b16 %v1099
        %v2296 = vunpack.c.h.b16 %v1099
        %v2297 = vunpack.c.l.b16 %v1100
        %v2298 = vunpack.c.h.b16 %v1100
        %v2299 = vunpack.c.l.b16 %v1101
        %v2300 = vunpack.c.h.b16 %v1101
        %v2301 = vunpack.c.l.b16 %v1102
        %v2302 = vunpack.c.h.b16 %v1102
        %v2303 = vunpack.c.l.b16 %v1103
        %v2304 = vunpack.c.h.b16 %v1103
        %v2305 = vunpack.c.l.b16 %v1104
        %v2306 = vunpack.c.h.b16 %v1104
        %v2307 = vunpack.c.l.b16 %v1105
        %v2308 = vunpack.c.h.b16 %v1105
        %v2309 = vunpack.c.l.b16 %v1106
        %v2310 = vunpack.c.h.b16 %v1106
        %v2311 = vunpack.c.l.b16 %v1107
        %v2312 = vunpack.c.h.b16 %v1107
        %v2313 = vunpack.c.l.b16 %v1108
        %v2314 = vunpack.c.h.b16 %v1108
        %v2315 = vunpack.c.l.b16 %v1109
        %v2316 = vunpack.c.h.b16 %v1109
        %v2317 = vunpack.c.l.b16 %v1110
        %v2318 = vunpack.c.h.b16 %v1110
        %v2319 = vunpack.c.l.b16 %v1111
        %v2320 = vunpack.c.h.b16 %v1111
        %v2321 = vunpack.c.l.b16 %v1112
        %v2322 = vunpack.c.h.b16 %v1112
        %v2323 = vunpack.c.l.b16 %v1113
        %v2324 = vunpack.c.h.b16 %v1113
        %v2325 = vunpack.c.l.b16 %v1114
        %v2326 = vunpack.c.h.b16 %v1114
        %v2327 = vunpack.c.l.b16 %v1115
        %v2328 = vunpack.c.h.b16 %v1115
        %v2329 = vunpack.c.l.b16 %v1116
        %v2330 = vunpack.c.h.b16 %v1116
        %v2331 = vunpack.c.l.b16 %v1117
        %v2332 = vunpack.c.h.b16 %v1117
        %v2333 = vunpack.c.l.b16 %v1118
        %v2334 = vunpack.c.h.b16 %v1118
        %v2335 = vunpack.c.l.b16 %v1119
        %v2336 = vunpack.c.h.b16 %v1119
        %v2337 = vunpack.c.l.b16 %v1120
        %v2338 = vunpack.c.h.b16 %v1120
        %v2339 = vunpack.c.l.b16 %v1121
        %v2340 = vunpack.c.h.b16 %v1121
        %v2341 = vunpack.c.l.b16 %v1122
        %v2342 = vunpack.c.h.b16 %v1122
        %v2343 = vunpack.c.l.b16 %v1123
        %v2344 = vunpack.c.h.b16 %v1123
        %v2345 = vunpack.c.l.b16 %v1124
        %v2346 = vunpack.c.h.b16 %v1124
        %v2347 = vunpack.c.l.b16 %v1125
        %v2348 = vunpack.c.h.b16 %v1125
        %v2349 = vunpack.c.l.b16 %v1126
        %v2350 = vunpack.c.h.b16 %v1126
        %v2351 = vunpack.c.l.b16 %v1127
        %v2352 = vunpack.c.h.b16 %v1127
        %v2353 = vunpack.c.l.b16 %v1128
        %v2354 = vunpack.c.h.b16 %v1128
        %v2355 = vunpack.c.l.b16 %v1129
        %v2356 = vunpack.c.h.b16 %v1129
        %v2357 = vunpack.c.l.b16 %v1130
        %v2358 = vunpack.c.h.b16 %v1130
        %v2359 = vunpack.c.l.b16 %v1131
        %v2360 = vunpack.c.h.b16 %v1131
        %v2361 = vunpack.c.l.b16 %v1132
        %v2362 = vunpack.c.h.b16 %v1132
        %v2363 = vunpack.c.l.b16 %v1133
        %v2364 = vunpack.c.h.b16 %v1133
        %v2365 = vunpack.c.l.b16 %v1134
        %v2366 = vunpack.c.h.b16 %v1134
        %v2367 = vunpack.c.l.b16 %v1135
        %v2368 = vunpack.c.h.b16 %v1135
        %v2369 = vunpack.c.l.b16 %v1136
        %v2370 = vunpack.c.h.b16 %v1136
        %v2371 = vunpack.c.l.b16 %v1137
        %v2372 = vunpack.c.h.b16 %v1137
        %v2373 = vunpack.c.l.b16 %v1138
        %v2374 = vunpack.c.h.b16 %v1138
        %v2375 = vunpack.c.l.b16 %v1139
        %v2376 = vunpack.c.h.b16 %v1139
        %v2377 = vunpack.c.l.b16 %v1140
        %v2378 = vunpack.c.h.b16 %v1140
        %v2379 = vunpack.c.l.b16 %v1141
        %v2380 = vunpack.c.h.b16 %v1141
        %v2381 = vunpack.c.l.b16 %v1142
        %v2382 = vunpack.c.h.b16 %v1142
        %v2383 = vunpack.c.l.b16 %v1143
        %v2384 = vunpack.c.h.b16 %v1143
        %v2385 = vunpack.c.l.b16 %v1144
        %v2386 = vunpack.c.h.b16 %v1144
        %v2387 = vunpack.c.l.b16 %v1145
        %v2388 = vunpack.c.h.b16 %v1145
        %v2389 = vunpack.c.l.b16 %v1146
        %v2390 = vunpack.c.h.b16 %v1146
        %v2391 = vunpack.c.l.b16 %v1147
        %v2392 = vunpack.c.h.b16 %v1147
        %v2393 = vunpack.c.l.b16 %v1148
        %v2394 = vunpack.c.h.b16 %v1148
        %v2395 = vunpack.c.l.b16 %v1149
        %v2396 = vunpack.c.h.b16 %v1149
        %v2397 = vunpack.c.l.b16 %v1150
        %v2398 = vunpack.c.h.b16 %v1150
        %v2399 = vunpack.c.l.b16 %v1151
        %v2400 = vunpack.c.h.b16 %v1151
        %v2401 = vunpack.c.l.b16 %v1152
        %v2402 = vunpack.c.h.b16 %v1152
        %v2403 = vunpack.c.l.b16 %v1153
        %v2404 = vunpack.c.h.b16 %v1153
        %v2405 = vunpack.c.l.b16 %v1154
        %v2406 = vunpack.c.h.b16 %v1154
        %v2407 = vunpack.c.l.b16 %v1155
        %v2408 = vunpack.c.h.b16 %v1155
        %v2409 = vunpack.c.l.b16 %v1156
        %v2410 = vunpack.c.h.b16 %v1156
        %v2411 = vunpack.c.l.b16 %v1157
        %v2412 = vunpack.c.h.b16 %v1157
        %v2413 = vunpack.c.l.b16 %v1158
        %v2414 = vunpack.c.h.b16 %v1158
        %v2415 = vunpack.c.l.b16 %v1159
        %v2416 = vunpack.c.h.b16 %v1159
        %v2417 = vunpack.c.l.b16 %v1160
        %v2418 = vunpack.c.h.b16 %v1160
        %v2419 = vunpack.c.l.b16 %v1161
        %v2420 = vunpack.c.h.b16 %v1161
        %v2421 = vunpack.c.l.b16 %v1162
        %v2422 = vunpack.c.h.b16 %v1162
        %v2423 = vunpack.c.l.b16 %v1163
        %v2424 = vunpack.c.h.b16 %v1163
        %v2425 = vunpack.c.l.b16 %v1164
        %v2426 = vunpack.c.h.b16 %v1164
        %v2427 = vunpack.c.l.b16 %v1165
        %v2428 = vunpack.c.h.b16 %v1165
        %v2429 = vunpack.c.l.b16 %v1166
        %v2430 = vunpack.c.h.b16 %v1166
        %v2431 = vunpack.c.l.b16 %v1167
        %v2432 = vunpack.c.h.b16 %v1167
        %v2433 = vunpack.c.l.b16 %v1168
        %v2434 = vunpack.c.h.b16 %v1168
        %v2435 = vunpack.c.l.b16 %v1169
        %v2436 = vunpack.c.h.b16 %v1169
        %v2437 = vunpack.c.l.b16 %v1170
        %v2438 = vunpack.c.h.b16 %v1170
        %v2439 = vunpack.c.l.b16 %v1171
        %v2440 = vunpack.c.h.b16 %v1171
        %v2441 = vunpack.c.l.b16 %v1172
        %v2442 = vunpack.c.h.b16 %v1172
        %v2443 = vunpack.c.l.b16 %v1173
        %v2444 = vunpack.c.h.b16 %v1173
        %v2445 = vunpack.c.l.b16 %v1174
        %v2446 = vunpack.c.h.b16 %v1174
        %v2447 = vunpack.c.l.b16 %v1175
        %v2448 = vunpack.c.h.b16 %v1175
        %v2449 = vunpack.c.l.b16 %v1176
        %v2450 = vunpack.c.h.b16 %v1176
        %v2451 = vunpack.c.l.b16 %v1177
        %v2452 = vunpack.c.h.b16 %v1177
        %v2453 = vunpack.c.l.b16 %v1178
        %v2454 = vunpack.c.h.b16 %v1178
        %v2455 = vunpack.c.l.b16 %v1179
        %v2456 = vunpack.c.h.b16 %v1179
        %v2457 = vunpack.c.l.b16 %v1180
        %v2458 = vunpack.c.h.b16 %v1180
        %v2459 = vunpack.c.l.b16 %v1181
        %v2460 = vunpack.c.h.b16 %v1181
        %v2461 = vunpack.c.l.b16 %v1182
        %v2462 = vunpack.c.h.b16 %v1182
        %v2463 = vunpack.c.l.b16 %v1183
        %v2464 = vunpack.c.h.b16 %v1183
        %v2465 = vunpack.c.l.b16 %v1184
        %v2466 = vunpack.c.h.b16 %v1184
        %v2467 = vunpack.c.l.b16 %v1185
        %v2468 = vunpack.c.h.b16 %v1185
        %v2469 = vunpack.c.l.b16 %v1186
        %v2470 = vunpack.c.h.b16 %v1186
        %v2471 = vunpack.c.l.b16 %v1187
        %v2472 = vunpack.c.h.b16 %v1187
        %v2473 = vunpack.c.l.b16 %v1188
        %v2474 = vunpack.c.h.b16 %v1188
        %v2475 = vunpack.c.l.b16 %v1189
        %v2476 = vunpack.c.h.b16 %v1189
        %v2477 = vunpack.c.l.b16 %v1190
        %v2478 = vunpack.c.h.b16 %v1190
        %v2479 = vunpack.c.l.b16 %v1191
        %v2480 = vunpack.c.h.b16 %v1191
        %v2481 = vunpack.c.l.b16 %v1192
        %v2482 = vunpack.c.h.b16 %v1192
        %v2483 = vunpack.c.l.b16 %v1193
        %v2484 = vunpack.c.h.b16 %v1193
        %v2485 = vunpack.c.l.b16 %v1194
        %v2486 = vunpack.c.h.b16 %v1194
        %v2487 = vunpack.c.l.b16 %v1195
        %v2488 = vunpack.c.h.b16 %v1195
        %v2489 = vunpack.c.l.b16 %v1196
        %v2490 = vunpack.c.h.b16 %v1196
        %v2491 = vunpack.c.l.b16 %v1197
        %v2492 = vunpack.c.h.b16 %v1197
        %v2493 = vunpack.c.l.b16 %v1198
        %v2494 = vunpack.c.h.b16 %v1198
        %v2495 = vunpack.c.l.b16 %v1199
        %v2496 = vunpack.c.h.b16 %v1199
        %v2497 = vunpack.c.l.b16 %v1200
        %v2498 = vunpack.c.h.b16 %v1200
        %v2499 = vunpack.c.l.b16 %v1201
        %v2500 = vunpack.c.h.b16 %v1201
        %v2501 = vunpack.c.l.b16 %v1202
        %v2502 = vunpack.c.h.b16 %v1202
        %v2503 = vunpack.c.l.b16 %v1203
        %v2504 = vunpack.c.h.b16 %v1203
        %v2505 = vunpack.c.l.b16 %v1204
        %v2506 = vunpack.c.h.b16 %v1204
        %v2507 = vunpack.c.l.b16 %v1205
        %v2508 = vunpack.c.h.b16 %v1205
        %v2509 = vunpack.c.l.b16 %v1206
        %v2510 = vunpack.c.h.b16 %v1206
        %v2511 = vunpack.c.l.b16 %v1207
        %v2512 = vunpack.c.h.b16 %v1207
        %v2513 = vunpack.c.l.b16 %v1208
        %v2514 = vunpack.c.h.b16 %v1208
        %v2515 = vunpack.c.l.b16 %v1209
        %v2516 = vunpack.c.h.b16 %v1209
        %v2517 = vunpack.c.l.b16 %v1210
        %v2518 = vunpack.c.h.b16 %v1210
        %v2519 = vunpack.c.l.b16 %v1211
        %v2520 = vunpack.c.h.b16 %v1211
        %v2521 = vunpack.c.l.b16 %v1212
        %v2522 = vunpack.c.h.b16 %v1212
        %v2523 = vunpack.c.l.b16 %v1213
        %v2524 = vunpack.c.h.b16 %v1213
        %v2525 = vunpack.c.l.b16 %v1214
        %v2526 = vunpack.c.h.b16 %v1214
        %v2527 = vunpack.c.l.b16 %v1215
        %v2528 = vunpack.c.h.b16 %v1215
        %v2529 = vunpack.c.l.b16 %v1216
        %v2530 = vunpack.c.h.b16 %v1216
        %v2531 = vunpack.c.l.b16 %v1217
        %v2532 = vunpack.c.h.b16 %v1217
        %v2533 = vunpack.c.l.b16 %v1218
        %v2534 = vunpack.c.h.b16 %v1218
        %v2535 = vunpack.c.l.b16 %v1219
        %v2536 = vunpack.c.h.b16 %v1219
        %v2537 = vunpack.c.l.b16 %v1220
        %v2538 = vunpack.c.h.b16 %v1220
        %v2539 = vunpack.c.l.b16 %v1221
        %v2540 = vunpack.c.h.b16 %v1221
        %v2541 = vunpack.c.l.b16 %v1222
        %v2542 = vunpack.c.h.b16 %v1222
        %v2543 = vunpack.c.l.b16 %v1223
        %v2544 = vunpack.c.h.b16 %v1223
        %v2545 = vunpack.c.l.b16 %v1224
        %v2546 = vunpack.c.h.b16 %v1224
        %v2547 = vunpack.c.l.b16 %v1225
        %v2548 = vunpack.c.h.b16 %v1225
        %v2549 = vunpack.c.l.b16 %v1226
        %v2550 = vunpack.c.h.b16 %v1226
        %v2551 = vunpack.c.l.b16 %v1227
        %v2552 = vunpack.c.h.b16 %v1227
        %v2553 = vunpack.c.l.b16 %v1228
        %v2554 = vunpack.c.h.b16 %v1228
        %v2555 = vunpack.c.l.b16 %v1229
        %v2556 = vunpack.c.h.b16 %v1229
        %v2557 = vunpack.c.l.b16 %v1230
        %v2558 = vunpack.c.h.b16 %v1230
        %v2559 = vunpack.c.l.b16 %v1231
        %v2560 = vunpack.c.h.b16 %v1231
        %v2561 = vunpack.c.l.b16 %v1232
        %v2562 = vunpack.c.h.b16 %v1232
        %v2563 = vunpack.c.l.b16 %v1233
        %v2564 = vunpack.c.h.b16 %v1233
        %v2565 = vunpack.c.l.b16 %v1234
        %v2566 = vunpack.c.h.b16 %v1234
        %v2567 = vunpack.c.l.b16 %v1235
        %v2568 = vunpack.c.h.b16 %v1235
        %v2569 = vunpack.c.l.b16 %v1236
        %v2570 = vunpack.c.h.b16 %v1236
        %v2571 = vunpack.c.l.b16 %v1237
        %v2572 = vunpack.c.h.b16 %v1237
        %v2573 = vunpack.c.l.b16 %v1238
        %v2574 = vunpack.c.h.b16 %v1238
        %v2575 = vunpack.c.l.b16 %v1239
        %v2576 = vunpack.c.h.b16 %v1239
        %v2577 = vunpack.c.l.b16 %v1240
        %v2578 = vunpack.c.h.b16 %v1240
        %v2579 = vunpack.c.l.b16 %v1241
        %v2580 = vunpack.c.h.b16 %v1241
        %v2581 = vunpack.c.l.b16 %v1242
        %v2582 = vunpack.c.h.b16 %v1242
        %v2583 = vunpack.c.l.b16 %v1243
        %v2584 = vunpack.c.h.b16 %v1243
        %v2585 = vunpack.c.l.b16 %v1244
        %v2586 = vunpack.c.h.b16 %v1244
        %v2587 = vunpack.c.l.b16 %v1245
        %v2588 = vunpack.c.h.b16 %v1245
        %v2589 = vunpack.c.l.b16 %v1246
        %v2590 = vunpack.c.h.b16 %v1246
        %v2591 = vunpack.c.l.b16 %v1247
        %v2592 = vunpack.c.h.b16 %v1247
        %v2593 = vunpack.c.l.b16 %v1248
        %v2594 = vunpack.c.h.b16 %v1248
        %v2595 = vunpack.c.l.b16 %v1249
        %v2596 = vunpack.c.h.b16 %v1249
        %v2597 = vunpack.c.l.b16 %v1250
        %v2598 = vunpack.c.h.b16 %v1250
        %v2599 = vunpack.c.l.b16 %v1251
        %v2600 = vunpack.c.h.b16 %v1251
        %v2601 = vunpack.c.l.b16 %v1252
        %v2602 = vunpack.c.h.b16 %v1252
        %v2603 = vunpack.c.l.b16 %v1253
        %v2604 = vunpack.c.h.b16 %v1253
        %v2605 = vunpack.c.l.b16 %v1254
        %v2606 = vunpack.c.h.b16 %v1254
        %v2607 = vunpack.c.l.b16 %v1255
        %v2608 = vunpack.c.h.b16 %v1255
        %v2609 = vunpack.c.l.b16 %v1256
        %v2610 = vunpack.c.h.b16 %v1256
        %v2611 = vunpack.c.l.b16 %v1257
        %v2612 = vunpack.c.h.b16 %v1257
        %v2613 = vunpack.c.l.b16 %v1258
        %v2614 = vunpack.c.h.b16 %v1258
        %v2615 = vunpack.c.l.b16 %v1259
        %v2616 = vunpack.c.h.b16 %v1259
        %v2617 = vunpack.c.l.b16 %v1260
        %v2618 = vunpack.c.h.b16 %v1260
        %v2619 = vunpack.c.l.b16 %v1261
        %v2620 = vunpack.c.h.b16 %v1261
        %v2621 = vunpack.c.l.b16 %v1262
        %v2622 = vunpack.c.h.b16 %v1262
        %v2623 = vunpack.c.l.b16 %v1263
        %v2624 = vunpack.c.h.b16 %v1263
        %v2625 = vunpack.c.l.b16 %v1264
        %v2626 = vunpack.c.h.b16 %v1264
        %v2627 = vunpack.c.l.b16 %v1265
        %v2628 = vunpack.c.h.b16 %v1265
        %v2629 = vunpack.c.l.b16 %v1266
        %v2630 = vunpack.c.h.b16 %v1266
        %v2631 = vunpack.c.l.b16 %v1267
        %v2632 = vunpack.c.h.b16 %v1267
        %v2633 = vunpack.c.l.b16 %v1268
        %v2634 = vunpack.c.h.b16 %v1268
        %v2635 = vunpack.c.l.b16 %v1269
        %v2636 = vunpack.c.h.b16 %v1269
        %v2637 = vunpack.c.l.b16 %v1270
        %v2638 = vunpack.c.h.b16 %v1270
        %v2639 = vunpack.c.l.b16 %v1271
        %v2640 = vunpack.c.h.b16 %v1271
        %v2641 = vunpack.c.l.b16 %v1272
        %v2642 = vunpack.c.h.b16 %v1272
        %v2643 = vunpack.c.l.b16 %v1273
        %v2644 = vunpack.c.h.b16 %v1273
        %v2645 = vunpack.c.l.b16 %v1274
        %v2646 = vunpack.c.h.b16 %v1274
        %v2647 = vunpack.c.l.b16 %v1275
        %v2648 = vunpack.c.h.b16 %v1275
        %v2649 = vunpack.c.l.b16 %v1276
        %v2650 = vunpack.c.h.b16 %v1276
        %v2651 = vunpack.c.l.b16 %v1277
        %v2652 = vunpack.c.h.b16 %v1277
        %v2653 = vunpack.c.l.b16 %v1278
        %v2654 = vunpack.c.h.b16 %v1278
        %v2655 = vunpack.c.l.b16 %v1279
        %v2656 = vunpack.c.h.b16 %v1279
        %v2657 = vunpack.c.l.b16 %v1280
        %v2658 = vunpack.c.h.b16 %v1280
        %v2659 = vunpack.c.l.b16 %v1281
        %v2660 = vunpack.c.h.b16 %v1281
        %v2661 = vunpack.c.l.b16 %v1282
        %v2662 = vunpack.c.h.b16 %v1282
        %v2663 = vunpack.c.l.b16 %v1283
        %v2664 = vunpack.c.h.b16 %v1283
        %v2665 = vunpack.c.l.b16 %v1284
        %v2666 = vunpack.c.h.b16 %v1284
        %v2667 = vunpack.c.l.b16 %v1285
        %v2668 = vunpack.c.h.b16 %v1285
        %v2669 = vunpack.c.l.b16 %v1286
        %v2670 = vunpack.c.h.b16 %v1286
        %v2671 = vunpack.c.l.b16 %v1287
        %v2672 = vunpack.c.h.b16 %v1287
        %v2673 = vunpack.c.l.b16 %v1288
        %v2674 = vunpack.c.h.b16 %v1288
        %v2675 = vunpack.c.l.b16 %v1289
        %v2676 = vunpack.c.h.b16 %v1289
        %v2677 = vunpack.c.l.b16 %v1290
        %v2678 = vunpack.c.h.b16 %v1290
        %v2679 = vunpack.c.l.b16 %v1291
        %v2680 = vunpack.c.h.b16 %v1291
        %v2681 = vunpack.c.l.b16 %v1292
        %v2682 = vunpack.c.h.b16 %v1292
        %v2683 = vunpack.c.l.b16 %v1293
        %v2684 = vunpack.c.h.b16 %v1293
        %v2685 = vunpack.c.l.b16 %v1294
        %v2686 = vunpack.c.h.b16 %v1294
        %v2687 = vunpack.c.l.b16 %v1295
        %v2688 = vunpack.c.h.b16 %v1295
        %v2689 = vunpack.c.l.b16 %v1296
        %v2690 = vunpack.c.h.b16 %v1296
        %v2691 = vunpack.c.l.b16 %v1297
        %v2692 = vunpack.c.h.b16 %v1297
        %v2693 = vunpack.c.l.b16 %v1298
        %v2694 = vunpack.c.h.b16 %v1298
        %v2695 = vunpack.c.l.b16 %v1299
        %v2696 = vunpack.c.h.b16 %v1299
        %v2697 = vunpack.c.l.b16 %v1300
        %v2698 = vunpack.c.h.b16 %v1300
        %v2699 = vunpack.c.l.b16 %v1301
        %v2700 = vunpack.c.h.b16 %v1301
        %v2701 = vunpack.c.l.b16 %v1302
        %v2702 = vunpack.c.h.b16 %v1302
        %v2703 = vunpack.c.l.b16 %v1303
        %v2704 = vunpack.c.h.b16 %v1303
        %v2705 = vunpack.c.l.b16 %v1304
        %v2706 = vunpack.c.h.b16 %v1304
        %v2707 = vunpack.c.l.b16 %v1305
        %v2708 = vunpack.c.h.b16 %v1305
        %v2709 = vunpack.c.l.b16 %v1306
        %v2710 = vunpack.c.h.b16 %v1306
        %v2711 = vunpack.c.l.b16 %v1307
        %v2712 = vunpack.c.h.b16 %v1307
        %v2713 = vunpack.c.l.b16 %v1308
        %v2714 = vunpack.c.h.b16 %v1308
        %v2715 = vunpack.c.l.b16 %v1309
        %v2716 = vunpack.c.h.b16 %v1309
        %v2717 = vunpack.c.l.b16 %v1310
        %v2718 = vunpack.c.h.b16 %v1310
        %v2719 = vunpack.c.l.b16 %v1311
        %v2720 = vunpack.c.h.b16 %v1311
        %v2721 = vunpack.c.l.b16 %v1312
        %v2722 = vunpack.c.h.b16 %v1312
        %v2723 = vunpack.c.l.b16 %v1313
        %v2724 = vunpack.c.h.b16 %v1313
        %v2725 = vunpack.c.l.b16 %v1314
        %v2726 = vunpack.c.h.b16 %v1314
        %v2727 = vunpack.c.l.b16 %v1315
        %v2728 = vunpack.c.h.b16 %v1315
        %v2729 = vunpack.c.l.b16 %v1316
        %v2730 = vunpack.c.h.b16 %v1316
        %v2731 = vunpack.c.l.b16 %v1317
        %v2732 = vunpack.c.h.b16 %v1317
        %v2733 = vunpack.c.l.b16 %v1318
        %v2734 = vunpack.c.h.b16 %v1318
        %v2735 = vunpack.c.l.b16 %v1319
        %v2736 = vunpack.c.h.b16 %v1319
        %v2737 = vunpack.c.l.b16 %v1320
        %v2738 = vunpack.c.h.b16 %v1320
        %v2739 = vunpack.c.l.b16 %v1321
        %v2740 = vunpack.c.h.b16 %v1321
        %v2741 = vunpack.c.l.b16 %v1322
        %v2742 = vunpack.c.h.b16 %v1322
        %v2743 = vunpack.c.l.b16 %v1323
        %v2744 = vunpack.c.h.b16 %v1323
        %v2745 = vunpack.c.l.b16 %v1324
        %v2746 = vunpack.c.h.b16 %v1324
        %v2747 = vunpack.c.l.b16 %v1325
        %v2748 = vunpack.c.h.b16 %v1325
        %v2749 = vunpack.c.l.b16 %v1326
        %v2750 = vunpack.c.h.b16 %v1326
        %v2751 = vunpack.c.l.b16 %v1327
        %v2752 = vunpack.c.h.b16 %v1327
        %v2753 = vunpack.c.l.b16 %v1328
        %v2754 = vunpack.c.h.b16 %v1328
        %v2755 = vunpack.c.l.b16 %v1329
        %v2756 = vunpack.c.h.b16 %v1329
        %v2757 = vunpack.c.l.b16 %v1330
        %v2758 = vunpack.c.h.b16 %v1330
        %v2759 = vunpack.c.l.b16 %v1331
        %v2760 = vunpack.c.h.b16 %v1331
        %v2761 = vunpack.c.l.b16 %v1332
        %v2762 = vunpack.c.h.b16 %v1332
        %v2763 = vunpack.c.l.b16 %v1333
        %v2764 = vunpack.c.h.b16 %v1333
        %v2765 = vunpack.c.l.b16 %v1334
        %v2766 = vunpack.c.h.b16 %v1334
        %v2767 = vunpack.c.l.b16 %v1335
        %v2768 = vunpack.c.h.b16 %v1335
        %v2769 = vunpack.c.l.b16 %v1336
        %v2770 = vunpack.c.h.b16 %v1336
        %v2771 = vunpack.c.l.b16 %v1337
        %v2772 = vunpack.c.h.b16 %v1337
        %v2773 = vunpack.c.l.b16 %v1338
        %v2774 = vunpack.c.h.b16 %v1338
        %v2775 = vunpack.c.l.b16 %v1339
        %v2776 = vunpack.c.h.b16 %v1339
        %v2777 = vunpack.c.l.b16 %v1340
        %v2778 = vunpack.c.h.b16 %v1340
        %v2779 = vunpack.c.l.b16 %v1341
        %v2780 = vunpack.c.h.b16 %v1341
        %v2781 = vunpack.c.l.b16 %v1342
        %v2782 = vunpack.c.h.b16 %v1342
        %v2783 = vunpack.c.l.b16 %v1343
        %v2784 = vunpack.c.h.b16 %v1343
        %v2785 = vunpack.c.l.b16 %v1344
        %v2786 = vunpack.c.h.b16 %v1344
        %v2787 = vunpack.c.l.b16 %v1345
        %v2788 = vunpack.c.h.b16 %v1345
        %v2789 = vunpack.c.l.b16 %v1346
        %v2790 = vunpack.c.h.b16 %v1346
        %v2791 = vunpack.c.l.b16 %v1347
        %v2792 = vunpack.c.h.b16 %v1347
        %v2793 = vunpack.c.l.b16 %v1348
        %v2794 = vunpack.c.h.b16 %v1348
        %v2795 = vunpack.c.l.b16 %v1349
        %v2796 = vunpack.c.h.b16 %v1349
        %v2797 = vunpack.c.l.b16 %v1350
        %v2798 = vunpack.c.h.b16 %v1350
        %v2799 = vunpack.c.l.b16 %v1351
        %v2800 = vunpack.c.h.b16 %v1351
        %v2801 = vunpack.c.l.b16 %v1352
        %v2802 = vunpack.c.h.b16 %v1352
        %v2803 = vunpack.c.l.b16 %v1353
        %v2804 = vunpack.c.h.b16 %v1353
        %v2805 = vunpack.c.l.b16 %v1354
        %v2806 = vunpack.c.h.b16 %v1354
        %v2807 = vunpack.c.l.b16 %v1355
        %v2808 = vunpack.c.h.b16 %v1355
        %v2809 = vunpack.c.l.b16 %v1356
        %v2810 = vunpack.c.h.b16 %v1356
        %v2811 = vunpack.c.l.b16 %v1357
        %v2812 = vunpack.c.h.b16 %v1357
        %v2813 = vunpack.c.l.b16 %v1358
        %v2814 = vunpack.c.h.b16 %v1358
        %v2815 = vunpack.c.l.b16 %v1359
        %v2816 = vunpack.c.h.b16 %v1359
        %v2817 = vunpack.c.l.b16 %v1360
        %v2818 = vunpack.c.h.b16 %v1360
        %v2819 = vunpack.c.l.b16 %v1361
        %v2820 = vunpack.c.h.b16 %v1361
        %v2821 = vunpack.c.l.b16 %v1362
        %v2822 = vunpack.c.h.b16 %v1362
        %v2823 = vunpack.c.l.b16 %v1363
        %v2824 = vunpack.c.h.b16 %v1363
        %v2825 = vunpack.c.l.b16 %v1364
        %v2826 = vunpack.c.h.b16 %v1364
        %v2827 = vunpack.c.l.b16 %v1365
        %v2828 = vunpack.c.h.b16 %v1365
        %v2829 = vunpack.c.l.b16 %v1366
        %v2830 = vunpack.c.h.b16 %v1366
        %v2831 = vunpack.c.l.b16 %v1367
        %v2832 = vunpack.c.h.b16 %v1367
        %v2833 = vunpack.c.l.b16 %v1368
        %v2834 = vunpack.c.h.b16 %v1368
        %v2835 = vunpack.c.l.b16 %v1369
        %v2836 = vunpack.c.h.b16 %v1369
        %v2837 = vunpack.c.l.b16 %v1370
        %v2838 = vunpack.c.h.b16 %v1370
        %v2839 = vunpack.c.l.b16 %v1371
        %v2840 = vunpack.c.h.b16 %v1371
        %v2841 = vunpack.c.l.b16 %v1372
        %v2842 = vunpack.c.h.b16 %v1372
        %v2843 = vunpack.c.l.b16 %v1373
        %v2844 = vunpack.c.h.b16 %v1373
        %v2845 = vunpack.c.l.b16 %v1374
        %v2846 = vunpack.c.h.b16 %v1374
        %v2847 = vunpack.c.l.b16 %v1375
        %v2848 = vunpack.c.h.b16 %v1375
        %v2849 = vunpack.c.l.b16 %v1376
        %v2850 = vunpack.c.h.b16 %v1376
        %v2851 = vunpack.c.l.b16 %v1377
        %v2852 = vunpack.c.h.b16 %v1377
        %v2853 = vunpack.c.l.b16 %v1378
        %v2854 = vunpack.c.h.b16 %v1378
        %v2855 = vunpack.c.l.b16 %v1379
        %v2856 = vunpack.c.h.b16 %v1379
        %v2857 = vunpack.c.l.b16 %v1380
        %v2858 = vunpack.c.h.b16 %v1380
        %v2859 = vunpack.c.l.b16 %v1381
        %v2860 = vunpack.c.h.b16 %v1381
        %v2861 = vunpack.c.l.b16 %v1382
        %v2862 = vunpack.c.h.b16 %v1382
        %v2863 = vunpack.c.l.b16 %v1383
        %v2864 = vunpack.c.h.b16 %v1383
        %v2865 = vunpack.c.l.b16 %v1384
        %v2866 = vunpack.c.h.b16 %v1384
        %v2867 = vunpack.c.l.b16 %v1385
        %v2868 = vunpack.c.h.b16 %v1385
        %v2869 = vunpack.c.l.b16 %v1386
        %v2870 = vunpack.c.h.b16 %v1386
        %v2871 = vunpack.c.l.b16 %v1387
        %v2872 = vunpack.c.h.b16 %v1387
        %v2873 = vunpack.c.l.b16 %v1388
        %v2874 = vunpack.c.h.b16 %v1388
        %v2875 = vunpack.c.l.b16 %v1389
        %v2876 = vunpack.c.h.b16 %v1389
        %v2877 = vunpack.c.l.b16 %v1390
        %v2878 = vunpack.c.h.b16 %v1390
        %v2879 = vunpack.c.l.b16 %v1391
        %v2880 = vunpack.c.h.b16 %v1391
        %v2881 = vunpack.c.l.b16 %v1392
        %v2882 = vunpack.c.h.b16 %v1392
        %v2883 = vunpack.c.l.b16 %v1393
        %v2884 = vunpack.c.h.b16 %v1393
        %v2885 = vunpack.c.l.b16 %v1394
        %v2886 = vunpack.c.h.b16 %v1394
        %v2887 = vunpack.c.l.b16 %v1395
        %v2888 = vunpack.c.h.b16 %v1395
        %v2889 = vunpack.c.l.b16 %v1396
        %v2890 = vunpack.c.h.b16 %v1396
        %v2891 = vunpack.c.l.b16 %v1397
        %v2892 = vunpack.c.h.b16 %v1397
        %v2893 = vunpack.c.l.b16 %v1398
        %v2894 = vunpack.c.h.b16 %v1398
        %v2895 = vunpack.c.l.b16 %v1399
        %v2896 = vunpack.c.h.b16 %v1399
        %v2897 = vunpack.c.l.b16 %v1400
        %v2898 = vunpack.c.h.b16 %v1400
        %v2899 = vunpack.c.l.b16 %v1401
        %v2900 = vunpack.c.h.b16 %v1401
        %v2901 = vunpack.c.l.b16 %v1402
        %v2902 = vunpack.c.h.b16 %v1402
        %v2903 = vunpack.c.l.b16 %v1403
        %v2904 = vunpack.c.h.b16 %v1403
        %v2905 = vunpack.c.l.b16 %v1404
        %v2906 = vunpack.c.h.b16 %v1404
        %v2907 = vunpack.c.l.b16 %v1405
        %v2908 = vunpack.c.h.b16 %v1405
        %v2909 = vpack.c.b16 %v1959, %v1949
        %v2910 = vpack.c.b16 %v1960, %v1950
        %v2911 = vpack.c.b16 %v1961, %v1951
        %v2912 = vpack.c.b16 %v1962, %v1952
        %v2913 = vpack.c.b16 %v1963, %v1953
        %v2914 = vpack.c.b16 %v1964, %v1954
        %v2915 = vpack.c.b16 %v1965, %v1955
        %v2916 = vpack.c.b16 %v1966, %v1956
        %v2917 = vpack.c.b16 %v1967, %v1957
        %v2918 = vpack.c.b16 %v1968, %v1958
        %v2919 = vpack.c.b16 %v1979, %v1969
        %v2920 = vpack.c.b16 %v1980, %v1970
        %v2921 = vpack.c.b16 %v1981, %v1971
        %v2922 = vpack.c.b16 %v1982, %v1972
        %v2923 = vpack.c.b16 %v1983, %v1973
        %v2924 = vpack.c.b16 %v1984, %v1974
        %v2925 = vpack.c.b16 %v1985, %v1975
        %v2926 = vpack.c.b16 %v1986, %v1976
        %v2927 = vpack.c.b16 %v1987, %v1977
        %v2928 = vpack.c.b16 %v1988, %v1978
        %v2929 = vpack.c.b16 %v1999, %v1989
        %v2930 = vpack.c.b16 %v2000, %v1990
        %v2931 = vpack.c.b16 %v2001, %v1991
        %v2932 = vpack.c.b16 %v2002, %v1992
        %v2933 = vpack.c.b16 %v2003, %v1993
        %v2934 = vpack.c.b16 %v2004, %v1994
        %v2935 = vpack.c.b16 %v2005, %v1995
        %v2936 = vpack.c.b16 %v2006, %v1996
        %v2937 = vpack.c.b16 %v2007, %v1997
        %v2938 = vpack.c.b16 %v2008, %v1998
        %v2939 = vpack.c.b16 %v2019, %v2009
        %v2940 = vpack.c.b16 %v2020, %v2010
        %v2941 = vpack.c.b16 %v2021, %v2011
        %v2942 = vpack.c.b16 %v2022, %v2012
        %v2943 = vpack.c.b16 %v2023, %v2013
        %v2944 = vpack.c.b16 %v2024, %v2014
        %v2945 = vpack.c.b16 %v2025, %v2015
        %v2946 = vpack.c.b16 %v2026, %v2016
        %v2947 = vpack.c.b16 %v2027, %v2017
        %v2948 = vpack.c.b16 %v2028, %v2018
        %v2949 = vpack.c.b16 %v2039, %v2029
        %v2950 = vpack.c.b16 %v2040, %v2030
        %v2951 = vpack.c.b16 %v2041, %v2031
        %v2952 = vpack.c.b16 %v2042, %v2032
        %v2953 = vpack.c.b16 %v2043, %v2033
        %v2954 = vpack.c.b16 %v2044, %v2034
        %v2955 = vpack.c.b16 %v2045, %v2035
        %v2956 = vpack.c.b16 %v2046, %v2036
        %v2957 = vpack.c.b16 %v2047, %v2037
        %v2958 = vpack.c.b16 %v2048, %v2038
        %v2959 = vpack.c.b16 %v2059, %v2049
        %v2960 = vpack.c.b16 %v2060, %v2050
        %v2961 = vpack.c.b16 %v2061, %v2051
        %v2962 = vpack.c.b16 %v2062, %v2052
        %v2963 = vpack.c.b16 %v2063, %v2053
        %v2964 = vpack.c.b16 %v2064, %v2054
        %v2965 = vpack.c.b16 %v2065, %v2055
        %v2966 = vpack.c.b16 %v2066, %v2056
        %v2967 = vpack.c.b16 %v2067, %v2057
        %v2968 = vpack.c.b16 %v2068, %v2058
        %v2969 = vpack.c.b16 %v2079, %v2069
        %v2970 = vpack.c.b16 %v2080, %v2070
        %v2971 = vpack.c.b16 %v2081, %v2071
        %v2972 = vpack.c.b16 %v2082, %v2072
        %v2973 = vpack.c.b16 %v2083, %v2073
        %v2974 = vpack.c.b16 %v2084, %v2074
        %v2975 = vpack.c.b16 %v2085, %v2075
        %v2976 = vpack.c.b16 %v2086, %v2076
        %v2977 = vpack.c.b16 %v2087, %v2077
        %v2978 = vpack.c.b16 %v2088, %v2078
        %v2979 = vpack.c.b16 %v2099, %v2089
        %v2980 = vpack.c.b16 %v2100, %v2090
        %v2981 = vpack.c.b16 %v2101, %v2091
        %v2982 = vpack.c.b16 %v2102, %v2092
        %v2983 = vpack.c.b16 %v2103, %v2093
        %v2984 = vpack.c.b16 %v2104, %v2094
        %v2985 = vpack.c.b16 %v2105, %v2095
        %v2986 = vpack.c.b16 %v2106, %v2096
        %v2987 = vpack.c.b16 %v2107, %v2097
        %v2988 = vpack.c.b16 %v2108, %v2098
        %v2989 = vpack.c.b16 %v2119, %v2109
        %v2990 = vpack.c.b16 %v2120, %v2110
        %v2991 = vpack.c.b16 %v2121, %v2111
        %v2992 = vpack.c.b16 %v2122, %v2112
        %v2993 = vpack.c.b16 %v2123, %v2113
        %v2994 = vpack.c.b16 %v2124, %v2114
        %v2995 = vpack.c.b16 %v2125, %v2115
        %v2996 = vpack.c.b16 %v2126, %v2116
        %v2997 = vpack.c.b16 %v2127, %v2117
        %v2998 = vpack.c.b16 %v2128, %v2118
        %v2999 = vpack.c.b16 %v2139, %v2129
        %v3000 = vpack.c.b16 %v2140, %v2130
        %v3001 = vpack.c.b16 %v2141, %v2131
        %v3002 = vpack.c.b16 %v2142, %v2132
        %v3003 = vpack.c.b16 %v2143, %v2133
        %v3004 = vpack.c.b16 %v2144, %v2134
        %v3005 = vpack.c.b16 %v2145, %v2135
        %v3006 = vpack.c.b16 %v2146, %v2136
        %v3007 = vpack.c.b16 %v2147, %v2137
        %v3008 = vpack.c.b16 %v2148, %v2138
        %v3009 = vpack.c.b16 %v2159, %v2149
        %v3010 = vpack.c.b16 %v2160, %v2150
        %v3011 = vpack.c.b16 %v2161, %v2151
        %v3012 = vpack.c.b16 %v2162, %v2152
        %v3013 = vpack.c.b16 %v2163, %v2153
        %v3014 = vpack.c.b16 %v2164, %v2154
        %v3015 = vpack.c.b16 %v2165, %v2155
        %v3016 = vpack.c.b16 %v2166, %v2156
        %v3017 = vpack.c.b16 %v2167, %v2157
        %v3018 = vpack.c.b16 %v2168, %v2158
        %v3019 = vpack.c.b16 %v2179, %v2169
        %v3020 = vpack.c.b16 %v2180, %v2170
        %v3021 = vpack.c.b16 %v2181, %v2171
        %v3022 = vpack.c.b16 %v2182, %v2172
        %v3023 = vpack.c.b16 %v2183, %v2173
        %v3024 = vpack.c.b16 %v2184, %v2174
        %v3025 = vpack.c.b16 %v2185, %v2175
        %v3026 = vpack.c.b16 %v2186, %v2176
        %v3027 = vpack.c.b16 %v2187, %v2177
        %v3028 = vpack.c.b16 %v2188, %v2178
        %v3029 = vpack.c.b16 %v2199, %v2189
        %v3030 = vpack.c.b16 %v2200, %v2190
        %v3031 = vpack.c.b16 %v2201, %v2191
        %v3032 = vpack.c.b16 %v2202, %v2192
        %v3033 = vpack.c.b16 %v2203, %v2193
        %v3034 = vpack.c.b16 %v2204, %v2194
        %v3035 = vpack.c.b16 %v2205, %v2195
        %v3036 = vpack.c.b16 %v2206, %v2196
        %v3037 = vpack.c.b16 %v2207, %v2197
        %v3038 = vpack.c.b16 %v2208, %v2198
        %v3039 = vpack.c.b16 %v2219, %v2209
        %v3040 = vpack.c.b16 %v2220, %v2210
        %v3041 = vpack.c.b16 %v2221, %v2211
        %v3042 = vpack.c.b16 %v2222, %v2212
        %v3043 = vpack.c.b16 %v2223, %v2213
        %v3044 = vpack.c.b16 %v2224, %v2214
        %v3045 = vpack.c.b16 %v2225, %v2215
        %v3046 = vpack.c.b16 %v2226, %v2216
        %v3047 = vpack.c.b16 %v2227, %v2217
        %v3048 = vpack.c.b16 %v2228, %v2218
        %v3049 = vpack.c.b16 %v2239, %v2229
        %v3050 = vpack.c.b16 %v2240, %v2230
        %v3051 = vpack.c.b16 %v2241, %v2231
        %v3052 = vpack.c.b16 %v2242, %v2232
        %v3053 = vpack.c.b16 %v2243, %v2233
        %v3054 = vpack.c.b16 %v2244, %v2234
        %v3055 = vpack.c.b16 %v2245, %v2235
        %v3056 = vpack.c.b16 %v2246, %v2236
        %v3057 = vpack.c.b16 %v2247, %v2237
        %v3058 = vpack.c.b16 %v2248, %v2238
        %v3059 = vpack.c.b16 %v2259, %v2249
        %v3060 = vpack.c.b16 %v2260, %v2250
        %v3061 = vpack.c.b16 %v2261, %v2251
        %v3062 = vpack.c.b16 %v2262, %v2252
        %v3063 = vpack.c.b16 %v2263, %v2253
        %v3064 = vpack.c.b16 %v2264, %v2254
        %v3065 = vpack.c.b16 %v2265, %v2255
        %v3066 = vpack.c.b16 %v2266, %v2256
        %v3067 = vpack.c.b16 %v2267, %v2257
        %v3068 = vpack.c.b16 %v2268, %v2258
        %v3069 = vpack.c.b16 %v2279, %v2269
        %v3070 = vpack.c.b16 %v2280, %v2270
        %v3071 = vpack.c.b16 %v2281, %v2271
        %v3072 = vpack.c.b16 %v2282, %v2272
        %v3073 = vpack.c.b16 %v2283, %v2273
        %v3074 = vpack.c.b16 %v2284, %v2274
        %v3075 = vpack.c.b16 %v2285, %v2275
        %v3076 = vpack.c.b16 %v2286, %v2276
        %v3077 = vpack.c.b16 %v2287, %v2277
        %v3078 = vpack.c.b16 %v2288, %v2278
        %v3079 = vpack.c.b16 %v2299, %v2289
        %v3080 = vpack.c.b16 %v2300, %v2290
        %v3081 = vpack.c.b16 %v2301, %v2291
        %v3082 = vpack.c.b16 %v2302, %v2292
        %v3083 = vpack.c.b16 %v2303, %v2293
        %v3084 = vpack.c.b16 %v2304, %v2294
        %v3085 = vpack.c.b16 %v2305, %v2295
        %v3086 = vpack.c.b16 %v2306, %v2296
        %v3087 = vpack.c.b16 %v2307, %v2297
        %v3088 = vpack.c.b16 %v2308, %v2298
        %v3089 = vpack.c.b16 %v2319, %v2309
        %v3090 = vpack.c.b16 %v2320, %v2310
        %v3091 = vpack.c.b16 %v2321, %v2311
        %v3092 = vpack.c.b16 %v2322, %v2312
        %v3093 = vpack.c.b16 %v2323, %v2313
        %v3094 = vpack.c.b16 %v2324, %v2314
        %v3095 = vpack.c.b16 %v2325, %v2315
        %v3096 = vpack.c.b16 %v2326, %v2316
        %v3097 = vpack.c.b16 %v2327, %v2317
        %v3098 = vpack.c.b16 %v2328, %v2318
        %v3099 = vpack.c.b16 %v2339, %v2329
        %v3100 = vpack.c.b16 %v2340, %v2330
        %v3101 = vpack.c.b16 %v2341, %v2331
        %v3102 = vpack.c.b16 %v2342, %v2332
        %v3103 = vpack.c.b16 %v2343, %v2333
        %v3104 = vpack.c.b16 %v2344, %v2334
        %v3105 = vpack.c.b16 %v2345, %v2335
        %v3106 = vpack.c.b16 %v2346, %v2336
        %v3107 = vpack.c.b16 %v2347, %v2337
        %v3108 = vpack.c.b16 %v2348, %v2338
        %v3109 = vpack.c.b16 %v2359, %v2349
        %v3110 = vpack.c.b16 %v2360, %v2350
        %v3111 = vpack.c.b16 %v2361, %v2351
        %v3112 = vpack.c.b16 %v2362, %v2352
        %v3113 = vpack.c.b16 %v2363, %v2353
        %v3114 = vpack.c.b16 %v2364, %v2354
        %v3115 = vpack.c.b16 %v2365, %v2355
        %v3116 = vpack.c.b16 %v2366, %v2356
        %v3117 = vpack.c.b16 %v2367, %v2357
        %v3118 = vpack.c.b16 %v2368, %v2358
        %v3119 = vpack.c.b16 %v2379, %v2369
        %v3120 = vpack.c.b16 %v2380, %v2370
        %v3121 = vpack.c.b16 %v2381, %v2371
        %v3122 = vpack.c.b16 %v2382, %v2372
        %v3123 = vpack.c.b16 %v2383, %v2373
        %v3124 = vpack.c.b16 %v2384, %v2374
        %v3125 = vpack.c.b16 %v2385, %v2375
        %v3126 = vpack.c.b16 %v2386, %v2376
        %v3127 = vpack.c.b16 %v2387, %v2377
        %v3128 = vpack.c.b16 %v2388, %v2378
        %v3129 = vpack.c.b16 %v2399, %v2389
        %v3130 = vpack.c.b16 %v2400, %v2390
        %v3131 = vpack.c.b16 %v2401, %v2391
        %v3132 = vpack.c.b16 %v2402, %v2392
        %v3133 = vpack.c.b16 %v2403, %v2393
        %v3134 = vpack.c.b16 %v2404, %v2394
        %v3135 = vpack.c.b16 %v2405, %v2395
        %v3136 = vpack.c.b16 %v2406, %v2396
        %v3137 = vpack.c.b16 %v2407, %v2397
        %v3138 = vpack.c.b16 %v2408, %v2398
        %v3139 = vpack.c.b16 %v2419, %v2409
        %v3140 = vpack.c.b16 %v2420, %v2410
        %v3141 = vpack.c.b16 %v2421, %v2411
        %v3142 = vpack.c.b16 %v2422, %v2412
        %v3143 = vpack.c.b16 %v2423, %v2413
        %v3144 = vpack.c.b16 %v2424, %v2414
        %v3145 = vpack.c.b16 %v2425, %v2415
        %v3146 = vpack.c.b16 %v2426, %v2416
        %v3147 = vpack.c.b16 %v2427, %v2417
        %v3148 = vpack.c.b16 %v2428, %v2418
        %v3149 = vpack.c.b16 %v2439, %v2429
        %v3150 = vpack.c.b16 %v2440, %v2430
        %v3151 = vpack.c.b16 %v2441, %v2431
        %v3152 = vpack.c.b16 %v2442, %v2432
        %v3153 = vpack.c.b16 %v2443, %v2433
        %v3154 = vpack.c.b16 %v2444, %v2434
        %v3155 = vpack.c.b16 %v2445, %v2435
        %v3156 = vpack.c.b16 %v2446, %v2436
        %v3157 = vpack.c.b16 %v2447, %v2437
        %v3158 = vpack.c.b16 %v2448, %v2438
        %v3159 = vpack.c.b16 %v2459, %v2449
        %v3160 = vpack.c.b16 %v2460, %v2450
        %v3161 = vpack.c.b16 %v2461, %v2451
        %v3162 = vpack.c.b16 %v2462, %v2452
        %v3163 = vpack.c.b16 %v2463, %v2453
        %v3164 = vpack.c.b16 %v2464, %v2454
        %v3165 = vpack.c.b16 %v2465, %v2455
        %v3166 = vpack.c.b16 %v2466, %v2456
        %v3167 = vpack.c.b16 %v2467, %v2457
        %v3168 = vpack.c.b16 %v2468, %v2458
        %v3169 = vpack.c.b16 %v2479, %v2469
        %v3170 = vpack.c.b16 %v2480, %v2470
        %v3171 = vpack.c.b16 %v2481, %v2471
        %v3172 = vpack.c.b16 %v2482, %v2472
        %v3173 = vpack.c.b16 %v2483, %v2473
        %v3174 = vpack.c.b16 %v2484, %v2474
        %v3175 = vpack.c.b16 %v2485, %v2475
        %v3176 = vpack.c.b16 %v2486, %v2476
        %v3177 = vpack.c.b16 %v2487, %v2477
        %v3178 = vpack.c.b16 %v2488, %v2478
        %v3179 = vpack.c.b16 %v2499, %v2489
        %v3180 = vpack.c.b16 %v2500, %v2490
        %v3181 = vpack.c.b16 %v2501, %v2491
        %v3182 = vpack.c.b16 %v2502, %v2492
        %v3183 = vpack.c.b16 %v2503, %v2493
        %v3184 = vpack.c.b16 %v2504, %v2494
        %v3185 = vpack.c.b16 %v2505, %v2495
        %v3186 = vpack.c.b16 %v2506, %v2496
        %v3187 = vpack.c.b16 %v2507, %v2497
        %v3188 = vpack.c.b16 %v2508, %v2498
        %v3189 = vpack.c.b16 %v2519, %v2509
        %v3190 = vpack.c.b16 %v2520, %v2510
        %v3191 = vpack.c.b16 %v2521, %v2511
        %v3192 = vpack.c.b16 %v2522, %v2512
        %v3193 = vpack.c.b16 %v2523, %v2513
        %v3194 = vpack.c.b16 %v2524, %v2514
        %v3195 = vpack.c.b16 %v2525, %v2515
        %v3196 = vpack.c.b16 %v2526, %v2516
        %v3197 = vpack.c.b16 %v2527, %v2517
        %v3198 = vpack.c.b16 %v2528, %v2518
        %v3199 = vpack.c.b16 %v2539, %v2529
        %v3200 = vpack.c.b16 %v2540, %v2530
        %v3201 = vpack.c.b16 %v2541, %v2531
        %v3202 = vpack.c.b16 %v2542, %v2532
        %v3203 = vpack.c.b16 %v2543, %v2533
        %v3204 = vpack.c.b16 %v2544, %v2534
        %v3205 = vpack.c.b16 %v2545, %v2535
        %v3206 = vpack.c.b16 %v2546, %v2536
        %v3207 = vpack.c.b16 %v2547, %v2537
        %v3208 = vpack.c.b16 %v2548, %v2538
        %v3209 = vpack.c.b16 %v2559, %v2549
        %v3210 = vpack.c.b16 %v2560, %v2550
        %v3211 = vpack.c.b16 %v2561, %v2551
        %v3212 = vpack.c.b16 %v2562, %v2552
        %v3213 = vpack.c.b16 %v2563, %v2553
        %v3214 = vpack.c.b16 %v2564, %v2554
        %v3215 = vpack.c.b16 %v2565, %v2555
        %v3216 = vpack.c.b16 %v2566, %v2556
        %v3217 = vpack.c.b16 %v2567, %v2557
        %v3218 = vpack.c.b16 %v2568, %v2558
        %v3219 = vpack.c.b16 %v2579, %v2569
        %v3220 = vpack.c.b16 %v2580, %v2570
        %v3221 = vpack.c.b16 %v2581, %v2571
        %v3222 = vpack.c.b16 %v2582, %v2572
        %v3223 = vpack.c.b16 %v2583, %v2573
        %v3224 = vpack.c.b16 %v2584, %v2574
        %v3225 = vpack.c.b16 %v2585, %v2575
        %v3226 = vpack.c.b16 %v2586, %v2576
        %v3227 = vpack.c.b16 %v2587, %v2577
        %v3228 = vpack.c.b16 %v2588, %v2578
        %v3229 = vpack.c.b16 %v2599, %v2589
        %v3230 = vpack.c.b16 %v2600, %v2590
        %v3231 = vpack.c.b16 %v2601, %v2591
        %v3232 = vpack.c.b16 %v2602, %v2592
        %v3233 = vpack.c.b16 %v2603, %v2593
        %v3234 = vpack.c.b16 %v2604, %v2594
        %v3235 = vpack.c.b16 %v2605, %v2595
        %v3236 = vpack.c.b16 %v2606, %v2596
        %v3237 = vpack.c.b16 %v2607, %v2597
        %v3238 = vpack.c.b16 %v2608, %v2598
        %v3239 = vpack.c.b16 %v2619, %v2609
        %v3240 = vpack.c.b16 %v2620, %v2610
        %v3241 = vpack.c.b16 %v2621, %v2611
        %v3242 = vpack.c.b16 %v2622, %v2612
        %v3243 = vpack.c.b16 %v2623, %v2613
        %v3244 = vpack.c.b16 %v2624, %v2614
        %v3245 = vpack.c.b16 %v2625, %v2615
        %v3246 = vpack.c.b16 %v2626, %v2616
        %v3247 = vpack.c.b16 %v2627, %v2617
        %v3248 = vpack.c.b16 %v2628, %v2618
        %v3249 = vpack.c.b16 %v2639, %v2629
        %v3250 = vpack.c.b16 %v2640, %v2630
        %v3251 = vpack.c.b16 %v2641, %v2631
        %v3252 = vpack.c.b16 %v2642, %v2632
        %v3253 = vpack.c.b16 %v2643, %v2633
        %v3254 = vpack.c.b16 %v2644, %v2634
        %v3255 = vpack.c.b16 %v2645, %v2635
        %v3256 = vpack.c.b16 %v2646, %v2636
        %v3257 = vpack.c.b16 %v2647, %v2637
        %v3258 = vpack.c.b16 %v2648, %v2638
        %v3259 = vpack.c.b16 %v2659, %v2649
        %v3260 = vpack.c.b16 %v2660, %v2650
        %v3261 = vpack.c.b16 %v2661, %v2651
        %v3262 = vpack.c.b16 %v2662, %v2652
        %v3263 = vpack.c.b16 %v2663, %v2653
        %v3264 = vpack.c.b16 %v2664, %v2654
        %v3265 = vpack.c.b16 %v2665, %v2655
        %v3266 = vpack.c.b16 %v2666, %v2656
        %v3267 = vpack.c.b16 %v2667, %v2657
        %v3268 = vpack.c.b16 %v2668, %v2658
        %v3269 = vpack.c.b16 %v2679, %v2669
        %v3270 = vpack.c.b16 %v2680, %v2670
        %v3271 = vpack.c.b16 %v2681, %v2671
        %v3272 = vpack.c.b16 %v2682, %v2672
        %v3273 = vpack.c.b16 %v2683, %v2673
        %v3274 = vpack.c.b16 %v2684, %v2674
        %v3275 = vpack.c.b16 %v2685, %v2675
        %v3276 = vpack.c.b16 %v2686, %v2676
        %v3277 = vpack.c.b16 %v2687, %v2677
        %v3278 = vpack.c.b16 %v2688, %v2678
        %v3279 = vpack.c.b16 %v2699, %v2689
        %v3280 = vpack.c.b16 %v2700, %v2690
        %v3281 = vpack.c.b16 %v2701, %v2691
        %v3282 = vpack.c.b16 %v2702, %v2692
        %v3283 = vpack.c.b16 %v2703, %v2693
        %v3284 = vpack.c.b16 %v2704, %v2694
        %v3285 = vpack.c.b16 %v2705, %v2695
        %v3286 = vpack.c.b16 %v2706, %v2696
        %v3287 = vpack.c.b16 %v2707, %v2697
        %v3288 = vpack.c.b16 %v2708, %v2698
        %v3289 = vpack.c.b16 %v2719, %v2709
        %v3290 = vpack.c.b16 %v2720, %v2710
        %v3291 = vpack.c.b16 %v2721, %v2711
        %v3292 = vpack.c.b16 %v2722, %v2712
        %v3293 = vpack.c.b16 %v2723, %v2713
        %v3294 = vpack.c.b16 %v2724, %v2714
        %v3295 = vpack.c.b16 %v2725, %v2715
        %v3296 = vpack.c.b16 %v2726, %v2716
        %v3297 = vpack.c.b16 %v2727, %v2717
        %v3298 = vpack.c.b16 %v2728, %v2718
        %v3299 = vpack.c.b16 %v2739, %v2729
        %v3300 = vpack.c.b16 %v2740, %v2730
        %v3301 = vpack.c.b16 %v2741, %v2731
        %v3302 = vpack.c.b16 %v2742, %v2732
        %v3303 = vpack.c.b16 %v2743, %v2733
        %v3304 = vpack.c.b16 %v2744, %v2734
        %v3305 = vpack.c.b16 %v2745, %v2735
        %v3306 = vpack.c.b16 %v2746, %v2736
        %v3307 = vpack.c.b16 %v2747, %v2737
        %v3308 = vpack.c.b16 %v2748, %v2738
        %v3309 = vpack.c.b16 %v2759, %v2749
        %v3310 = vpack.c.b16 %v2760, %v2750
        %v3311 = vpack.c.b16 %v2761, %v2751
        %v3312 = vpack.c.b16 %v2762, %v2752
        %v3313 = vpack.c.b16 %v2763, %v2753
        %v3314 = vpack.c.b16 %v2764, %v2754
        %v3315 = vpack.c.b16 %v2765, %v2755
        %v3316 = vpack.c.b16 %v2766, %v2756
        %v3317 = vpack.c.b16 %v2767, %v2757
        %v3318 = vpack.c.b16 %v2768, %v2758
        %v3319 = vpack.c.b16 %v2779, %v2769
        %v3320 = vpack.c.b16 %v2780, %v2770
        %v3321 = vpack.c.b16 %v2781, %v2771
        %v3322 = vpack.c.b16 %v2782, %v2772
        %v3323 = vpack.c.b16 %v2783, %v2773
        %v3324 = vpack.c.b16 %v2784, %v2774
        %v3325 = vpack.c.b16 %v2785, %v2775
        %v3326 = vpack.c.b16 %v2786, %v2776
        %v3327 = vpack.c.b16 %v2787, %v2777
        %v3328 = vpack.c.b16 %v2788, %v2778
        %v3329 = vpack.c.b16 %v2799, %v2789
        %v3330 = vpack.c.b16 %v2800, %v2790
        %v3331 = vpack.c.b16 %v2801, %v2791
        %v3332 = vpack.c.b16 %v2802, %v2792
        %v3333 = vpack.c.b16 %v2803, %v2793
        %v3334 = vpack.c.b16 %v2804, %v2794
        %v3335 = vpack.c.b16 %v2805, %v2795
        %v3336 = vpack.c.b16 %v2806, %v2796
        %v3337 = vpack.c.b16 %v2807, %v2797
        %v3338 = vpack.c.b16 %v2808, %v2798
        %v3339 = vpack.c.b16 %v2819, %v2809
        %v3340 = vpack.c.b16 %v2820, %v2810
        %v3341 = vpack.c.b16 %v2821, %v2811
        %v3342 = vpack.c.b16 %v2822, %v2812
        %v3343 = vpack.c.b16 %v2823, %v2813
        %v3344 = vpack.c.b16 %v2824, %v2814
        %v3345 = vpack.c.b16 %v2825, %v2815
        %v3346 = vpack.c.b16 %v2826, %v2816
        %v3347 = vpack.c.b16 %v2827, %v2817
        %v3348 = vpack.c.b16 %v2828, %v2818
        %v3349 = vpack.c.b16 %v2839, %v2829
        %v3350 = vpack.c.b16 %v2840, %v2830
        %v3351 = vpack.c.b16 %v2841, %v2831
        %v3352 = vpack.c.b16 %v2842, %v2832
        %v3353 = vpack.c.b16 %v2843, %v2833
        %v3354 = vpack.c.b16 %v2844, %v2834
        %v3355 = vpack.c.b16 %v2845, %v2835
        %v3356 = vpack.c.b16 %v2846, %v2836
        %v3357 = vpack.c.b16 %v2847, %v2837
        %v3358 = vpack.c.b16 %v2848, %v2838
        %v3359 = vpack.c.b16 %v2859, %v2849
        %v3360 = vpack.c.b16 %v2860, %v2850
        %v3361 = vpack.c.b16 %v2861, %v2851
        %v3362 = vpack.c.b16 %v2862, %v2852
        %v3363 = vpack.c.b16 %v2863, %v2853
        %v3364 = vpack.c.b16 %v2864, %v2854
        %v3365 = vpack.c.b16 %v2865, %v2855
        %v3366 = vpack.c.b16 %v2866, %v2856
        %v3367 = vpack.c.b16 %v2867, %v2857
        %v3368 = vpack.c.b16 %v2868, %v2858
        %v3369 = vpack.c.b16 %v2879, %v2869
        %v3370 = vpack.c.b16 %v2880, %v2870
        %v3371 = vpack.c.b16 %v2881, %v2871
        %v3372 = vpack.c.b16 %v2882, %v2872
        %v3373 = vpack.c.b16 %v2883, %v2873
        %v3374 = vpack.c.b16 %v2884, %v2874
        %v3375 = vpack.c.b16 %v2885, %v2875
        %v3376 = vpack.c.b16 %v2886, %v2876
        %v3377 = vpack.c.b16 %v2887, %v2877
        %v3378 = vpack.c.b16 %v2888, %v2878
        %v3379 = vpack.c.b16 %v2899, %v2889
        %v3380 = vpack.c.b16 %v2900, %v2890
        %v3381 = vpack.c.b16 %v2901, %v2891
        %v3382 = vpack.c.b16 %v2902, %v2892
        %v3383 = vpack.c.b16 %v2903, %v2893
        %v3384 = vpack.c.b16 %v2904, %v2894
        %v3385 = vpack.c.b16 %v2905, %v2895
        %v3386 = vpack.c.b16 %v2906, %v2896
        %v3387 = vpack.c.b16 %v2907, %v2897
        %v3388 = vpack.c.b16 %v2908, %v2898
        %3869 = vmatprep.subr.bf16.mxu0 %v2910
        %3870 = vmatpush1.bf16.msra.mxu0 %v2909
        %3871 = vmatprep.subr.bf16.mxu0 %v2920
        %3872 = vmatpush1.bf16.msra.mxu0 %v2919
        %3873 = vmatprep.subr.bf16.mxu0 %v2930
        %3874 = vmatpush1.bf16.msra.mxu0 %v2929
        %3875 = vmatprep.subr.bf16.mxu0 %v2940
        %3876 = vmatpush1.bf16.msra.mxu0 %v2939
        %3877 = vmatprep.subr.bf16.mxu0 %v2950
        %3878 = vmatpush1.bf16.msra.mxu0 %v2949
        %3879 = vmatprep.subr.bf16.mxu0 %v2960
        %3880 = vmatpush1.bf16.msra.mxu0 %v2959
        %3881 = vmatprep.subr.bf16.mxu0 %v2970
        %3882 = vmatpush1.bf16.msra.mxu0 %v2969
        %3883 = vmatprep.subr.bf16.mxu0 %v2980
        %3884 = vmatpush1.bf16.msra.mxu0 %v2979
        %3885 = vmatprep.subr.bf16.mxu0 %v2990
        %3886 = vmatpush1.bf16.msra.mxu0 %v2989
        %3887 = vmatprep.subr.bf16.mxu0 %v3000
        %3888 = vmatpush1.bf16.msra.mxu0 %v2999
        %3889 = vmatprep.subr.bf16.mxu0 %v3010
        %3890 = vmatpush1.bf16.msra.mxu0 %v3009
        %3891 = vmatprep.subr.bf16.mxu0 %v3020
        %3892 = vmatpush1.bf16.msra.mxu0 %v3019
        %3893 = vmatprep.subr.bf16.mxu0 %v3030
        %3894 = vmatpush1.bf16.msra.mxu0 %v3029
        %3895 = vmatprep.subr.bf16.mxu0 %v3040
        %3896 = vmatpush1.bf16.msra.mxu0 %v3039
        %3897 = vmatprep.subr.bf16.mxu0 %v3050
        %3898 = vmatpush1.bf16.msra.mxu0 %v3049
        %3899 = vmatprep.subr.bf16.mxu0 %v3060
        %3900 = vmatpush1.bf16.msra.mxu0 %v3059
        %3901 = vmatprep.mubr.bf16.mxu0 %v1434
        %3902 = vmatmul.mubr.bf16.gmra.mrb[0].mxu0 %v1427
        %v3903 = vpop.f32.mrb[0].mxu0
        %v3904 = vadd.f32 0.0, %v3903
        %v3905 = vpop.f32.mrb[0].mxu0
        %v3906 = vadd.f32 0.0, %v3905
        %v3907 = vpop.f32.mrb[0].mxu0
        %v3908 = vpop.f32.mrb[0].mxu0
        %3909 = vdwg.mxu0
        %3910 = vmatprep.subr.bf16.mxu0 %v3070
        %3911 = vmatpush1.bf16.msra.mxu0 %v3069
        %3912 = vmatprep.subr.bf16.mxu0 %v3080
        %3913 = vmatpush1.bf16.msra.mxu0 %v3079
        %3914 = vmatprep.subr.bf16.mxu0 %v3090
        %3915 = vmatpush1.bf16.msra.mxu0 %v3089
        %3916 = vmatprep.subr.bf16.mxu0 %v3100
        %3917 = vmatpush1.bf16.msra.mxu0 %v3099
        %3918 = vmatprep.subr.bf16.mxu0 %v3110
        %3919 = vmatpush1.bf16.msra.mxu0 %v3109
        %3920 = vmatprep.subr.bf16.mxu0 %v3120
        %3921 = vmatpush1.bf16.msra.mxu0 %v3119
        %3922 = vmatprep.subr.bf16.mxu0 %v3130
        %3923 = vmatpush1.bf16.msra.mxu0 %v3129
        %3924 = vmatprep.subr.bf16.mxu0 %v3140
        %3925 = vmatpush1.bf16.msra.mxu0 %v3139
        %3926 = vmatprep.subr.bf16.mxu0 %v3150
        %3927 = vmatpush1.bf16.msra.mxu0 %v3149
        %3928 = vmatprep.subr.bf16.mxu0 %v3160
        %3929 = vmatpush1.bf16.msra.mxu0 %v3159
        %3930 = vmatprep.subr.bf16.mxu0 %v3170
        %3931 = vmatpush1.bf16.msra.mxu0 %v3169
        %3932 = vmatprep.subr.bf16.mxu0 %v3180
        %3933 = vmatpush1.bf16.msra.mxu0 %v3179
        %3934 = vmatprep.subr.bf16.mxu0 %v3190
        %3935 = vmatpush1.bf16.msra.mxu0 %v3189
        %3936 = vmatprep.subr.bf16.mxu0 %v3200
        %3937 = vmatpush1.bf16.msra.mxu0 %v3199
        %3938 = vmatprep.subr.bf16.mxu0 %v3210
        %3939 = vmatpush1.bf16.msra.mxu0 %v3209
        %3940 = vmatprep.subr.bf16.mxu0 %v3220
        %3941 = vmatpush1.bf16.msra.mxu0 %v3219
        %3942 = vmatprep.mubr.bf16.mxu0 %v1448
        %3943 = vmatmul.mubr.bf16.gmra.mrb[0].mxu0 %v1441
        %v3944 = vpop.f32.mrb[0].mxu0
        %v3945 = vadd.f32 %v3904, %v3944
        %v3946 = vpop.f32.mrb[0].mxu0
        %v3947 = vadd.f32 %v3906, %v3946
        %v3948 = vpop.f32.mrb[0].mxu0
        %v3949 = vpop.f32.mrb[0].mxu0
        %3950 = vdwg.mxu0
        %3951 = vmatprep.subr.bf16.mxu0 %v3230
        %3952 = vmatpush1.bf16.msra.mxu0 %v3229
        %3953 = vmatprep.subr.bf16.mxu0 %v3240
        %3954 = vmatpush1.bf16.msra.mxu0 %v3239
        %3955 = vmatprep.subr.bf16.mxu0 %v3250
        %3956 = vmatpush1.bf16.msra.mxu0 %v3249
        %3957 = vmatprep.subr.bf16.mxu0 %v3260
        %3958 = vmatpush1.bf16.msra.mxu0 %v3259
        %3959 = vmatprep.subr.bf16.mxu0 %v3270
        %3960 = vmatpush1.bf16.msra.mxu0 %v3269
        %3961 = vmatprep.subr.bf16.mxu0 %v3280
        %3962 = vmatpush1.bf16.msra.mxu0 %v3279
        %3963 = vmatprep.subr.bf16.mxu0 %v3290
        %3964 = vmatpush1.bf16.msra.mxu0 %v3289
        %3965 = vmatprep.subr.bf16.mxu0 %v3300
        %3966 = vmatpush1.bf16.msra.mxu0 %v3299
        %3967 = vmatprep.subr.bf16.mxu0 %v3310
        %3968 = vmatpush1.bf16.msra.mxu0 %v3309
        %3969 = vmatprep.subr.bf16.mxu0 %v3320
        %3970 = vmatpush1.bf16.msra.mxu0 %v3319
        %3971 = vmatprep.subr.bf16.mxu0 %v3330
        %3972 = vmatpush1.bf16.msra.mxu0 %v3329
        %3973 = vmatprep.subr.bf16.mxu0 %v3340
        %3974 = vmatpush1.bf16.msra.mxu0 %v3339
        %3975 = vmatprep.subr.bf16.mxu0 %v3350
        %3976 = vmatpush1.bf16.msra.mxu0 %v3349
        %3977 = vmatprep.subr.bf16.mxu0 %v3360
        %3978 = vmatpush1.bf16.msra.mxu0 %v3359
        %3979 = vmatprep.subr.bf16.mxu0 %v3370
        %3980 = vmatpush1.bf16.msra.mxu0 %v3369
        %3981 = vmatprep.subr.bf16.mxu0 %v3380
        %3982 = vmatpush1.bf16.msra.mxu0 %v3379
        %3983 = vmatprep.mubr.bf16.mxu0 %v1462
        %3984 = vmatmul.mubr.bf16.gmra.mrb[0].mxu0 %v1455
        %v3985 = vpop.f32.mrb[0].mxu0
        %v3986 = vadd.f32 %v3945, %v3985
        %v3987 = vpop.f32.mrb[0].mxu0
        %v3988 = vadd.f32 %v3947, %v3987
        %v3989 = vpop.f32.mrb[0].mxu0
        %v3990 = vpop.f32.mrb[0].mxu0
        %3991 = vdwg.mxu0
        %3992 = vmatprep.subr.bf16.mxu0 %v2912
        %3993 = vmatpush1.bf16.msra.mxu0 %v2911
        %3994 = vmatprep.subr.bf16.mxu0 %v2922
        %3995 = vmatpush1.bf16.msra.mxu0 %v2921
        %3996 = vmatprep.subr.bf16.mxu0 %v2932
        %3997 = vmatpush1.bf16.msra.mxu0 %v2931
        %3998 = vmatprep.subr.bf16.mxu0 %v2942
        %3999 = vmatpush1.bf16.msra.mxu0 %v2941
        %4000 = vmatprep.subr.bf16.mxu0 %v2952
        %4001 = vmatpush1.bf16.msra.mxu0 %v2951
        %4002 = vmatprep.subr.bf16.mxu0 %v2962
        %4003 = vmatpush1.bf16.msra.mxu0 %v2961
        %4004 = vmatprep.subr.bf16.mxu0 %v2972
        %4005 = vmatpush1.bf16.msra.mxu0 %v2971
        %4006 = vmatprep.subr.bf16.mxu0 %v2982
        %4007 = vmatpush1.bf16.msra.mxu0 %v2981
        %4008 = vmatprep.subr.bf16.mxu0 %v2992
        %4009 = vmatpush1.bf16.msra.mxu0 %v2991
        %4010 = vmatprep.subr.bf16.mxu0 %v3002
        %4011 = vmatpush1.bf16.msra.mxu0 %v3001
        %4012 = vmatprep.subr.bf16.mxu0 %v3012
        %4013 = vmatpush1.bf16.msra.mxu0 %v3011
        %4014 = vmatprep.subr.bf16.mxu0 %v3022
        %4015 = vmatpush1.bf16.msra.mxu0 %v3021
        %4016 = vmatprep.subr.bf16.mxu0 %v3032
        %4017 = vmatpush1.bf16.msra.mxu0 %v3031
        %4018 = vmatprep.subr.bf16.mxu0 %v3042
        %4019 = vmatpush1.bf16.msra.mxu0 %v3041
        %4020 = vmatprep.subr.bf16.mxu0 %v3052
        %4021 = vmatpush1.bf16.msra.mxu0 %v3051
        %4022 = vmatprep.subr.bf16.mxu0 %v3062
        %4023 = vmatpush1.bf16.msra.mxu0 %v3061
        %4024 = vmatprep.mubr.bf16.mxu0 %v1434
        %4025 = vmatmul.mubr.bf16.gmra.mrb[0].mxu0 %v1427
        %v4026 = vpop.f32.mrb[0].mxu0
        %v4027 = vadd.f32 0.0, %v4026
        %v4028 = vpop.f32.mrb[0].mxu0
        %v4029 = vadd.f32 0.0, %v4028
        %v4030 = vpop.f32.mrb[0].mxu0
        %v4031 = vpop.f32.mrb[0].mxu0
        %4032 = vdwg.mxu0
        %4033 = vmatprep.subr.bf16.mxu0 %v3072
        %4034 = vmatpush1.bf16.msra.mxu0 %v3071
        %4035 = vmatprep.subr.bf16.mxu0 %v3082
        %4036 = vmatpush1.bf16.msra.mxu0 %v3081
        %4037 = vmatprep.subr.bf16.mxu0 %v3092
        %4038 = vmatpush1.bf16.msra.mxu0 %v3091
        %4039 = vmatprep.subr.bf16.mxu0 %v3102
        %4040 = vmatpush1.bf16.msra.mxu0 %v3101
        %4041 = vmatprep.subr.bf16.mxu0 %v3112
        %4042 = vmatpush1.bf16.msra.mxu0 %v3111
        %4043 = vmatprep.subr.bf16.mxu0 %v3122
        %4044 = vmatpush1.bf16.msra.mxu0 %v3121
        %4045 = vmatprep.subr.bf16.mxu0 %v3132
        %4046 = vmatpush1.bf16.msra.mxu0 %v3131
        %4047 = vmatprep.subr.bf16.mxu0 %v3142
        %4048 = vmatpush1.bf16.msra.mxu0 %v3141
        %4049 = vmatprep.subr.bf16.mxu0 %v3152
        %4050 = vmatpush1.bf16.msra.mxu0 %v3151
        %4051 = vmatprep.subr.bf16.mxu0 %v3162
        %4052 = vmatpush1.bf16.msra.mxu0 %v3161
        %4053 = vmatprep.subr.bf16.mxu0 %v3172
        %4054 = vmatpush1.bf16.msra.mxu0 %v3171
        %4055 = vmatprep.subr.bf16.mxu0 %v3182
        %4056 = vmatpush1.bf16.msra.mxu0 %v3181
        %4057 = vmatprep.subr.bf16.mxu0 %v3192
        %4058 = vmatpush1.bf16.msra.mxu0 %v3191
        %4059 = vmatprep.subr.bf16.mxu0 %v3202
        %4060 = vmatpush1.bf16.msra.mxu0 %v3201
        %4061 = vmatprep.subr.bf16.mxu0 %v3212
        %4062 = vmatpush1.bf16.msra.mxu0 %v3211
        %4063 = vmatprep.subr.bf16.mxu0 %v3222
        %4064 = vmatpush1.bf16.msra.mxu0 %v3221
        %4065 = vmatprep.mubr.bf16.mxu0 %v1448
        %4066 = vmatmul.mubr.bf16.gmra.mrb[0].mxu0 %v1441
        %v4067 = vpop.f32.mrb[0].mxu0
        %v4068 = vadd.f32 %v4027, %v4067
        %v4069 = vpop.f32.mrb[0].mxu0
        %v4070 = vadd.f32 %v4029, %v4069
        %v4071 = vpop.f32.mrb[0].mxu0
        %v4072 = vpop.f32.mrb[0].mxu0
        %4073 = vdwg.mxu0
        %4074 = vmatprep.subr.bf16.mxu0 %v3232
        %4075 = vmatpush1.bf16.msra.mxu0 %v3231
        %4076 = vmatprep.subr.bf16.mxu0 %v3242
        %4077 = vmatpush1.bf16.msra.mxu0 %v3241
        %4078 = vmatprep.subr.bf16.mxu0 %v3252
        %4079 = vmatpush1.bf16.msra.mxu0 %v3251
        %4080 = vmatprep.subr.bf16.mxu0 %v3262
        %4081 = vmatpush1.bf16.msra.mxu0 %v3261
        %4082 = vmatprep.subr.bf16.mxu0 %v3272
        %4083 = vmatpush1.bf16.msra.mxu0 %v3271
        %4084 = vmatprep.subr.bf16.mxu0 %v3282
        %4085 = vmatpush1.bf16.msra.mxu0 %v3281
        %4086 = vmatprep.subr.bf16.mxu0 %v3292
        %4087 = vmatpush1.bf16.msra.mxu0 %v3291
        %4088 = vmatprep.subr.bf16.mxu0 %v3302
        %4089 = vmatpush1.bf16.msra.mxu0 %v3301
        %4090 = vmatprep.subr.bf16.mxu0 %v3312
        %4091 = vmatpush1.bf16.msra.mxu0 %v3311
        %4092 = vmatprep.subr.bf16.mxu0 %v3322
        %4093 = vmatpush1.bf16.msra.mxu0 %v3321
        %4094 = vmatprep.subr.bf16.mxu0 %v3332
        %4095 = vmatpush1.bf16.msra.mxu0 %v3331
        %4096 = vmatprep.subr.bf16.mxu0 %v3342
        %4097 = vmatpush1.bf16.msra.mxu0 %v3341
        %4098 = vmatprep.subr.bf16.mxu0 %v3352
        %4099 = vmatpush1.bf16.msra.mxu0 %v3351
        %4100 = vmatprep.subr.bf16.mxu0 %v3362
        %4101 = vmatpush1.bf16.msra.mxu0 %v3361
        %4102 = vmatprep.subr.bf16.mxu0 %v3372
        %4103 = vmatpush1.bf16.msra.mxu0 %v3371
        %4104 = vmatprep.subr.bf16.mxu0 %v3382
        %4105 = vmatpush1.bf16.msra.mxu0 %v3381
        %4106 = vmatprep.mubr.bf16.mxu0 %v1462
        %4107 = vmatmul.mubr.bf16.gmra.mrb[0].mxu0 %v1455
        %v4108 = vpop.f32.mrb[0].mxu0
        %v4109 = vadd.f32 %v4068, %v4108
        %v4110 = vpop.f32.mrb[0].mxu0
        %v4111 = vadd.f32 %v4070, %v4110
        %v4112 = vpop.f32.mrb[0].mxu0
        %v4113 = vpop.f32.mrb[0].mxu0
        %4114 = vdwg.mxu0
        %4115 = vmatprep.subr.bf16.mxu0 %v2914
        %4116 = vmatpush1.bf16.msra.mxu0 %v2913
        %4117 = vmatprep.subr.bf16.mxu0 %v2924
        %4118 = vmatpush1.bf16.msra.mxu0 %v2923
        %4119 = vmatprep.subr.bf16.mxu0 %v2934
        %4120 = vmatpush1.bf16.msra.mxu0 %v2933
        %4121 = vmatprep.subr.bf16.mxu0 %v2944
        %4122 = vmatpush1.bf16.msra.mxu0 %v2943
        %4123 = vmatprep.subr.bf16.mxu0 %v2954
        %4124 = vmatpush1.bf16.msra.mxu0 %v2953
        %4125 = vmatprep.subr.bf16.mxu0 %v2964
        %4126 = vmatpush1.bf16.msra.mxu0 %v2963
        %4127 = vmatprep.subr.bf16.mxu0 %v2974
        %4128 = vmatpush1.bf16.msra.mxu0 %v2973
        %4129 = vmatprep.subr.bf16.mxu0 %v2984
        %4130 = vmatpush1.bf16.msra.mxu0 %v2983
        %4131 = vmatprep.subr.bf16.mxu0 %v2994
        %4132 = vmatpush1.bf16.msra.mxu0 %v2993
        %4133 = vmatprep.subr.bf16.mxu0 %v3004
        %4134 = vmatpush1.bf16.msra.mxu0 %v3003
        %4135 = vmatprep.subr.bf16.mxu0 %v3014
        %4136 = vmatpush1.bf16.msra.mxu0 %v3013
        %4137 = vmatprep.subr.bf16.mxu0 %v3024
        %4138 = vmatpush1.bf16.msra.mxu0 %v3023
        %4139 = vmatprep.subr.bf16.mxu0 %v3034
        %4140 = vmatpush1.bf16.msra.mxu0 %v3033
        %4141 = vmatprep.subr.bf16.mxu0 %v3044
        %4142 = vmatpush1.bf16.msra.mxu0 %v3043
        %4143 = vmatprep.subr.bf16.mxu0 %v3054
        %4144 = vmatpush1.bf16.msra.mxu0 %v3053
        %4145 = vmatprep.subr.bf16.mxu0 %v3064
        %4146 = vmatpush1.bf16.msra.mxu0 %v3063
        %4147 = vmatprep.mubr.bf16.mxu0 %v1434
        %4148 = vmatmul.mubr.bf16.gmra.mrb[0].mxu0 %v1427
        %v4149 = vpop.f32.mrb[0].mxu0
        %v4150 = vadd.f32 0.0, %v4149
        %v4151 = vpop.f32.mrb[0].mxu0
        %v4152 = vadd.f32 0.0, %v4151
        %v4153 = vpop.f32.mrb[0].mxu0
        %v4154 = vpop.f32.mrb[0].mxu0
        %4155 = vdwg.mxu0
        %4156 = vmatprep.subr.bf16.mxu0 %v3074
        %4157 = vmatpush1.bf16.msra.mxu0 %v3073
        %4158 = vmatprep.subr.bf16.mxu0 %v3084
        %4159 = vmatpush1.bf16.msra.mxu0 %v3083
        %4160 = vmatprep.subr.bf16.mxu0 %v3094
        %4161 = vmatpush1.bf16.msra.mxu0 %v3093
        %4162 = vmatprep.subr.bf16.mxu0 %v3104
        %4163 = vmatpush1.bf16.msra.mxu0 %v3103
        %4164 = vmatprep.subr.bf16.mxu0 %v3114
        %4165 = vmatpush1.bf16.msra.mxu0 %v3113
        %4166 = vmatprep.subr.bf16.mxu0 %v3124
        %4167 = vmatpush1.bf16.msra.mxu0 %v3123
        %4168 = vmatprep.subr.bf16.mxu0 %v3134
        %4169 = vmatpush1.bf16.msra.mxu0 %v3133
        %4170 = vmatprep.subr.bf16.mxu0 %v3144
        %4171 = vmatpush1.bf16.msra.mxu0 %v3143
        %4172 = vmatprep.subr.bf16.mxu0 %v3154
        %4173 = vmatpush1.bf16.msra.mxu0 %v3153
        %4174 = vmatprep.subr.bf16.mxu0 %v3164
        %4175 = vmatpush1.bf16.msra.mxu0 %v3163
        %4176 = vmatprep.subr.bf16.mxu0 %v3174
        %4177 = vmatpush1.bf16.msra.mxu0 %v3173
        %4178 = vmatprep.subr.bf16.mxu0 %v3184
        %4179 = vmatpush1.bf16.msra.mxu0 %v3183
        %4180 = vmatprep.subr.bf16.mxu0 %v3194
        %4181 = vmatpush1.bf16.msra.mxu0 %v3193
        %4182 = vmatprep.subr.bf16.mxu0 %v3204
        %4183 = vmatpush1.bf16.msra.mxu0 %v3203
        %4184 = vmatprep.subr.bf16.mxu0 %v3214
        %4185 = vmatpush1.bf16.msra.mxu0 %v3213
        %4186 = vmatprep.subr.bf16.mxu0 %v3224
        %4187 = vmatpush1.bf16.msra.mxu0 %v3223
        %4188 = vmatprep.mubr.bf16.mxu0 %v1448
        %4189 = vmatmul.mubr.bf16.gmra.mrb[0].mxu0 %v1441
        %v4190 = vpop.f32.mrb[0].mxu0
        %v4191 = vadd.f32 %v4150, %v4190
        %v4192 = vpop.f32.mrb[0].mxu0
        %v4193 = vadd.f32 %v4152, %v4192
        %v4194 = vpop.f32.mrb[0].mxu0
        %v4195 = vpop.f32.mrb[0].mxu0
        %4196 = vdwg.mxu0
        %4197 = vmatprep.subr.bf16.mxu0 %v3234
        %4198 = vmatpush1.bf16.msra.mxu0 %v3233
        %4199 = vmatprep.subr.bf16.mxu0 %v3244
        %4200 = vmatpush1.bf16.msra.mxu0 %v3243
        %4201 = vmatprep.subr.bf16.mxu0 %v3254
        %4202 = vmatpush1.bf16.msra.mxu0 %v3253
        %4203 = vmatprep.subr.bf16.mxu0 %v3264
        %4204 = vmatpush1.bf16.msra.mxu0 %v3263
        %4205 = vmatprep.subr.bf16.mxu0 %v3274
        %4206 = vmatpush1.bf16.msra.mxu0 %v3273
        %4207 = vmatprep.subr.bf16.mxu0 %v3284
        %4208 = vmatpush1.bf16.msra.mxu0 %v3283
        %4209 = vmatprep.subr.bf16.mxu0 %v3294
        %4210 = vmatpush1.bf16.msra.mxu0 %v3293
        %4211 = vmatprep.subr.bf16.mxu0 %v3304
        %4212 = vmatpush1.bf16.msra.mxu0 %v3303
        %4213 = vmatprep.subr.bf16.mxu0 %v3314
        %4214 = vmatpush1.bf16.msra.mxu0 %v3313
        %4215 = vmatprep.subr.bf16.mxu0 %v3324
        %4216 = vmatpush1.bf16.msra.mxu0 %v3323
        %4217 = vmatprep.subr.bf16.mxu0 %v3334
        %4218 = vmatpush1.bf16.msra.mxu0 %v3333
        %4219 = vmatprep.subr.bf16.mxu0 %v3344
        %4220 = vmatpush1.bf16.msra.mxu0 %v3343
        %4221 = vmatprep.subr.bf16.mxu0 %v3354
        %4222 = vmatpush1.bf16.msra.mxu0 %v3353
        %4223 = vmatprep.subr.bf16.mxu0 %v3364
        %4224 = vmatpush1.bf16.msra.mxu0 %v3363
        %4225 = vmatprep.subr.bf16.mxu0 %v3374
        %4226 = vmatpush1.bf16.msra.mxu0 %v3373
        %4227 = vmatprep.subr.bf16.mxu0 %v3384
        %4228 = vmatpush1.bf16.msra.mxu0 %v3383
        %4229 = vmatprep.mubr.bf16.mxu0 %v1462
        %4230 = vmatmul.mubr.bf16.gmra.mrb[0].mxu0 %v1455
        %v4231 = vpop.f32.mrb[0].mxu0
        %v4232 = vadd.f32 %v4191, %v4231
        %v4233 = vpop.f32.mrb[0].mxu0
        %v4234 = vadd.f32 %v4193, %v4233
        %v4235 = vpop.f32.mrb[0].mxu0
        %v4236 = vpop.f32.mrb[0].mxu0
        %4237 = vdwg.mxu0
        %4238 = vmatprep.subr.bf16.mxu0 %v2916
        %4239 = vmatpush1.bf16.msra.mxu0 %v2915
        %4240 = vmatprep.subr.bf16.mxu0 %v2926
        %4241 = vmatpush1.bf16.msra.mxu0 %v2925
        %4242 = vmatprep.subr.bf16.mxu0 %v2936
        %4243 = vmatpush1.bf16.msra.mxu0 %v2935
        %4244 = vmatprep.subr.bf16.mxu0 %v2946
        %4245 = vmatpush1.bf16.msra.mxu0 %v2945
        %4246 = vmatprep.subr.bf16.mxu0 %v2956
        %4247 = vmatpush1.bf16.msra.mxu0 %v2955
        %4248 = vmatprep.subr.bf16.mxu0 %v2966
        %4249 = vmatpush1.bf16.msra.mxu0 %v2965
        %4250 = vmatprep.subr.bf16.mxu0 %v2976
        %4251 = vmatpush1.bf16.msra.mxu0 %v2975
        %4252 = vmatprep.subr.bf16.mxu0 %v2986
        %4253 = vmatpush1.bf16.msra.mxu0 %v2985
        %4254 = vmatprep.subr.bf16.mxu0 %v2996
        %4255 = vmatpush1.bf16.msra.mxu0 %v2995
        %4256 = vmatprep.subr.bf16.mxu0 %v3006
        %4257 = vmatpush1.bf16.msra.mxu0 %v3005
        %4258 = vmatprep.subr.bf16.mxu0 %v3016
        %4259 = vmatpush1.bf16.msra.mxu0 %v3015
        %4260 = vmatprep.subr.bf16.mxu0 %v3026
        %4261 = vmatpush1.bf16.msra.mxu0 %v3025
        %4262 = vmatprep.subr.bf16.mxu0 %v3036
        %4263 = vmatpush1.bf16.msra.mxu0 %v3035
        %4264 = vmatprep.subr.bf16.mxu0 %v3046
        %4265 = vmatpush1.bf16.msra.mxu0 %v3045
        %4266 = vmatprep.subr.bf16.mxu0 %v3056
        %4267 = vmatpush1.bf16.msra.mxu0 %v3055
        %4268 = vmatprep.subr.bf16.mxu0 %v3066
        %4269 = vmatpush1.bf16.msra.mxu0 %v3065
        %4270 = vmatprep.mubr.bf16.mxu0 %v1434
        %4271 = vmatmul.mubr.bf16.gmra.mrb[0].mxu0 %v1427
        %v4272 = vpop.f32.mrb[0].mxu0
        %v4273 = vadd.f32 0.0, %v4272
        %v4274 = vpop.f32.mrb[0].mxu0
        %v4275 = vadd.f32 0.0, %v4274
        %v4276 = vpop.f32.mrb[0].mxu0
        %v4277 = vpop.f32.mrb[0].mxu0
        %4278 = vdwg.mxu0
        %4279 = vmatprep.subr.bf16.mxu0 %v3076
        %4280 = vmatpush1.bf16.msra.mxu0 %v3075
        %4281 = vmatprep.subr.bf16.mxu0 %v3086
        %4282 = vmatpush1.bf16.msra.mxu0 %v3085
        %4283 = vmatprep.subr.bf16.mxu0 %v3096
        %4284 = vmatpush1.bf16.msra.mxu0 %v3095
        %4285 = vmatprep.subr.bf16.mxu0 %v3106
        %4286 = vmatpush1.bf16.msra.mxu0 %v3105
        %4287 = vmatprep.subr.bf16.mxu0 %v3116
        %4288 = vmatpush1.bf16.msra.mxu0 %v3115
        %4289 = vmatprep.subr.bf16.mxu0 %v3126
        %4290 = vmatpush1.bf16.msra.mxu0 %v3125
        %4291 = vmatprep.subr.bf16.mxu0 %v3136
        %4292 = vmatpush1.bf16.msra.mxu0 %v3135
        %4293 = vmatprep.subr.bf16.mxu0 %v3146
        %4294 = vmatpush1.bf16.msra.mxu0 %v3145
        %4295 = vmatprep.subr.bf16.mxu0 %v3156
        %4296 = vmatpush1.bf16.msra.mxu0 %v3155
        %4297 = vmatprep.subr.bf16.mxu0 %v3166
        %4298 = vmatpush1.bf16.msra.mxu0 %v3165
        %4299 = vmatprep.subr.bf16.mxu0 %v3176
        %4300 = vmatpush1.bf16.msra.mxu0 %v3175
        %4301 = vmatprep.subr.bf16.mxu0 %v3186
        %4302 = vmatpush1.bf16.msra.mxu0 %v3185
        %4303 = vmatprep.subr.bf16.mxu0 %v3196
        %4304 = vmatpush1.bf16.msra.mxu0 %v3195
        %4305 = vmatprep.subr.bf16.mxu0 %v3206
        %4306 = vmatpush1.bf16.msra.mxu0 %v3205
        %4307 = vmatprep.subr.bf16.mxu0 %v3216
        %4308 = vmatpush1.bf16.msra.mxu0 %v3215
        %4309 = vmatprep.subr.bf16.mxu0 %v3226
        %4310 = vmatpush1.bf16.msra.mxu0 %v3225
        %4311 = vmatprep.mubr.bf16.mxu0 %v1448
        %4312 = vmatmul.mubr.bf16.gmra.mrb[0].mxu0 %v1441
        %v4313 = vpop.f32.mrb[0].mxu0
        %v4314 = vadd.f32 %v4273, %v4313
        %v4315 = vpop.f32.mrb[0].mxu0
        %v4316 = vadd.f32 %v4275, %v4315
        %v4317 = vpop.f32.mrb[0].mxu0
        %v4318 = vpop.f32.mrb[0].mxu0
        %4319 = vdwg.mxu0
        %4320 = vmatprep.subr.bf16.mxu0 %v3236
        %4321 = vmatpush1.bf16.msra.mxu0 %v3235
        %4322 = vmatprep.subr.bf16.mxu0 %v3246
        %4323 = vmatpush1.bf16.msra.mxu0 %v3245
        %4324 = vmatprep.subr.bf16.mxu0 %v3256
        %4325 = vmatpush1.bf16.msra.mxu0 %v3255
        %4326 = vmatprep.subr.bf16.mxu0 %v3266
        %4327 = vmatpush1.bf16.msra.mxu0 %v3265
        %4328 = vmatprep.subr.bf16.mxu0 %v3276
        %4329 = vmatpush1.bf16.msra.mxu0 %v3275
        %4330 = vmatprep.subr.bf16.mxu0 %v3286
        %4331 = vmatpush1.bf16.msra.mxu0 %v3285
        %4332 = vmatprep.subr.bf16.mxu0 %v3296
        %4333 = vmatpush1.bf16.msra.mxu0 %v3295
        %4334 = vmatprep.subr.bf16.mxu0 %v3306
        %4335 = vmatpush1.bf16.msra.mxu0 %v3305
        %4336 = vmatprep.subr.bf16.mxu0 %v3316
        %4337 = vmatpush1.bf16.msra.mxu0 %v3315
        %4338 = vmatprep.subr.bf16.mxu0 %v3326
        %4339 = vmatpush1.bf16.msra.mxu0 %v3325
        %4340 = vmatprep.subr.bf16.mxu0 %v3336
        %4341 = vmatpush1.bf16.msra.mxu0 %v3335
        %4342 = vmatprep.subr.bf16.mxu0 %v3346
        %4343 = vmatpush1.bf16.msra.mxu0 %v3345
        %4344 = vmatprep.subr.bf16.mxu0 %v3356
        %4345 = vmatpush1.bf16.msra.mxu0 %v3355
        %4346 = vmatprep.subr.bf16.mxu0 %v3366
        %4347 = vmatpush1.bf16.msra.mxu0 %v3365
        %4348 = vmatprep.subr.bf16.mxu0 %v3376
        %4349 = vmatpush1.bf16.msra.mxu0 %v3375
        %4350 = vmatprep.subr.bf16.mxu0 %v3386
        %4351 = vmatpush1.bf16.msra.mxu0 %v3385
        %4352 = vmatprep.mubr.bf16.mxu0 %v1462
        %4353 = vmatmul.mubr.bf16.gmra.mrb[0].mxu0 %v1455
        %v4354 = vpop.f32.mrb[0].mxu0
        %v4355 = vadd.f32 %v4314, %v4354
        %v4356 = vpop.f32.mrb[0].mxu0
        %v4357 = vadd.f32 %v4316, %v4356
        %v4358 = vpop.f32.mrb[0].mxu0
        %v4359 = vpop.f32.mrb[0].mxu0
        %4360 = vdwg.mxu0
        %4361 = vmatprep.subr.bf16.mxu0 %v2918
        %4362 = vmatpush1.bf16.msra.mxu0 %v2917
        %4363 = vmatprep.subr.bf16.mxu0 %v2928
        %4364 = vmatpush1.bf16.msra.mxu0 %v2927
        %4365 = vmatprep.subr.bf16.mxu0 %v2938
        %4366 = vmatpush1.bf16.msra.mxu0 %v2937
        %4367 = vmatprep.subr.bf16.mxu0 %v2948
        %4368 = vmatpush1.bf16.msra.mxu0 %v2947
        %4369 = vmatprep.subr.bf16.mxu0 %v2958
        %4370 = vmatpush1.bf16.msra.mxu0 %v2957
        %4371 = vmatprep.subr.bf16.mxu0 %v2968
        %4372 = vmatpush1.bf16.msra.mxu0 %v2967
        %4373 = vmatprep.subr.bf16.mxu0 %v2978
        %4374 = vmatpush1.bf16.msra.mxu0 %v2977
        %4375 = vmatprep.subr.bf16.mxu0 %v2988
        %4376 = vmatpush1.bf16.msra.mxu0 %v2987
        %4377 = vmatprep.subr.bf16.mxu0 %v2998
        %4378 = vmatpush1.bf16.msra.mxu0 %v2997
        %4379 = vmatprep.subr.bf16.mxu0 %v3008
        %4380 = vmatpush1.bf16.msra.mxu0 %v3007
        %4381 = vmatprep.subr.bf16.mxu0 %v3018
        %4382 = vmatpush1.bf16.msra.mxu0 %v3017
        %4383 = vmatprep.subr.bf16.mxu0 %v3028
        %4384 = vmatpush1.bf16.msra.mxu0 %v3027
        %4385 = vmatprep.subr.bf16.mxu0 %v3038
        %4386 = vmatpush1.bf16.msra.mxu0 %v3037
        %4387 = vmatprep.subr.bf16.mxu0 %v3048
        %4388 = vmatpush1.bf16.msra.mxu0 %v3047
        %4389 = vmatprep.subr.bf16.mxu0 %v3058
        %4390 = vmatpush1.bf16.msra.mxu0 %v3057
        %4391 = vmatprep.subr.bf16.mxu0 %v3068
        %4392 = vmatpush1.bf16.msra.mxu0 %v3067
        %4393 = vmatprep.mubr.bf16.mxu0 %v1434
        %4394 = vmatmul.mubr.bf16.gmra.mrb[0].mxu0 %v1427
        %v4395 = vpop.f32.mrb[0].mxu0
        %v4396 = vadd.f32 0.0, %v4395
        %v4397 = vpop.f32.mrb[0].mxu0
        %v4398 = vadd.f32 0.0, %v4397
        %v4399 = vpop.f32.mrb[0].mxu0
        %v4400 = vpop.f32.mrb[0].mxu0
        %4401 = vdwg.mxu0
        %4402 = vmatprep.subr.bf16.mxu0 %v3078
        %4403 = vmatpush1.bf16.msra.mxu0 %v3077
        %4404 = vmatprep.subr.bf16.mxu0 %v3088
        %4405 = vmatpush1.bf16.msra.mxu0 %v3087
        %4406 = vmatprep.subr.bf16.mxu0 %v3098
        %4407 = vmatpush1.bf16.msra.mxu0 %v3097
        %4408 = vmatprep.subr.bf16.mxu0 %v3108
        %4409 = vmatpush1.bf16.msra.mxu0 %v3107
        %4410 = vmatprep.subr.bf16.mxu0 %v3118
        %4411 = vmatpush1.bf16.msra.mxu0 %v3117
        %4412 = vmatprep.subr.bf16.mxu0 %v3128
        %4413 = vmatpush1.bf16.msra.mxu0 %v3127
        %4414 = vmatprep.subr.bf16.mxu0 %v3138
        %4415 = vmatpush1.bf16.msra.mxu0 %v3137
        %4416 = vmatprep.subr.bf16.mxu0 %v3148
        %4417 = vmatpush1.bf16.msra.mxu0 %v3147
        %4418 = vmatprep.subr.bf16.mxu0 %v3158
        %4419 = vmatpush1.bf16.msra.mxu0 %v3157
        %4420 = vmatprep.subr.bf16.mxu0 %v3168
        %4421 = vmatpush1.bf16.msra.mxu0 %v3167
        %4422 = vmatprep.subr.bf16.mxu0 %v3178
        %4423 = vmatpush1.bf16.msra.mxu0 %v3177
        %4424 = vmatprep.subr.bf16.mxu0 %v3188
        %4425 = vmatpush1.bf16.msra.mxu0 %v3187
        %4426 = vmatprep.subr.bf16.mxu0 %v3198
        %4427 = vmatpush1.bf16.msra.mxu0 %v3197
        %4428 = vmatprep.subr.bf16.mxu0 %v3208
        %4429 = vmatpush1.bf16.msra.mxu0 %v3207
        %4430 = vmatprep.subr.bf16.mxu0 %v3218
        %4431 = vmatpush1.bf16.msra.mxu0 %v3217
        %4432 = vmatprep.subr.bf16.mxu0 %v3228
        %4433 = vmatpush1.bf16.msra.mxu0 %v3227
        %4434 = vmatprep.mubr.bf16.mxu0 %v1448
        %4435 = vmatmul.mubr.bf16.gmra.mrb[0].mxu0 %v1441
        %v4436 = vpop.f32.mrb[0].mxu0
        %v4437 = vadd.f32 %v4396, %v4436
        %v4438 = vpop.f32.mrb[0].mxu0
        %v4439 = vadd.f32 %v4398, %v4438
        %v4440 = vpop.f32.mrb[0].mxu0
        %v4441 = vpop.f32.mrb[0].mxu0
        %4442 = vdwg.mxu0
        %4443 = vmatprep.subr.bf16.mxu0 %v3238
        %4444 = vmatpush1.bf16.msra.mxu0 %v3237
        %4445 = vmatprep.subr.bf16.mxu0 %v3248
        %4446 = vmatpush1.bf16.msra.mxu0 %v3247
        %4447 = vmatprep.subr.bf16.mxu0 %v3258
        %4448 = vmatpush1.bf16.msra.mxu0 %v3257
        %4449 = vmatprep.subr.bf16.mxu0 %v3268
        %4450 = vmatpush1.bf16.msra.mxu0 %v3267
        %4451 = vmatprep.subr.bf16.mxu0 %v3278
        %4452 = vmatpush1.bf16.msra.mxu0 %v3277
        %4453 = vmatprep.subr.bf16.mxu0 %v3288
        %4454 = vmatpush1.bf16.msra.mxu0 %v3287
        %4455 = vmatprep.subr.bf16.mxu0 %v3298
        %4456 = vmatpush1.bf16.msra.mxu0 %v3297
        %4457 = vmatprep.subr.bf16.mxu0 %v3308
        %4458 = vmatpush1.bf16.msra.mxu0 %v3307
        %4459 = vmatprep.subr.bf16.mxu0 %v3318
        %4460 = vmatpush1.bf16.msra.mxu0 %v3317
        %4461 = vmatprep.subr.bf16.mxu0 %v3328
        %4462 = vmatpush1.bf16.msra.mxu0 %v3327
        %4463 = vmatprep.subr.bf16.mxu0 %v3338
        %4464 = vmatpush1.bf16.msra.mxu0 %v3337
        %4465 = vmatprep.subr.bf16.mxu0 %v3348
        %4466 = vmatpush1.bf16.msra.mxu0 %v3347
        %4467 = vmatprep.subr.bf16.mxu0 %v3358
        %4468 = vmatpush1.bf16.msra.mxu0 %v3357
        %4469 = vmatprep.subr.bf16.mxu0 %v3368
        %4470 = vmatpush1.bf16.msra.mxu0 %v3367
        %4471 = vmatprep.subr.bf16.mxu0 %v3378
        %4472 = vmatpush1.bf16.msra.mxu0 %v3377
        %4473 = vmatprep.subr.bf16.mxu0 %v3388
        %4474 = vmatpush1.bf16.msra.mxu0 %v3387
        %4475 = vmatprep.mubr.bf16.mxu0 %v1462
        %4476 = vmatmul.mubr.bf16.gmra.mrb[0].mxu0 %v1455
        %v4477 = vpop.f32.mrb[0].mxu0
        %v4478 = vadd.f32 %v4437, %v4477
        %v4479 = vpop.f32.mrb[0].mxu0
        %v4480 = vadd.f32 %v4439, %v4479
        %v4481 = vpop.f32.mrb[0].mxu0
        %v4482 = vpop.f32.mrb[0].mxu0
        %4483 = vdwg.mxu0
        %v4970 = vunpack.c.l.b16 %v445
        %v4971 = vunpack.c.h.b16 %v445
        %v4972 = vunpack.c.l.b16 %v446
        %v4973 = vunpack.c.h.b16 %v446
        %v4974 = vunpack.c.l.b16 %v447
        %v4975 = vunpack.c.h.b16 %v447
        %v4976 = vunpack.c.l.b16 %v448
        %v4977 = vunpack.c.h.b16 %v448
        %v4978 = vunpack.c.l.b16 %v449
        %v4979 = vunpack.c.h.b16 %v449
        %v4980 = vunpack.c.l.b16 %v450
        %v4981 = vunpack.c.h.b16 %v450
        %v4982 = vunpack.c.l.b16 %v451
        %v4983 = vunpack.c.h.b16 %v451
        %v4984 = vunpack.c.l.b16 %v452
        %v4985 = vunpack.c.h.b16 %v452
        %v4986 = vunpack.c.l.b16 %v453
        %v4987 = vunpack.c.h.b16 %v453
        %v4988 = vunpack.c.l.b16 %v454
        %v4989 = vunpack.c.h.b16 %v454
        %v4990 = vunpack.c.l.b16 %v455
        %v4991 = vunpack.c.h.b16 %v455
        %v4992 = vunpack.c.l.b16 %v456
        %v4993 = vunpack.c.h.b16 %v456
        %v4994 = vunpack.c.l.b16 %v457
        %v4995 = vunpack.c.h.b16 %v457
        %v4996 = vunpack.c.l.b16 %v458
        %v4997 = vunpack.c.h.b16 %v458
        %v4998 = vunpack.c.l.b16 %v459
        %v4999 = vunpack.c.h.b16 %v459
        %v5000 = vunpack.c.l.b16 %v460
        %v5001 = vunpack.c.h.b16 %v460
        %v5002 = vunpack.c.l.b16 %v461
        %v5003 = vunpack.c.h.b16 %v461
        %v5004 = vunpack.c.l.b16 %v462
        %v5005 = vunpack.c.h.b16 %v462
        %v5006 = vunpack.c.l.b16 %v463
        %v5007 = vunpack.c.h.b16 %v463
        %v5008 = vunpack.c.l.b16 %v464
        %v5009 = vunpack.c.h.b16 %v464
        %v5010 = vunpack.c.l.b16 %v465
        %v5011 = vunpack.c.h.b16 %v465
        %v5012 = vunpack.c.l.b16 %v466
        %v5013 = vunpack.c.h.b16 %v466
        %v5014 = vunpack.c.l.b16 %v467
        %v5015 = vunpack.c.h.b16 %v467
        %v5016 = vunpack.c.l.b16 %v468
        %v5017 = vunpack.c.h.b16 %v468
        %v5018 = vunpack.c.l.b16 %v469
        %v5019 = vunpack.c.h.b16 %v469
        %v5020 = vunpack.c.l.b16 %v470
        %v5021 = vunpack.c.h.b16 %v470
        %v5022 = vunpack.c.l.b16 %v471
        %v5023 = vunpack.c.h.b16 %v471
        %v5024 = vunpack.c.l.b16 %v472
        %v5025 = vunpack.c.h.b16 %v472
        %v5026 = vunpack.c.l.b16 %v473
        %v5027 = vunpack.c.h.b16 %v473
        %v5028 = vunpack.c.l.b16 %v474
        %v5029 = vunpack.c.h.b16 %v474
        %v5030 = vunpack.c.l.b16 %v475
        %v5031 = vunpack.c.h.b16 %v475
        %v5032 = vunpack.c.l.b16 %v476
        %v5033 = vunpack.c.h.b16 %v476
        %v5034 = vunpack.c.l.b16 %v477
        %v5035 = vunpack.c.h.b16 %v477
        %v5036 = vunpack.c.l.b16 %v478
        %v5037 = vunpack.c.h.b16 %v478
        %v5038 = vunpack.c.l.b16 %v479
        %v5039 = vunpack.c.h.b16 %v479
        %v5040 = vunpack.c.l.b16 %v480
        %v5041 = vunpack.c.h.b16 %v480
        %v5042 = vunpack.c.l.b16 %v481
        %v5043 = vunpack.c.h.b16 %v481
        %v5044 = vunpack.c.l.b16 %v482
        %v5045 = vunpack.c.h.b16 %v482
        %v5046 = vunpack.c.l.b16 %v483
        %v5047 = vunpack.c.h.b16 %v483
        %v5048 = vunpack.c.l.b16 %v484
        %v5049 = vunpack.c.h.b16 %v484
        %v5050 = vunpack.c.l.b16 %v485
        %v5051 = vunpack.c.h.b16 %v485
        %v5052 = vunpack.c.l.b16 %v486
        %v5053 = vunpack.c.h.b16 %v486
        %v5054 = vunpack.c.l.b16 %v487
        %v5055 = vunpack.c.h.b16 %v487
        %v5056 = vunpack.c.l.b16 %v488
        %v5057 = vunpack.c.h.b16 %v488
        %v5058 = vunpack.c.l.b16 %v489
        %v5059 = vunpack.c.h.b16 %v489
        %v5060 = vunpack.c.l.b16 %v490
        %v5061 = vunpack.c.h.b16 %v490
        %v5062 = vunpack.c.l.b16 %v491
        %v5063 = vunpack.c.h.b16 %v491
        %v5064 = vunpack.c.l.b16 %v492
        %v5065 = vunpack.c.h.b16 %v492
        %v5066 = vunpack.c.l.b16 %v493
        %v5067 = vunpack.c.h.b16 %v493
        %v5068 = vunpack.c.l.b16 %v494
        %v5069 = vunpack.c.h.b16 %v494
        %v5070 = vunpack.c.l.b16 %v495
        %v5071 = vunpack.c.h.b16 %v495
        %v5072 = vunpack.c.l.b16 %v496
        %v5073 = vunpack.c.h.b16 %v496
        %v5074 = vunpack.c.l.b16 %v497
        %v5075 = vunpack.c.h.b16 %v497
        %v5076 = vunpack.c.l.b16 %v498
        %v5077 = vunpack.c.h.b16 %v498
        %v5078 = vunpack.c.l.b16 %v499
        %v5079 = vunpack.c.h.b16 %v499
        %v5080 = vunpack.c.l.b16 %v500
        %v5081 = vunpack.c.h.b16 %v500
        %v5082 = vunpack.c.l.b16 %v501
        %v5083 = vunpack.c.h.b16 %v501
        %v5084 = vunpack.c.l.b16 %v502
        %v5085 = vunpack.c.h.b16 %v502
        %v5086 = vunpack.c.l.b16 %v503
        %v5087 = vunpack.c.h.b16 %v503
        %v5088 = vunpack.c.l.b16 %v504
        %v5089 = vunpack.c.h.b16 %v504
        %v5090 = vunpack.c.l.b16 %v505
        %v5091 = vunpack.c.h.b16 %v505
        %v5092 = vunpack.c.l.b16 %v506
        %v5093 = vunpack.c.h.b16 %v506
        %v5094 = vunpack.c.l.b16 %v507
        %v5095 = vunpack.c.h.b16 %v507
        %v5096 = vunpack.c.l.b16 %v508
        %v5097 = vunpack.c.h.b16 %v508
        %v5098 = vunpack.c.l.b16 %v509
        %v5099 = vunpack.c.h.b16 %v509
        %v5100 = vunpack.c.l.b16 %v510
        %v5101 = vunpack.c.h.b16 %v510
        %v5102 = vunpack.c.l.b16 %v511
        %v5103 = vunpack.c.h.b16 %v511
        %v5104 = vunpack.c.l.b16 %v512
        %v5105 = vunpack.c.h.b16 %v512
        %v5106 = vunpack.c.l.b16 %v513
        %v5107 = vunpack.c.h.b16 %v513
        %v5108 = vunpack.c.l.b16 %v514
        %v5109 = vunpack.c.h.b16 %v514
        %v5110 = vunpack.c.l.b16 %v515
        %v5111 = vunpack.c.h.b16 %v515
        %v5112 = vunpack.c.l.b16 %v516
        %v5113 = vunpack.c.h.b16 %v516
        %v5114 = vunpack.c.l.b16 %v517
        %v5115 = vunpack.c.h.b16 %v517
        %v5116 = vunpack.c.l.b16 %v518
        %v5117 = vunpack.c.h.b16 %v518
        %v5118 = vunpack.c.l.b16 %v519
        %v5119 = vunpack.c.h.b16 %v519
        %v5120 = vunpack.c.l.b16 %v520
        %v5121 = vunpack.c.h.b16 %v520
        %v5122 = vunpack.c.l.b16 %v521
        %v5123 = vunpack.c.h.b16 %v521
        %v5124 = vunpack.c.l.b16 %v522
        %v5125 = vunpack.c.h.b16 %v522
        %v5126 = vunpack.c.l.b16 %v523
        %v5127 = vunpack.c.h.b16 %v523
        %v5128 = vunpack.c.l.b16 %v524
        %v5129 = vunpack.c.h.b16 %v524
        %v5130 = vunpack.c.l.b16 %v525
        %v5131 = vunpack.c.h.b16 %v525
        %v5132 = vunpack.c.l.b16 %v526
        %v5133 = vunpack.c.h.b16 %v526
        %v5134 = vunpack.c.l.b16 %v527
        %v5135 = vunpack.c.h.b16 %v527
        %v5136 = vunpack.c.l.b16 %v528
        %v5137 = vunpack.c.h.b16 %v528
        %v5138 = vunpack.c.l.b16 %v529
        %v5139 = vunpack.c.h.b16 %v529
        %v5140 = vunpack.c.l.b16 %v530
        %v5141 = vunpack.c.h.b16 %v530
        %v5142 = vunpack.c.l.b16 %v531
        %v5143 = vunpack.c.h.b16 %v531
        %v5144 = vunpack.c.l.b16 %v532
        %v5145 = vunpack.c.h.b16 %v532
        %v5146 = vunpack.c.l.b16 %v533
        %v5147 = vunpack.c.h.b16 %v533
        %v5148 = vunpack.c.l.b16 %v534
        %v5149 = vunpack.c.h.b16 %v534
        %v5150 = vunpack.c.l.b16 %v535
        %v5151 = vunpack.c.h.b16 %v535
        %v5152 = vunpack.c.l.b16 %v536
        %v5153 = vunpack.c.h.b16 %v536
        %v5154 = vunpack.c.l.b16 %v537
        %v5155 = vunpack.c.h.b16 %v537
        %v5156 = vunpack.c.l.b16 %v538
        %v5157 = vunpack.c.h.b16 %v538
        %v5158 = vunpack.c.l.b16 %v539
        %v5159 = vunpack.c.h.b16 %v539
        %v5160 = vunpack.c.l.b16 %v540
        %v5161 = vunpack.c.h.b16 %v540
        %v5162 = vunpack.c.l.b16 %v541
        %v5163 = vunpack.c.h.b16 %v541
        %v5164 = vunpack.c.l.b16 %v542
        %v5165 = vunpack.c.h.b16 %v542
        %v5166 = vunpack.c.l.b16 %v543
        %v5167 = vunpack.c.h.b16 %v543
        %v5168 = vunpack.c.l.b16 %v544
        %v5169 = vunpack.c.h.b16 %v544
        %v5170 = vunpack.c.l.b16 %v545
        %v5171 = vunpack.c.h.b16 %v545
        %v5172 = vunpack.c.l.b16 %v546
        %v5173 = vunpack.c.h.b16 %v546
        %v5174 = vunpack.c.l.b16 %v547
        %v5175 = vunpack.c.h.b16 %v547
        %v5176 = vunpack.c.l.b16 %v548
        %v5177 = vunpack.c.h.b16 %v548
        %v5178 = vunpack.c.l.b16 %v549
        %v5179 = vunpack.c.h.b16 %v549
        %v5180 = vunpack.c.l.b16 %v550
        %v5181 = vunpack.c.h.b16 %v550
        %v5182 = vunpack.c.l.b16 %v551
        %v5183 = vunpack.c.h.b16 %v551
        %v5184 = vunpack.c.l.b16 %v552
        %v5185 = vunpack.c.h.b16 %v552
        %v5186 = vunpack.c.l.b16 %v553
        %v5187 = vunpack.c.h.b16 %v553
        %v5188 = vunpack.c.l.b16 %v554
        %v5189 = vunpack.c.h.b16 %v554
        %v5190 = vunpack.c.l.b16 %v555
        %v5191 = vunpack.c.h.b16 %v555
        %v5192 = vunpack.c.l.b16 %v556
        %v5193 = vunpack.c.h.b16 %v556
        %v5194 = vunpack.c.l.b16 %v557
        %v5195 = vunpack.c.h.b16 %v557
        %v5196 = vunpack.c.l.b16 %v558
        %v5197 = vunpack.c.h.b16 %v558
        %v5198 = vunpack.c.l.b16 %v559
        %v5199 = vunpack.c.h.b16 %v559
        %v5200 = vunpack.c.l.b16 %v560
        %v5201 = vunpack.c.h.b16 %v560
        %v5202 = vunpack.c.l.b16 %v561
        %v5203 = vunpack.c.h.b16 %v561
        %v5204 = vunpack.c.l.b16 %v562
        %v5205 = vunpack.c.h.b16 %v562
        %v5206 = vunpack.c.l.b16 %v563
        %v5207 = vunpack.c.h.b16 %v563
        %v5208 = vunpack.c.l.b16 %v564
        %v5209 = vunpack.c.h.b16 %v564
        %v5210 = vunpack.c.l.b16 %v565
        %v5211 = vunpack.c.h.b16 %v565
        %v5212 = vunpack.c.l.b16 %v566
        %v5213 = vunpack.c.h.b16 %v566
        %v5214 = vunpack.c.l.b16 %v567
        %v5215 = vunpack.c.h.b16 %v567
        %v5216 = vunpack.c.l.b16 %v568
        %v5217 = vunpack.c.h.b16 %v568
        %v5218 = vunpack.c.l.b16 %v569
        %v5219 = vunpack.c.h.b16 %v569
        %v5220 = vunpack.c.l.b16 %v570
        %v5221 = vunpack.c.h.b16 %v570
        %v5222 = vunpack.c.l.b16 %v571
        %v5223 = vunpack.c.h.b16 %v571
        %v5224 = vunpack.c.l.b16 %v572
        %v5225 = vunpack.c.h.b16 %v572
        %v5226 = vunpack.c.l.b16 %v573
        %v5227 = vunpack.c.h.b16 %v573
        %v5228 = vunpack.c.l.b16 %v574
        %v5229 = vunpack.c.h.b16 %v574
        %v5230 = vunpack.c.l.b16 %v575
        %v5231 = vunpack.c.h.b16 %v575
        %v5232 = vunpack.c.l.b16 %v576
        %v5233 = vunpack.c.h.b16 %v576
        %v5234 = vunpack.c.l.b16 %v577
        %v5235 = vunpack.c.h.b16 %v577
        %v5236 = vunpack.c.l.b16 %v578
        %v5237 = vunpack.c.h.b16 %v578
        %v5238 = vunpack.c.l.b16 %v579
        %v5239 = vunpack.c.h.b16 %v579
        %v5240 = vunpack.c.l.b16 %v580
        %v5241 = vunpack.c.h.b16 %v580
        %v5242 = vunpack.c.l.b16 %v581
        %v5243 = vunpack.c.h.b16 %v581
        %v5244 = vunpack.c.l.b16 %v582
        %v5245 = vunpack.c.h.b16 %v582
        %v5246 = vunpack.c.l.b16 %v583
        %v5247 = vunpack.c.h.b16 %v583
        %v5248 = vunpack.c.l.b16 %v584
        %v5249 = vunpack.c.h.b16 %v584
        %v5250 = vunpack.c.l.b16 %v585
        %v5251 = vunpack.c.h.b16 %v585
        %v5252 = vunpack.c.l.b16 %v586
        %v5253 = vunpack.c.h.b16 %v586
        %v5254 = vunpack.c.l.b16 %v587
        %v5255 = vunpack.c.h.b16 %v587
        %v5256 = vunpack.c.l.b16 %v588
        %v5257 = vunpack.c.h.b16 %v588
        %v5258 = vunpack.c.l.b16 %v589
        %v5259 = vunpack.c.h.b16 %v589
        %v5260 = vunpack.c.l.b16 %v590
        %v5261 = vunpack.c.h.b16 %v590
        %v5262 = vunpack.c.l.b16 %v591
        %v5263 = vunpack.c.h.b16 %v591
        %v5264 = vunpack.c.l.b16 %v592
        %v5265 = vunpack.c.h.b16 %v592
        %v5266 = vunpack.c.l.b16 %v593
        %v5267 = vunpack.c.h.b16 %v593
        %v5268 = vunpack.c.l.b16 %v594
        %v5269 = vunpack.c.h.b16 %v594
        %v5270 = vunpack.c.l.b16 %v595
        %v5271 = vunpack.c.h.b16 %v595
        %v5272 = vunpack.c.l.b16 %v596
        %v5273 = vunpack.c.h.b16 %v596
        %v5274 = vunpack.c.l.b16 %v597
        %v5275 = vunpack.c.h.b16 %v597
        %v5276 = vunpack.c.l.b16 %v598
        %v5277 = vunpack.c.h.b16 %v598
        %v5278 = vunpack.c.l.b16 %v599
        %v5279 = vunpack.c.h.b16 %v599
        %v5280 = vunpack.c.l.b16 %v600
        %v5281 = vunpack.c.h.b16 %v600
        %v5282 = vunpack.c.l.b16 %v601
        %v5283 = vunpack.c.h.b16 %v601
        %v5284 = vunpack.c.l.b16 %v602
        %v5285 = vunpack.c.h.b16 %v602
        %v5286 = vunpack.c.l.b16 %v603
        %v5287 = vunpack.c.h.b16 %v603
        %v5288 = vunpack.c.l.b16 %v604
        %v5289 = vunpack.c.h.b16 %v604
        %v5290 = vunpack.c.l.b16 %v605
        %v5291 = vunpack.c.h.b16 %v605
        %v5292 = vunpack.c.l.b16 %v606
        %v5293 = vunpack.c.h.b16 %v606
        %v5294 = vunpack.c.l.b16 %v607
        %v5295 = vunpack.c.h.b16 %v607
        %v5296 = vunpack.c.l.b16 %v608
        %v5297 = vunpack.c.h.b16 %v608
        %v5298 = vunpack.c.l.b16 %v609
        %v5299 = vunpack.c.h.b16 %v609
        %v5300 = vunpack.c.l.b16 %v610
        %v5301 = vunpack.c.h.b16 %v610
        %v5302 = vunpack.c.l.b16 %v611
        %v5303 = vunpack.c.h.b16 %v611
        %v5304 = vunpack.c.l.b16 %v612
        %v5305 = vunpack.c.h.b16 %v612
        %v5306 = vunpack.c.l.b16 %v613
        %v5307 = vunpack.c.h.b16 %v613
        %v5308 = vunpack.c.l.b16 %v614
        %v5309 = vunpack.c.h.b16 %v614
        %v5310 = vunpack.c.l.b16 %v615
        %v5311 = vunpack.c.h.b16 %v615
        %v5312 = vunpack.c.l.b16 %v616
        %v5313 = vunpack.c.h.b16 %v616
        %v5314 = vunpack.c.l.b16 %v617
        %v5315 = vunpack.c.h.b16 %v617
        %v5316 = vunpack.c.l.b16 %v618
        %v5317 = vunpack.c.h.b16 %v618
        %v5318 = vunpack.c.l.b16 %v619
        %v5319 = vunpack.c.h.b16 %v619
        %v5320 = vunpack.c.l.b16 %v620
        %v5321 = vunpack.c.h.b16 %v620
        %v5322 = vunpack.c.l.b16 %v621
        %v5323 = vunpack.c.h.b16 %v621
        %v5324 = vunpack.c.l.b16 %v622
        %v5325 = vunpack.c.h.b16 %v622
        %v5326 = vunpack.c.l.b16 %v623
        %v5327 = vunpack.c.h.b16 %v623
        %v5328 = vunpack.c.l.b16 %v624
        %v5329 = vunpack.c.h.b16 %v624
        %v5330 = vunpack.c.l.b16 %v625
        %v5331 = vunpack.c.h.b16 %v625
        %v5332 = vunpack.c.l.b16 %v626
        %v5333 = vunpack.c.h.b16 %v626
        %v5334 = vunpack.c.l.b16 %v627
        %v5335 = vunpack.c.h.b16 %v627
        %v5336 = vunpack.c.l.b16 %v628
        %v5337 = vunpack.c.h.b16 %v628
        %v5338 = vunpack.c.l.b16 %v629
        %v5339 = vunpack.c.h.b16 %v629
        %v5340 = vunpack.c.l.b16 %v630
        %v5341 = vunpack.c.h.b16 %v630
        %v5342 = vunpack.c.l.b16 %v631
        %v5343 = vunpack.c.h.b16 %v631
        %v5344 = vunpack.c.l.b16 %v632
        %v5345 = vunpack.c.h.b16 %v632
        %v5346 = vunpack.c.l.b16 %v633
        %v5347 = vunpack.c.h.b16 %v633
        %v5348 = vunpack.c.l.b16 %v634
        %v5349 = vunpack.c.h.b16 %v634
        %v5350 = vunpack.c.l.b16 %v635
        %v5351 = vunpack.c.h.b16 %v635
        %v5352 = vunpack.c.l.b16 %v636
        %v5353 = vunpack.c.h.b16 %v636
        %v5354 = vunpack.c.l.b16 %v637
        %v5355 = vunpack.c.h.b16 %v637
        %v5356 = vunpack.c.l.b16 %v638
        %v5357 = vunpack.c.h.b16 %v638
        %v5358 = vunpack.c.l.b16 %v639
        %v5359 = vunpack.c.h.b16 %v639
        %v5360 = vunpack.c.l.b16 %v640
        %v5361 = vunpack.c.h.b16 %v640
        %v5362 = vunpack.c.l.b16 %v641
        %v5363 = vunpack.c.h.b16 %v641
        %v5364 = vunpack.c.l.b16 %v642
        %v5365 = vunpack.c.h.b16 %v642
        %v5366 = vunpack.c.l.b16 %v643
        %v5367 = vunpack.c.h.b16 %v643
        %v5368 = vunpack.c.l.b16 %v644
        %v5369 = vunpack.c.h.b16 %v644
        %v5370 = vunpack.c.l.b16 %v645
        %v5371 = vunpack.c.h.b16 %v645
        %v5372 = vunpack.c.l.b16 %v646
        %v5373 = vunpack.c.h.b16 %v646
        %v5374 = vunpack.c.l.b16 %v647
        %v5375 = vunpack.c.h.b16 %v647
        %v5376 = vunpack.c.l.b16 %v648
        %v5377 = vunpack.c.h.b16 %v648
        %v5378 = vunpack.c.l.b16 %v649
        %v5379 = vunpack.c.h.b16 %v649
        %v5380 = vunpack.c.l.b16 %v650
        %v5381 = vunpack.c.h.b16 %v650
        %v5382 = vunpack.c.l.b16 %v651
        %v5383 = vunpack.c.h.b16 %v651
        %v5384 = vunpack.c.l.b16 %v652
        %v5385 = vunpack.c.h.b16 %v652
        %v5386 = vunpack.c.l.b16 %v653
        %v5387 = vunpack.c.h.b16 %v653
        %v5388 = vunpack.c.l.b16 %v654
        %v5389 = vunpack.c.h.b16 %v654
        %v5390 = vunpack.c.l.b16 %v655
        %v5391 = vunpack.c.h.b16 %v655
        %v5392 = vunpack.c.l.b16 %v656
        %v5393 = vunpack.c.h.b16 %v656
        %v5394 = vunpack.c.l.b16 %v657
        %v5395 = vunpack.c.h.b16 %v657
        %v5396 = vunpack.c.l.b16 %v658
        %v5397 = vunpack.c.h.b16 %v658
        %v5398 = vunpack.c.l.b16 %v659
        %v5399 = vunpack.c.h.b16 %v659
        %v5400 = vunpack.c.l.b16 %v660
        %v5401 = vunpack.c.h.b16 %v660
        %v5402 = vunpack.c.l.b16 %v661
        %v5403 = vunpack.c.h.b16 %v661
        %v5404 = vunpack.c.l.b16 %v662
        %v5405 = vunpack.c.h.b16 %v662
        %v5406 = vunpack.c.l.b16 %v663
        %v5407 = vunpack.c.h.b16 %v663
        %v5408 = vunpack.c.l.b16 %v664
        %v5409 = vunpack.c.h.b16 %v664
        %v5410 = vunpack.c.l.b16 %v665
        %v5411 = vunpack.c.h.b16 %v665
        %v5412 = vunpack.c.l.b16 %v666
        %v5413 = vunpack.c.h.b16 %v666
        %v5414 = vunpack.c.l.b16 %v667
        %v5415 = vunpack.c.h.b16 %v667
        %v5416 = vunpack.c.l.b16 %v668
        %v5417 = vunpack.c.h.b16 %v668
        %v5418 = vunpack.c.l.b16 %v669
        %v5419 = vunpack.c.h.b16 %v669
        %v5420 = vunpack.c.l.b16 %v670
        %v5421 = vunpack.c.h.b16 %v670
        %v5422 = vunpack.c.l.b16 %v671
        %v5423 = vunpack.c.h.b16 %v671
        %v5424 = vunpack.c.l.b16 %v672
        %v5425 = vunpack.c.h.b16 %v672
        %v5426 = vunpack.c.l.b16 %v673
        %v5427 = vunpack.c.h.b16 %v673
        %v5428 = vunpack.c.l.b16 %v674
        %v5429 = vunpack.c.h.b16 %v674
        %v5430 = vunpack.c.l.b16 %v675
        %v5431 = vunpack.c.h.b16 %v675
        %v5432 = vunpack.c.l.b16 %v676
        %v5433 = vunpack.c.h.b16 %v676
        %v5434 = vunpack.c.l.b16 %v677
        %v5435 = vunpack.c.h.b16 %v677
        %v5436 = vunpack.c.l.b16 %v678
        %v5437 = vunpack.c.h.b16 %v678
        %v5438 = vunpack.c.l.b16 %v679
        %v5439 = vunpack.c.h.b16 %v679
        %v5440 = vunpack.c.l.b16 %v680
        %v5441 = vunpack.c.h.b16 %v680
        %v5442 = vunpack.c.l.b16 %v681
        %v5443 = vunpack.c.h.b16 %v681
        %v5444 = vunpack.c.l.b16 %v682
        %v5445 = vunpack.c.h.b16 %v682
        %v5446 = vunpack.c.l.b16 %v683
        %v5447 = vunpack.c.h.b16 %v683
        %v5448 = vunpack.c.l.b16 %v684
        %v5449 = vunpack.c.h.b16 %v684
        %v5450 = vunpack.c.l.b16 %v685
        %v5451 = vunpack.c.h.b16 %v685
        %v5452 = vunpack.c.l.b16 %v686
        %v5453 = vunpack.c.h.b16 %v686
        %v5454 = vunpack.c.l.b16 %v687
        %v5455 = vunpack.c.h.b16 %v687
        %v5456 = vunpack.c.l.b16 %v688
        %v5457 = vunpack.c.h.b16 %v688
        %v5458 = vunpack.c.l.b16 %v689
        %v5459 = vunpack.c.h.b16 %v689
        %v5460 = vunpack.c.l.b16 %v690
        %v5461 = vunpack.c.h.b16 %v690
        %v5462 = vunpack.c.l.b16 %v691
        %v5463 = vunpack.c.h.b16 %v691
        %v5464 = vunpack.c.l.b16 %v692
        %v5465 = vunpack.c.h.b16 %v692
        %v5466 = vunpack.c.l.b16 %v693
        %v5467 = vunpack.c.h.b16 %v693
        %v5468 = vunpack.c.l.b16 %v694
        %v5469 = vunpack.c.h.b16 %v694
        %v5470 = vunpack.c.l.b16 %v695
        %v5471 = vunpack.c.h.b16 %v695
        %v5472 = vunpack.c.l.b16 %v696
        %v5473 = vunpack.c.h.b16 %v696
        %v5474 = vunpack.c.l.b16 %v697
        %v5475 = vunpack.c.h.b16 %v697
        %v5476 = vunpack.c.l.b16 %v698
        %v5477 = vunpack.c.h.b16 %v698
        %v5478 = vunpack.c.l.b16 %v699
        %v5479 = vunpack.c.h.b16 %v699
        %v5480 = vunpack.c.l.b16 %v700
        %v5481 = vunpack.c.h.b16 %v700
        %v5482 = vunpack.c.l.b16 %v701
        %v5483 = vunpack.c.h.b16 %v701
        %v5484 = vunpack.c.l.b16 %v702
        %v5485 = vunpack.c.h.b16 %v702
        %v5486 = vunpack.c.l.b16 %v703
        %v5487 = vunpack.c.h.b16 %v703
        %v5488 = vunpack.c.l.b16 %v704
        %v5489 = vunpack.c.h.b16 %v704
        %v5490 = vunpack.c.l.b16 %v705
        %v5491 = vunpack.c.h.b16 %v705
        %v5492 = vunpack.c.l.b16 %v706
        %v5493 = vunpack.c.h.b16 %v706
        %v5494 = vunpack.c.l.b16 %v707
        %v5495 = vunpack.c.h.b16 %v707
        %v5496 = vunpack.c.l.b16 %v708
        %v5497 = vunpack.c.h.b16 %v708
        %v5498 = vunpack.c.l.b16 %v709
        %v5499 = vunpack.c.h.b16 %v709
        %v5500 = vunpack.c.l.b16 %v710
        %v5501 = vunpack.c.h.b16 %v710
        %v5502 = vunpack.c.l.b16 %v711
        %v5503 = vunpack.c.h.b16 %v711
        %v5504 = vunpack.c.l.b16 %v712
        %v5505 = vunpack.c.h.b16 %v712
        %v5506 = vunpack.c.l.b16 %v713
        %v5507 = vunpack.c.h.b16 %v713
        %v5508 = vunpack.c.l.b16 %v714
        %v5509 = vunpack.c.h.b16 %v714
        %v5510 = vunpack.c.l.b16 %v715
        %v5511 = vunpack.c.h.b16 %v715
        %v5512 = vunpack.c.l.b16 %v716
        %v5513 = vunpack.c.h.b16 %v716
        %v5514 = vunpack.c.l.b16 %v717
        %v5515 = vunpack.c.h.b16 %v717
        %v5516 = vunpack.c.l.b16 %v718
        %v5517 = vunpack.c.h.b16 %v718
        %v5518 = vunpack.c.l.b16 %v719
        %v5519 = vunpack.c.h.b16 %v719
        %v5520 = vunpack.c.l.b16 %v720
        %v5521 = vunpack.c.h.b16 %v720
        %v5522 = vunpack.c.l.b16 %v721
        %v5523 = vunpack.c.h.b16 %v721
        %v5524 = vunpack.c.l.b16 %v722
        %v5525 = vunpack.c.h.b16 %v722
        %v5526 = vunpack.c.l.b16 %v723
        %v5527 = vunpack.c.h.b16 %v723
        %v5528 = vunpack.c.l.b16 %v724
        %v5529 = vunpack.c.h.b16 %v724
        %v5530 = vunpack.c.l.b16 %v725
        %v5531 = vunpack.c.h.b16 %v725
        %v5532 = vunpack.c.l.b16 %v726
        %v5533 = vunpack.c.h.b16 %v726
        %v5534 = vunpack.c.l.b16 %v727
        %v5535 = vunpack.c.h.b16 %v727
        %v5536 = vunpack.c.l.b16 %v728
        %v5537 = vunpack.c.h.b16 %v728
        %v5538 = vunpack.c.l.b16 %v729
        %v5539 = vunpack.c.h.b16 %v729
        %v5540 = vunpack.c.l.b16 %v730
        %v5541 = vunpack.c.h.b16 %v730
        %v5542 = vunpack.c.l.b16 %v731
        %v5543 = vunpack.c.h.b16 %v731
        %v5544 = vunpack.c.l.b16 %v732
        %v5545 = vunpack.c.h.b16 %v732
        %v5546 = vunpack.c.l.b16 %v733
        %v5547 = vunpack.c.h.b16 %v733
        %v5548 = vunpack.c.l.b16 %v734
        %v5549 = vunpack.c.h.b16 %v734
        %v5550 = vunpack.c.l.b16 %v735
        %v5551 = vunpack.c.h.b16 %v735
        %v5552 = vunpack.c.l.b16 %v736
        %v5553 = vunpack.c.h.b16 %v736
        %v5554 = vunpack.c.l.b16 %v737
        %v5555 = vunpack.c.h.b16 %v737
        %v5556 = vunpack.c.l.b16 %v738
        %v5557 = vunpack.c.h.b16 %v738
        %v5558 = vunpack.c.l.b16 %v739
        %v5559 = vunpack.c.h.b16 %v739
        %v5560 = vunpack.c.l.b16 %v740
        %v5561 = vunpack.c.h.b16 %v740
        %v5562 = vunpack.c.l.b16 %v741
        %v5563 = vunpack.c.h.b16 %v741
        %v5564 = vunpack.c.l.b16 %v742
        %v5565 = vunpack.c.h.b16 %v742
        %v5566 = vunpack.c.l.b16 %v743
        %v5567 = vunpack.c.h.b16 %v743
        %v5568 = vunpack.c.l.b16 %v744
        %v5569 = vunpack.c.h.b16 %v744
        %v5570 = vunpack.c.l.b16 %v745
        %v5571 = vunpack.c.h.b16 %v745
        %v5572 = vunpack.c.l.b16 %v746
        %v5573 = vunpack.c.h.b16 %v746
        %v5574 = vunpack.c.l.b16 %v747
        %v5575 = vunpack.c.h.b16 %v747
        %v5576 = vunpack.c.l.b16 %v748
        %v5577 = vunpack.c.h.b16 %v748
        %v5578 = vunpack.c.l.b16 %v749
        %v5579 = vunpack.c.h.b16 %v749
        %v5580 = vunpack.c.l.b16 %v750
        %v5581 = vunpack.c.h.b16 %v750
        %v5582 = vunpack.c.l.b16 %v751
        %v5583 = vunpack.c.h.b16 %v751
        %v5584 = vunpack.c.l.b16 %v752
        %v5585 = vunpack.c.h.b16 %v752
        %v5586 = vunpack.c.l.b16 %v753
        %v5587 = vunpack.c.h.b16 %v753
        %v5588 = vunpack.c.l.b16 %v754
        %v5589 = vunpack.c.h.b16 %v754
        %v5590 = vunpack.c.l.b16 %v755
        %v5591 = vunpack.c.h.b16 %v755
        %v5592 = vunpack.c.l.b16 %v756
        %v5593 = vunpack.c.h.b16 %v756
        %v5594 = vunpack.c.l.b16 %v757
        %v5595 = vunpack.c.h.b16 %v757
        %v5596 = vunpack.c.l.b16 %v758
        %v5597 = vunpack.c.h.b16 %v758
        %v5598 = vunpack.c.l.b16 %v759
        %v5599 = vunpack.c.h.b16 %v759
        %v5600 = vunpack.c.l.b16 %v760
        %v5601 = vunpack.c.h.b16 %v760
        %v5602 = vunpack.c.l.b16 %v761
        %v5603 = vunpack.c.h.b16 %v761
        %v5604 = vunpack.c.l.b16 %v762
        %v5605 = vunpack.c.h.b16 %v762
        %v5606 = vunpack.c.l.b16 %v763
        %v5607 = vunpack.c.h.b16 %v763
        %v5608 = vunpack.c.l.b16 %v764
        %v5609 = vunpack.c.h.b16 %v764
        %v5610 = vunpack.c.l.b16 %v765
        %v5611 = vunpack.c.h.b16 %v765
        %v5612 = vunpack.c.l.b16 %v766
        %v5613 = vunpack.c.h.b16 %v766
        %v5614 = vunpack.c.l.b16 %v767
        %v5615 = vunpack.c.h.b16 %v767
        %v5616 = vunpack.c.l.b16 %v768
        %v5617 = vunpack.c.h.b16 %v768
        %v5618 = vunpack.c.l.b16 %v769
        %v5619 = vunpack.c.h.b16 %v769
        %v5620 = vunpack.c.l.b16 %v770
        %v5621 = vunpack.c.h.b16 %v770
        %v5622 = vunpack.c.l.b16 %v771
        %v5623 = vunpack.c.h.b16 %v771
        %v5624 = vunpack.c.l.b16 %v772
        %v5625 = vunpack.c.h.b16 %v772
        %v5626 = vunpack.c.l.b16 %v773
        %v5627 = vunpack.c.h.b16 %v773
        %v5628 = vunpack.c.l.b16 %v774
        %v5629 = vunpack.c.h.b16 %v774
        %v5630 = vunpack.c.l.b16 %v775
        %v5631 = vunpack.c.h.b16 %v775
        %v5632 = vunpack.c.l.b16 %v776
        %v5633 = vunpack.c.h.b16 %v776
        %v5634 = vunpack.c.l.b16 %v777
        %v5635 = vunpack.c.h.b16 %v777
        %v5636 = vunpack.c.l.b16 %v778
        %v5637 = vunpack.c.h.b16 %v778
        %v5638 = vunpack.c.l.b16 %v779
        %v5639 = vunpack.c.h.b16 %v779
        %v5640 = vunpack.c.l.b16 %v780
        %v5641 = vunpack.c.h.b16 %v780
        %v5642 = vunpack.c.l.b16 %v781
        %v5643 = vunpack.c.h.b16 %v781
        %v5644 = vunpack.c.l.b16 %v782
        %v5645 = vunpack.c.h.b16 %v782
        %v5646 = vunpack.c.l.b16 %v783
        %v5647 = vunpack.c.h.b16 %v783
        %v5648 = vunpack.c.l.b16 %v784
        %v5649 = vunpack.c.h.b16 %v784
        %v5650 = vunpack.c.l.b16 %v785
        %v5651 = vunpack.c.h.b16 %v785
        %v5652 = vunpack.c.l.b16 %v786
        %v5653 = vunpack.c.h.b16 %v786
        %v5654 = vunpack.c.l.b16 %v787
        %v5655 = vunpack.c.h.b16 %v787
        %v5656 = vunpack.c.l.b16 %v788
        %v5657 = vunpack.c.h.b16 %v788
        %v5658 = vunpack.c.l.b16 %v789
        %v5659 = vunpack.c.h.b16 %v789
        %v5660 = vunpack.c.l.b16 %v790
        %v5661 = vunpack.c.h.b16 %v790
        %v5662 = vunpack.c.l.b16 %v791
        %v5663 = vunpack.c.h.b16 %v791
        %v5664 = vunpack.c.l.b16 %v792
        %v5665 = vunpack.c.h.b16 %v792
        %v5666 = vunpack.c.l.b16 %v793
        %v5667 = vunpack.c.h.b16 %v793
        %v5668 = vunpack.c.l.b16 %v794
        %v5669 = vunpack.c.h.b16 %v794
        %v5670 = vunpack.c.l.b16 %v795
        %v5671 = vunpack.c.h.b16 %v795
        %v5672 = vunpack.c.l.b16 %v796
        %v5673 = vunpack.c.h.b16 %v796
        %v5674 = vunpack.c.l.b16 %v797
        %v5675 = vunpack.c.h.b16 %v797
        %v5676 = vunpack.c.l.b16 %v798
        %v5677 = vunpack.c.h.b16 %v798
        %v5678 = vunpack.c.l.b16 %v799
        %v5679 = vunpack.c.h.b16 %v799
        %v5680 = vunpack.c.l.b16 %v800
        %v5681 = vunpack.c.h.b16 %v800
        %v5682 = vunpack.c.l.b16 %v801
        %v5683 = vunpack.c.h.b16 %v801
        %v5684 = vunpack.c.l.b16 %v802
        %v5685 = vunpack.c.h.b16 %v802
        %v5686 = vunpack.c.l.b16 %v803
        %v5687 = vunpack.c.h.b16 %v803
        %v5688 = vunpack.c.l.b16 %v804
        %v5689 = vunpack.c.h.b16 %v804
        %v5690 = vunpack.c.l.b16 %v805
        %v5691 = vunpack.c.h.b16 %v805
        %v5692 = vunpack.c.l.b16 %v806
        %v5693 = vunpack.c.h.b16 %v806
        %v5694 = vunpack.c.l.b16 %v807
        %v5695 = vunpack.c.h.b16 %v807
        %v5696 = vunpack.c.l.b16 %v808
        %v5697 = vunpack.c.h.b16 %v808
        %v5698 = vunpack.c.l.b16 %v809
        %v5699 = vunpack.c.h.b16 %v809
        %v5700 = vunpack.c.l.b16 %v810
        %v5701 = vunpack.c.h.b16 %v810
        %v5702 = vunpack.c.l.b16 %v811
        %v5703 = vunpack.c.h.b16 %v811
        %v5704 = vunpack.c.l.b16 %v812
        %v5705 = vunpack.c.h.b16 %v812
        %v5706 = vunpack.c.l.b16 %v813
        %v5707 = vunpack.c.h.b16 %v813
        %v5708 = vunpack.c.l.b16 %v814
        %v5709 = vunpack.c.h.b16 %v814
        %v5710 = vunpack.c.l.b16 %v815
        %v5711 = vunpack.c.h.b16 %v815
        %v5712 = vunpack.c.l.b16 %v816
        %v5713 = vunpack.c.h.b16 %v816
        %v5714 = vunpack.c.l.b16 %v817
        %v5715 = vunpack.c.h.b16 %v817
        %v5716 = vunpack.c.l.b16 %v818
        %v5717 = vunpack.c.h.b16 %v818
        %v5718 = vunpack.c.l.b16 %v819
        %v5719 = vunpack.c.h.b16 %v819
        %v5720 = vunpack.c.l.b16 %v820
        %v5721 = vunpack.c.h.b16 %v820
        %v5722 = vunpack.c.l.b16 %v821
        %v5723 = vunpack.c.h.b16 %v821
        %v5724 = vunpack.c.l.b16 %v822
        %v5725 = vunpack.c.h.b16 %v822
        %v5726 = vunpack.c.l.b16 %v823
        %v5727 = vunpack.c.h.b16 %v823
        %v5728 = vunpack.c.l.b16 %v824
        %v5729 = vunpack.c.h.b16 %v824
        %v5730 = vunpack.c.l.b16 %v825
        %v5731 = vunpack.c.h.b16 %v825
        %v5732 = vunpack.c.l.b16 %v826
        %v5733 = vunpack.c.h.b16 %v826
        %v5734 = vunpack.c.l.b16 %v827
        %v5735 = vunpack.c.h.b16 %v827
        %v5736 = vunpack.c.l.b16 %v828
        %v5737 = vunpack.c.h.b16 %v828
        %v5738 = vunpack.c.l.b16 %v829
        %v5739 = vunpack.c.h.b16 %v829
        %v5740 = vunpack.c.l.b16 %v830
        %v5741 = vunpack.c.h.b16 %v830
        %v5742 = vunpack.c.l.b16 %v831
        %v5743 = vunpack.c.h.b16 %v831
        %v5744 = vunpack.c.l.b16 %v832
        %v5745 = vunpack.c.h.b16 %v832
        %v5746 = vunpack.c.l.b16 %v833
        %v5747 = vunpack.c.h.b16 %v833
        %v5748 = vunpack.c.l.b16 %v834
        %v5749 = vunpack.c.h.b16 %v834
        %v5750 = vunpack.c.l.b16 %v835
        %v5751 = vunpack.c.h.b16 %v835
        %v5752 = vunpack.c.l.b16 %v836
        %v5753 = vunpack.c.h.b16 %v836
        %v5754 = vunpack.c.l.b16 %v837
        %v5755 = vunpack.c.h.b16 %v837
        %v5756 = vunpack.c.l.b16 %v838
        %v5757 = vunpack.c.h.b16 %v838
        %v5758 = vunpack.c.l.b16 %v839
        %v5759 = vunpack.c.h.b16 %v839
        %v5760 = vunpack.c.l.b16 %v840
        %v5761 = vunpack.c.h.b16 %v840
        %v5762 = vunpack.c.l.b16 %v841
        %v5763 = vunpack.c.h.b16 %v841
        %v5764 = vunpack.c.l.b16 %v842
        %v5765 = vunpack.c.h.b16 %v842
        %v5766 = vunpack.c.l.b16 %v843
        %v5767 = vunpack.c.h.b16 %v843
        %v5768 = vunpack.c.l.b16 %v844
        %v5769 = vunpack.c.h.b16 %v844
        %v5770 = vunpack.c.l.b16 %v845
        %v5771 = vunpack.c.h.b16 %v845
        %v5772 = vunpack.c.l.b16 %v846
        %v5773 = vunpack.c.h.b16 %v846
        %v5774 = vunpack.c.l.b16 %v847
        %v5775 = vunpack.c.h.b16 %v847
        %v5776 = vunpack.c.l.b16 %v848
        %v5777 = vunpack.c.h.b16 %v848
        %v5778 = vunpack.c.l.b16 %v849
        %v5779 = vunpack.c.h.b16 %v849
        %v5780 = vunpack.c.l.b16 %v850
        %v5781 = vunpack.c.h.b16 %v850
        %v5782 = vunpack.c.l.b16 %v851
        %v5783 = vunpack.c.h.b16 %v851
        %v5784 = vunpack.c.l.b16 %v852
        %v5785 = vunpack.c.h.b16 %v852
        %v5786 = vunpack.c.l.b16 %v853
        %v5787 = vunpack.c.h.b16 %v853
        %v5788 = vunpack.c.l.b16 %v854
        %v5789 = vunpack.c.h.b16 %v854
        %v5790 = vunpack.c.l.b16 %v855
        %v5791 = vunpack.c.h.b16 %v855
        %v5792 = vunpack.c.l.b16 %v856
        %v5793 = vunpack.c.h.b16 %v856
        %v5794 = vunpack.c.l.b16 %v857
        %v5795 = vunpack.c.h.b16 %v857
        %v5796 = vunpack.c.l.b16 %v858
        %v5797 = vunpack.c.h.b16 %v858
        %v5798 = vunpack.c.l.b16 %v859
        %v5799 = vunpack.c.h.b16 %v859
        %v5800 = vunpack.c.l.b16 %v860
        %v5801 = vunpack.c.h.b16 %v860
        %v5802 = vunpack.c.l.b16 %v861
        %v5803 = vunpack.c.h.b16 %v861
        %v5804 = vunpack.c.l.b16 %v862
        %v5805 = vunpack.c.h.b16 %v862
        %v5806 = vunpack.c.l.b16 %v863
        %v5807 = vunpack.c.h.b16 %v863
        %v5808 = vunpack.c.l.b16 %v864
        %v5809 = vunpack.c.h.b16 %v864
        %v5810 = vunpack.c.l.b16 %v865
        %v5811 = vunpack.c.h.b16 %v865
        %v5812 = vunpack.c.l.b16 %v866
        %v5813 = vunpack.c.h.b16 %v866
        %v5814 = vunpack.c.l.b16 %v867
        %v5815 = vunpack.c.h.b16 %v867
        %v5816 = vunpack.c.l.b16 %v868
        %v5817 = vunpack.c.h.b16 %v868
        %v5818 = vunpack.c.l.b16 %v869
        %v5819 = vunpack.c.h.b16 %v869
        %v5820 = vunpack.c.l.b16 %v870
        %v5821 = vunpack.c.h.b16 %v870
        %v5822 = vunpack.c.l.b16 %v871
        %v5823 = vunpack.c.h.b16 %v871
        %v5824 = vunpack.c.l.b16 %v872
        %v5825 = vunpack.c.h.b16 %v872
        %v5826 = vunpack.c.l.b16 %v873
        %v5827 = vunpack.c.h.b16 %v873
        %v5828 = vunpack.c.l.b16 %v874
        %v5829 = vunpack.c.h.b16 %v874
        %v5830 = vunpack.c.l.b16 %v875
        %v5831 = vunpack.c.h.b16 %v875
        %v5832 = vunpack.c.l.b16 %v876
        %v5833 = vunpack.c.h.b16 %v876
        %v5834 = vunpack.c.l.b16 %v877
        %v5835 = vunpack.c.h.b16 %v877
        %v5836 = vunpack.c.l.b16 %v878
        %v5837 = vunpack.c.h.b16 %v878
        %v5838 = vunpack.c.l.b16 %v879
        %v5839 = vunpack.c.h.b16 %v879
        %v5840 = vunpack.c.l.b16 %v880
        %v5841 = vunpack.c.h.b16 %v880
        %v5842 = vunpack.c.l.b16 %v881
        %v5843 = vunpack.c.h.b16 %v881
        %v5844 = vunpack.c.l.b16 %v882
        %v5845 = vunpack.c.h.b16 %v882
        %v5846 = vunpack.c.l.b16 %v883
        %v5847 = vunpack.c.h.b16 %v883
        %v5848 = vunpack.c.l.b16 %v884
        %v5849 = vunpack.c.h.b16 %v884
        %v5850 = vunpack.c.l.b16 %v885
        %v5851 = vunpack.c.h.b16 %v885
        %v5852 = vunpack.c.l.b16 %v886
        %v5853 = vunpack.c.h.b16 %v886
        %v5854 = vunpack.c.l.b16 %v887
        %v5855 = vunpack.c.h.b16 %v887
        %v5856 = vunpack.c.l.b16 %v888
        %v5857 = vunpack.c.h.b16 %v888
        %v5858 = vunpack.c.l.b16 %v889
        %v5859 = vunpack.c.h.b16 %v889
        %v5860 = vunpack.c.l.b16 %v890
        %v5861 = vunpack.c.h.b16 %v890
        %v5862 = vunpack.c.l.b16 %v891
        %v5863 = vunpack.c.h.b16 %v891
        %v5864 = vunpack.c.l.b16 %v892
        %v5865 = vunpack.c.h.b16 %v892
        %v5866 = vunpack.c.l.b16 %v893
        %v5867 = vunpack.c.h.b16 %v893
        %v5868 = vunpack.c.l.b16 %v894
        %v5869 = vunpack.c.h.b16 %v894
        %v5870 = vunpack.c.l.b16 %v895
        %v5871 = vunpack.c.h.b16 %v895
        %v5872 = vunpack.c.l.b16 %v896
        %v5873 = vunpack.c.h.b16 %v896
        %v5874 = vunpack.c.l.b16 %v897
        %v5875 = vunpack.c.h.b16 %v897
        %v5876 = vunpack.c.l.b16 %v898
        %v5877 = vunpack.c.h.b16 %v898
        %v5878 = vunpack.c.l.b16 %v899
        %v5879 = vunpack.c.h.b16 %v899
        %v5880 = vunpack.c.l.b16 %v900
        %v5881 = vunpack.c.h.b16 %v900
        %v5882 = vunpack.c.l.b16 %v901
        %v5883 = vunpack.c.h.b16 %v901
        %v5884 = vunpack.c.l.b16 %v902
        %v5885 = vunpack.c.h.b16 %v902
        %v5886 = vunpack.c.l.b16 %v903
        %v5887 = vunpack.c.h.b16 %v903
        %v5888 = vunpack.c.l.b16 %v904
        %v5889 = vunpack.c.h.b16 %v904
        %v5890 = vunpack.c.l.b16 %v905
        %v5891 = vunpack.c.h.b16 %v905
        %v5892 = vunpack.c.l.b16 %v906
        %v5893 = vunpack.c.h.b16 %v906
        %v5894 = vunpack.c.l.b16 %v907
        %v5895 = vunpack.c.h.b16 %v907
        %v5896 = vunpack.c.l.b16 %v908
        %v5897 = vunpack.c.h.b16 %v908
        %v5898 = vunpack.c.l.b16 %v909
        %v5899 = vunpack.c.h.b16 %v909
        %v5900 = vunpack.c.l.b16 %v910
        %v5901 = vunpack.c.h.b16 %v910
        %v5902 = vunpack.c.l.b16 %v911
        %v5903 = vunpack.c.h.b16 %v911
        %v5904 = vunpack.c.l.b16 %v912
        %v5905 = vunpack.c.h.b16 %v912
        %v5906 = vunpack.c.l.b16 %v913
        %v5907 = vunpack.c.h.b16 %v913
        %v5908 = vunpack.c.l.b16 %v914
        %v5909 = vunpack.c.h.b16 %v914
        %v5910 = vunpack.c.l.b16 %v915
        %v5911 = vunpack.c.h.b16 %v915
        %v5912 = vunpack.c.l.b16 %v916
        %v5913 = vunpack.c.h.b16 %v916
        %v5914 = vunpack.c.l.b16 %v917
        %v5915 = vunpack.c.h.b16 %v917
        %v5916 = vunpack.c.l.b16 %v918
        %v5917 = vunpack.c.h.b16 %v918
        %v5918 = vunpack.c.l.b16 %v919
        %v5919 = vunpack.c.h.b16 %v919
        %v5920 = vunpack.c.l.b16 %v920
        %v5921 = vunpack.c.h.b16 %v920
        %v5922 = vunpack.c.l.b16 %v921
        %v5923 = vunpack.c.h.b16 %v921
        %v5924 = vunpack.c.l.b16 %v922
        %v5925 = vunpack.c.h.b16 %v922
        %v5926 = vunpack.c.l.b16 %v923
        %v5927 = vunpack.c.h.b16 %v923
        %v5928 = vunpack.c.l.b16 %v924
        %v5929 = vunpack.c.h.b16 %v924
        %v5930 = vpack.c.b16 %v4980, %v4970
        %v5931 = vpack.c.b16 %v4981, %v4971
        %v5932 = vpack.c.b16 %v4982, %v4972
        %v5933 = vpack.c.b16 %v4983, %v4973
        %v5934 = vpack.c.b16 %v4984, %v4974
        %v5935 = vpack.c.b16 %v4985, %v4975
        %v5936 = vpack.c.b16 %v4986, %v4976
        %v5937 = vpack.c.b16 %v4987, %v4977
        %v5938 = vpack.c.b16 %v4988, %v4978
        %v5939 = vpack.c.b16 %v4989, %v4979
        %v5940 = vpack.c.b16 %v5000, %v4990
        %v5941 = vpack.c.b16 %v5001, %v4991
        %v5942 = vpack.c.b16 %v5002, %v4992
        %v5943 = vpack.c.b16 %v5003, %v4993
        %v5944 = vpack.c.b16 %v5004, %v4994
        %v5945 = vpack.c.b16 %v5005, %v4995
        %v5946 = vpack.c.b16 %v5006, %v4996
        %v5947 = vpack.c.b16 %v5007, %v4997
        %v5948 = vpack.c.b16 %v5008, %v4998
        %v5949 = vpack.c.b16 %v5009, %v4999
        %v5950 = vpack.c.b16 %v5020, %v5010
        %v5951 = vpack.c.b16 %v5021, %v5011
        %v5952 = vpack.c.b16 %v5022, %v5012
        %v5953 = vpack.c.b16 %v5023, %v5013
        %v5954 = vpack.c.b16 %v5024, %v5014
        %v5955 = vpack.c.b16 %v5025, %v5015
        %v5956 = vpack.c.b16 %v5026, %v5016
        %v5957 = vpack.c.b16 %v5027, %v5017
        %v5958 = vpack.c.b16 %v5028, %v5018
        %v5959 = vpack.c.b16 %v5029, %v5019
        %v5960 = vpack.c.b16 %v5040, %v5030
        %v5961 = vpack.c.b16 %v5041, %v5031
        %v5962 = vpack.c.b16 %v5042, %v5032
        %v5963 = vpack.c.b16 %v5043, %v5033
        %v5964 = vpack.c.b16 %v5044, %v5034
        %v5965 = vpack.c.b16 %v5045, %v5035
        %v5966 = vpack.c.b16 %v5046, %v5036
        %v5967 = vpack.c.b16 %v5047, %v5037
        %v5968 = vpack.c.b16 %v5048, %v5038
        %v5969 = vpack.c.b16 %v5049, %v5039
        %v5970 = vpack.c.b16 %v5060, %v5050
        %v5971 = vpack.c.b16 %v5061, %v5051
        %v5972 = vpack.c.b16 %v5062, %v5052
        %v5973 = vpack.c.b16 %v5063, %v5053
        %v5974 = vpack.c.b16 %v5064, %v5054
        %v5975 = vpack.c.b16 %v5065, %v5055
        %v5976 = vpack.c.b16 %v5066, %v5056
        %v5977 = vpack.c.b16 %v5067, %v5057
        %v5978 = vpack.c.b16 %v5068, %v5058
        %v5979 = vpack.c.b16 %v5069, %v5059
        %v5980 = vpack.c.b16 %v5080, %v5070
        %v5981 = vpack.c.b16 %v5081, %v5071
        %v5982 = vpack.c.b16 %v5082, %v5072
        %v5983 = vpack.c.b16 %v5083, %v5073
        %v5984 = vpack.c.b16 %v5084, %v5074
        %v5985 = vpack.c.b16 %v5085, %v5075
        %v5986 = vpack.c.b16 %v5086, %v5076
        %v5987 = vpack.c.b16 %v5087, %v5077
        %v5988 = vpack.c.b16 %v5088, %v5078
        %v5989 = vpack.c.b16 %v5089, %v5079
        %v5990 = vpack.c.b16 %v5100, %v5090
        %v5991 = vpack.c.b16 %v5101, %v5091
        %v5992 = vpack.c.b16 %v5102, %v5092
        %v5993 = vpack.c.b16 %v5103, %v5093
        %v5994 = vpack.c.b16 %v5104, %v5094
        %v5995 = vpack.c.b16 %v5105, %v5095
        %v5996 = vpack.c.b16 %v5106, %v5096
        %v5997 = vpack.c.b16 %v5107, %v5097
        %v5998 = vpack.c.b16 %v5108, %v5098
        %v5999 = vpack.c.b16 %v5109, %v5099
        %v6000 = vpack.c.b16 %v5120, %v5110
        %v6001 = vpack.c.b16 %v5121, %v5111
        %v6002 = vpack.c.b16 %v5122, %v5112
        %v6003 = vpack.c.b16 %v5123, %v5113
        %v6004 = vpack.c.b16 %v5124, %v5114
        %v6005 = vpack.c.b16 %v5125, %v5115
        %v6006 = vpack.c.b16 %v5126, %v5116
        %v6007 = vpack.c.b16 %v5127, %v5117
        %v6008 = vpack.c.b16 %v5128, %v5118
        %v6009 = vpack.c.b16 %v5129, %v5119
        %v6010 = vpack.c.b16 %v5140, %v5130
        %v6011 = vpack.c.b16 %v5141, %v5131
        %v6012 = vpack.c.b16 %v5142, %v5132
        %v6013 = vpack.c.b16 %v5143, %v5133
        %v6014 = vpack.c.b16 %v5144, %v5134
        %v6015 = vpack.c.b16 %v5145, %v5135
        %v6016 = vpack.c.b16 %v5146, %v5136
        %v6017 = vpack.c.b16 %v5147, %v5137
        %v6018 = vpack.c.b16 %v5148, %v5138
        %v6019 = vpack.c.b16 %v5149, %v5139
        %v6020 = vpack.c.b16 %v5160, %v5150
        %v6021 = vpack.c.b16 %v5161, %v5151
        %v6022 = vpack.c.b16 %v5162, %v5152
        %v6023 = vpack.c.b16 %v5163, %v5153
        %v6024 = vpack.c.b16 %v5164, %v5154
        %v6025 = vpack.c.b16 %v5165, %v5155
        %v6026 = vpack.c.b16 %v5166, %v5156
        %v6027 = vpack.c.b16 %v5167, %v5157
        %v6028 = vpack.c.b16 %v5168, %v5158
        %v6029 = vpack.c.b16 %v5169, %v5159
        %v6030 = vpack.c.b16 %v5180, %v5170
        %v6031 = vpack.c.b16 %v5181, %v5171
        %v6032 = vpack.c.b16 %v5182, %v5172
        %v6033 = vpack.c.b16 %v5183, %v5173
        %v6034 = vpack.c.b16 %v5184, %v5174
        %v6035 = vpack.c.b16 %v5185, %v5175
        %v6036 = vpack.c.b16 %v5186, %v5176
        %v6037 = vpack.c.b16 %v5187, %v5177
        %v6038 = vpack.c.b16 %v5188, %v5178
        %v6039 = vpack.c.b16 %v5189, %v5179
        %v6040 = vpack.c.b16 %v5200, %v5190
        %v6041 = vpack.c.b16 %v5201, %v5191
        %v6042 = vpack.c.b16 %v5202, %v5192
        %v6043 = vpack.c.b16 %v5203, %v5193
        %v6044 = vpack.c.b16 %v5204, %v5194
        %v6045 = vpack.c.b16 %v5205, %v5195
        %v6046 = vpack.c.b16 %v5206, %v5196
        %v6047 = vpack.c.b16 %v5207, %v5197
        %v6048 = vpack.c.b16 %v5208, %v5198
        %v6049 = vpack.c.b16 %v5209, %v5199
        %v6050 = vpack.c.b16 %v5220, %v5210
        %v6051 = vpack.c.b16 %v5221, %v5211
        %v6052 = vpack.c.b16 %v5222, %v5212
        %v6053 = vpack.c.b16 %v5223, %v5213
        %v6054 = vpack.c.b16 %v5224, %v5214
        %v6055 = vpack.c.b16 %v5225, %v5215
        %v6056 = vpack.c.b16 %v5226, %v5216
        %v6057 = vpack.c.b16 %v5227, %v5217
        %v6058 = vpack.c.b16 %v5228, %v5218
        %v6059 = vpack.c.b16 %v5229, %v5219
        %v6060 = vpack.c.b16 %v5240, %v5230
        %v6061 = vpack.c.b16 %v5241, %v5231
        %v6062 = vpack.c.b16 %v5242, %v5232
        %v6063 = vpack.c.b16 %v5243, %v5233
        %v6064 = vpack.c.b16 %v5244, %v5234
        %v6065 = vpack.c.b16 %v5245, %v5235
        %v6066 = vpack.c.b16 %v5246, %v5236
        %v6067 = vpack.c.b16 %v5247, %v5237
        %v6068 = vpack.c.b16 %v5248, %v5238
        %v6069 = vpack.c.b16 %v5249, %v5239
        %v6070 = vpack.c.b16 %v5260, %v5250
        %v6071 = vpack.c.b16 %v5261, %v5251
        %v6072 = vpack.c.b16 %v5262, %v5252
        %v6073 = vpack.c.b16 %v5263, %v5253
        %v6074 = vpack.c.b16 %v5264, %v5254
        %v6075 = vpack.c.b16 %v5265, %v5255
        %v6076 = vpack.c.b16 %v5266, %v5256
        %v6077 = vpack.c.b16 %v5267, %v5257
        %v6078 = vpack.c.b16 %v5268, %v5258
        %v6079 = vpack.c.b16 %v5269, %v5259
        %v6080 = vpack.c.b16 %v5280, %v5270
        %v6081 = vpack.c.b16 %v5281, %v5271
        %v6082 = vpack.c.b16 %v5282, %v5272
        %v6083 = vpack.c.b16 %v5283, %v5273
        %v6084 = vpack.c.b16 %v5284, %v5274
        %v6085 = vpack.c.b16 %v5285, %v5275
        %v6086 = vpack.c.b16 %v5286, %v5276
        %v6087 = vpack.c.b16 %v5287, %v5277
        %v6088 = vpack.c.b16 %v5288, %v5278
        %v6089 = vpack.c.b16 %v5289, %v5279
        %v6090 = vpack.c.b16 %v5300, %v5290
        %v6091 = vpack.c.b16 %v5301, %v5291
        %v6092 = vpack.c.b16 %v5302, %v5292
        %v6093 = vpack.c.b16 %v5303, %v5293
        %v6094 = vpack.c.b16 %v5304, %v5294
        %v6095 = vpack.c.b16 %v5305, %v5295
        %v6096 = vpack.c.b16 %v5306, %v5296
        %v6097 = vpack.c.b16 %v5307, %v5297
        %v6098 = vpack.c.b16 %v5308, %v5298
        %v6099 = vpack.c.b16 %v5309, %v5299
        %v6100 = vpack.c.b16 %v5320, %v5310
        %v6101 = vpack.c.b16 %v5321, %v5311
        %v6102 = vpack.c.b16 %v5322, %v5312
        %v6103 = vpack.c.b16 %v5323, %v5313
        %v6104 = vpack.c.b16 %v5324, %v5314
        %v6105 = vpack.c.b16 %v5325, %v5315
        %v6106 = vpack.c.b16 %v5326, %v5316
        %v6107 = vpack.c.b16 %v5327, %v5317
        %v6108 = vpack.c.b16 %v5328, %v5318
        %v6109 = vpack.c.b16 %v5329, %v5319
        %v6110 = vpack.c.b16 %v5340, %v5330
        %v6111 = vpack.c.b16 %v5341, %v5331
        %v6112 = vpack.c.b16 %v5342, %v5332
        %v6113 = vpack.c.b16 %v5343, %v5333
        %v6114 = vpack.c.b16 %v5344, %v5334
        %v6115 = vpack.c.b16 %v5345, %v5335
        %v6116 = vpack.c.b16 %v5346, %v5336
        %v6117 = vpack.c.b16 %v5347, %v5337
        %v6118 = vpack.c.b16 %v5348, %v5338
        %v6119 = vpack.c.b16 %v5349, %v5339
        %v6120 = vpack.c.b16 %v5360, %v5350
        %v6121 = vpack.c.b16 %v5361, %v5351
        %v6122 = vpack.c.b16 %v5362, %v5352
        %v6123 = vpack.c.b16 %v5363, %v5353
        %v6124 = vpack.c.b16 %v5364, %v5354
        %v6125 = vpack.c.b16 %v5365, %v5355
        %v6126 = vpack.c.b16 %v5366, %v5356
        %v6127 = vpack.c.b16 %v5367, %v5357
        %v6128 = vpack.c.b16 %v5368, %v5358
        %v6129 = vpack.c.b16 %v5369, %v5359
        %v6130 = vpack.c.b16 %v5380, %v5370
        %v6131 = vpack.c.b16 %v5381, %v5371
        %v6132 = vpack.c.b16 %v5382, %v5372
        %v6133 = vpack.c.b16 %v5383, %v5373
        %v6134 = vpack.c.b16 %v5384, %v5374
        %v6135 = vpack.c.b16 %v5385, %v5375
        %v6136 = vpack.c.b16 %v5386, %v5376
        %v6137 = vpack.c.b16 %v5387, %v5377
        %v6138 = vpack.c.b16 %v5388, %v5378
        %v6139 = vpack.c.b16 %v5389, %v5379
        %v6140 = vpack.c.b16 %v5400, %v5390
        %v6141 = vpack.c.b16 %v5401, %v5391
        %v6142 = vpack.c.b16 %v5402, %v5392
        %v6143 = vpack.c.b16 %v5403, %v5393
        %v6144 = vpack.c.b16 %v5404, %v5394
        %v6145 = vpack.c.b16 %v5405, %v5395
        %v6146 = vpack.c.b16 %v5406, %v5396
        %v6147 = vpack.c.b16 %v5407, %v5397
        %v6148 = vpack.c.b16 %v5408, %v5398
        %v6149 = vpack.c.b16 %v5409, %v5399
        %v6150 = vpack.c.b16 %v5420, %v5410
        %v6151 = vpack.c.b16 %v5421, %v5411
        %v6152 = vpack.c.b16 %v5422, %v5412
        %v6153 = vpack.c.b16 %v5423, %v5413
        %v6154 = vpack.c.b16 %v5424, %v5414
        %v6155 = vpack.c.b16 %v5425, %v5415
        %v6156 = vpack.c.b16 %v5426, %v5416
        %v6157 = vpack.c.b16 %v5427, %v5417
        %v6158 = vpack.c.b16 %v5428, %v5418
        %v6159 = vpack.c.b16 %v5429, %v5419
        %v6160 = vpack.c.b16 %v5440, %v5430
        %v6161 = vpack.c.b16 %v5441, %v5431
        %v6162 = vpack.c.b16 %v5442, %v5432
        %v6163 = vpack.c.b16 %v5443, %v5433
        %v6164 = vpack.c.b16 %v5444, %v5434
        %v6165 = vpack.c.b16 %v5445, %v5435
        %v6166 = vpack.c.b16 %v5446, %v5436
        %v6167 = vpack.c.b16 %v5447, %v5437
        %v6168 = vpack.c.b16 %v5448, %v5438
        %v6169 = vpack.c.b16 %v5449, %v5439
        %v6170 = vpack.c.b16 %v5460, %v5450
        %v6171 = vpack.c.b16 %v5461, %v5451
        %v6172 = vpack.c.b16 %v5462, %v5452
        %v6173 = vpack.c.b16 %v5463, %v5453
        %v6174 = vpack.c.b16 %v5464, %v5454
        %v6175 = vpack.c.b16 %v5465, %v5455
        %v6176 = vpack.c.b16 %v5466, %v5456
        %v6177 = vpack.c.b16 %v5467, %v5457
        %v6178 = vpack.c.b16 %v5468, %v5458
        %v6179 = vpack.c.b16 %v5469, %v5459
        %v6180 = vpack.c.b16 %v5480, %v5470
        %v6181 = vpack.c.b16 %v5481, %v5471
        %v6182 = vpack.c.b16 %v5482, %v5472
        %v6183 = vpack.c.b16 %v5483, %v5473
        %v6184 = vpack.c.b16 %v5484, %v5474
        %v6185 = vpack.c.b16 %v5485, %v5475
        %v6186 = vpack.c.b16 %v5486, %v5476
        %v6187 = vpack.c.b16 %v5487, %v5477
        %v6188 = vpack.c.b16 %v5488, %v5478
        %v6189 = vpack.c.b16 %v5489, %v5479
        %v6190 = vpack.c.b16 %v5500, %v5490
        %v6191 = vpack.c.b16 %v5501, %v5491
        %v6192 = vpack.c.b16 %v5502, %v5492
        %v6193 = vpack.c.b16 %v5503, %v5493
        %v6194 = vpack.c.b16 %v5504, %v5494
        %v6195 = vpack.c.b16 %v5505, %v5495
        %v6196 = vpack.c.b16 %v5506, %v5496
        %v6197 = vpack.c.b16 %v5507, %v5497
        %v6198 = vpack.c.b16 %v5508, %v5498
        %v6199 = vpack.c.b16 %v5509, %v5499
        %v6200 = vpack.c.b16 %v5520, %v5510
        %v6201 = vpack.c.b16 %v5521, %v5511
        %v6202 = vpack.c.b16 %v5522, %v5512
        %v6203 = vpack.c.b16 %v5523, %v5513
        %v6204 = vpack.c.b16 %v5524, %v5514
        %v6205 = vpack.c.b16 %v5525, %v5515
        %v6206 = vpack.c.b16 %v5526, %v5516
        %v6207 = vpack.c.b16 %v5527, %v5517
        %v6208 = vpack.c.b16 %v5528, %v5518
        %v6209 = vpack.c.b16 %v5529, %v5519
        %v6210 = vpack.c.b16 %v5540, %v5530
        %v6211 = vpack.c.b16 %v5541, %v5531
        %v6212 = vpack.c.b16 %v5542, %v5532
        %v6213 = vpack.c.b16 %v5543, %v5533
        %v6214 = vpack.c.b16 %v5544, %v5534
        %v6215 = vpack.c.b16 %v5545, %v5535
        %v6216 = vpack.c.b16 %v5546, %v5536
        %v6217 = vpack.c.b16 %v5547, %v5537
        %v6218 = vpack.c.b16 %v5548, %v5538
        %v6219 = vpack.c.b16 %v5549, %v5539
        %v6220 = vpack.c.b16 %v5560, %v5550
        %v6221 = vpack.c.b16 %v5561, %v5551
        %v6222 = vpack.c.b16 %v5562, %v5552
        %v6223 = vpack.c.b16 %v5563, %v5553
        %v6224 = vpack.c.b16 %v5564, %v5554
        %v6225 = vpack.c.b16 %v5565, %v5555
        %v6226 = vpack.c.b16 %v5566, %v5556
        %v6227 = vpack.c.b16 %v5567, %v5557
        %v6228 = vpack.c.b16 %v5568, %v5558
        %v6229 = vpack.c.b16 %v5569, %v5559
        %v6230 = vpack.c.b16 %v5580, %v5570
        %v6231 = vpack.c.b16 %v5581, %v5571
        %v6232 = vpack.c.b16 %v5582, %v5572
        %v6233 = vpack.c.b16 %v5583, %v5573
        %v6234 = vpack.c.b16 %v5584, %v5574
        %v6235 = vpack.c.b16 %v5585, %v5575
        %v6236 = vpack.c.b16 %v5586, %v5576
        %v6237 = vpack.c.b16 %v5587, %v5577
        %v6238 = vpack.c.b16 %v5588, %v5578
        %v6239 = vpack.c.b16 %v5589, %v5579
        %v6240 = vpack.c.b16 %v5600, %v5590
        %v6241 = vpack.c.b16 %v5601, %v5591
        %v6242 = vpack.c.b16 %v5602, %v5592
        %v6243 = vpack.c.b16 %v5603, %v5593
        %v6244 = vpack.c.b16 %v5604, %v5594
        %v6245 = vpack.c.b16 %v5605, %v5595
        %v6246 = vpack.c.b16 %v5606, %v5596
        %v6247 = vpack.c.b16 %v5607, %v5597
        %v6248 = vpack.c.b16 %v5608, %v5598
        %v6249 = vpack.c.b16 %v5609, %v5599
        %v6250 = vpack.c.b16 %v5620, %v5610
        %v6251 = vpack.c.b16 %v5621, %v5611
        %v6252 = vpack.c.b16 %v5622, %v5612
        %v6253 = vpack.c.b16 %v5623, %v5613
        %v6254 = vpack.c.b16 %v5624, %v5614
        %v6255 = vpack.c.b16 %v5625, %v5615
        %v6256 = vpack.c.b16 %v5626, %v5616
        %v6257 = vpack.c.b16 %v5627, %v5617
        %v6258 = vpack.c.b16 %v5628, %v5618
        %v6259 = vpack.c.b16 %v5629, %v5619
        %v6260 = vpack.c.b16 %v5640, %v5630
        %v6261 = vpack.c.b16 %v5641, %v5631
        %v6262 = vpack.c.b16 %v5642, %v5632
        %v6263 = vpack.c.b16 %v5643, %v5633
        %v6264 = vpack.c.b16 %v5644, %v5634
        %v6265 = vpack.c.b16 %v5645, %v5635
        %v6266 = vpack.c.b16 %v5646, %v5636
        %v6267 = vpack.c.b16 %v5647, %v5637
        %v6268 = vpack.c.b16 %v5648, %v5638
        %v6269 = vpack.c.b16 %v5649, %v5639
        %v6270 = vpack.c.b16 %v5660, %v5650
        %v6271 = vpack.c.b16 %v5661, %v5651
        %v6272 = vpack.c.b16 %v5662, %v5652
        %v6273 = vpack.c.b16 %v5663, %v5653
        %v6274 = vpack.c.b16 %v5664, %v5654
        %v6275 = vpack.c.b16 %v5665, %v5655
        %v6276 = vpack.c.b16 %v5666, %v5656
        %v6277 = vpack.c.b16 %v5667, %v5657
        %v6278 = vpack.c.b16 %v5668, %v5658
        %v6279 = vpack.c.b16 %v5669, %v5659
        %v6280 = vpack.c.b16 %v5680, %v5670
        %v6281 = vpack.c.b16 %v5681, %v5671
        %v6282 = vpack.c.b16 %v5682, %v5672
        %v6283 = vpack.c.b16 %v5683, %v5673
        %v6284 = vpack.c.b16 %v5684, %v5674
        %v6285 = vpack.c.b16 %v5685, %v5675
        %v6286 = vpack.c.b16 %v5686, %v5676
        %v6287 = vpack.c.b16 %v5687, %v5677
        %v6288 = vpack.c.b16 %v5688, %v5678
        %v6289 = vpack.c.b16 %v5689, %v5679
        %v6290 = vpack.c.b16 %v5700, %v5690
        %v6291 = vpack.c.b16 %v5701, %v5691
        %v6292 = vpack.c.b16 %v5702, %v5692
        %v6293 = vpack.c.b16 %v5703, %v5693
        %v6294 = vpack.c.b16 %v5704, %v5694
        %v6295 = vpack.c.b16 %v5705, %v5695
        %v6296 = vpack.c.b16 %v5706, %v5696
        %v6297 = vpack.c.b16 %v5707, %v5697
        %v6298 = vpack.c.b16 %v5708, %v5698
        %v6299 = vpack.c.b16 %v5709, %v5699
        %v6300 = vpack.c.b16 %v5720, %v5710
        %v6301 = vpack.c.b16 %v5721, %v5711
        %v6302 = vpack.c.b16 %v5722, %v5712
        %v6303 = vpack.c.b16 %v5723, %v5713
        %v6304 = vpack.c.b16 %v5724, %v5714
        %v6305 = vpack.c.b16 %v5725, %v5715
        %v6306 = vpack.c.b16 %v5726, %v5716
        %v6307 = vpack.c.b16 %v5727, %v5717
        %v6308 = vpack.c.b16 %v5728, %v5718
        %v6309 = vpack.c.b16 %v5729, %v5719
        %v6310 = vpack.c.b16 %v5740, %v5730
        %v6311 = vpack.c.b16 %v5741, %v5731
        %v6312 = vpack.c.b16 %v5742, %v5732
        %v6313 = vpack.c.b16 %v5743, %v5733
        %v6314 = vpack.c.b16 %v5744, %v5734
        %v6315 = vpack.c.b16 %v5745, %v5735
        %v6316 = vpack.c.b16 %v5746, %v5736
        %v6317 = vpack.c.b16 %v5747, %v5737
        %v6318 = vpack.c.b16 %v5748, %v5738
        %v6319 = vpack.c.b16 %v5749, %v5739
        %v6320 = vpack.c.b16 %v5760, %v5750
        %v6321 = vpack.c.b16 %v5761, %v5751
        %v6322 = vpack.c.b16 %v5762, %v5752
        %v6323 = vpack.c.b16 %v5763, %v5753
        %v6324 = vpack.c.b16 %v5764, %v5754
        %v6325 = vpack.c.b16 %v5765, %v5755
        %v6326 = vpack.c.b16 %v5766, %v5756
        %v6327 = vpack.c.b16 %v5767, %v5757
        %v6328 = vpack.c.b16 %v5768, %v5758
        %v6329 = vpack.c.b16 %v5769, %v5759
        %v6330 = vpack.c.b16 %v5780, %v5770
        %v6331 = vpack.c.b16 %v5781, %v5771
        %v6332 = vpack.c.b16 %v5782, %v5772
        %v6333 = vpack.c.b16 %v5783, %v5773
        %v6334 = vpack.c.b16 %v5784, %v5774
        %v6335 = vpack.c.b16 %v5785, %v5775
        %v6336 = vpack.c.b16 %v5786, %v5776
        %v6337 = vpack.c.b16 %v5787, %v5777
        %v6338 = vpack.c.b16 %v5788, %v5778
        %v6339 = vpack.c.b16 %v5789, %v5779
        %v6340 = vpack.c.b16 %v5800, %v5790
        %v6341 = vpack.c.b16 %v5801, %v5791
        %v6342 = vpack.c.b16 %v5802, %v5792
        %v6343 = vpack.c.b16 %v5803, %v5793
        %v6344 = vpack.c.b16 %v5804, %v5794
        %v6345 = vpack.c.b16 %v5805, %v5795
        %v6346 = vpack.c.b16 %v5806, %v5796
        %v6347 = vpack.c.b16 %v5807, %v5797
        %v6348 = vpack.c.b16 %v5808, %v5798
        %v6349 = vpack.c.b16 %v5809, %v5799
        %v6350 = vpack.c.b16 %v5820, %v5810
        %v6351 = vpack.c.b16 %v5821, %v5811
        %v6352 = vpack.c.b16 %v5822, %v5812
        %v6353 = vpack.c.b16 %v5823, %v5813
        %v6354 = vpack.c.b16 %v5824, %v5814
        %v6355 = vpack.c.b16 %v5825, %v5815
        %v6356 = vpack.c.b16 %v5826, %v5816
        %v6357 = vpack.c.b16 %v5827, %v5817
        %v6358 = vpack.c.b16 %v5828, %v5818
        %v6359 = vpack.c.b16 %v5829, %v5819
        %v6360 = vpack.c.b16 %v5840, %v5830
        %v6361 = vpack.c.b16 %v5841, %v5831
        %v6362 = vpack.c.b16 %v5842, %v5832
        %v6363 = vpack.c.b16 %v5843, %v5833
        %v6364 = vpack.c.b16 %v5844, %v5834
        %v6365 = vpack.c.b16 %v5845, %v5835
        %v6366 = vpack.c.b16 %v5846, %v5836
        %v6367 = vpack.c.b16 %v5847, %v5837
        %v6368 = vpack.c.b16 %v5848, %v5838
        %v6369 = vpack.c.b16 %v5849, %v5839
        %v6370 = vpack.c.b16 %v5860, %v5850
        %v6371 = vpack.c.b16 %v5861, %v5851
        %v6372 = vpack.c.b16 %v5862, %v5852
        %v6373 = vpack.c.b16 %v5863, %v5853
        %v6374 = vpack.c.b16 %v5864, %v5854
        %v6375 = vpack.c.b16 %v5865, %v5855
        %v6376 = vpack.c.b16 %v5866, %v5856
        %v6377 = vpack.c.b16 %v5867, %v5857
        %v6378 = vpack.c.b16 %v5868, %v5858
        %v6379 = vpack.c.b16 %v5869, %v5859
        %v6380 = vpack.c.b16 %v5880, %v5870
        %v6381 = vpack.c.b16 %v5881, %v5871
        %v6382 = vpack.c.b16 %v5882, %v5872
        %v6383 = vpack.c.b16 %v5883, %v5873
        %v6384 = vpack.c.b16 %v5884, %v5874
        %v6385 = vpack.c.b16 %v5885, %v5875
        %v6386 = vpack.c.b16 %v5886, %v5876
        %v6387 = vpack.c.b16 %v5887, %v5877
        %v6388 = vpack.c.b16 %v5888, %v5878
        %v6389 = vpack.c.b16 %v5889, %v5879
        %v6390 = vpack.c.b16 %v5900, %v5890
        %v6391 = vpack.c.b16 %v5901, %v5891
        %v6392 = vpack.c.b16 %v5902, %v5892
        %v6393 = vpack.c.b16 %v5903, %v5893
        %v6394 = vpack.c.b16 %v5904, %v5894
        %v6395 = vpack.c.b16 %v5905, %v5895
        %v6396 = vpack.c.b16 %v5906, %v5896
        %v6397 = vpack.c.b16 %v5907, %v5897
        %v6398 = vpack.c.b16 %v5908, %v5898
        %v6399 = vpack.c.b16 %v5909, %v5899
        %v6400 = vpack.c.b16 %v5920, %v5910
        %v6401 = vpack.c.b16 %v5921, %v5911
        %v6402 = vpack.c.b16 %v5922, %v5912
        %v6403 = vpack.c.b16 %v5923, %v5913
        %v6404 = vpack.c.b16 %v5924, %v5914
        %v6405 = vpack.c.b16 %v5925, %v5915
        %v6406 = vpack.c.b16 %v5926, %v5916
        %v6407 = vpack.c.b16 %v5927, %v5917
        %v6408 = vpack.c.b16 %v5928, %v5918
        %v6409 = vpack.c.b16 %v5929, %v5919
        %6890 = vmatprep.subr.bf16.mxu0 %v5931
        %6891 = vmatpush1.bf16.msra.mxu0 %v5930
        %6892 = vmatprep.subr.bf16.mxu0 %v5941
        %6893 = vmatpush1.bf16.msra.mxu0 %v5940
        %6894 = vmatprep.subr.bf16.mxu0 %v5951
        %6895 = vmatpush1.bf16.msra.mxu0 %v5950
        %6896 = vmatprep.subr.bf16.mxu0 %v5961
        %6897 = vmatpush1.bf16.msra.mxu0 %v5960
        %6898 = vmatprep.subr.bf16.mxu0 %v5971
        %6899 = vmatpush1.bf16.msra.mxu0 %v5970
        %6900 = vmatprep.subr.bf16.mxu0 %v5981
        %6901 = vmatpush1.bf16.msra.mxu0 %v5980
        %6902 = vmatprep.subr.bf16.mxu0 %v5991
        %6903 = vmatpush1.bf16.msra.mxu0 %v5990
        %6904 = vmatprep.subr.bf16.mxu0 %v6001
        %6905 = vmatpush1.bf16.msra.mxu0 %v6000
        %6906 = vmatprep.subr.bf16.mxu0 %v6011
        %6907 = vmatpush1.bf16.msra.mxu0 %v6010
        %6908 = vmatprep.subr.bf16.mxu0 %v6021
        %6909 = vmatpush1.bf16.msra.mxu0 %v6020
        %6910 = vmatprep.subr.bf16.mxu0 %v6031
        %6911 = vmatpush1.bf16.msra.mxu0 %v6030
        %6912 = vmatprep.subr.bf16.mxu0 %v6041
        %6913 = vmatpush1.bf16.msra.mxu0 %v6040
        %6914 = vmatprep.subr.bf16.mxu0 %v6051
        %6915 = vmatpush1.bf16.msra.mxu0 %v6050
        %6916 = vmatprep.subr.bf16.mxu0 %v6061
        %6917 = vmatpush1.bf16.msra.mxu0 %v6060
        %6918 = vmatprep.subr.bf16.mxu0 %v6071
        %6919 = vmatpush1.bf16.msra.mxu0 %v6070
        %6920 = vmatprep.subr.bf16.mxu0 %v6081
        %6921 = vmatpush1.bf16.msra.mxu0 %v6080
        %6922 = vmatprep.mubr.bf16.mxu0 %v1416
        %6923 = vmatmul.mubr.bf16.gmra.mrb[0].mxu0 %v1415
        %v6924 = vpop.f32.mrb[0].mxu0
        %v6925 = vadd.f32 %v3986, %v6924
        %v6926 = vpop.f32.mrb[0].mxu0
        %v6927 = vadd.f32 %v3988, %v6926
        %v6928 = vpop.f32.mrb[0].mxu0
        %v6929 = vpop.f32.mrb[0].mxu0
        %6930 = vdwg.mxu0
        %6931 = vmatprep.subr.bf16.mxu0 %v6091
        %6932 = vmatpush1.bf16.msra.mxu0 %v6090
        %6933 = vmatprep.subr.bf16.mxu0 %v6101
        %6934 = vmatpush1.bf16.msra.mxu0 %v6100
        %6935 = vmatprep.subr.bf16.mxu0 %v6111
        %6936 = vmatpush1.bf16.msra.mxu0 %v6110
        %6937 = vmatprep.subr.bf16.mxu0 %v6121
        %6938 = vmatpush1.bf16.msra.mxu0 %v6120
        %6939 = vmatprep.subr.bf16.mxu0 %v6131
        %6940 = vmatpush1.bf16.msra.mxu0 %v6130
        %6941 = vmatprep.subr.bf16.mxu0 %v6141
        %6942 = vmatpush1.bf16.msra.mxu0 %v6140
        %6943 = vmatprep.subr.bf16.mxu0 %v6151
        %6944 = vmatpush1.bf16.msra.mxu0 %v6150
        %6945 = vmatprep.subr.bf16.mxu0 %v6161
        %6946 = vmatpush1.bf16.msra.mxu0 %v6160
        %6947 = vmatprep.subr.bf16.mxu0 %v6171
        %6948 = vmatpush1.bf16.msra.mxu0 %v6170
        %6949 = vmatprep.subr.bf16.mxu0 %v6181
        %6950 = vmatpush1.bf16.msra.mxu0 %v6180
        %6951 = vmatprep.subr.bf16.mxu0 %v6191
        %6952 = vmatpush1.bf16.msra.mxu0 %v6190
        %6953 = vmatprep.subr.bf16.mxu0 %v6201
        %6954 = vmatpush1.bf16.msra.mxu0 %v6200
        %6955 = vmatprep.subr.bf16.mxu0 %v6211
        %6956 = vmatpush1.bf16.msra.mxu0 %v6210
        %6957 = vmatprep.subr.bf16.mxu0 %v6221
        %6958 = vmatpush1.bf16.msra.mxu0 %v6220
        %6959 = vmatprep.subr.bf16.mxu0 %v6231
        %6960 = vmatpush1.bf16.msra.mxu0 %v6230
        %6961 = vmatprep.subr.bf16.mxu0 %v6241
        %6962 = vmatpush1.bf16.msra.mxu0 %v6240
        %6963 = vmatprep.mubr.bf16.mxu0 %v1418
        %6964 = vmatmul.mubr.bf16.gmra.mrb[0].mxu0 %v1417
        %v6965 = vpop.f32.mrb[0].mxu0
        %v6966 = vadd.f32 %v6925, %v6965
        %v6967 = vpop.f32.mrb[0].mxu0
        %v6968 = vadd.f32 %v6927, %v6967
        %v6969 = vpop.f32.mrb[0].mxu0
        %v6970 = vpop.f32.mrb[0].mxu0
        %6971 = vdwg.mxu0
        %6972 = vmatprep.subr.bf16.mxu0 %v6251
        %6973 = vmatpush1.bf16.msra.mxu0 %v6250
        %6974 = vmatprep.subr.bf16.mxu0 %v6261
        %6975 = vmatpush1.bf16.msra.mxu0 %v6260
        %6976 = vmatprep.subr.bf16.mxu0 %v6271
        %6977 = vmatpush1.bf16.msra.mxu0 %v6270
        %6978 = vmatprep.subr.bf16.mxu0 %v6281
        %6979 = vmatpush1.bf16.msra.mxu0 %v6280
        %6980 = vmatprep.subr.bf16.mxu0 %v6291
        %6981 = vmatpush1.bf16.msra.mxu0 %v6290
        %6982 = vmatprep.subr.bf16.mxu0 %v6301
        %6983 = vmatpush1.bf16.msra.mxu0 %v6300
        %6984 = vmatprep.subr.bf16.mxu0 %v6311
        %6985 = vmatpush1.bf16.msra.mxu0 %v6310
        %6986 = vmatprep.subr.bf16.mxu0 %v6321
        %6987 = vmatpush1.bf16.msra.mxu0 %v6320
        %6988 = vmatprep.subr.bf16.mxu0 %v6331
        %6989 = vmatpush1.bf16.msra.mxu0 %v6330
        %6990 = vmatprep.subr.bf16.mxu0 %v6341
        %6991 = vmatpush1.bf16.msra.mxu0 %v6340
        %6992 = vmatprep.subr.bf16.mxu0 %v6351
        %6993 = vmatpush1.bf16.msra.mxu0 %v6350
        %6994 = vmatprep.subr.bf16.mxu0 %v6361
        %6995 = vmatpush1.bf16.msra.mxu0 %v6360
        %6996 = vmatprep.subr.bf16.mxu0 %v6371
        %6997 = vmatpush1.bf16.msra.mxu0 %v6370
        %6998 = vmatprep.subr.bf16.mxu0 %v6381
        %6999 = vmatpush1.bf16.msra.mxu0 %v6380
        %7000 = vmatprep.subr.bf16.mxu0 %v6391
        %7001 = vmatpush1.bf16.msra.mxu0 %v6390
        %7002 = vmatprep.subr.bf16.mxu0 %v6401
        %7003 = vmatpush1.bf16.msra.mxu0 %v6400
        %7004 = vmatprep.mubr.bf16.mxu0 %v1420
        %7005 = vmatmul.mubr.bf16.gmra.mrb[0].mxu0 %v1419
        %v7006 = vpop.f32.mrb[0].mxu0
        %v7007 = vadd.f32 %v6966, %v7006
        %v7008 = vpop.f32.mrb[0].mxu0
        %v7009 = vadd.f32 %v6968, %v7008
        %v7010 = vpop.f32.mrb[0].mxu0
        %v7011 = vpop.f32.mrb[0].mxu0
        %7012 = vdwg.mxu0
        %7013 = vmatprep.subr.bf16.mxu0 %v5933
        %7014 = vmatpush1.bf16.msra.mxu0 %v5932
        %7015 = vmatprep.subr.bf16.mxu0 %v5943
        %7016 = vmatpush1.bf16.msra.mxu0 %v5942
        %7017 = vmatprep.subr.bf16.mxu0 %v5953
        %7018 = vmatpush1.bf16.msra.mxu0 %v5952
        %7019 = vmatprep.subr.bf16.mxu0 %v5963
        %7020 = vmatpush1.bf16.msra.mxu0 %v5962
        %7021 = vmatprep.subr.bf16.mxu0 %v5973
        %7022 = vmatpush1.bf16.msra.mxu0 %v5972
        %7023 = vmatprep.subr.bf16.mxu0 %v5983
        %7024 = vmatpush1.bf16.msra.mxu0 %v5982
        %7025 = vmatprep.subr.bf16.mxu0 %v5993
        %7026 = vmatpush1.bf16.msra.mxu0 %v5992
        %7027 = vmatprep.subr.bf16.mxu0 %v6003
        %7028 = vmatpush1.bf16.msra.mxu0 %v6002
        %7029 = vmatprep.subr.bf16.mxu0 %v6013
        %7030 = vmatpush1.bf16.msra.mxu0 %v6012
        %7031 = vmatprep.subr.bf16.mxu0 %v6023
        %7032 = vmatpush1.bf16.msra.mxu0 %v6022
        %7033 = vmatprep.subr.bf16.mxu0 %v6033
        %7034 = vmatpush1.bf16.msra.mxu0 %v6032
        %7035 = vmatprep.subr.bf16.mxu0 %v6043
        %7036 = vmatpush1.bf16.msra.mxu0 %v6042
        %7037 = vmatprep.subr.bf16.mxu0 %v6053
        %7038 = vmatpush1.bf16.msra.mxu0 %v6052
        %7039 = vmatprep.subr.bf16.mxu0 %v6063
        %7040 = vmatpush1.bf16.msra.mxu0 %v6062
        %7041 = vmatprep.subr.bf16.mxu0 %v6073
        %7042 = vmatpush1.bf16.msra.mxu0 %v6072
        %7043 = vmatprep.subr.bf16.mxu0 %v6083
        %7044 = vmatpush1.bf16.msra.mxu0 %v6082
        %7045 = vmatprep.mubr.bf16.mxu0 %v1416
        %7046 = vmatmul.mubr.bf16.gmra.mrb[0].mxu0 %v1415
        %v7047 = vpop.f32.mrb[0].mxu0
        %v7048 = vadd.f32 %v4109, %v7047
        %v7049 = vpop.f32.mrb[0].mxu0
        %v7050 = vadd.f32 %v4111, %v7049
        %v7051 = vpop.f32.mrb[0].mxu0
        %v7052 = vpop.f32.mrb[0].mxu0
        %7053 = vdwg.mxu0
        %7054 = vmatprep.subr.bf16.mxu0 %v6093
        %7055 = vmatpush1.bf16.msra.mxu0 %v6092
        %7056 = vmatprep.subr.bf16.mxu0 %v6103
        %7057 = vmatpush1.bf16.msra.mxu0 %v6102
        %7058 = vmatprep.subr.bf16.mxu0 %v6113
        %7059 = vmatpush1.bf16.msra.mxu0 %v6112
        %7060 = vmatprep.subr.bf16.mxu0 %v6123
        %7061 = vmatpush1.bf16.msra.mxu0 %v6122
        %7062 = vmatprep.subr.bf16.mxu0 %v6133
        %7063 = vmatpush1.bf16.msra.mxu0 %v6132
        %7064 = vmatprep.subr.bf16.mxu0 %v6143
        %7065 = vmatpush1.bf16.msra.mxu0 %v6142
        %7066 = vmatprep.subr.bf16.mxu0 %v6153
        %7067 = vmatpush1.bf16.msra.mxu0 %v6152
        %7068 = vmatprep.subr.bf16.mxu0 %v6163
        %7069 = vmatpush1.bf16.msra.mxu0 %v6162
        %7070 = vmatprep.subr.bf16.mxu0 %v6173
        %7071 = vmatpush1.bf16.msra.mxu0 %v6172
        %7072 = vmatprep.subr.bf16.mxu0 %v6183
        %7073 = vmatpush1.bf16.msra.mxu0 %v6182
        %7074 = vmatprep.subr.bf16.mxu0 %v6193
        %7075 = vmatpush1.bf16.msra.mxu0 %v6192
        %7076 = vmatprep.subr.bf16.mxu0 %v6203
        %7077 = vmatpush1.bf16.msra.mxu0 %v6202
        %7078 = vmatprep.subr.bf16.mxu0 %v6213
        %7079 = vmatpush1.bf16.msra.mxu0 %v6212
        %7080 = vmatprep.subr.bf16.mxu0 %v6223
        %7081 = vmatpush1.bf16.msra.mxu0 %v6222
        %7082 = vmatprep.subr.bf16.mxu0 %v6233
        %7083 = vmatpush1.bf16.msra.mxu0 %v6232
        %7084 = vmatprep.subr.bf16.mxu0 %v6243
        %7085 = vmatpush1.bf16.msra.mxu0 %v6242
        %7086 = vmatprep.mubr.bf16.mxu0 %v1418
        %7087 = vmatmul.mubr.bf16.gmra.mrb[0].mxu0 %v1417
        %v7088 = vpop.f32.mrb[0].mxu0
        %v7089 = vadd.f32 %v7048, %v7088
        %v7090 = vpop.f32.mrb[0].mxu0
        %v7091 = vadd.f32 %v7050, %v7090
        %v7092 = vpop.f32.mrb[0].mxu0
        %v7093 = vpop.f32.mrb[0].mxu0
        %7094 = vdwg.mxu0
        %7095 = vmatprep.subr.bf16.mxu0 %v6253
        %7096 = vmatpush1.bf16.msra.mxu0 %v6252
        %7097 = vmatprep.subr.bf16.mxu0 %v6263
        %7098 = vmatpush1.bf16.msra.mxu0 %v6262
        %7099 = vmatprep.subr.bf16.mxu0 %v6273
        %7100 = vmatpush1.bf16.msra.mxu0 %v6272
        %7101 = vmatprep.subr.bf16.mxu0 %v6283
        %7102 = vmatpush1.bf16.msra.mxu0 %v6282
        %7103 = vmatprep.subr.bf16.mxu0 %v6293
        %7104 = vmatpush1.bf16.msra.mxu0 %v6292
        %7105 = vmatprep.subr.bf16.mxu0 %v6303
        %7106 = vmatpush1.bf16.msra.mxu0 %v6302
        %7107 = vmatprep.subr.bf16.mxu0 %v6313
        %7108 = vmatpush1.bf16.msra.mxu0 %v6312
        %7109 = vmatprep.subr.bf16.mxu0 %v6323
        %7110 = vmatpush1.bf16.msra.mxu0 %v6322
        %7111 = vmatprep.subr.bf16.mxu0 %v6333
        %7112 = vmatpush1.bf16.msra.mxu0 %v6332
        %7113 = vmatprep.subr.bf16.mxu0 %v6343
        %7114 = vmatpush1.bf16.msra.mxu0 %v6342
        %7115 = vmatprep.subr.bf16.mxu0 %v6353
        %7116 = vmatpush1.bf16.msra.mxu0 %v6352
        %7117 = vmatprep.subr.bf16.mxu0 %v6363
        %7118 = vmatpush1.bf16.msra.mxu0 %v6362
        %7119 = vmatprep.subr.bf16.mxu0 %v6373
        %7120 = vmatpush1.bf16.msra.mxu0 %v6372
        %7121 = vmatprep.subr.bf16.mxu0 %v6383
        %7122 = vmatpush1.bf16.msra.mxu0 %v6382
        %7123 = vmatprep.subr.bf16.mxu0 %v6393
        %7124 = vmatpush1.bf16.msra.mxu0 %v6392
        %7125 = vmatprep.subr.bf16.mxu0 %v6403
        %7126 = vmatpush1.bf16.msra.mxu0 %v6402
        %7127 = vmatprep.mubr.bf16.mxu0 %v1420
        %7128 = vmatmul.mubr.bf16.gmra.mrb[0].mxu0 %v1419
        %v7129 = vpop.f32.mrb[0].mxu0
        %v7130 = vadd.f32 %v7089, %v7129
        %v7131 = vpop.f32.mrb[0].mxu0
        %v7132 = vadd.f32 %v7091, %v7131
        %v7133 = vpop.f32.mrb[0].mxu0
        %v7134 = vpop.f32.mrb[0].mxu0
        %7135 = vdwg.mxu0
        %7136 = vmatprep.subr.bf16.mxu0 %v5935
        %7137 = vmatpush1.bf16.msra.mxu0 %v5934
        %7138 = vmatprep.subr.bf16.mxu0 %v5945
        %7139 = vmatpush1.bf16.msra.mxu0 %v5944
        %7140 = vmatprep.subr.bf16.mxu0 %v5955
        %7141 = vmatpush1.bf16.msra.mxu0 %v5954
        %7142 = vmatprep.subr.bf16.mxu0 %v5965
        %7143 = vmatpush1.bf16.msra.mxu0 %v5964
        %7144 = vmatprep.subr.bf16.mxu0 %v5975
        %7145 = vmatpush1.bf16.msra.mxu0 %v5974
        %7146 = vmatprep.subr.bf16.mxu0 %v5985
        %7147 = vmatpush1.bf16.msra.mxu0 %v5984
        %7148 = vmatprep.subr.bf16.mxu0 %v5995
        %7149 = vmatpush1.bf16.msra.mxu0 %v5994
        %7150 = vmatprep.subr.bf16.mxu0 %v6005
        %7151 = vmatpush1.bf16.msra.mxu0 %v6004
        %7152 = vmatprep.subr.bf16.mxu0 %v6015
        %7153 = vmatpush1.bf16.msra.mxu0 %v6014
        %7154 = vmatprep.subr.bf16.mxu0 %v6025
        %7155 = vmatpush1.bf16.msra.mxu0 %v6024
        %7156 = vmatprep.subr.bf16.mxu0 %v6035
        %7157 = vmatpush1.bf16.msra.mxu0 %v6034
        %7158 = vmatprep.subr.bf16.mxu0 %v6045
        %7159 = vmatpush1.bf16.msra.mxu0 %v6044
        %7160 = vmatprep.subr.bf16.mxu0 %v6055
        %7161 = vmatpush1.bf16.msra.mxu0 %v6054
        %7162 = vmatprep.subr.bf16.mxu0 %v6065
        %7163 = vmatpush1.bf16.msra.mxu0 %v6064
        %7164 = vmatprep.subr.bf16.mxu0 %v6075
        %7165 = vmatpush1.bf16.msra.mxu0 %v6074
        %7166 = vmatprep.subr.bf16.mxu0 %v6085
        %7167 = vmatpush1.bf16.msra.mxu0 %v6084
        %7168 = vmatprep.mubr.bf16.mxu0 %v1416
        %7169 = vmatmul.mubr.bf16.gmra.mrb[0].mxu0 %v1415
        %v7170 = vpop.f32.mrb[0].mxu0
        %v7171 = vadd.f32 %v4232, %v7170
        %v7172 = vpop.f32.mrb[0].mxu0
        %v7173 = vadd.f32 %v4234, %v7172
        %v7174 = vpop.f32.mrb[0].mxu0
        %v7175 = vpop.f32.mrb[0].mxu0
        %7176 = vdwg.mxu0
        %7177 = vmatprep.subr.bf16.mxu0 %v6095
        %7178 = vmatpush1.bf16.msra.mxu0 %v6094
        %7179 = vmatprep.subr.bf16.mxu0 %v6105
        %7180 = vmatpush1.bf16.msra.mxu0 %v6104
        %7181 = vmatprep.subr.bf16.mxu0 %v6115
        %7182 = vmatpush1.bf16.msra.mxu0 %v6114
        %7183 = vmatprep.subr.bf16.mxu0 %v6125
        %7184 = vmatpush1.bf16.msra.mxu0 %v6124
        %7185 = vmatprep.subr.bf16.mxu0 %v6135
        %7186 = vmatpush1.bf16.msra.mxu0 %v6134
        %7187 = vmatprep.subr.bf16.mxu0 %v6145
        %7188 = vmatpush1.bf16.msra.mxu0 %v6144
        %7189 = vmatprep.subr.bf16.mxu0 %v6155
        %7190 = vmatpush1.bf16.msra.mxu0 %v6154
        %7191 = vmatprep.subr.bf16.mxu0 %v6165
        %7192 = vmatpush1.bf16.msra.mxu0 %v6164
        %7193 = vmatprep.subr.bf16.mxu0 %v6175
        %7194 = vmatpush1.bf16.msra.mxu0 %v6174
        %7195 = vmatprep.subr.bf16.mxu0 %v6185
        %7196 = vmatpush1.bf16.msra.mxu0 %v6184
        %7197 = vmatprep.subr.bf16.mxu0 %v6195
        %7198 = vmatpush1.bf16.msra.mxu0 %v6194
        %7199 = vmatprep.subr.bf16.mxu0 %v6205
        %7200 = vmatpush1.bf16.msra.mxu0 %v6204
        %7201 = vmatprep.subr.bf16.mxu0 %v6215
        %7202 = vmatpush1.bf16.msra.mxu0 %v6214
        %7203 = vmatprep.subr.bf16.mxu0 %v6225
        %7204 = vmatpush1.bf16.msra.mxu0 %v6224
        %7205 = vmatprep.subr.bf16.mxu0 %v6235
        %7206 = vmatpush1.bf16.msra.mxu0 %v6234
        %7207 = vmatprep.subr.bf16.mxu0 %v6245
        %7208 = vmatpush1.bf16.msra.mxu0 %v6244
        %7209 = vmatprep.mubr.bf16.mxu0 %v1418
        %7210 = vmatmul.mubr.bf16.gmra.mrb[0].mxu0 %v1417
        %v7211 = vpop.f32.mrb[0].mxu0
        %v7212 = vadd.f32 %v7171, %v7211
        %v7213 = vpop.f32.mrb[0].mxu0
        %v7214 = vadd.f32 %v7173, %v7213
        %v7215 = vpop.f32.mrb[0].mxu0
        %v7216 = vpop.f32.mrb[0].mxu0
        %7217 = vdwg.mxu0
        %7218 = vmatprep.subr.bf16.mxu0 %v6255
        %7219 = vmatpush1.bf16.msra.mxu0 %v6254
        %7220 = vmatprep.subr.bf16.mxu0 %v6265
        %7221 = vmatpush1.bf16.msra.mxu0 %v6264
        %7222 = vmatprep.subr.bf16.mxu0 %v6275
        %7223 = vmatpush1.bf16.msra.mxu0 %v6274
        %7224 = vmatprep.subr.bf16.mxu0 %v6285
        %7225 = vmatpush1.bf16.msra.mxu0 %v6284
        %7226 = vmatprep.subr.bf16.mxu0 %v6295
        %7227 = vmatpush1.bf16.msra.mxu0 %v6294
        %7228 = vmatprep.subr.bf16.mxu0 %v6305
        %7229 = vmatpush1.bf16.msra.mxu0 %v6304
        %7230 = vmatprep.subr.bf16.mxu0 %v6315
        %7231 = vmatpush1.bf16.msra.mxu0 %v6314
        %7232 = vmatprep.subr.bf16.mxu0 %v6325
        %7233 = vmatpush1.bf16.msra.mxu0 %v6324
        %7234 = vmatprep.subr.bf16.mxu0 %v6335
        %7235 = vmatpush1.bf16.msra.mxu0 %v6334
        %7236 = vmatprep.subr.bf16.mxu0 %v6345
        %7237 = vmatpush1.bf16.msra.mxu0 %v6344
        %7238 = vmatprep.subr.bf16.mxu0 %v6355
        %7239 = vmatpush1.bf16.msra.mxu0 %v6354
        %7240 = vmatprep.subr.bf16.mxu0 %v6365
        %7241 = vmatpush1.bf16.msra.mxu0 %v6364
        %7242 = vmatprep.subr.bf16.mxu0 %v6375
        %7243 = vmatpush1.bf16.msra.mxu0 %v6374
        %7244 = vmatprep.subr.bf16.mxu0 %v6385
        %7245 = vmatpush1.bf16.msra.mxu0 %v6384
        %7246 = vmatprep.subr.bf16.mxu0 %v6395
        %7247 = vmatpush1.bf16.msra.mxu0 %v6394
        %7248 = vmatprep.subr.bf16.mxu0 %v6405
        %7249 = vmatpush1.bf16.msra.mxu0 %v6404
        %7250 = vmatprep.mubr.bf16.mxu0 %v1420
        %7251 = vmatmul.mubr.bf16.gmra.mrb[0].mxu0 %v1419
        %v7252 = vpop.f32.mrb[0].mxu0
        %v7253 = vadd.f32 %v7212, %v7252
        %v7254 = vpop.f32.mrb[0].mxu0
        %v7255 = vadd.f32 %v7214, %v7254
        %v7256 = vpop.f32.mrb[0].mxu0
        %v7257 = vpop.f32.mrb[0].mxu0
        %7258 = vdwg.mxu0
        %7259 = vmatprep.subr.bf16.mxu0 %v5937
        %7260 = vmatpush1.bf16.msra.mxu0 %v5936
        %7261 = vmatprep.subr.bf16.mxu0 %v5947
        %7262 = vmatpush1.bf16.msra.mxu0 %v5946
        %7263 = vmatprep.subr.bf16.mxu0 %v5957
        %7264 = vmatpush1.bf16.msra.mxu0 %v5956
        %7265 = vmatprep.subr.bf16.mxu0 %v5967
        %7266 = vmatpush1.bf16.msra.mxu0 %v5966
        %7267 = vmatprep.subr.bf16.mxu0 %v5977
        %7268 = vmatpush1.bf16.msra.mxu0 %v5976
        %7269 = vmatprep.subr.bf16.mxu0 %v5987
        %7270 = vmatpush1.bf16.msra.mxu0 %v5986
        %7271 = vmatprep.subr.bf16.mxu0 %v5997
        %7272 = vmatpush1.bf16.msra.mxu0 %v5996
        %7273 = vmatprep.subr.bf16.mxu0 %v6007
        %7274 = vmatpush1.bf16.msra.mxu0 %v6006
        %7275 = vmatprep.subr.bf16.mxu0 %v6017
        %7276 = vmatpush1.bf16.msra.mxu0 %v6016
        %7277 = vmatprep.subr.bf16.mxu0 %v6027
        %7278 = vmatpush1.bf16.msra.mxu0 %v6026
        %7279 = vmatprep.subr.bf16.mxu0 %v6037
        %7280 = vmatpush1.bf16.msra.mxu0 %v6036
        %7281 = vmatprep.subr.bf16.mxu0 %v6047
        %7282 = vmatpush1.bf16.msra.mxu0 %v6046
        %7283 = vmatprep.subr.bf16.mxu0 %v6057
        %7284 = vmatpush1.bf16.msra.mxu0 %v6056
        %7285 = vmatprep.subr.bf16.mxu0 %v6067
        %7286 = vmatpush1.bf16.msra.mxu0 %v6066
        %7287 = vmatprep.subr.bf16.mxu0 %v6077
        %7288 = vmatpush1.bf16.msra.mxu0 %v6076
        %7289 = vmatprep.subr.bf16.mxu0 %v6087
        %7290 = vmatpush1.bf16.msra.mxu0 %v6086
        %7291 = vmatprep.mubr.bf16.mxu0 %v1416
        %7292 = vmatmul.mubr.bf16.gmra.mrb[0].mxu0 %v1415
        %v7293 = vpop.f32.mrb[0].mxu0
        %v7294 = vadd.f32 %v4355, %v7293
        %v7295 = vpop.f32.mrb[0].mxu0
        %v7296 = vadd.f32 %v4357, %v7295
        %v7297 = vpop.f32.mrb[0].mxu0
        %v7298 = vpop.f32.mrb[0].mxu0
        %7299 = vdwg.mxu0
        %7300 = vmatprep.subr.bf16.mxu0 %v6097
        %7301 = vmatpush1.bf16.msra.mxu0 %v6096
        %7302 = vmatprep.subr.bf16.mxu0 %v6107
        %7303 = vmatpush1.bf16.msra.mxu0 %v6106
        %7304 = vmatprep.subr.bf16.mxu0 %v6117
        %7305 = vmatpush1.bf16.msra.mxu0 %v6116
        %7306 = vmatprep.subr.bf16.mxu0 %v6127
        %7307 = vmatpush1.bf16.msra.mxu0 %v6126
        %7308 = vmatprep.subr.bf16.mxu0 %v6137
        %7309 = vmatpush1.bf16.msra.mxu0 %v6136
        %7310 = vmatprep.subr.bf16.mxu0 %v6147
        %7311 = vmatpush1.bf16.msra.mxu0 %v6146
        %7312 = vmatprep.subr.bf16.mxu0 %v6157
        %7313 = vmatpush1.bf16.msra.mxu0 %v6156
        %7314 = vmatprep.subr.bf16.mxu0 %v6167
        %7315 = vmatpush1.bf16.msra.mxu0 %v6166
        %7316 = vmatprep.subr.bf16.mxu0 %v6177
        %7317 = vmatpush1.bf16.msra.mxu0 %v6176
        %7318 = vmatprep.subr.bf16.mxu0 %v6187
        %7319 = vmatpush1.bf16.msra.mxu0 %v6186
        %7320 = vmatprep.subr.bf16.mxu0 %v6197
        %7321 = vmatpush1.bf16.msra.mxu0 %v6196
        %7322 = vmatprep.subr.bf16.mxu0 %v6207
        %7323 = vmatpush1.bf16.msra.mxu0 %v6206
        %7324 = vmatprep.subr.bf16.mxu0 %v6217
        %7325 = vmatpush1.bf16.msra.mxu0 %v6216
        %7326 = vmatprep.subr.bf16.mxu0 %v6227
        %7327 = vmatpush1.bf16.msra.mxu0 %v6226
        %7328 = vmatprep.subr.bf16.mxu0 %v6237
        %7329 = vmatpush1.bf16.msra.mxu0 %v6236
        %7330 = vmatprep.subr.bf16.mxu0 %v6247
        %7331 = vmatpush1.bf16.msra.mxu0 %v6246
        %7332 = vmatprep.mubr.bf16.mxu0 %v1418
        %7333 = vmatmul.mubr.bf16.gmra.mrb[0].mxu0 %v1417
        %v7334 = vpop.f32.mrb[0].mxu0
        %v7335 = vadd.f32 %v7294, %v7334
        %v7336 = vpop.f32.mrb[0].mxu0
        %v7337 = vadd.f32 %v7296, %v7336
        %v7338 = vpop.f32.mrb[0].mxu0
        %v7339 = vpop.f32.mrb[0].mxu0
        %7340 = vdwg.mxu0
        %7341 = vmatprep.subr.bf16.mxu0 %v6257
        %7342 = vmatpush1.bf16.msra.mxu0 %v6256
        %7343 = vmatprep.subr.bf16.mxu0 %v6267
        %7344 = vmatpush1.bf16.msra.mxu0 %v6266
        %7345 = vmatprep.subr.bf16.mxu0 %v6277
        %7346 = vmatpush1.bf16.msra.mxu0 %v6276
        %7347 = vmatprep.subr.bf16.mxu0 %v6287
        %7348 = vmatpush1.bf16.msra.mxu0 %v6286
        %7349 = vmatprep.subr.bf16.mxu0 %v6297
        %7350 = vmatpush1.bf16.msra.mxu0 %v6296
        %7351 = vmatprep.subr.bf16.mxu0 %v6307
        %7352 = vmatpush1.bf16.msra.mxu0 %v6306
        %7353 = vmatprep.subr.bf16.mxu0 %v6317
        %7354 = vmatpush1.bf16.msra.mxu0 %v6316
        %7355 = vmatprep.subr.bf16.mxu0 %v6327
        %7356 = vmatpush1.bf16.msra.mxu0 %v6326
        %7357 = vmatprep.subr.bf16.mxu0 %v6337
        %7358 = vmatpush1.bf16.msra.mxu0 %v6336
        %7359 = vmatprep.subr.bf16.mxu0 %v6347
        %7360 = vmatpush1.bf16.msra.mxu0 %v6346
        %7361 = vmatprep.subr.bf16.mxu0 %v6357
        %7362 = vmatpush1.bf16.msra.mxu0 %v6356
        %7363 = vmatprep.subr.bf16.mxu0 %v6367
        %7364 = vmatpush1.bf16.msra.mxu0 %v6366
        %7365 = vmatprep.subr.bf16.mxu0 %v6377
        %7366 = vmatpush1.bf16.msra.mxu0 %v6376
        %7367 = vmatprep.subr.bf16.mxu0 %v6387
        %7368 = vmatpush1.bf16.msra.mxu0 %v6386
        %7369 = vmatprep.subr.bf16.mxu0 %v6397
        %7370 = vmatpush1.bf16.msra.mxu0 %v6396
        %7371 = vmatprep.subr.bf16.mxu0 %v6407
        %7372 = vmatpush1.bf16.msra.mxu0 %v6406
        %7373 = vmatprep.mubr.bf16.mxu0 %v1420
        %7374 = vmatmul.mubr.bf16.gmra.mrb[0].mxu0 %v1419
        %v7375 = vpop.f32.mrb[0].mxu0
        %v7376 = vadd.f32 %v7335, %v7375
        %v7377 = vpop.f32.mrb[0].mxu0
        %v7378 = vadd.f32 %v7337, %v7377
        %v7379 = vpop.f32.mrb[0].mxu0
        %v7380 = vpop.f32.mrb[0].mxu0
        %7381 = vdwg.mxu0
        %7382 = vmatprep.subr.bf16.mxu0 %v5939
        %7383 = vmatpush1.bf16.msra.mxu0 %v5938
        %7384 = vmatprep.subr.bf16.mxu0 %v5949
        %7385 = vmatpush1.bf16.msra.mxu0 %v5948
        %7386 = vmatprep.subr.bf16.mxu0 %v5959
        %7387 = vmatpush1.bf16.msra.mxu0 %v5958
        %7388 = vmatprep.subr.bf16.mxu0 %v5969
        %7389 = vmatpush1.bf16.msra.mxu0 %v5968
        %7390 = vmatprep.subr.bf16.mxu0 %v5979
        %7391 = vmatpush1.bf16.msra.mxu0 %v5978
        %7392 = vmatprep.subr.bf16.mxu0 %v5989
        %7393 = vmatpush1.bf16.msra.mxu0 %v5988
        %7394 = vmatprep.subr.bf16.mxu0 %v5999
        %7395 = vmatpush1.bf16.msra.mxu0 %v5998
        %7396 = vmatprep.subr.bf16.mxu0 %v6009
        %7397 = vmatpush1.bf16.msra.mxu0 %v6008
        %7398 = vmatprep.subr.bf16.mxu0 %v6019
        %7399 = vmatpush1.bf16.msra.mxu0 %v6018
        %7400 = vmatprep.subr.bf16.mxu0 %v6029
        %7401 = vmatpush1.bf16.msra.mxu0 %v6028
        %7402 = vmatprep.subr.bf16.mxu0 %v6039
        %7403 = vmatpush1.bf16.msra.mxu0 %v6038
        %7404 = vmatprep.subr.bf16.mxu0 %v6049
        %7405 = vmatpush1.bf16.msra.mxu0 %v6048
        %7406 = vmatprep.subr.bf16.mxu0 %v6059
        %7407 = vmatpush1.bf16.msra.mxu0 %v6058
        %7408 = vmatprep.subr.bf16.mxu0 %v6069
        %7409 = vmatpush1.bf16.msra.mxu0 %v6068
        %7410 = vmatprep.subr.bf16.mxu0 %v6079
        %7411 = vmatpush1.bf16.msra.mxu0 %v6078
        %7412 = vmatprep.subr.bf16.mxu0 %v6089
        %7413 = vmatpush1.bf16.msra.mxu0 %v6088
        %7414 = vmatprep.mubr.bf16.mxu0 %v1416
        %7415 = vmatmul.mubr.bf16.gmra.mrb[0].mxu0 %v1415
        %v7416 = vpop.f32.mrb[0].mxu0
        %v7417 = vadd.f32 %v4478, %v7416
        %v7418 = vpop.f32.mrb[0].mxu0
        %v7419 = vadd.f32 %v4480, %v7418
        %v7420 = vpop.f32.mrb[0].mxu0
        %v7421 = vpop.f32.mrb[0].mxu0
        %7422 = vdwg.mxu0
        %7423 = vmatprep.subr.bf16.mxu0 %v6099
        %7424 = vmatpush1.bf16.msra.mxu0 %v6098
        %7425 = vmatprep.subr.bf16.mxu0 %v6109
        %7426 = vmatpush1.bf16.msra.mxu0 %v6108
        %7427 = vmatprep.subr.bf16.mxu0 %v6119
        %7428 = vmatpush1.bf16.msra.mxu0 %v6118
        %7429 = vmatprep.subr.bf16.mxu0 %v6129
        %7430 = vmatpush1.bf16.msra.mxu0 %v6128
        %7431 = vmatprep.subr.bf16.mxu0 %v6139
        %7432 = vmatpush1.bf16.msra.mxu0 %v6138
        %7433 = vmatprep.subr.bf16.mxu0 %v6149
        %7434 = vmatpush1.bf16.msra.mxu0 %v6148
        %7435 = vmatprep.subr.bf16.mxu0 %v6159
        %7436 = vmatpush1.bf16.msra.mxu0 %v6158
        %7437 = vmatprep.subr.bf16.mxu0 %v6169
        %7438 = vmatpush1.bf16.msra.mxu0 %v6168
        %7439 = vmatprep.subr.bf16.mxu0 %v6179
        %7440 = vmatpush1.bf16.msra.mxu0 %v6178
        %7441 = vmatprep.subr.bf16.mxu0 %v6189
        %7442 = vmatpush1.bf16.msra.mxu0 %v6188
        %7443 = vmatprep.subr.bf16.mxu0 %v6199
        %7444 = vmatpush1.bf16.msra.mxu0 %v6198
        %7445 = vmatprep.subr.bf16.mxu0 %v6209
        %7446 = vmatpush1.bf16.msra.mxu0 %v6208
        %7447 = vmatprep.subr.bf16.mxu0 %v6219
        %7448 = vmatpush1.bf16.msra.mxu0 %v6218
        %7449 = vmatprep.subr.bf16.mxu0 %v6229
        %7450 = vmatpush1.bf16.msra.mxu0 %v6228
        %7451 = vmatprep.subr.bf16.mxu0 %v6239
        %7452 = vmatpush1.bf16.msra.mxu0 %v6238
        %7453 = vmatprep.subr.bf16.mxu0 %v6249
        %7454 = vmatpush1.bf16.msra.mxu0 %v6248
        %7455 = vmatprep.mubr.bf16.mxu0 %v1418
        %7456 = vmatmul.mubr.bf16.gmra.mrb[0].mxu0 %v1417
        %v7457 = vpop.f32.mrb[0].mxu0
        %v7458 = vadd.f32 %v7417, %v7457
        %v7459 = vpop.f32.mrb[0].mxu0
        %v7460 = vadd.f32 %v7419, %v7459
        %v7461 = vpop.f32.mrb[0].mxu0
        %v7462 = vpop.f32.mrb[0].mxu0
        %7463 = vdwg.mxu0
        %7464 = vmatprep.subr.bf16.mxu0 %v6259
        %7465 = vmatpush1.bf16.msra.mxu0 %v6258
        %7466 = vmatprep.subr.bf16.mxu0 %v6269
        %7467 = vmatpush1.bf16.msra.mxu0 %v6268
        %7468 = vmatprep.subr.bf16.mxu0 %v6279
        %7469 = vmatpush1.bf16.msra.mxu0 %v6278
        %7470 = vmatprep.subr.bf16.mxu0 %v6289
        %7471 = vmatpush1.bf16.msra.mxu0 %v6288
        %7472 = vmatprep.subr.bf16.mxu0 %v6299
        %7473 = vmatpush1.bf16.msra.mxu0 %v6298
        %7474 = vmatprep.subr.bf16.mxu0 %v6309
        %7475 = vmatpush1.bf16.msra.mxu0 %v6308
        %7476 = vmatprep.subr.bf16.mxu0 %v6319
        %7477 = vmatpush1.bf16.msra.mxu0 %v6318
        %7478 = vmatprep.subr.bf16.mxu0 %v6329
        %7479 = vmatpush1.bf16.msra.mxu0 %v6328
        %7480 = vmatprep.subr.bf16.mxu0 %v6339
        %7481 = vmatpush1.bf16.msra.mxu0 %v6338
        %7482 = vmatprep.subr.bf16.mxu0 %v6349
        %7483 = vmatpush1.bf16.msra.mxu0 %v6348
        %7484 = vmatprep.subr.bf16.mxu0 %v6359
        %7485 = vmatpush1.bf16.msra.mxu0 %v6358
        %7486 = vmatprep.subr.bf16.mxu0 %v6369
        %7487 = vmatpush1.bf16.msra.mxu0 %v6368
        %7488 = vmatprep.subr.bf16.mxu0 %v6379
        %7489 = vmatpush1.bf16.msra.mxu0 %v6378
        %7490 = vmatprep.subr.bf16.mxu0 %v6389
        %7491 = vmatpush1.bf16.msra.mxu0 %v6388
        %7492 = vmatprep.subr.bf16.mxu0 %v6399
        %7493 = vmatpush1.bf16.msra.mxu0 %v6398
        %7494 = vmatprep.subr.bf16.mxu0 %v6409
        %7495 = vmatpush1.bf16.msra.mxu0 %v6408
        %7496 = vmatprep.mubr.bf16.mxu0 %v1420
        %7497 = vmatmul.mubr.bf16.gmra.mrb[0].mxu0 %v1419
        %v7498 = vpop.f32.mrb[0].mxu0
        %v7499 = vadd.f32 %v7458, %v7498
        %v7500 = vpop.f32.mrb[0].mxu0
        %v7501 = vadd.f32 %v7460, %v7500
        %v7502 = vpop.f32.mrb[0].mxu0
        %v7503 = vpop.f32.mrb[0].mxu0
        %7504 = vdwg.mxu0
        %v7507 = vlaneseq
        %v7508 = vshrl.u32 %v7507, 7
        %v7509 = vsub.s32 0, %v7508
        %v7510 = vrot.slane %v317, %v7509
        %v7511 = vlaneseq
        %v7512 = vshrl.u32 %v7511, 7
        %v7513 = vsub.s32 1, %v7512
        %v7514 = vrot.slane %v317, %v7513
        %v7515 = vlaneseq
        %v7516 = vshrl.u32 %v7515, 7
        %v7517 = vsub.s32 2, %v7516
        %v7518 = vrot.slane %v317, %v7517
        %v7519 = vlaneseq
        %v7520 = vshrl.u32 %v7519, 7
        %v7521 = vsub.s32 3, %v7520
        %v7522 = vrot.slane %v317, %v7521
        %v7523 = vlaneseq
        %v7524 = vshrl.u32 %v7523, 7
        %v7525 = vsub.s32 4, %v7524
        %v7526 = vrot.slane %v317, %v7525
        %v7527 = vlaneseq
        %v7528 = vshrl.u32 %v7527, 7
        %v7529 = vsub.s32 5, %v7528
        %v7530 = vrot.slane %v317, %v7529
        %v7531 = vlaneseq
        %v7532 = vshrl.u32 %v7531, 7
        %v7533 = vsub.s32 6, %v7532
        %v7534 = vrot.slane %v317, %v7533
        %v7535 = vlaneseq
        %v7536 = vshrl.u32 %v7535, 7
        %v7537 = vsub.s32 7, %v7536
        %v7538 = vrot.slane %v317, %v7537
        %v7539 = vlaneseq
        %v7540 = vshrl.u32 %v7539, 7
        %v7541 = vsub.s32 0, %v7540
        %v7542 = vrot.slane %v318, %v7541
        %v7543 = vlaneseq
        %v7544 = vshrl.u32 %v7543, 7
        %v7545 = vsub.s32 1, %v7544
        %v7546 = vrot.slane %v318, %v7545
        %v7557 = vmul.f32 %v7007, %v7510
        %v7558 = vmul.f32 %v7009, %v7514
        %v7559 = vmul.f32 %v7130, %v7518
        %v7560 = vmul.f32 %v7132, %v7522
        %v7561 = vmul.f32 %v7253, %v7526
        %v7562 = vmul.f32 %v7255, %v7530
        %v7563 = vmul.f32 %v7376, %v7534
        %v7564 = vmul.f32 %v7378, %v7538
        %v7565 = vmul.f32 %v7499, %v7542
        %v7566 = vmul.f32 %v7501, %v7546
        %v7569 = vlaneseq
        %v7570 = vshrl.u32 %v7569, 7
        %v7571 = vsub.s32 0, %v7570
        %v7572 = vrot.slane %v319, %v7571
        %v7573 = vlaneseq
        %v7574 = vshrl.u32 %v7573, 7
        %v7575 = vsub.s32 1, %v7574
        %v7576 = vrot.slane %v319, %v7575
        %v7577 = vlaneseq
        %v7578 = vshrl.u32 %v7577, 7
        %v7579 = vsub.s32 2, %v7578
        %v7580 = vrot.slane %v319, %v7579
        %v7581 = vlaneseq
        %v7582 = vshrl.u32 %v7581, 7
        %v7583 = vsub.s32 3, %v7582
        %v7584 = vrot.slane %v319, %v7583
        %v7585 = vlaneseq
        %v7586 = vshrl.u32 %v7585, 7
        %v7587 = vsub.s32 4, %v7586
        %v7588 = vrot.slane %v319, %v7587
        %v7589 = vlaneseq
        %v7590 = vshrl.u32 %v7589, 7
        %v7591 = vsub.s32 5, %v7590
        %v7592 = vrot.slane %v319, %v7591
        %v7593 = vlaneseq
        %v7594 = vshrl.u32 %v7593, 7
        %v7595 = vsub.s32 6, %v7594
        %v7596 = vrot.slane %v319, %v7595
        %v7597 = vlaneseq
        %v7598 = vshrl.u32 %v7597, 7
        %v7599 = vsub.s32 7, %v7598
        %v7600 = vrot.slane %v319, %v7599
        %v7601 = vlaneseq
        %v7602 = vshrl.u32 %v7601, 7
        %v7603 = vsub.s32 0, %v7602
        %v7604 = vrot.slane %v320, %v7603
        %v7605 = vlaneseq
        %v7606 = vshrl.u32 %v7605, 7
        %v7607 = vsub.s32 1, %v7606
        %v7608 = vrot.slane %v320, %v7607
        %v7619 = vadd.f32 %v7557, %v7572
        %v7620 = vadd.f32 %v7558, %v7576
        %v7621 = vadd.f32 %v7559, %v7580
        %v7622 = vadd.f32 %v7560, %v7584
        %v7623 = vadd.f32 %v7561, %v7588
        %v7624 = vadd.f32 %v7562, %v7592
        %v7625 = vadd.f32 %v7563, %v7596
        %v7626 = vadd.f32 %v7564, %v7600
        %v7627 = vadd.f32 %v7565, %v7604
        %v7628 = vadd.f32 %v7566, %v7608
        %v7629 = vmax.f32 %v7619, 0.0
        %v7630 = vmax.f32 %v7620, 0.0
        %v7631 = vmax.f32 %v7621, 0.0
        %v7632 = vmax.f32 %v7622, 0.0
        %v7633 = vmax.f32 %v7623, 0.0
        %v7634 = vmax.f32 %v7624, 0.0
        %v7635 = vmax.f32 %v7625, 0.0
        %v7636 = vmax.f32 %v7626, 0.0
        %v7637 = vmax.f32 %v7627, 0.0
        %v7638 = vmax.f32 %v7628, 0.0
        %7642 = vrot.lane.b32.xlu0 %v7631, 64
        %v7643 = vpop.permute.xlu0 %7642
        %7644 = vrot.lane.b32.xlu0 %v7632, 64
        %v7645 = vpop.permute.xlu0 %7644
        %7646 = vrot.lane.b32.xlu0 %v7633, 64
        %v7647 = vpop.permute.xlu0 %7646
        %vm7648 = vcmask 523264
        %v7649 = vsel %vm7648, %v7643, %v7645
        %v7650 = vsel %vm7648, %v7645, %v7647
        %v7654 = vmax.f32 %v7629, %v7649
        %v7655 = vmax.f32 %v7630, %v7650
        %v7656 = vmax.f32 %v7631, %v7647
        %7660 = vrot.lane.b32.xlu0 %v7636, 64
        %v7661 = vpop.permute.xlu0 %7660
        %7662 = vrot.lane.b32.xlu0 %v7637, 64
        %v7663 = vpop.permute.xlu0 %7662
        %7664 = vrot.lane.b32.xlu0 %v7638, 64
        %v7665 = vpop.permute.xlu0 %7664
        %v7666 = vsel %vm7648, %v7661, %v7663
        %v7667 = vsel %vm7648, %v7663, %v7665
        %v7671 = vmax.f32 %v7634, %v7666
        %v7672 = vmax.f32 %v7635, %v7667
        %v7673 = vmax.f32 %v7636, %v7665
        %v7674 = vmax.f32 %v7654, %v7671
        %v7675 = vmax.f32 %v7655, %v7672
        %v7676 = vmax.f32 %v7656, %v7673
        %v7677 = vpack.c.bf16 %v7674, %v7674
        %v7678 = vpack.c.bf16 %v7675, %v7675
        %v7679 = vpack.c.bf16 %v7676, %v7676
        %v7800 = vunpack.c.l.b16 %v321
        %v7801 = vunpack.c.h.b16 %v321
        %v7802 = vunpack.c.l.b16 %v322
        %v7803 = vunpack.c.h.b16 %v322
        %v7804 = vunpack.c.l.b16 %v323
        %v7805 = vunpack.c.l.b16 %v324
        %v7806 = vunpack.c.h.b16 %v324
        %v7807 = vunpack.c.l.b16 %v325
        %v7808 = vunpack.c.h.b16 %v325
        %v7809 = vunpack.c.l.b16 %v326
        %v7810 = vunpack.c.l.b16 %v327
        %v7811 = vunpack.c.h.b16 %v327
        %v7812 = vunpack.c.l.b16 %v328
        %v7813 = vunpack.c.h.b16 %v328
        %v7814 = vunpack.c.l.b16 %v329
        %v7815 = vunpack.c.l.b16 %v330
        %v7816 = vunpack.c.h.b16 %v330
        %v7817 = vunpack.c.l.b16 %v331
        %v7818 = vunpack.c.h.b16 %v331
        %v7819 = vunpack.c.l.b16 %v332
        %v7820 = vunpack.c.l.b16 %v333
        %v7821 = vunpack.c.h.b16 %v333
        %v7822 = vunpack.c.l.b16 %v334
        %v7823 = vunpack.c.h.b16 %v334
        %v7824 = vunpack.c.l.b16 %v335
        %v7825 = vunpack.c.l.b16 %v336
        %v7826 = vunpack.c.h.b16 %v336
        %v7827 = vunpack.c.l.b16 %v337
        %v7828 = vunpack.c.h.b16 %v337
        %v7829 = vunpack.c.l.b16 %v338
        %v7830 = vunpack.c.l.b16 %v339
        %v7831 = vunpack.c.h.b16 %v339
        %v7832 = vunpack.c.l.b16 %v340
        %v7833 = vunpack.c.h.b16 %v340
        %v7834 = vunpack.c.l.b16 %v341
        %v7835 = vunpack.c.l.b16 %v342
        %v7836 = vunpack.c.h.b16 %v342
        %v7837 = vunpack.c.l.b16 %v343
        %v7838 = vunpack.c.h.b16 %v343
        %v7839 = vunpack.c.l.b16 %v344
        %v7840 = vunpack.c.l.b16 %v345
        %v7841 = vunpack.c.h.b16 %v345
        %v7842 = vunpack.c.l.b16 %v346
        %v7843 = vunpack.c.h.b16 %v346
        %v7844 = vunpack.c.l.b16 %v347
        %v7845 = vunpack.c.l.b16 %v348
        %v7846 = vunpack.c.h.b16 %v348
        %v7847 = vunpack.c.l.b16 %v349
        %v7848 = vunpack.c.h.b16 %v349
        %v7849 = vunpack.c.l.b16 %v350
        %v7850 = vunpack.c.l.b16 %v351
        %v7851 = vunpack.c.h.b16 %v351
        %v7852 = vunpack.c.l.b16 %v352
        %v7853 = vunpack.c.h.b16 %v352
        %v7854 = vunpack.c.l.b16 %v353
        %v7855 = vunpack.c.l.b16 %v354
        %v7856 = vunpack.c.h.b16 %v354
        %v7857 = vunpack.c.l.b16 %v355
        %v7858 = vunpack.c.h.b16 %v355
        %v7859 = vunpack.c.l.b16 %v356
        %v7860 = vunpack.c.l.b16 %v357
        %v7861 = vunpack.c.h.b16 %v357
        %v7862 = vunpack.c.l.b16 %v358
        %v7863 = vunpack.c.h.b16 %v358
        %v7864 = vunpack.c.l.b16 %v359
        %v7865 = vunpack.c.l.b16 %v360
        %v7866 = vunpack.c.h.b16 %v360
        %v7867 = vunpack.c.l.b16 %v361
        %v7868 = vunpack.c.h.b16 %v361
        %v7869 = vunpack.c.l.b16 %v362
        %v7870 = vunpack.c.l.b16 %v363
        %v7871 = vunpack.c.h.b16 %v363
        %v7872 = vunpack.c.l.b16 %v364
        %v7873 = vunpack.c.h.b16 %v364
        %v7874 = vunpack.c.l.b16 %v365
        %v7875 = vunpack.c.l.b16 %v366
        %v7876 = vunpack.c.h.b16 %v366
        %v7877 = vunpack.c.l.b16 %v367
        %v7878 = vunpack.c.h.b16 %v367
        %v7879 = vunpack.c.l.b16 %v368
        %v7880 = vunpack.c.l.b16 %v369
        %v7881 = vunpack.c.h.b16 %v369
        %v7882 = vunpack.c.l.b16 %v370
        %v7883 = vunpack.c.h.b16 %v370
        %v7884 = vunpack.c.l.b16 %v371
        %v7885 = vunpack.c.l.b16 %v372
        %v7886 = vunpack.c.h.b16 %v372
        %v7887 = vunpack.c.l.b16 %v373
        %v7888 = vunpack.c.h.b16 %v373
        %v7889 = vunpack.c.l.b16 %v374
        %v7890 = vunpack.c.l.b16 %v375
        %v7891 = vunpack.c.h.b16 %v375
        %v7892 = vunpack.c.l.b16 %v376
        %v7893 = vunpack.c.h.b16 %v376
        %v7894 = vunpack.c.l.b16 %v377
        %v7895 = vunpack.c.l.b16 %v378
        %v7896 = vunpack.c.h.b16 %v378
        %v7897 = vunpack.c.l.b16 %v379
        %v7898 = vunpack.c.h.b16 %v379
        %v7899 = vunpack.c.l.b16 %v380
        %v7900 = vunpack.c.l.b16 %v381
        %v7901 = vunpack.c.h.b16 %v381
        %v7902 = vunpack.c.l.b16 %v382
        %v7903 = vunpack.c.h.b16 %v382
        %v7904 = vunpack.c.l.b16 %v383
        %v7905 = vunpack.c.l.b16 %v384
        %v7906 = vunpack.c.h.b16 %v384
        %v7907 = vunpack.c.l.b16 %v385
        %v7908 = vunpack.c.h.b16 %v385
        %v7909 = vunpack.c.l.b16 %v386
        %v7910 = vunpack.c.l.b16 %v387
        %v7911 = vunpack.c.h.b16 %v387
        %v7912 = vunpack.c.l.b16 %v388
        %v7913 = vunpack.c.h.b16 %v388
        %v7914 = vunpack.c.l.b16 %v389
        %v7915 = vunpack.c.l.b16 %v390
        %v7916 = vunpack.c.h.b16 %v390
        %v7917 = vunpack.c.l.b16 %v391
        %v7918 = vunpack.c.h.b16 %v391
        %v7919 = vunpack.c.l.b16 %v392
        %v7920 = vunpack.c.l.b16 %v393
        %v7921 = vunpack.c.h.b16 %v393
        %v7922 = vunpack.c.l.b16 %v394
        %v7923 = vunpack.c.h.b16 %v394
        %v7924 = vunpack.c.l.b16 %v395
        %v7925 = vunpack.c.l.b16 %v396
        %v7926 = vunpack.c.h.b16 %v396
        %v7927 = vunpack.c.l.b16 %v397
        %v7928 = vunpack.c.h.b16 %v397
        %v7929 = vunpack.c.l.b16 %v398
        %v7930 = vunpack.c.l.b16 %v399
        %v7931 = vunpack.c.h.b16 %v399
        %v7932 = vunpack.c.l.b16 %v400
        %v7933 = vunpack.c.h.b16 %v400
        %v7934 = vunpack.c.l.b16 %v401
        %v7935 = vunpack.c.l.b16 %v402
        %v7936 = vunpack.c.h.b16 %v402
        %v7937 = vunpack.c.l.b16 %v403
        %v7938 = vunpack.c.h.b16 %v403
        %v7939 = vunpack.c.l.b16 %v404
        %v7940 = vunpack.c.l.b16 %v405
        %v7941 = vunpack.c.h.b16 %v405
        %v7942 = vunpack.c.l.b16 %v406
        %v7943 = vunpack.c.h.b16 %v406
        %v7944 = vunpack.c.l.b16 %v407
        %v7945 = vunpack.c.l.b16 %v408
        %v7946 = vunpack.c.h.b16 %v408
        %v7947 = vunpack.c.l.b16 %v409
        %v7948 = vunpack.c.h.b16 %v409
        %v7949 = vunpack.c.l.b16 %v410
        %v7950 = vunpack.c.l.b16 %v411
        %v7951 = vunpack.c.h.b16 %v411
        %v7952 = vunpack.c.l.b16 %v412
        %v7953 = vunpack.c.h.b16 %v412
        %v7954 = vunpack.c.l.b16 %v413
        %v7955 = vunpack.c.l.b16 %v414
        %v7956 = vunpack.c.h.b16 %v414
        %v7957 = vunpack.c.l.b16 %v415
        %v7958 = vunpack.c.h.b16 %v415
        %v7959 = vunpack.c.l.b16 %v416
        %v7960 = vunpack.c.l.b16 %v417
        %v7961 = vunpack.c.h.b16 %v417
        %v7962 = vunpack.c.l.b16 %v418
        %v7963 = vunpack.c.h.b16 %v418
        %v7964 = vunpack.c.l.b16 %v419
        %v7965 = vunpack.c.l.b16 %v420
        %v7966 = vunpack.c.h.b16 %v420
        %v7967 = vunpack.c.l.b16 %v421
        %v7968 = vunpack.c.h.b16 %v421
        %v7969 = vunpack.c.l.b16 %v422
        %v7970 = vunpack.c.l.b16 %v423
        %v7971 = vunpack.c.h.b16 %v423
        %v7972 = vunpack.c.l.b16 %v424
        %v7973 = vunpack.c.h.b16 %v424
        %v7974 = vunpack.c.l.b16 %v425
        %v7975 = vunpack.c.l.b16 %v426
        %v7976 = vunpack.c.h.b16 %v426
        %v7977 = vunpack.c.l.b16 %v427
        %v7978 = vunpack.c.h.b16 %v427
        %v7979 = vunpack.c.l.b16 %v428
        %v7980 = vunpack.c.l.b16 %v429
        %v7981 = vunpack.c.h.b16 %v429
        %v7982 = vunpack.c.l.b16 %v430
        %v7983 = vunpack.c.h.b16 %v430
        %v7984 = vunpack.c.l.b16 %v431
        %v7985 = vunpack.c.l.b16 %v432
        %v7986 = vunpack.c.h.b16 %v432
        %v7987 = vunpack.c.l.b16 %v433
        %v7988 = vunpack.c.h.b16 %v433
        %v7989 = vunpack.c.l.b16 %v434
        %v7990 = vunpack.c.l.b16 %v435
        %v7991 = vunpack.c.h.b16 %v435
        %v7992 = vunpack.c.l.b16 %v436
        %v7993 = vunpack.c.h.b16 %v436
        %v7994 = vunpack.c.l.b16 %v437
        %v7995 = vunpack.c.l.b16 %v438
        %v7996 = vunpack.c.h.b16 %v438
        %v7997 = vunpack.c.l.b16 %v439
        %v7998 = vunpack.c.h.b16 %v439
        %v7999 = vunpack.c.l.b16 %v440
        %v8000 = vpack.c.b16 %v7805, %v7800
        %v8001 = vpack.c.b16 %v7806, %v7801
        %v8002 = vpack.c.b16 %v7807, %v7802
        %v8003 = vpack.c.b16 %v7808, %v7803
        %v8004 = vpack.c.b16 %v7809, %v7804
        %v8005 = vpack.c.b16 %v7815, %v7810
        %v8006 = vpack.c.b16 %v7816, %v7811
        %v8007 = vpack.c.b16 %v7817, %v7812
        %v8008 = vpack.c.b16 %v7818, %v7813
        %v8009 = vpack.c.b16 %v7819, %v7814
        %v8010 = vpack.c.b16 %v7825, %v7820
        %v8011 = vpack.c.b16 %v7826, %v7821
        %v8012 = vpack.c.b16 %v7827, %v7822
        %v8013 = vpack.c.b16 %v7828, %v7823
        %v8014 = vpack.c.b16 %v7829, %v7824
        %v8015 = vpack.c.b16 %v7835, %v7830
        %v8016 = vpack.c.b16 %v7836, %v7831
        %v8017 = vpack.c.b16 %v7837, %v7832
        %v8018 = vpack.c.b16 %v7838, %v7833
        %v8019 = vpack.c.b16 %v7839, %v7834
        %v8020 = vpack.c.b16 %v7845, %v7840
        %v8021 = vpack.c.b16 %v7846, %v7841
        %v8022 = vpack.c.b16 %v7847, %v7842
        %v8023 = vpack.c.b16 %v7848, %v7843
        %v8024 = vpack.c.b16 %v7849, %v7844
        %v8025 = vpack.c.b16 %v7855, %v7850
        %v8026 = vpack.c.b16 %v7856, %v7851
        %v8027 = vpack.c.b16 %v7857, %v7852
        %v8028 = vpack.c.b16 %v7858, %v7853
        %v8029 = vpack.c.b16 %v7859, %v7854
        %v8030 = vpack.c.b16 %v7865, %v7860
        %v8031 = vpack.c.b16 %v7866, %v7861
        %v8032 = vpack.c.b16 %v7867, %v7862
        %v8033 = vpack.c.b16 %v7868, %v7863
        %v8034 = vpack.c.b16 %v7869, %v7864
        %v8035 = vpack.c.b16 %v7875, %v7870
        %v8036 = vpack.c.b16 %v7876, %v7871
        %v8037 = vpack.c.b16 %v7877, %v7872
        %v8038 = vpack.c.b16 %v7878, %v7873
        %v8039 = vpack.c.b16 %v7879, %v7874
        %v8040 = vpack.c.b16 %v7885, %v7880
        %v8041 = vpack.c.b16 %v7886, %v7881
        %v8042 = vpack.c.b16 %v7887, %v7882
        %v8043 = vpack.c.b16 %v7888, %v7883
        %v8044 = vpack.c.b16 %v7889, %v7884
        %v8045 = vpack.c.b16 %v7895, %v7890
        %v8046 = vpack.c.b16 %v7896, %v7891
        %v8047 = vpack.c.b16 %v7897, %v7892
        %v8048 = vpack.c.b16 %v7898, %v7893
        %v8049 = vpack.c.b16 %v7899, %v7894
        %v8050 = vpack.c.b16 %v7905, %v7900
        %v8051 = vpack.c.b16 %v7906, %v7901
        %v8052 = vpack.c.b16 %v7907, %v7902
        %v8053 = vpack.c.b16 %v7908, %v7903
        %v8054 = vpack.c.b16 %v7909, %v7904
        %v8055 = vpack.c.b16 %v7915, %v7910
        %v8056 = vpack.c.b16 %v7916, %v7911
        %v8057 = vpack.c.b16 %v7917, %v7912
        %v8058 = vpack.c.b16 %v7918, %v7913
        %v8059 = vpack.c.b16 %v7919, %v7914
        %v8060 = vpack.c.b16 %v7925, %v7920
        %v8061 = vpack.c.b16 %v7926, %v7921
        %v8062 = vpack.c.b16 %v7927, %v7922
        %v8063 = vpack.c.b16 %v7928, %v7923
        %v8064 = vpack.c.b16 %v7929, %v7924
        %v8065 = vpack.c.b16 %v7935, %v7930
        %v8066 = vpack.c.b16 %v7936, %v7931
        %v8067 = vpack.c.b16 %v7937, %v7932
        %v8068 = vpack.c.b16 %v7938, %v7933
        %v8069 = vpack.c.b16 %v7939, %v7934
        %v8070 = vpack.c.b16 %v7945, %v7940
        %v8071 = vpack.c.b16 %v7946, %v7941
        %v8072 = vpack.c.b16 %v7947, %v7942
        %v8073 = vpack.c.b16 %v7948, %v7943
        %v8074 = vpack.c.b16 %v7949, %v7944
        %v8075 = vpack.c.b16 %v7955, %v7950
        %v8076 = vpack.c.b16 %v7956, %v7951
        %v8077 = vpack.c.b16 %v7957, %v7952
        %v8078 = vpack.c.b16 %v7958, %v7953
        %v8079 = vpack.c.b16 %v7959, %v7954
        %v8080 = vpack.c.b16 %v7965, %v7960
        %v8081 = vpack.c.b16 %v7966, %v7961
        %v8082 = vpack.c.b16 %v7967, %v7962
        %v8083 = vpack.c.b16 %v7968, %v7963
        %v8084 = vpack.c.b16 %v7969, %v7964
        %v8085 = vpack.c.b16 %v7975, %v7970
        %v8086 = vpack.c.b16 %v7976, %v7971
        %v8087 = vpack.c.b16 %v7977, %v7972
        %v8088 = vpack.c.b16 %v7978, %v7973
        %v8089 = vpack.c.b16 %v7979, %v7974
        %v8090 = vpack.c.b16 %v7985, %v7980
        %v8091 = vpack.c.b16 %v7986, %v7981
        %v8092 = vpack.c.b16 %v7987, %v7982
        %v8093 = vpack.c.b16 %v7988, %v7983
        %v8094 = vpack.c.b16 %v7989, %v7984
        %v8095 = vpack.c.b16 %v7995, %v7990
        %v8096 = vpack.c.b16 %v7996, %v7991
        %v8097 = vpack.c.b16 %v7997, %v7992
        %v8098 = vpack.c.b16 %v7998, %v7993
        %v8099 = vpack.c.b16 %v7999, %v7994
        %v8201 = vsel %vm7648, %v7679, 0
        %8203 = vmatprep.subr.bf16.mxu0 %v8001
        %8204 = vmatpush1.bf16.msra.mxu0 %v8000
        %8205 = vmatprep.subr.bf16.mxu0 %v8006
        %8206 = vmatpush1.bf16.msra.mxu0 %v8005
        %8207 = vmatprep.subr.bf16.mxu0 %v8011
        %8208 = vmatpush1.bf16.msra.mxu0 %v8010
        %8209 = vmatprep.subr.bf16.mxu0 %v8016
        %8210 = vmatpush1.bf16.msra.mxu0 %v8015
        %8211 = vmatprep.subr.bf16.mxu0 %v8021
        %8212 = vmatpush1.bf16.msra.mxu0 %v8020
        %8213 = vmatprep.subr.bf16.mxu0 %v8026
        %8214 = vmatpush1.bf16.msra.mxu0 %v8025
        %8215 = vmatprep.subr.bf16.mxu0 %v8031
        %8216 = vmatpush1.bf16.msra.mxu0 %v8030
        %8217 = vmatprep.subr.bf16.mxu0 %v8036
        %8218 = vmatpush1.bf16.msra.mxu0 %v8035
        %8219 = vmatprep.subr.bf16.mxu0 %v8041
        %8220 = vmatpush1.bf16.msra.mxu0 %v8040
        %8221 = vmatprep.subr.bf16.mxu0 %v8046
        %8222 = vmatpush1.bf16.msra.mxu0 %v8045
        %8223 = vmatprep.subr.bf16.mxu0 %v8051
        %8224 = vmatpush1.bf16.msra.mxu0 %v8050
        %8225 = vmatprep.subr.bf16.mxu0 %v8056
        %8226 = vmatpush1.bf16.msra.mxu0 %v8055
        %8227 = vmatprep.subr.bf16.mxu0 %v8061
        %8228 = vmatpush1.bf16.msra.mxu0 %v8060
        %8229 = vmatprep.subr.bf16.mxu0 %v8066
        %8230 = vmatpush1.bf16.msra.mxu0 %v8065
        %8231 = vmatprep.subr.bf16.mxu0 %v8071
        %8232 = vmatpush1.bf16.msra.mxu0 %v8070
        %8233 = vmatprep.subr.bf16.mxu0 %v8076
        %8234 = vmatpush1.bf16.msra.mxu0 %v8075
        %8235 = vmatprep.mubr.bf16.mxu0 %v7678
        %8236 = vmatmul.mubr.bf16.gmra.mrb[0].mxu0 %v7677
        %v8237 = vpop.f32.mrb[0].mxu0
        %v8238 = vadd.f32 0.0, %v8237
        %v8239 = vpop.f32.mrb[0].mxu0
        %v8240 = vadd.f32 0.0, %v8239
        %v8241 = vpop.f32.mrb[0].mxu0
        %v8242 = vpop.f32.mrb[0].mxu0
        %8243 = vdwg.mxu0
        %8244 = vmatprep.subr.bf16.mxu0 %v8081
        %8245 = vmatpush1.bf16.msra.mxu0 %v8080
        %8246 = vmatprep.subr.bf16.mxu0 %v8086
        %8247 = vmatpush1.bf16.msra.mxu0 %v8085
        %8248 = vmatprep.subr.bf16.mxu0 %v8091
        %8249 = vmatpush1.bf16.msra.mxu0 %v8090
        %8250 = vmatprep.subr.bf16.mxu0 %v8096
        %8251 = vmatpush1.bf16.msra.mxu0 %v8095
        %8252 = vmatprep.subr.bf16.mxu0 0
        %8253 = vmatpush1.bf16.msra.mxu0 0
        %8254 = vmatprep.subr.bf16.mxu0 0
        %8255 = vmatpush1.bf16.msra.mxu0 0
        %8256 = vmatprep.subr.bf16.mxu0 0
        %8257 = vmatpush1.bf16.msra.mxu0 0
        %8258 = vmatprep.subr.bf16.mxu0 0
        %8259 = vmatpush1.bf16.msra.mxu0 0
        %8260 = vmatprep.subr.bf16.mxu0 0
        %8261 = vmatpush1.bf16.msra.mxu0 0
        %8262 = vmatprep.subr.bf16.mxu0 0
        %8263 = vmatpush1.bf16.msra.mxu0 0
        %8264 = vmatprep.subr.bf16.mxu0 0
        %8265 = vmatpush1.bf16.msra.mxu0 0
        %8266 = vmatprep.subr.bf16.mxu0 0
        %8267 = vmatpush1.bf16.msra.mxu0 0
        %8268 = vmatprep.subr.bf16.mxu0 0
        %8269 = vmatpush1.bf16.msra.mxu0 0
        %8270 = vmatprep.subr.bf16.mxu0 0
        %8271 = vmatpush1.bf16.msra.mxu0 0
        %8272 = vmatprep.subr.bf16.mxu0 0
        %8273 = vmatpush1.bf16.msra.mxu0 0
        %8274 = vmatprep.subr.bf16.mxu0 0
        %8275 = vmatpush1.bf16.msra.mxu0 0
        %8276 = vmatprep.mubr.bf16.mxu0 0
        %8277 = vmatmul.mubr.bf16.gmra.mrb[0].mxu0 %v8201
        %v8278 = vpop.f32.mrb[0].mxu0
        %v8279 = vadd.f32 %v8238, %v8278
        %v8280 = vpop.f32.mrb[0].mxu0
        %v8281 = vadd.f32 %v8240, %v8280
        %v8282 = vpop.f32.mrb[0].mxu0
        %v8283 = vpop.f32.mrb[0].mxu0
        %8284 = vdwg.mxu0
        %8285 = vmatprep.subr.bf16.mxu0 %v8003
        %8286 = vmatpush1.bf16.msra.mxu0 %v8002
        %8287 = vmatprep.subr.bf16.mxu0 %v8008
        %8288 = vmatpush1.bf16.msra.mxu0 %v8007
        %8289 = vmatprep.subr.bf16.mxu0 %v8013
        %8290 = vmatpush1.bf16.msra.mxu0 %v8012
        %8291 = vmatprep.subr.bf16.mxu0 %v8018
        %8292 = vmatpush1.bf16.msra.mxu0 %v8017
        %8293 = vmatprep.subr.bf16.mxu0 %v8023
        %8294 = vmatpush1.bf16.msra.mxu0 %v8022
        %8295 = vmatprep.subr.bf16.mxu0 %v8028
        %8296 = vmatpush1.bf16.msra.mxu0 %v8027
        %8297 = vmatprep.subr.bf16.mxu0 %v8033
        %8298 = vmatpush1.bf16.msra.mxu0 %v8032
        %8299 = vmatprep.subr.bf16.mxu0 %v8038
        %8300 = vmatpush1.bf16.msra.mxu0 %v8037
        %8301 = vmatprep.subr.bf16.mxu0 %v8043
        %8302 = vmatpush1.bf16.msra.mxu0 %v8042
        %8303 = vmatprep.subr.bf16.mxu0 %v8048
        %8304 = vmatpush1.bf16.msra.mxu0 %v8047
        %8305 = vmatprep.subr.bf16.mxu0 %v8053
        %8306 = vmatpush1.bf16.msra.mxu0 %v8052
        %8307 = vmatprep.subr.bf16.mxu0 %v8058
        %8308 = vmatpush1.bf16.msra.mxu0 %v8057
        %8309 = vmatprep.subr.bf16.mxu0 %v8063
        %8310 = vmatpush1.bf16.msra.mxu0 %v8062
        %8311 = vmatprep.subr.bf16.mxu0 %v8068
        %8312 = vmatpush1.bf16.msra.mxu0 %v8067
        %8313 = vmatprep.subr.bf16.mxu0 %v8073
        %8314 = vmatpush1.bf16.msra.mxu0 %v8072
        %8315 = vmatprep.subr.bf16.mxu0 %v8078
        %8316 = vmatpush1.bf16.msra.mxu0 %v8077
        %8317 = vmatprep.mubr.bf16.mxu0 %v7678
        %8318 = vmatmul.mubr.bf16.gmra.mrb[0].mxu0 %v7677
        %v8319 = vpop.f32.mrb[0].mxu0
        %v8320 = vadd.f32 0.0, %v8319
        %v8321 = vpop.f32.mrb[0].mxu0
        %v8322 = vadd.f32 0.0, %v8321
        %v8323 = vpop.f32.mrb[0].mxu0
        %v8324 = vpop.f32.mrb[0].mxu0
        %8325 = vdwg.mxu0
        %8326 = vmatprep.subr.bf16.mxu0 %v8083
        %8327 = vmatpush1.bf16.msra.mxu0 %v8082
        %8328 = vmatprep.subr.bf16.mxu0 %v8088
        %8329 = vmatpush1.bf16.msra.mxu0 %v8087
        %8330 = vmatprep.subr.bf16.mxu0 %v8093
        %8331 = vmatpush1.bf16.msra.mxu0 %v8092
        %8332 = vmatprep.subr.bf16.mxu0 %v8098
        %8333 = vmatpush1.bf16.msra.mxu0 %v8097
        %8334 = vmatprep.subr.bf16.mxu0 0
        %8335 = vmatpush1.bf16.msra.mxu0 0
        %8336 = vmatprep.subr.bf16.mxu0 0
        %8337 = vmatpush1.bf16.msra.mxu0 0
        %8338 = vmatprep.subr.bf16.mxu0 0
        %8339 = vmatpush1.bf16.msra.mxu0 0
        %8340 = vmatprep.subr.bf16.mxu0 0
        %8341 = vmatpush1.bf16.msra.mxu0 0
        %8342 = vmatprep.subr.bf16.mxu0 0
        %8343 = vmatpush1.bf16.msra.mxu0 0
        %8344 = vmatprep.subr.bf16.mxu0 0
        %8345 = vmatpush1.bf16.msra.mxu0 0
        %8346 = vmatprep.subr.bf16.mxu0 0
        %8347 = vmatpush1.bf16.msra.mxu0 0
        %8348 = vmatprep.subr.bf16.mxu0 0
        %8349 = vmatpush1.bf16.msra.mxu0 0
        %8350 = vmatprep.subr.bf16.mxu0 0
        %8351 = vmatpush1.bf16.msra.mxu0 0
        %8352 = vmatprep.subr.bf16.mxu0 0
        %8353 = vmatpush1.bf16.msra.mxu0 0
        %8354 = vmatprep.subr.bf16.mxu0 0
        %8355 = vmatpush1.bf16.msra.mxu0 0
        %8356 = vmatprep.subr.bf16.mxu0 0
        %8357 = vmatpush1.bf16.msra.mxu0 0
        %8358 = vmatprep.mubr.bf16.mxu0 0
        %8359 = vmatmul.mubr.bf16.gmra.mrb[0].mxu0 %v8201
        %v8360 = vpop.f32.mrb[0].mxu0
        %v8361 = vadd.f32 %v8320, %v8360
        %v8362 = vpop.f32.mrb[0].mxu0
        %v8363 = vadd.f32 %v8322, %v8362
        %v8364 = vpop.f32.mrb[0].mxu0
        %v8365 = vpop.f32.mrb[0].mxu0
        %8366 = vdwg.mxu0
        %8367 = vmatprep.subr.bf16.mxu0 0
        %8368 = vmatpush1.bf16.msra.mxu0 %v8004
        %8369 = vmatprep.subr.bf16.mxu0 0
        %8370 = vmatpush1.bf16.msra.mxu0 %v8009
        %8371 = vmatprep.subr.bf16.mxu0 0
        %8372 = vmatpush1.bf16.msra.mxu0 %v8014
        %8373 = vmatprep.subr.bf16.mxu0 0
        %8374 = vmatpush1.bf16.msra.mxu0 %v8019
        %8375 = vmatprep.subr.bf16.mxu0 0
        %8376 = vmatpush1.bf16.msra.mxu0 %v8024
        %8377 = vmatprep.subr.bf16.mxu0 0
        %8378 = vmatpush1.bf16.msra.mxu0 %v8029
        %8379 = vmatprep.subr.bf16.mxu0 0
        %8380 = vmatpush1.bf16.msra.mxu0 %v8034
        %8381 = vmatprep.subr.bf16.mxu0 0
        %8382 = vmatpush1.bf16.msra.mxu0 %v8039
        %8383 = vmatprep.subr.bf16.mxu0 0
        %8384 = vmatpush1.bf16.msra.mxu0 %v8044
        %8385 = vmatprep.subr.bf16.mxu0 0
        %8386 = vmatpush1.bf16.msra.mxu0 %v8049
        %8387 = vmatprep.subr.bf16.mxu0 0
        %8388 = vmatpush1.bf16.msra.mxu0 %v8054
        %8389 = vmatprep.subr.bf16.mxu0 0
        %8390 = vmatpush1.bf16.msra.mxu0 %v8059
        %8391 = vmatprep.subr.bf16.mxu0 0
        %8392 = vmatpush1.bf16.msra.mxu0 %v8064
        %8393 = vmatprep.subr.bf16.mxu0 0
        %8394 = vmatpush1.bf16.msra.mxu0 %v8069
        %8395 = vmatprep.subr.bf16.mxu0 0
        %8396 = vmatpush1.bf16.msra.mxu0 %v8074
        %8397 = vmatprep.subr.bf16.mxu0 0
        %8398 = vmatpush1.bf16.msra.mxu0 %v8079
        %8399 = vmatprep.mubr.bf16.mxu0 %v7678
        %8400 = vmatmul.mubr.bf16.gmra.mrb[0].mxu0 %v7677
        %v8401 = vpop.f32.mrb[0].mxu0
        %v8402 = vadd.f32 0.0, %v8401
        %v8403 = vpop.f32.mrb[0].mxu0
        %v8404 = vpop.f32.mrb[0].mxu0
        %v8405 = vpop.f32.mrb[0].mxu0
        %8406 = vdwg.mxu0
        %8407 = vmatprep.subr.bf16.mxu0 0
        %8408 = vmatpush1.bf16.msra.mxu0 %v8084
        %8409 = vmatprep.subr.bf16.mxu0 0
        %8410 = vmatpush1.bf16.msra.mxu0 %v8089
        %8411 = vmatprep.subr.bf16.mxu0 0
        %8412 = vmatpush1.bf16.msra.mxu0 %v8094
        %8413 = vmatprep.subr.bf16.mxu0 0
        %8414 = vmatpush1.bf16.msra.mxu0 %v8099
        %8415 = vmatprep.subr.bf16.mxu0 0
        %8416 = vmatpush1.bf16.msra.mxu0 0
        %8417 = vmatprep.subr.bf16.mxu0 0
        %8418 = vmatpush1.bf16.msra.mxu0 0
        %8419 = vmatprep.subr.bf16.mxu0 0
        %8420 = vmatpush1.bf16.msra.mxu0 0
        %8421 = vmatprep.subr.bf16.mxu0 0
        %8422 = vmatpush1.bf16.msra.mxu0 0
        %8423 = vmatprep.subr.bf16.mxu0 0
        %8424 = vmatpush1.bf16.msra.mxu0 0
        %8425 = vmatprep.subr.bf16.mxu0 0
        %8426 = vmatpush1.bf16.msra.mxu0 0
        %8427 = vmatprep.subr.bf16.mxu0 0
        %8428 = vmatpush1.bf16.msra.mxu0 0
        %8429 = vmatprep.subr.bf16.mxu0 0
        %8430 = vmatpush1.bf16.msra.mxu0 0
        %8431 = vmatprep.subr.bf16.mxu0 0
        %8432 = vmatpush1.bf16.msra.mxu0 0
        %8433 = vmatprep.subr.bf16.mxu0 0
        %8434 = vmatpush1.bf16.msra.mxu0 0
        %8435 = vmatprep.subr.bf16.mxu0 0
        %8436 = vmatpush1.bf16.msra.mxu0 0
        %8437 = vmatprep.subr.bf16.mxu0 0
        %8438 = vmatpush1.bf16.msra.mxu0 0
        %8439 = vmatprep.mubr.bf16.mxu0 0
        %8440 = vmatmul.mubr.bf16.gmra.mrb[0].mxu0 %v8201
        %v8441 = vpop.f32.mrb[0].mxu0
        %v8442 = vadd.f32 %v8402, %v8441
        %v8443 = vpop.f32.mrb[0].mxu0
        %v8444 = vpop.f32.mrb[0].mxu0
        %v8445 = vpop.f32.mrb[0].mxu0
        %8446 = vdwg.mxu0
        %v8447 = vadd.f32 %v441, %v8279
        %v8450 = vunpack.c.l.s4 1966171168
        %v8451 = vunpack.c.0.s8 %v8450
        %v8452 = vlaneseq
        %v8453 = vshrl.u32 %v8452, 7
        %v8454 = vsub.s32 %v8451, %v8453
        %v8455 = vrot.slane %v8281, %v8454
        %v8456 = vcombine.high %v8455, %v8455
        %v8458 = vunpack.c.l.s4 1966171168
        %v8459 = vunpack.c.0.s8 %v8458
        %v8460 = vlaneseq
        %v8461 = vshrl.u32 %v8460, 7
        %v8462 = vsub.s32 %v8459, %v8461
        %v8463 = vrot.slane %v8456, %v8462
        %v8465 = vadd.f32 %v8447, %v8463
        %v8468 = vunpack.c.l.s4 1966171168
        %v8469 = vunpack.c.0.s8 %v8468
        %v8470 = vlaneseq
        %v8471 = vshrl.u32 %v8470, 7
        %v8472 = vsub.s32 %v8469, %v8471
        %v8473 = vrot.slane %v8361, %v8472
        %v8475 = vunpack.c.l.s4 1966171168
        %v8476 = vunpack.c.0.s8 %v8475
        %v8477 = vlaneseq
        %v8478 = vshrl.u32 %v8477, 7
        %v8479 = vsub.s32 %v8476, %v8478
        %v8480 = vrot.slane %v8473, %v8479
        %v8481 = vcombine.high %v8480, %v8480
        %v8483 = vadd.f32 %v8465, %v8481
        %v8486 = vunpack.c.l.s4 1966171168
        %v8487 = vunpack.c.0.s8 %v8486
        %v8488 = vlaneseq
        %v8489 = vshrl.u32 %v8488, 7
        %v8490 = vsub.s32 %v8487, %v8489
        %v8491 = vrot.slane %v8363, %v8490
        %v8492 = vcombine.high %v8491, %v8491
        %v8494 = vunpack.c.l.s4 1966171168
        %v8495 = vunpack.c.0.s8 %v8494
        %v8496 = vlaneseq
        %v8497 = vshrl.u32 %v8496, 7
        %v8498 = vsub.s32 %v8495, %v8497
        %v8499 = vrot.slane %v8492, %v8498
        %v8500 = vcombine.high %v8499, %v8499
        %v8502 = vadd.f32 %v8483, %v8500
        %v8504 = vcombine.high %v8442, %v8442
        %v8506 = vunpack.c.l.s4 1966171168
        %v8507 = vunpack.c.0.s8 %v8506
        %v8508 = vlaneseq
        %v8509 = vshrl.u32 %v8508, 7
        %v8510 = vsub.s32 %v8507, %v8509
        %v8511 = vrot.slane %v8504, %v8510
        %v8513 = vunpack.c.l.s4 1966171168
        %v8514 = vunpack.c.0.s8 %v8513
        %v8515 = vlaneseq
        %v8516 = vshrl.u32 %v8515, 7
        %v8517 = vsub.s32 %v8514, %v8516
        %v8518 = vrot.slane %v8511, %v8517
        %v8520 = vadd.f32 %v8502, %v8518
        %8521 = vst [vmem:[%s310] sm:$0x1] %v8520
        %s8522 = sand.u32 %s162, 1
        %s8523 = scalar_lea.sflag [#allocation4], %s8522
        %s8524 = sand.u32 %s162, 1
        %s8525 = scalar_lea.vmem [#allocation11], %s8524
        // Predicated region
        $region65: #{cnn_fmnist_forward.5} parent=43 // pred_check
          %p8526 = pneg %p172
        $region66: #{cnn_fmnist_forward.5} parent=43 // pred_check_branch
          %8528 = sbr.rel (%p8526) target = $region68
        $region67: #{cnn_fmnist_forward.5} parent=43 // pred_region
          %s8530 = ssub.s32 16, 16
          %8531 = vsyncadd %s8523, %s8530
          %s8532 = smul.addr %s23, 16
          %s8533 = scalar_lea.hbm %s6, %s8532
          %s8535 = sshll.u32 %s8525, 4
          %s8536 = int_to_ptr.vmem [resolvable:$true] %s8535
          %8538 = dma.vmem_to_hbm [thread:$0]  %s8536, 16, %s8533, %s8523
        $region68: #{cnn_fmnist_forward.5} parent=43 // pred_fallthru
          _
      $region44: #{cnn_fmnist_forward.5} parent=5 // pred_fallthru
        _
      %p8539 = scmp.le.s32.totalorder 2, %s18
      // Predicated region
      $region69: #{cnn_fmnist_forward.5} parent=5 // pred_check
        %p8540 = pneg %p8539
      $region70: #{cnn_fmnist_forward.5} parent=5 // pred_check_branch
        %8542 = sbr.rel (%p8540) target = $region72
      $region71: #{cnn_fmnist_forward.5} parent=5 // pred_region
        %s8543 = ssub.s32 %s18, 2
        // Predicated region
        $region73: #{cnn_fmnist_forward.5} parent=71 // pred_check
          %p8544 = pneg %p178
        $region74: #{cnn_fmnist_forward.5} parent=71 // pred_check_branch
          %8546 = sbr.rel (%p8544) target = $region76
        $region75: #{cnn_fmnist_forward.5} parent=71 // pred_region
          %s8547 = sand.u32 %s163, 1
          %s8548 = scalar_lea.sflag [#allocation4], %s8547
          %s8549 = sand.u32 %s163, 1
          %s8550 = scalar_lea.vmem [#allocation11], %s8549
          %8551 = dma.done %s8548, 16
        $region76: #{cnn_fmnist_forward.5} parent=71 // pred_fallthru
          _
      $region72: #{cnn_fmnist_forward.5} parent=5 // pred_fallthru
        _
    $region6: #{cnn_fmnist_forward.5} parent=1 // loop_footer
      %s22 = sadd.s32 1, %s18
    $region7: #{cnn_fmnist_forward.5} parent=1 // loop_footer_branch
      %17 = sbr.rel target = $region3
    $region8: #{cnn_fmnist_forward.5} parent=1 // loop_exit
      _
    %8552 = vsyncpa [#allocation3], 1
    %s8553 = scalar_lea.sflag [#allocation3], 1
    %8554 = vsyncpa %s8553, 1
    %8555 = vsyncpa [#allocation6], 1
    %8556 = vsyncpa [#allocation9], 1
    %8557 = vsyncpa [#allocation4], 1
    %s8558 = scalar_lea.sflag [#allocation4], 1
    %8559 = vsyncpa %s8558, 1

</llo_original>
